<compile_context>
chip_gen: v7x
topology: tpu7x:2x2x1
jax: 0.10.0
libtpu: 0.0.40
codegen_flags: <defaults>
</compile_context>

<pallas_src>
import jax
import jax.numpy as jnp
import numpy as np
from jax.experimental import pallas as pl
from jax.experimental.pallas import tpu as pltpu

# ---- hyper-params (mirroring the PyTorch globals, at reduced sizes) ----
B = 8              # batch_size (100 in original)
IN_DIM = 16 * 16   # 28*28 in original
H1 = 128           # cfg_fc[0] = 512 in original
H2 = 10            # cfg_fc[1] = 10
H2P = 128          # lane-padded layer-2 width (dense vreg stores)
TAU_W = 40.0
THRESH = 0.35
INV_THRESH = 1.0 / THRESH
TIME_WINDOW = 10
W_DECAY = 0.95
# spikingjelly LIFNode defaults: tau=2.0, v_threshold=1.0, v_reset=0.0, decay_input=True
LIF_TAU = 2.0
INV_LIF_TAU = 1.0 / LIF_TAU
V_TH = 1.0

# Compile-time decay constants (step index is static once the loop is unrolled).
_DECAYS = np.exp(-np.arange(TIME_WINDOW, dtype=np.float32) /
                 np.float32(TAU_W)).astype(np.float32)


def _snn_kernel(alpha_ref,                                    # SMEM (2,)
                x_ref, w1_ref, b1_ref, w2_ref, b2_ref,        # VMEM inputs
                eta1_ref, eta2_ref, beta1_ref, beta2_ref,
                hebb1_in_ref, hebb2_in_ref,                   # aliased to outputs
                h2_spike_ref, h1_sum_ref, h2_sum_ref,         # VMEM outputs
                hebb1_ref, hebb2_ref):
    a1 = alpha_ref[0]
    a2 = alpha_ref[1]
    inv_b = 1.0 / B

    # ---- hoisted, loop-invariant precomputes ----
    x = x_ref[...]                                            # (B, IN)
    xw1 = jnp.dot(x, w1_ref[...],
                  preferred_element_type=jnp.float32)         # (B, H1), once
    xb1 = x * beta1_ref[...]                                  # (B, IN), once
    b1 = b1_ref[...]
    b2 = b2_ref[...]
    eta1 = eta1_ref[...]
    eta2 = eta2_ref[...]
    # fold the 1/B mean into the small (1, H1) pre-factor once, not into the
    # (H1, H2P) outer product every step.
    beta2_s = beta2_ref[...] * jnp.float32(inv_b)
    w2 = w2_ref[...]                                          # loop-invariant load

    # hebb2 (128x128 = 16 f32 vregs) is cheap enough to carry as a value,
    # removing 16 vst + 16 vld per step and a VMEM ordering point on the
    # serial layer-2 recurrence. hebb1 (256x128) stays in VMEM via its ref.
    hebb2 = hebb2_in_ref[...]

    # LIF state / spike accumulators carried as values, written once at the end.
    v1 = jnp.zeros((B, H1), jnp.float32)
    v2 = jnp.zeros((B, H2P), jnp.float32)
    h1_sum = jnp.zeros((B, H1), jnp.float32)
    h2_sum = jnp.zeros((B, H2P), jnp.float32)
    h2_spike = jnp.zeros((B, H2P), jnp.float32)

    for step in range(TIME_WINDOW):                           # fully unrolled
        d = float(_DECAYS[step])
        # Initial hebb1 from the (aliased) input ref on the first step, then
        # from what we wrote on the previous step.
        hebb1 = hebb1_in_ref[...] if step == 0 else hebb1_ref[...]

        # ---- layer 1 ----
        # (x*d) @ W1 == d * (x @ W1) ; alpha1 * ((x*d) @ hebb1) == (alpha1*d) * (x @ hebb1)
        x_hebb1 = jnp.dot(x, hebb1, preferred_element_type=jnp.float32)
        h1_mem = d * xw1 + b1 + (a1 * d) * x_hebb1

        # Hebbian update: mean over batch of outer((pre*beta), tanh(post/thresh - eta)).
        # The (d/B) scale is applied to the 2-vreg xb1 operand, not the
        # 32-vreg outer product result.
        post1 = jnp.tanh(h1_mem * INV_THRESH - eta1)          # (B, H1)
        xb1_s = xb1 * jnp.float32(d * inv_b)                  # (B, IN)
        outer1 = jax.lax.dot_general(                         # xb1_s.T @ post1 on the MXU
            xb1_s, post1, (((0,), (0,)), ((), ())),
            preferred_element_type=jnp.float32)
        hebb1_ref[...] = jnp.clip(W_DECAY * hebb1 + outer1, -4.0, 4.0)

        # LIF1: v += (x - v)/tau ; spike = v >= 1 ; hard reset to 0
        v1 = v1 + (h1_mem - v1) * INV_LIF_TAU
        h1_spike = (v1 >= V_TH).astype(jnp.float32)
        v1 = v1 * (1.0 - h1_spike)
        h1_sum = h1_sum + h1_spike

        # ---- layer 2 (fused: one MXU pass through W2 + alpha2*hebb2) ----
        w_eff2 = w2 + a2 * hebb2                              # (H1, H2P) VPU FMA
        h2_mem = jnp.dot(h1_spike, w_eff2,
                         preferred_element_type=jnp.float32) + b2

        post2 = jnp.tanh(h2_mem * INV_THRESH - eta2)          # (B, H2P)
        pre2 = h1_spike * beta2_s                             # (B, H1), 1/B pre-folded
        outer2 = jax.lax.dot_general(
            pre2, post2, (((0,), (0,)), ((), ())),
            preferred_element_type=jnp.float32)
        hebb2 = jnp.clip(W_DECAY * hebb2 + outer2, -4.0, 4.0)

        v2 = v2 + (h2_mem - v2) * INV_LIF_TAU
        h2_spike = (v2 >= V_TH).astype(jnp.float32)
        v2 = v2 * (1.0 - h2_spike)
        h2_sum = h2_sum + h2_spike

    # single lane-dense store of the small outputs + the carried hebb2
    h2_spike_ref[...] = h2_spike
    h1_sum_ref[...] = h1_sum
    h2_sum_ref[...] = h2_sum
    hebb2_ref[...] = hebb2


@jax.jit
def snn_forward(x, w1, b1, w2, b2, alpha1, alpha2, eta1, eta2, beta1, beta2,
                hebb1, hebb2):
    x_flat = x.reshape(x.shape[0], -1).astype(jnp.float32)        # (B, IN)
    alphas = jnp.concatenate([alpha1.reshape(1), alpha2.reshape(1)]).astype(jnp.float32)
    w1t = w1.T                                                    # (IN, H1)
    b1r = b1.reshape(1, H1)

    # pad layer-2 width 10 -> 128 (zero padding is numerically inert here:
    # eta2/b2/w2/hebb2 padded lanes are zero -> tanh(0)=0, v stays below v_th)
    pad2 = H2P - H2
    w2tp = jnp.pad(w2.T, ((0, 0), (0, pad2)))                     # (H1, H2P)
    b2rp = jnp.pad(b2.reshape(1, H2), ((0, 0), (0, pad2)))        # (1, H2P)
    eta2p = jnp.pad(eta2, ((0, 0), (0, pad2)))                    # (1, H2P)
    hebb2p = jnp.pad(hebb2, ((0, 0), (0, pad2)))                  # (H1, H2P)
    hebb1f = hebb1.astype(jnp.float32)

    smem = pl.BlockSpec(memory_space=pltpu.MemorySpace.SMEM)
    vmem = pl.BlockSpec(memory_space=pltpu.MemorySpace.VMEM)

    out_shapes = (
        jax.ShapeDtypeStruct((B, H2P), jnp.float32),       # h2_spike (padded)
        jax.ShapeDtypeStruct((B, H1), jnp.float32),        # h1_sumspike
        jax.ShapeDtypeStruct((B, H2P), jnp.float32),       # h2_sumspike (padded)
        jax.ShapeDtypeStruct((IN_DIM, H1), jnp.float32),   # hebb1
        jax.ShapeDtypeStruct((H1, H2P), jnp.float32),      # hebb2 (padded)
    )

    outs = pl.pallas_call(
        _snn_kernel,
        out_shape=out_shapes,
        in_specs=[smem] + [vmem] * 11,
        out_specs=(vmem,) * 5,
        # hebb1 (input 10) -> output 3, hebb2 (input 11) -> output 4
        input_output_aliases={10: 3, 11: 4},
    )(alphas, x_flat, w1t, b1r, w2tp, b2rp,
      eta1, eta2p, beta1, beta2, hebb1f, hebb2p)

    h2_spike, h1_sum, h2_sum, hebb1_o, hebb2_o = outs
    return (h2_spike[:, :H2], h1_sum, h2_sum[:, :H2],
            hebb1_o, hebb2_o[:, :H2], eta1, eta2)


# ---- pure-JAX reference (mirrors the PyTorch forward) ----
def _mm(a, b):
    return jax.lax.dot_general(a, b, (((1,), (0,)), ((), ())),
                               precision=jax.lax.Precision.HIGHEST,
                               preferred_element_type=jnp.float32)


def _mm_tn(a, b):  # a.T @ b
    return jax.lax.dot_general(a, b, (((0,), (0,)), ((), ())),
                               precision=jax.lax.Precision.HIGHEST,
                               preferred_element_type=jnp.float32)


def snn_forward_ref(x, w1, b1, w2, b2, alpha1, alpha2, eta1, eta2, beta1, beta2,
                    hebb1, hebb2):
    x_flat = x.reshape(x.shape[0], -1).astype(jnp.float32)
    decay = jnp.exp(-jnp.arange(TIME_WINDOW, dtype=jnp.float32) / TAU_W)
    h1_sum = jnp.zeros((B, H1), jnp.float32)
    h2_sum = jnp.zeros((B, H2), jnp.float32)
    h2_spike = jnp.zeros((B, H2), jnp.float32)
    v1 = jnp.zeros((B, H1), jnp.float32)
    v2 = jnp.zeros((B, H2), jnp.float32)
    for step in range(TIME_WINDOW):
        xs = x_flat * decay[step]
        h1_mem = _mm(xs, w1.T) + b1 + alpha1 * _mm(xs, hebb1)
        pre1 = xs * beta1
        post1 = jnp.tanh(h1_mem / THRESH - eta1)
        hebb1 = jnp.clip(W_DECAY * hebb1 + _mm_tn(pre1, post1) / B, -4.0, 4.0)
        v1 = v1 + (h1_mem - v1) / LIF_TAU
        h1_spike = (v1 >= V_TH).astype(jnp.float32)
        v1 = v1 * (1.0 - h1_spike)
        h1_sum = h1_sum + h1_spike

        h2_mem = _mm(h1_spike, w2.T) + b2 + alpha2 * _mm(h1_spike, hebb2)
        pre2 = h1_spike * beta2
        post2 = jnp.tanh(h2_mem / THRESH - eta2)
        hebb2 = jnp.clip(W_DECAY * hebb2 + _mm_tn(pre2, post2) / B, -4.0, 4.0)
        v2 = v2 + (h2_mem - v2) / LIF_TAU
        h2_spike = (v2 >= V_TH).astype(jnp.float32)
        v2 = v2 * (1.0 - h2_spike)
        h2_sum = h2_sum + h2_spike
    return h2_spike, h1_sum, h2_sum, hebb1, hebb2, eta1, eta2


if __name__ == "__main__":
    key = jax.random.PRNGKey(0)
    ks = jax.random.split(key, 12)
    # deterministic synthetic parameters (shapes follow the module's __init__)
    w1 = 0.15 * jax.random.normal(ks[0], (H1, IN_DIM), jnp.float32)
    b1 = 0.10 * jax.random.normal(ks[1], (H1,), jnp.float32)
    w2 = 0.30 * jax.random.normal(ks[2], (H2, H1), jnp.float32)
    b2 = 0.10 * jax.random.normal(ks[3], (H2,), jnp.float32)
    alpha1 = 0.01 * jax.random.uniform(ks[4], (1,), jnp.float32)
    alpha2 = 0.01 * jax.random.uniform(ks[5], (1,), jnp.float32)
    eta1 = 0.01 * jax.random.uniform(ks[6], (1, H1), jnp.float32)
    eta2 = 0.01 * jax.random.uniform(ks[7], (1, H2), jnp.float32)
    beta1 = 0.01 * jax.random.uniform(ks[8], (1, IN_DIM), jnp.float32)
    beta2 = 0.01 * jax.random.uniform(ks[9], (1, H1), jnp.float32)
    x = jax.random.uniform(ks[10], (B, 1, 16, 16), jnp.float32)   # NCHW input
    hebb1 = jnp.zeros((IN_DIM, H1), jnp.float32)                  # produce_hebb()
    hebb2 = jnp.zeros((H1, H2), jnp.float32)

    args = (x, w1, b1, w2, b2, alpha1, alpha2, eta1, eta2, beta1, beta2,
            hebb1, hebb2)

    outs = snn_forward(*args)
    outs = jax.block_until_ready(outs)

    refs = snn_forward_ref(*args)
    for o, r in zip(outs[:5], refs[:5]):
        np.testing.assert_allclose(np.asarray(o), np.asarray(r),
                                   rtol=1e-3, atol=1e-3)

    print("KERNEL_OK")
</pallas_src>

<mosaic_0001>
module attributes {stable_mosaic.version = 11 : i64} {
  func.func @_snn_kernel(%arg0: memref<2xf32, #tpu.memory_space<smem>>, %arg1: memref<8x256xf32, #tpu.memory_space<vmem>>, %arg2: memref<256x128xf32, #tpu.memory_space<vmem>>, %arg3: memref<1x128xf32, #tpu.memory_space<vmem>>, %arg4: memref<128x128xf32, #tpu.memory_space<vmem>>, %arg5: memref<1x128xf32, #tpu.memory_space<vmem>>, %arg6: memref<1x128xf32, #tpu.memory_space<vmem>>, %arg7: memref<1x128xf32, #tpu.memory_space<vmem>>, %arg8: memref<1x256xf32, #tpu.memory_space<vmem>>, %arg9: memref<1x128xf32, #tpu.memory_space<vmem>>, %arg10: memref<256x128xf32, #tpu.memory_space<vmem>>, %arg11: memref<128x128xf32, #tpu.memory_space<vmem>>, %arg12: memref<8x128xf32, #tpu.memory_space<vmem>>, %arg13: memref<8x128xf32, #tpu.memory_space<vmem>>, %arg14: memref<8x128xf32, #tpu.memory_space<vmem>>, %arg15: memref<256x128xf32, #tpu.memory_space<vmem>>, %arg16: memref<128x128xf32, #tpu.memory_space<vmem>>) attributes {dimension_semantics = [], scalar_prefetch = 0 : i64, scratch_operands = 0 : i64, tpu.core_type = #tpu.core_type<tc>} {
    %c0 = arith.constant 0 : index
    %0 = memref.load %arg0[%c0] : memref<2xf32, #tpu.memory_space<smem>>
    %c1 = arith.constant 1 : index
    %1 = memref.load %arg0[%c1] : memref<2xf32, #tpu.memory_space<smem>>
    %c0_0 = arith.constant 0 : index
    %c0_1 = arith.constant 0 : index
    %2 = vector.load %arg1[%c0_0, %c0_1] : memref<8x256xf32, #tpu.memory_space<vmem>>, vector<8x256xf32>
    %c0_2 = arith.constant 0 : index
    %c0_3 = arith.constant 0 : index
    %3 = vector.load %arg2[%c0_2, %c0_3] : memref<256x128xf32, #tpu.memory_space<vmem>>, vector<256x128xf32>
    %cst = arith.constant dense<0.000000e+00> : vector<8x128xf32>
    %4 = tpu.matmul %2, %3, %cst {dimension_numbers = #tpu.dot_dimension_numbers<[1], [0], [0], [1], [0, 0, 1, 1], [], []>} : vector<8x256xf32>, vector<256x128xf32>, vector<8x128xf32> -> vector<8x128xf32>
    %c0_4 = arith.constant 0 : index
    %c0_5 = arith.constant 0 : index
    %5 = vector.load %arg8[%c0_4, %c0_5] : memref<1x256xf32, #tpu.memory_space<vmem>>, vector<1x256xf32>
    %6 = vector.broadcast %5 : vector<1x256xf32> to vector<8x256xf32>
    %7 = arith.mulf %2, %6 : vector<8x256xf32>
    %c0_6 = arith.constant 0 : index
    %c0_7 = arith.constant 0 : index
    %8 = vector.load %arg3[%c0_6, %c0_7] : memref<1x128xf32, #tpu.memory_space<vmem>>, vector<1x128xf32>
    %c0_8 = arith.constant 0 : index
    %c0_9 = arith.constant 0 : index
    %9 = vector.load %arg5[%c0_8, %c0_9] : memref<1x128xf32, #tpu.memory_space<vmem>>, vector<1x128xf32>
    %c0_10 = arith.constant 0 : index
    %c0_11 = arith.constant 0 : index
    %10 = vector.load %arg6[%c0_10, %c0_11] : memref<1x128xf32, #tpu.memory_space<vmem>>, vector<1x128xf32>
    %c0_12 = arith.constant 0 : index
    %c0_13 = arith.constant 0 : index
    %11 = vector.load %arg7[%c0_12, %c0_13] : memref<1x128xf32, #tpu.memory_space<vmem>>, vector<1x128xf32>
    %c0_14 = arith.constant 0 : index
    %c0_15 = arith.constant 0 : index
    %12 = vector.load %arg9[%c0_14, %c0_15] : memref<1x128xf32, #tpu.memory_space<vmem>>, vector<1x128xf32>
    %cst_16 = arith.constant 1.250000e-01 : f32
    %13 = vector.broadcast %cst_16 : f32 to vector<1x128xf32>
    %14 = arith.mulf %12, %13 : vector<1x128xf32>
    %c0_17 = arith.constant 0 : index
    %c0_18 = arith.constant 0 : index
    %15 = vector.load %arg4[%c0_17, %c0_18] : memref<128x128xf32, #tpu.memory_space<vmem>>, vector<128x128xf32>
    %c0_19 = arith.constant 0 : index
    %c0_20 = arith.constant 0 : index
    %16 = vector.load %arg11[%c0_19, %c0_20] : memref<128x128xf32, #tpu.memory_space<vmem>>, vector<128x128xf32>
    %cst_21 = arith.constant 0.000000e+00 : f32
    %17 = vector.broadcast %cst_21 : f32 to vector<8x128xf32>
    %cst_22 = arith.constant 0.000000e+00 : f32
    %18 = vector.broadcast %cst_22 : f32 to vector<8x128xf32>
    %cst_23 = arith.constant 0.000000e+00 : f32
    %19 = vector.broadcast %cst_23 : f32 to vector<8x128xf32>
    %cst_24 = arith.constant 0.000000e+00 : f32
    %20 = vector.broadcast %cst_24 : f32 to vector<8x128xf32>
    %c0_25 = arith.constant 0 : index
    %c0_26 = arith.constant 0 : index
    %21 = vector.load %arg10[%c0_25, %c0_26] : memref<256x128xf32, #tpu.memory_space<vmem>>, vector<256x128xf32>
    %cst_27 = arith.constant dense<0.000000e+00> : vector<8x128xf32>
    %22 = tpu.matmul %2, %21, %cst_27 {dimension_numbers = #tpu.dot_dimension_numbers<[1], [0], [0], [1], [0, 0, 1, 1], [], []>} : vector<8x256xf32>, vector<256x128xf32>, vector<8x128xf32> -> vector<8x128xf32>
    %cst_28 = arith.constant 1.000000e+00 : f32
    %23 = vector.broadcast %cst_28 : f32 to vector<8x128xf32>
    %24 = arith.mulf %23, %4 : vector<8x128xf32>
    %25 = vector.broadcast %8 : vector<1x128xf32> to vector<8x128xf32>
    %26 = arith.addf %24, %25 : vector<8x128xf32>
    %cst_29 = arith.constant 1.000000e+00 : f32
    %27 = arith.mulf %0, %cst_29 : f32
    %28 = vector.broadcast %27 : f32 to vector<8x128xf32>
    %29 = arith.mulf %28, %22 : vector<8x128xf32>
    %30 = arith.addf %26, %29 : vector<8x128xf32>
    %cst_30 = arith.constant 2.85714293 : f32
    %31 = vector.broadcast %cst_30 : f32 to vector<8x128xf32>
    %32 = arith.mulf %30, %31 : vector<8x128xf32>
    %33 = vector.broadcast %10 : vector<1x128xf32> to vector<8x128xf32>
    %34 = arith.subf %32, %33 : vector<8x128xf32>
    %35 = math.tanh %34 : vector<8x128xf32>
    %cst_31 = arith.constant 1.250000e-01 : f32
    %36 = vector.broadcast %cst_31 : f32 to vector<8x256xf32>
    %37 = arith.mulf %7, %36 : vector<8x256xf32>
    %cst_32 = arith.constant dense<0.000000e+00> : vector<256x128xf32>
    %38 = tpu.matmul %37, %35, %cst_32 {dimension_numbers = #tpu.dot_dimension_numbers<[0], [0], [1], [1], [0, 1, 1, 1], [], []>} : vector<8x256xf32>, vector<8x128xf32>, vector<256x128xf32> -> vector<256x128xf32>
    %cst_33 = arith.constant 0.949999988 : f32
    %39 = vector.broadcast %cst_33 : f32 to vector<256x128xf32>
    %40 = arith.mulf %39, %21 : vector<256x128xf32>
    %41 = arith.addf %40, %38 : vector<256x128xf32>
    %cst_34 = arith.constant -4.000000e+00 : f32
    %cst_35 = arith.constant 4.000000e+00 : f32
    %42 = vector.broadcast %cst_34 : f32 to vector<256x128xf32>
    %43 = arith.maximumf %42, %41 : vector<256x128xf32>
    %44 = vector.broadcast %cst_35 : f32 to vector<256x128xf32>
    %45 = arith.minimumf %44, %43 : vector<256x128xf32>
    %c0_36 = arith.constant 0 : index
    %c0_37 = arith.constant 0 : index
    %46 = vector.load %arg15[%c0_36, %c0_37] : memref<256x128xf32, #tpu.memory_space<vmem>>, vector<256x128xf32>
    tpu.vector_store %arg15[%c0_36, %c0_37], %45 {strides = array<i32>} : memref<256x128xf32, #tpu.memory_space<vmem>>, vector<256x128xf32>,
    %47 = arith.subf %30, %17 : vector<8x128xf32>
    %cst_38 = arith.constant 5.000000e-01 : f32
    %48 = vector.broadcast %cst_38 : f32 to vector<8x128xf32>
    %49 = arith.mulf %47, %48 : vector<8x128xf32>
    %50 = arith.addf %17, %49 : vector<8x128xf32>
    %cst_39 = arith.constant 1.000000e+00 : f32
    %51 = vector.broadcast %cst_39 : f32 to vector<8x128xf32>
    %52 = arith.cmpf oge, %50, %51 : vector<8x128xf32>
    %53 = arith.extui %52 : vector<8x128xi1> to vector<8x128xi32>
    %54 = arith.sitofp %53 : vector<8x128xi32> to vector<8x128xf32>
    %cst_40 = arith.constant 1.000000e+00 : f32
    %55 = vector.broadcast %cst_40 : f32 to vector<8x128xf32>
    %56 = arith.subf %55, %54 : vector<8x128xf32>
    %57 = arith.mulf %50, %56 : vector<8x128xf32>
    %58 = arith.addf %19, %54 : vector<8x128xf32>
    %59 = vector.broadcast %1 : f32 to vector<128x128xf32>
    %60 = arith.mulf %59, %16 : vector<128x128xf32>
    %61 = arith.addf %15, %60 : vector<128x128xf32>
    %cst_41 = arith.constant dense<0.000000e+00> : vector<8x128xf32>
    %62 = tpu.matmul %54, %61, %cst_41 {dimension_numbers = #tpu.dot_dimension_numbers<[1], [0], [0], [1], [0, 0, 1, 1], [], []>} : vector<8x128xf32>, vector<128x128xf32>, vector<8x128xf32> -> vector<8x128xf32>
    %63 = vector.broadcast %9 : vector<1x128xf32> to vector<8x128xf32>
    %64 = arith.addf %62, %63 : vector<8x128xf32>
    %cst_42 = arith.constant 2.85714293 : f32
    %65 = vector.broadcast %cst_42 : f32 to vector<8x128xf32>
    %66 = arith.mulf %64, %65 : vector<8x128xf32>
    %67 = vector.broadcast %11 : vector<1x128xf32> to vector<8x128xf32>
    %68 = arith.subf %66, %67 : vector<8x128xf32>
    %69 = math.tanh %68 : vector<8x128xf32>
    %70 = vector.broadcast %14 : vector<1x128xf32> to vector<8x128xf32>
    %71 = arith.mulf %54, %70 : vector<8x128xf32>
    %cst_43 = arith.constant dense<0.000000e+00> : vector<128x128xf32>
    %72 = tpu.matmul %71, %69, %cst_43 {dimension_numbers = #tpu.dot_dimension_numbers<[0], [0], [1], [1], [0, 1, 1, 1], [], []>} : vector<8x128xf32>, vector<8x128xf32>, vector<128x128xf32> -> vector<128x128xf32>
    %cst_44 = arith.constant 0.949999988 : f32
    %73 = vector.broadcast %cst_44 : f32 to vector<128x128xf32>
    %74 = arith.mulf %73, %16 : vector<128x128xf32>
    %75 = arith.addf %74, %72 : vector<128x128xf32>
    %cst_45 = arith.constant -4.000000e+00 : f32
    %cst_46 = arith.constant 4.000000e+00 : f32
    %76 = vector.broadcast %cst_45 : f32 to vector<128x128xf32>
    %77 = arith.maximumf %76, %75 : vector<128x128xf32>
    %78 = vector.broadcast %cst_46 : f32 to vector<128x128xf32>
    %79 = arith.minimumf %78, %77 : vector<128x128xf32>
    %80 = arith.subf %64, %18 : vector<8x128xf32>
    %cst_47 = arith.constant 5.000000e-01 : f32
    %81 = vector.broadcast %cst_47 : f32 to vector<8x128xf32>
    %82 = arith.mulf %80, %81 : vector<8x128xf32>
    %83 = arith.addf %18, %82 : vector<8x128xf32>
    %cst_48 = arith.constant 1.000000e+00 : f32
    %84 = vector.broadcast %cst_48 : f32 to vector<8x128xf32>
    %85 = arith.cmpf oge, %83, %84 : vector<8x128xf32>
    %86 = arith.extui %85 : vector<8x128xi1> to vector<8x128xi32>
    %87 = arith.sitofp %86 : vector<8x128xi32> to vector<8x128xf32>
    %cst_49 = arith.constant 1.000000e+00 : f32
    %88 = vector.broadcast %cst_49 : f32 to vector<8x128xf32>
    %89 = arith.subf %88, %87 : vector<8x128xf32>
    %90 = arith.mulf %83, %89 : vector<8x128xf32>
    %91 = arith.addf %20, %87 : vector<8x128xf32>
    %c0_50 = arith.constant 0 : index
    %c0_51 = arith.constant 0 : index
    %92 = vector.load %arg15[%c0_50, %c0_51] : memref<256x128xf32, #tpu.memory_space<vmem>>, vector<256x128xf32>
    %cst_52 = arith.constant dense<0.000000e+00> : vector<8x128xf32>
    %93 = tpu.matmul %2, %92, %cst_52 {dimension_numbers = #tpu.dot_dimension_numbers<[1], [0], [0], [1], [0, 0, 1, 1], [], []>} : vector<8x256xf32>, vector<256x128xf32>, vector<8x128xf32> -> vector<8x128xf32>
    %cst_53 = arith.constant 0.975309908 : f32
    %94 = vector.broadcast %cst_53 : f32 to vector<8x128xf32>
    %95 = arith.mulf %94, %4 : vector<8x128xf32>
    %96 = vector.broadcast %8 : vector<1x128xf32> to vector<8x128xf32>
    %97 = arith.addf %95, %96 : vector<8x128xf32>
    %cst_54 = arith.constant 0.975309908 : f32
    %98 = arith.mulf %0, %cst_54 : f32
    %99 = vector.broadcast %98 : f32 to vector<8x128xf32>
    %100 = arith.mulf %99, %93 : vector<8x128xf32>
    %101 = arith.addf %97, %100 : vector<8x128xf32>
    %cst_55 = arith.constant 2.85714293 : f32
    %102 = vector.broadcast %cst_55 : f32 to vector<8x128xf32>
    %103 = arith.mulf %101, %102 : vector<8x128xf32>
    %104 = vector.broadcast %10 : vector<1x128xf32> to vector<8x128xf32>
    %105 = arith.subf %103, %104 : vector<8x128xf32>
    %106 = math.tanh %105 : vector<8x128xf32>
    %cst_56 = arith.constant 0.121913739 : f32
    %107 = vector.broadcast %cst_56 : f32 to vector<8x256xf32>
    %108 = arith.mulf %7, %107 : vector<8x256xf32>
    %cst_57 = arith.constant dense<0.000000e+00> : vector<256x128xf32>
    %109 = tpu.matmul %108, %106, %cst_57 {dimension_numbers = #tpu.dot_dimension_numbers<[0], [0], [1], [1], [0, 1, 1, 1], [], []>} : vector<8x256xf32>, vector<8x128xf32>, vector<256x128xf32> -> vector<256x128xf32>
    %cst_58 = arith.constant 0.949999988 : f32
    %110 = vector.broadcast %cst_58 : f32 to vector<256x128xf32>
    %111 = arith.mulf %110, %92 : vector<256x128xf32>
    %112 = arith.addf %111, %109 : vector<256x128xf32>
    %cst_59 = arith.constant -4.000000e+00 : f32
    %cst_60 = arith.constant 4.000000e+00 : f32
    %113 = vector.broadcast %cst_59 : f32 to vector<256x128xf32>
    %114 = arith.maximumf %113, %112 : vector<256x128xf32>
    %115 = vector.broadcast %cst_60 : f32 to vector<256x128xf32>
    %116 = arith.minimumf %115, %114 : vector<256x128xf32>
    %c0_61 = arith.constant 0 : index
    %c0_62 = arith.constant 0 : index
    %117 = vector.load %arg15[%c0_61, %c0_62] : memref<256x128xf32, #tpu.memory_space<vmem>>, vector<256x128xf32>
    tpu.vector_store %arg15[%c0_61, %c0_62], %116 {strides = array<i32>} : memref<256x128xf32, #tpu.memory_space<vmem>>, vector<256x128xf32>,
    %118 = arith.subf %101, %57 : vector<8x128xf32>
    %cst_63 = arith.constant 5.000000e-01 : f32
    %119 = vector.broadcast %cst_63 : f32 to vector<8x128xf32>
    %120 = arith.mulf %118, %119 : vector<8x128xf32>
    %121 = arith.addf %57, %120 : vector<8x128xf32>
    %cst_64 = arith.constant 1.000000e+00 : f32
    %122 = vector.broadcast %cst_64 : f32 to vector<8x128xf32>
    %123 = arith.cmpf oge, %121, %122 : vector<8x128xf32>
    %124 = arith.extui %123 : vector<8x128xi1> to vector<8x128xi32>
    %125 = arith.sitofp %124 : vector<8x128xi32> to vector<8x128xf32>
    %cst_65 = arith.constant 1.000000e+00 : f32
    %126 = vector.broadcast %cst_65 : f32 to vector<8x128xf32>
    %127 = arith.subf %126, %125 : vector<8x128xf32>
    %128 = arith.mulf %121, %127 : vector<8x128xf32>
    %129 = arith.addf %58, %125 : vector<8x128xf32>
    %130 = vector.broadcast %1 : f32 to vector<128x128xf32>
    %131 = arith.mulf %130, %79 : vector<128x128xf32>
    %132 = arith.addf %15, %131 : vector<128x128xf32>
    %cst_66 = arith.constant dense<0.000000e+00> : vector<8x128xf32>
    %133 = tpu.matmul %125, %132, %cst_66 {dimension_numbers = #tpu.dot_dimension_numbers<[1], [0], [0], [1], [0, 0, 1, 1], [], []>} : vector<8x128xf32>, vector<128x128xf32>, vector<8x128xf32> -> vector<8x128xf32>
    %134 = vector.broadcast %9 : vector<1x128xf32> to vector<8x128xf32>
    %135 = arith.addf %133, %134 : vector<8x128xf32>
    %cst_67 = arith.constant 2.85714293 : f32
    %136 = vector.broadcast %cst_67 : f32 to vector<8x128xf32>
    %137 = arith.mulf %135, %136 : vector<8x128xf32>
    %138 = vector.broadcast %11 : vector<1x128xf32> to vector<8x128xf32>
    %139 = arith.subf %137, %138 : vector<8x128xf32>
    %140 = math.tanh %139 : vector<8x128xf32>
    %141 = vector.broadcast %14 : vector<1x128xf32> to vector<8x128xf32>
    %142 = arith.mulf %125, %141 : vector<8x128xf32>
    %cst_68 = arith.constant dense<0.000000e+00> : vector<128x128xf32>
    %143 = tpu.matmul %142, %140, %cst_68 {dimension_numbers = #tpu.dot_dimension_numbers<[0], [0], [1], [1], [0, 1, 1, 1], [], []>} : vector<8x128xf32>, vector<8x128xf32>, vector<128x128xf32> -> vector<128x128xf32>
    %cst_69 = arith.constant 0.949999988 : f32
    %144 = vector.broadcast %cst_69 : f32 to vector<128x128xf32>
    %145 = arith.mulf %144, %79 : vector<128x128xf32>
    %146 = arith.addf %145, %143 : vector<128x128xf32>
    %cst_70 = arith.constant -4.000000e+00 : f32
    %cst_71 = arith.constant 4.000000e+00 : f32
    %147 = vector.broadcast %cst_70 : f32 to vector<128x128xf32>
    %148 = arith.maximumf %147, %146 : vector<128x128xf32>
    %149 = vector.broadcast %cst_71 : f32 to vector<128x128xf32>
    %150 = arith.minimumf %149, %148 : vector<128x128xf32>
    %151 = arith.subf %135, %90 : vector<8x128xf32>
    %cst_72 = arith.constant 5.000000e-01 : f32
    %152 = vector.broadcast %cst_72 : f32 to vector<8x128xf32>
    %153 = arith.mulf %151, %152 : vector<8x128xf32>
    %154 = arith.addf %90, %153 : vector<8x128xf32>
    %cst_73 = arith.constant 1.000000e+00 : f32
    %155 = vector.broadcast %cst_73 : f32 to vector<8x128xf32>
    %156 = arith.cmpf oge, %154, %155 : vector<8x128xf32>
    %157 = arith.extui %156 : vector<8x128xi1> to vector<8x128xi32>
    %158 = arith.sitofp %157 : vector<8x128xi32> to vector<8x128xf32>
    %cst_74 = arith.constant 1.000000e+00 : f32
    %159 = vector.broadcast %cst_74 : f32 to vector<8x128xf32>
    %160 = arith.subf %159, %158 : vector<8x128xf32>
    %161 = arith.mulf %154, %160 : vector<8x128xf32>
    %162 = arith.addf %91, %158 : vector<8x128xf32>
    %c0_75 = arith.constant 0 : index
    %c0_76 = arith.constant 0 : index
    %163 = vector.load %arg15[%c0_75, %c0_76] : memref<256x128xf32, #tpu.memory_space<vmem>>, vector<256x128xf32>
    %cst_77 = arith.constant dense<0.000000e+00> : vector<8x128xf32>
    %164 = tpu.matmul %2, %163, %cst_77 {dimension_numbers = #tpu.dot_dimension_numbers<[1], [0], [0], [1], [0, 0, 1, 1], [], []>} : vector<8x256xf32>, vector<256x128xf32>, vector<8x128xf32> -> vector<8x128xf32>
    %cst_78 = arith.constant 0.951229393 : f32
    %165 = vector.broadcast %cst_78 : f32 to vector<8x128xf32>
    %166 = arith.mulf %165, %4 : vector<8x128xf32>
    %167 = vector.broadcast %8 : vector<1x128xf32> to vector<8x128xf32>
    %168 = arith.addf %166, %167 : vector<8x128xf32>
    %cst_79 = arith.constant 0.951229393 : f32
    %169 = arith.mulf %0, %cst_79 : f32
    %170 = vector.broadcast %169 : f32 to vector<8x128xf32>
    %171 = arith.mulf %170, %164 : vector<8x128xf32>
    %172 = arith.addf %168, %171 : vector<8x128xf32>
    %cst_80 = arith.constant 2.85714293 : f32
    %173 = vector.broadcast %cst_80 : f32 to vector<8x128xf32>
    %174 = arith.mulf %172, %173 : vector<8x128xf32>
    %175 = vector.broadcast %10 : vector<1x128xf32> to vector<8x128xf32>
    %176 = arith.subf %174, %175 : vector<8x128xf32>
    %177 = math.tanh %176 : vector<8x128xf32>
    %cst_81 = arith.constant 0.118903674 : f32
    %178 = vector.broadcast %cst_81 : f32 to vector<8x256xf32>
    %179 = arith.mulf %7, %178 : vector<8x256xf32>
    %cst_82 = arith.constant dense<0.000000e+00> : vector<256x128xf32>
    %180 = tpu.matmul %179, %177, %cst_82 {dimension_numbers = #tpu.dot_dimension_numbers<[0], [0], [1], [1], [0, 1, 1, 1], [], []>} : vector<8x256xf32>, vector<8x128xf32>, vector<256x128xf32> -> vector<256x128xf32>
    %cst_83 = arith.constant 0.949999988 : f32
    %181 = vector.broadcast %cst_83 : f32 to vector<256x128xf32>
    %182 = arith.mulf %181, %163 : vector<256x128xf32>
    %183 = arith.addf %182, %180 : vector<256x128xf32>
    %cst_84 = arith.constant -4.000000e+00 : f32
    %cst_85 = arith.constant 4.000000e+00 : f32
    %184 = vector.broadcast %cst_84 : f32 to vector<256x128xf32>
    %185 = arith.maximumf %184, %183 : vector<256x128xf32>
    %186 = vector.broadcast %cst_85 : f32 to vector<256x128xf32>
    %187 = arith.minimumf %186, %185 : vector<256x128xf32>
    %c0_86 = arith.constant 0 : index
    %c0_87 = arith.constant 0 : index
    %188 = vector.load %arg15[%c0_86, %c0_87] : memref<256x128xf32, #tpu.memory_space<vmem>>, vector<256x128xf32>
    tpu.vector_store %arg15[%c0_86, %c0_87], %187 {strides = array<i32>} : memref<256x128xf32, #tpu.memory_space<vmem>>, vector<256x128xf32>,
    %189 = arith.subf %172, %128 : vector<8x128xf32>
    %cst_88 = arith.constant 5.000000e-01 : f32
    %190 = vector.broadcast %cst_88 : f32 to vector<8x128xf32>
    %191 = arith.mulf %189, %190 : vector<8x128xf32>
    %192 = arith.addf %128, %191 : vector<8x128xf32>
    %cst_89 = arith.constant 1.000000e+00 : f32
    %193 = vector.broadcast %cst_89 : f32 to vector<8x128xf32>
    %194 = arith.cmpf oge, %192, %193 : vector<8x128xf32>
    %195 = arith.extui %194 : vector<8x128xi1> to vector<8x128xi32>
    %196 = arith.sitofp %195 : vector<8x128xi32> to vector<8x128xf32>
    %cst_90 = arith.constant 1.000000e+00 : f32
    %197 = vector.broadcast %cst_90 : f32 to vector<8x128xf32>
    %198 = arith.subf %197, %196 : vector<8x128xf32>
    %199 = arith.mulf %192, %198 : vector<8x128xf32>
    %200 = arith.addf %129, %196 : vector<8x128xf32>
    %201 = vector.broadcast %1 : f32 to vector<128x128xf32>
    %202 = arith.mulf %201, %150 : vector<128x128xf32>
    %203 = arith.addf %15, %202 : vector<128x128xf32>
    %cst_91 = arith.constant dense<0.000000e+00> : vector<8x128xf32>
    %204 = tpu.matmul %196, %203, %cst_91 {dimension_numbers = #tpu.dot_dimension_numbers<[1], [0], [0], [1], [0, 0, 1, 1], [], []>} : vector<8x128xf32>, vector<128x128xf32>, vector<8x128xf32> -> vector<8x128xf32>
    %205 = vector.broadcast %9 : vector<1x128xf32> to vector<8x128xf32>
    %206 = arith.addf %204, %205 : vector<8x128xf32>
    %cst_92 = arith.constant 2.85714293 : f32
    %207 = vector.broadcast %cst_92 : f32 to vector<8x128xf32>
    %208 = arith.mulf %206, %207 : vector<8x128xf32>
    %209 = vector.broadcast %11 : vector<1x128xf32> to vector<8x128xf32>
    %210 = arith.subf %208, %209 : vector<8x128xf32>
    %211 = math.tanh %210 : vector<8x128xf32>
    %212 = vector.broadcast %14 : vector<1x128xf32> to vector<8x128xf32>
    %213 = arith.mulf %196, %212 : vector<8x128xf32>
    %cst_93 = arith.constant dense<0.000000e+00> : vector<128x128xf32>
    %214 = tpu.matmul %213, %211, %cst_93 {dimension_numbers = #tpu.dot_dimension_numbers<[0], [0], [1], [1], [0, 1, 1, 1], [], []>} : vector<8x128xf32>, vector<8x128xf32>, vector<128x128xf32> -> vector<128x128xf32>
    %cst_94 = arith.constant 0.949999988 : f32
    %215 = vector.broadcast %cst_94 : f32 to vector<128x128xf32>
    %216 = arith.mulf %215, %150 : vector<128x128xf32>
    %217 = arith.addf %216, %214 : vector<128x128xf32>
    %cst_95 = arith.constant -4.000000e+00 : f32
    %cst_96 = arith.constant 4.000000e+00 : f32
    %218 = vector.broadcast %cst_95 : f32 to vector<128x128xf32>
    %219 = arith.maximumf %218, %217 : vector<128x128xf32>
    %220 = vector.broadcast %cst_96 : f32 to vector<128x128xf32>
    %221 = arith.minimumf %220, %219 : vector<128x128xf32>
    %222 = arith.subf %206, %161 : vector<8x128xf32>
    %cst_97 = arith.constant 5.000000e-01 : f32
    %223 = vector.broadcast %cst_97 : f32 to vector<8x128xf32>
    %224 = arith.mulf %222, %223 : vector<8x128xf32>
    %225 = arith.addf %161, %224 : vector<8x128xf32>
    %cst_98 = arith.constant 1.000000e+00 : f32
    %226 = vector.broadcast %cst_98 : f32 to vector<8x128xf32>
    %227 = arith.cmpf oge, %225, %226 : vector<8x128xf32>
    %228 = arith.extui %227 : vector<8x128xi1> to vector<8x128xi32>
    %229 = arith.sitofp %228 : vector<8x128xi32> to vector<8x128xf32>
    %cst_99 = arith.constant 1.000000e+00 : f32
    %230 = vector.broadcast %cst_99 : f32 to vector<8x128xf32>
    %231 = arith.subf %230, %229 : vector<8x128xf32>
    %232 = arith.mulf %225, %231 : vector<8x128xf32>
    %233 = arith.addf %162, %229 : vector<8x128xf32>
    %c0_100 = arith.constant 0 : index
    %c0_101 = arith.constant 0 : index
    %234 = vector.load %arg15[%c0_100, %c0_101] : memref<256x128xf32, #tpu.memory_space<vmem>>, vector<256x128xf32>
    %cst_102 = arith.constant dense<0.000000e+00> : vector<8x128xf32>
    %235 = tpu.matmul %2, %234, %cst_102 {dimension_numbers = #tpu.dot_dimension_numbers<[1], [0], [0], [1], [0, 0, 1, 1], [], []>} : vector<8x256xf32>, vector<256x128xf32>, vector<8x128xf32> -> vector<8x128xf32>
    %cst_103 = arith.constant 0.927743494 : f32
    %236 = vector.broadcast %cst_103 : f32 to vector<8x128xf32>
    %237 = arith.mulf %236, %4 : vector<8x128xf32>
    %238 = vector.broadcast %8 : vector<1x128xf32> to vector<8x128xf32>
    %239 = arith.addf %237, %238 : vector<8x128xf32>
    %cst_104 = arith.constant 0.927743494 : f32
    %240 = arith.mulf %0, %cst_104 : f32
    %241 = vector.broadcast %240 : f32 to vector<8x128xf32>
    %242 = arith.mulf %241, %235 : vector<8x128xf32>
    %243 = arith.addf %239, %242 : vector<8x128xf32>
    %cst_105 = arith.constant 2.85714293 : f32
    %244 = vector.broadcast %cst_105 : f32 to vector<8x128xf32>
    %245 = arith.mulf %243, %244 : vector<8x128xf32>
    %246 = vector.broadcast %10 : vector<1x128xf32> to vector<8x128xf32>
    %247 = arith.subf %245, %246 : vector<8x128xf32>
    %248 = math.tanh %247 : vector<8x128xf32>
    %cst_106 = arith.constant 0.115967937 : f32
    %249 = vector.broadcast %cst_106 : f32 to vector<8x256xf32>
    %250 = arith.mulf %7, %249 : vector<8x256xf32>
    %cst_107 = arith.constant dense<0.000000e+00> : vector<256x128xf32>
    %251 = tpu.matmul %250, %248, %cst_107 {dimension_numbers = #tpu.dot_dimension_numbers<[0], [0], [1], [1], [0, 1, 1, 1], [], []>} : vector<8x256xf32>, vector<8x128xf32>, vector<256x128xf32> -> vector<256x128xf32>
    %cst_108 = arith.constant 0.949999988 : f32
    %252 = vector.broadcast %cst_108 : f32 to vector<256x128xf32>
    %253 = arith.mulf %252, %234 : vector<256x128xf32>
    %254 = arith.addf %253, %251 : vector<256x128xf32>
    %cst_109 = arith.constant -4.000000e+00 : f32
    %cst_110 = arith.constant 4.000000e+00 : f32
    %255 = vector.broadcast %cst_109 : f32 to vector<256x128xf32>
    %256 = arith.maximumf %255, %254 : vector<256x128xf32>
    %257 = vector.broadcast %cst_110 : f32 to vector<256x128xf32>
    %258 = arith.minimumf %257, %256 : vector<256x128xf32>
    %c0_111 = arith.constant 0 : index
    %c0_112 = arith.constant 0 : index
    %259 = vector.load %arg15[%c0_111, %c0_112] : memref<256x128xf32, #tpu.memory_space<vmem>>, vector<256x128xf32>
    tpu.vector_store %arg15[%c0_111, %c0_112], %258 {strides = array<i32>} : memref<256x128xf32, #tpu.memory_space<vmem>>, vector<256x128xf32>,
    %260 = arith.subf %243, %199 : vector<8x128xf32>
    %cst_113 = arith.constant 5.000000e-01 : f32
    %261 = vector.broadcast %cst_113 : f32 to vector<8x128xf32>
    %262 = arith.mulf %260, %261 : vector<8x128xf32>
    %263 = arith.addf %199, %262 : vector<8x128xf32>
    %cst_114 = arith.constant 1.000000e+00 : f32
    %264 = vector.broadcast %cst_114 : f32 to vector<8x128xf32>
    %265 = arith.cmpf oge, %263, %264 : vector<8x128xf32>
    %266 = arith.extui %265 : vector<8x128xi1> to vector<8x128xi32>
    %267 = arith.sitofp %266 : vector<8x128xi32> to vector<8x128xf32>
    %cst_115 = arith.constant 1.000000e+00 : f32
    %268 = vector.broadcast %cst_115 : f32 to vector<8x128xf32>
    %269 = arith.subf %268, %267 : vector<8x128xf32>
    %270 = arith.mulf %263, %269 : vector<8x128xf32>
    %271 = arith.addf %200, %267 : vector<8x128xf32>
    %272 = vector.broadcast %1 : f32 to vector<128x128xf32>
    %273 = arith.mulf %272, %221 : vector<128x128xf32>
    %274 = arith.addf %15, %273 : vector<128x128xf32>
    %cst_116 = arith.constant dense<0.000000e+00> : vector<8x128xf32>
    %275 = tpu.matmul %267, %274, %cst_116 {dimension_numbers = #tpu.dot_dimension_numbers<[1], [0], [0], [1], [0, 0, 1, 1], [], []>} : vector<8x128xf32>, vector<128x128xf32>, vector<8x128xf32> -> vector<8x128xf32>
    %276 = vector.broadcast %9 : vector<1x128xf32> to vector<8x128xf32>
    %277 = arith.addf %275, %276 : vector<8x128xf32>
    %cst_117 = arith.constant 2.85714293 : f32
    %278 = vector.broadcast %cst_117 : f32 to vector<8x128xf32>
    %279 = arith.mulf %277, %278 : vector<8x128xf32>
    %280 = vector.broadcast %11 : vector<1x128xf32> to vector<8x128xf32>
    %281 = arith.subf %279, %280 : vector<8x128xf32>
    %282 = math.tanh %281 : vector<8x128xf32>
    %283 = vector.broadcast %14 : vector<1x128xf32> to vector<8x128xf32>
    %284 = arith.mulf %267, %283 : vector<8x128xf32>
    %cst_118 = arith.constant dense<0.000000e+00> : vector<128x128xf32>
    %285 = tpu.matmul %284, %282, %cst_118 {dimension_numbers = #tpu.dot_dimension_numbers<[0], [0], [1], [1], [0, 1, 1, 1], [], []>} : vector<8x128xf32>, vector<8x128xf32>, vector<128x128xf32> -> vector<128x128xf32>
    %cst_119 = arith.constant 0.949999988 : f32
    %286 = vector.broadcast %cst_119 : f32 to vector<128x128xf32>
    %287 = arith.mulf %286, %221 : vector<128x128xf32>
    %288 = arith.addf %287, %285 : vector<128x128xf32>
    %cst_120 = arith.constant -4.000000e+00 : f32
    %cst_121 = arith.constant 4.000000e+00 : f32
    %289 = vector.broadcast %cst_120 : f32 to vector<128x128xf32>
    %290 = arith.maximumf %289, %288 : vector<128x128xf32>
    %291 = vector.broadcast %cst_121 : f32 to vector<128x128xf32>
    %292 = arith.minimumf %291, %290 : vector<128x128xf32>
    %293 = arith.subf %277, %232 : vector<8x128xf32>
    %cst_122 = arith.constant 5.000000e-01 : f32
    %294 = vector.broadcast %cst_122 : f32 to vector<8x128xf32>
    %295 = arith.mulf %293, %294 : vector<8x128xf32>
    %296 = arith.addf %232, %295 : vector<8x128xf32>
    %cst_123 = arith.constant 1.000000e+00 : f32
    %297 = vector.broadcast %cst_123 : f32 to vector<8x128xf32>
    %298 = arith.cmpf oge, %296, %297 : vector<8x128xf32>
    %299 = arith.extui %298 : vector<8x128xi1> to vector<8x128xi32>
    %300 = arith.sitofp %299 : vector<8x128xi32> to vector<8x128xf32>
    %cst_124 = arith.constant 1.000000e+00 : f32
    %301 = vector.broadcast %cst_124 : f32 to vector<8x128xf32>
    %302 = arith.subf %301, %300 : vector<8x128xf32>
    %303 = arith.mulf %296, %302 : vector<8x128xf32>
    %304 = arith.addf %233, %300 : vector<8x128xf32>
    %c0_125 = arith.constant 0 : index
    %c0_126 = arith.constant 0 : index
    %305 = vector.load %arg15[%c0_125, %c0_126] : memref<256x128xf32, #tpu.memory_space<vmem>>, vector<256x128xf32>
    %cst_127 = arith.constant dense<0.000000e+00> : vector<8x128xf32>
    %306 = tpu.matmul %2, %305, %cst_127 {dimension_numbers = #tpu.dot_dimension_numbers<[1], [0], [0], [1], [0, 0, 1, 1], [], []>} : vector<8x256xf32>, vector<256x128xf32>, vector<8x128xf32> -> vector<8x128xf32>
    %cst_128 = arith.constant 0.904837429 : f32
    %307 = vector.broadcast %cst_128 : f32 to vector<8x128xf32>
    %308 = arith.mulf %307, %4 : vector<8x128xf32>
    %309 = vector.broadcast %8 : vector<1x128xf32> to vector<8x128xf32>
    %310 = arith.addf %308, %309 : vector<8x128xf32>
    %cst_129 = arith.constant 0.904837429 : f32
    %311 = arith.mulf %0, %cst_129 : f32
    %312 = vector.broadcast %311 : f32 to vector<8x128xf32>
    %313 = arith.mulf %312, %306 : vector<8x128xf32>
    %314 = arith.addf %310, %313 : vector<8x128xf32>
    %cst_130 = arith.constant 2.85714293 : f32
    %315 = vector.broadcast %cst_130 : f32 to vector<8x128xf32>
    %316 = arith.mulf %314, %315 : vector<8x128xf32>
    %317 = vector.broadcast %10 : vector<1x128xf32> to vector<8x128xf32>
    %318 = arith.subf %316, %317 : vector<8x128xf32>
    %319 = math.tanh %318 : vector<8x128xf32>
    %cst_131 = arith.constant 0.113104679 : f32
    %320 = vector.broadcast %cst_131 : f32 to vector<8x256xf32>
    %321 = arith.mulf %7, %320 : vector<8x256xf32>
    %cst_132 = arith.constant dense<0.000000e+00> : vector<256x128xf32>
    %322 = tpu.matmul %321, %319, %cst_132 {dimension_numbers = #tpu.dot_dimension_numbers<[0], [0], [1], [1], [0, 1, 1, 1], [], []>} : vector<8x256xf32>, vector<8x128xf32>, vector<256x128xf32> -> vector<256x128xf32>
    %cst_133 = arith.constant 0.949999988 : f32
    %323 = vector.broadcast %cst_133 : f32 to vector<256x128xf32>
    %324 = arith.mulf %323, %305 : vector<256x128xf32>
    %325 = arith.addf %324, %322 : vector<256x128xf32>
    %cst_134 = arith.constant -4.000000e+00 : f32
    %cst_135 = arith.constant 4.000000e+00 : f32
    %326 = vector.broadcast %cst_134 : f32 to vector<256x128xf32>
    %327 = arith.maximumf %326, %325 : vector<256x128xf32>
    %328 = vector.broadcast %cst_135 : f32 to vector<256x128xf32>
    %329 = arith.minimumf %328, %327 : vector<256x128xf32>
    %c0_136 = arith.constant 0 : index
    %c0_137 = arith.constant 0 : index
    %330 = vector.load %arg15[%c0_136, %c0_137] : memref<256x128xf32, #tpu.memory_space<vmem>>, vector<256x128xf32>
    tpu.vector_store %arg15[%c0_136, %c0_137], %329 {strides = array<i32>} : memref<256x128xf32, #tpu.memory_space<vmem>>, vector<256x128xf32>,
    %331 = arith.subf %314, %270 : vector<8x128xf32>
    %cst_138 = arith.constant 5.000000e-01 : f32
    %332 = vector.broadcast %cst_138 : f32 to vector<8x128xf32>
    %333 = arith.mulf %331, %332 : vector<8x128xf32>
    %334 = arith.addf %270, %333 : vector<8x128xf32>
    %cst_139 = arith.constant 1.000000e+00 : f32
    %335 = vector.broadcast %cst_139 : f32 to vector<8x128xf32>
    %336 = arith.cmpf oge, %334, %335 : vector<8x128xf32>
    %337 = arith.extui %336 : vector<8x128xi1> to vector<8x128xi32>
    %338 = arith.sitofp %337 : vector<8x128xi32> to vector<8x128xf32>
    %cst_140 = arith.constant 1.000000e+00 : f32
    %339 = vector.broadcast %cst_140 : f32 to vector<8x128xf32>
    %340 = arith.subf %339, %338 : vector<8x128xf32>
    %341 = arith.mulf %334, %340 : vector<8x128xf32>
    %342 = arith.addf %271, %338 : vector<8x128xf32>
    %343 = vector.broadcast %1 : f32 to vector<128x128xf32>
    %344 = arith.mulf %343, %292 : vector<128x128xf32>
    %345 = arith.addf %15, %344 : vector<128x128xf32>
    %cst_141 = arith.constant dense<0.000000e+00> : vector<8x128xf32>
    %346 = tpu.matmul %338, %345, %cst_141 {dimension_numbers = #tpu.dot_dimension_numbers<[1], [0], [0], [1], [0, 0, 1, 1], [], []>} : vector<8x128xf32>, vector<128x128xf32>, vector<8x128xf32> -> vector<8x128xf32>
    %347 = vector.broadcast %9 : vector<1x128xf32> to vector<8x128xf32>
    %348 = arith.addf %346, %347 : vector<8x128xf32>
    %cst_142 = arith.constant 2.85714293 : f32
    %349 = vector.broadcast %cst_142 : f32 to vector<8x128xf32>
    %350 = arith.mulf %348, %349 : vector<8x128xf32>
    %351 = vector.broadcast %11 : vector<1x128xf32> to vector<8x128xf32>
    %352 = arith.subf %350, %351 : vector<8x128xf32>
    %353 = math.tanh %352 : vector<8x128xf32>
    %354 = vector.broadcast %14 : vector<1x128xf32> to vector<8x128xf32>
    %355 = arith.mulf %338, %354 : vector<8x128xf32>
    %cst_143 = arith.constant dense<0.000000e+00> : vector<128x128xf32>
    %356 = tpu.matmul %355, %353, %cst_143 {dimension_numbers = #tpu.dot_dimension_numbers<[0], [0], [1], [1], [0, 1, 1, 1], [], []>} : vector<8x128xf32>, vector<8x128xf32>, vector<128x128xf32> -> vector<128x128xf32>
    %cst_144 = arith.constant 0.949999988 : f32
    %357 = vector.broadcast %cst_144 : f32 to vector<128x128xf32>
    %358 = arith.mulf %357, %292 : vector<128x128xf32>
    %359 = arith.addf %358, %356 : vector<128x128xf32>
    %cst_145 = arith.constant -4.000000e+00 : f32
    %cst_146 = arith.constant 4.000000e+00 : f32
    %360 = vector.broadcast %cst_145 : f32 to vector<128x128xf32>
    %361 = arith.maximumf %360, %359 : vector<128x128xf32>
    %362 = vector.broadcast %cst_146 : f32 to vector<128x128xf32>
    %363 = arith.minimumf %362, %361 : vector<128x128xf32>
    %364 = arith.subf %348, %303 : vector<8x128xf32>
    %cst_147 = arith.constant 5.000000e-01 : f32
    %365 = vector.broadcast %cst_147 : f32 to vector<8x128xf32>
    %366 = arith.mulf %364, %365 : vector<8x128xf32>
    %367 = arith.addf %303, %366 : vector<8x128xf32>
    %cst_148 = arith.constant 1.000000e+00 : f32
    %368 = vector.broadcast %cst_148 : f32 to vector<8x128xf32>
    %369 = arith.cmpf oge, %367, %368 : vector<8x128xf32>
    %370 = arith.extui %369 : vector<8x128xi1> to vector<8x128xi32>
    %371 = arith.sitofp %370 : vector<8x128xi32> to vector<8x128xf32>
    %cst_149 = arith.constant 1.000000e+00 : f32
    %372 = vector.broadcast %cst_149 : f32 to vector<8x128xf32>
    %373 = arith.subf %372, %371 : vector<8x128xf32>
    %374 = arith.mulf %367, %373 : vector<8x128xf32>
    %375 = arith.addf %304, %371 : vector<8x128xf32>
    %c0_150 = arith.constant 0 : index
    %c0_151 = arith.constant 0 : index
    %376 = vector.load %arg15[%c0_150, %c0_151] : memref<256x128xf32, #tpu.memory_space<vmem>>, vector<256x128xf32>
    %cst_152 = arith.constant dense<0.000000e+00> : vector<8x128xf32>
    %377 = tpu.matmul %2, %376, %cst_152 {dimension_numbers = #tpu.dot_dimension_numbers<[1], [0], [0], [1], [0, 0, 1, 1], [], []>} : vector<8x256xf32>, vector<256x128xf32>, vector<8x128xf32> -> vector<8x128xf32>
    %cst_153 = arith.constant 0.882496893 : f32
    %378 = vector.broadcast %cst_153 : f32 to vector<8x128xf32>
    %379 = arith.mulf %378, %4 : vector<8x128xf32>
    %380 = vector.broadcast %8 : vector<1x128xf32> to vector<8x128xf32>
    %381 = arith.addf %379, %380 : vector<8x128xf32>
    %cst_154 = arith.constant 0.882496893 : f32
    %382 = arith.mulf %0, %cst_154 : f32
    %383 = vector.broadcast %382 : f32 to vector<8x128xf32>
    %384 = arith.mulf %383, %377 : vector<8x128xf32>
    %385 = arith.addf %381, %384 : vector<8x128xf32>
    %cst_155 = arith.constant 2.85714293 : f32
    %386 = vector.broadcast %cst_155 : f32 to vector<8x128xf32>
    %387 = arith.mulf %385, %386 : vector<8x128xf32>
    %388 = vector.broadcast %10 : vector<1x128xf32> to vector<8x128xf32>
    %389 = arith.subf %387, %388 : vector<8x128xf32>
    %390 = math.tanh %389 : vector<8x128xf32>
    %cst_156 = arith.constant 0.110312112 : f32
    %391 = vector.broadcast %cst_156 : f32 to vector<8x256xf32>
    %392 = arith.mulf %7, %391 : vector<8x256xf32>
    %cst_157 = arith.constant dense<0.000000e+00> : vector<256x128xf32>
    %393 = tpu.matmul %392, %390, %cst_157 {dimension_numbers = #tpu.dot_dimension_numbers<[0], [0], [1], [1], [0, 1, 1, 1], [], []>} : vector<8x256xf32>, vector<8x128xf32>, vector<256x128xf32> -> vector<256x128xf32>
    %cst_158 = arith.constant 0.949999988 : f32
    %394 = vector.broadcast %cst_158 : f32 to vector<256x128xf32>
    %395 = arith.mulf %394, %376 : vector<256x128xf32>
    %396 = arith.addf %395, %393 : vector<256x128xf32>
    %cst_159 = arith.constant -4.000000e+00 : f32
    %cst_160 = arith.constant 4.000000e+00 : f32
    %397 = vector.broadcast %cst_159 : f32 to vector<256x128xf32>
    %398 = arith.maximumf %397, %396 : vector<256x128xf32>
    %399 = vector.broadcast %cst_160 : f32 to vector<256x128xf32>
    %400 = arith.minimumf %399, %398 : vector<256x128xf32>
    %c0_161 = arith.constant 0 : index
    %c0_162 = arith.constant 0 : index
    %401 = vector.load %arg15[%c0_161, %c0_162] : memref<256x128xf32, #tpu.memory_space<vmem>>, vector<256x128xf32>
    tpu.vector_store %arg15[%c0_161, %c0_162], %400 {strides = array<i32>} : memref<256x128xf32, #tpu.memory_space<vmem>>, vector<256x128xf32>,
    %402 = arith.subf %385, %341 : vector<8x128xf32>
    %cst_163 = arith.constant 5.000000e-01 : f32
    %403 = vector.broadcast %cst_163 : f32 to vector<8x128xf32>
    %404 = arith.mulf %402, %403 : vector<8x128xf32>
    %405 = arith.addf %341, %404 : vector<8x128xf32>
    %cst_164 = arith.constant 1.000000e+00 : f32
    %406 = vector.broadcast %cst_164 : f32 to vector<8x128xf32>
    %407 = arith.cmpf oge, %405, %406 : vector<8x128xf32>
    %408 = arith.extui %407 : vector<8x128xi1> to vector<8x128xi32>
    %409 = arith.sitofp %408 : vector<8x128xi32> to vector<8x128xf32>
    %cst_165 = arith.constant 1.000000e+00 : f32
    %410 = vector.broadcast %cst_165 : f32 to vector<8x128xf32>
    %411 = arith.subf %410, %409 : vector<8x128xf32>
    %412 = arith.mulf %405, %411 : vector<8x128xf32>
    %413 = arith.addf %342, %409 : vector<8x128xf32>
    %414 = vector.broadcast %1 : f32 to vector<128x128xf32>
    %415 = arith.mulf %414, %363 : vector<128x128xf32>
    %416 = arith.addf %15, %415 : vector<128x128xf32>
    %cst_166 = arith.constant dense<0.000000e+00> : vector<8x128xf32>
    %417 = tpu.matmul %409, %416, %cst_166 {dimension_numbers = #tpu.dot_dimension_numbers<[1], [0], [0], [1], [0, 0, 1, 1], [], []>} : vector<8x128xf32>, vector<128x128xf32>, vector<8x128xf32> -> vector<8x128xf32>
    %418 = vector.broadcast %9 : vector<1x128xf32> to vector<8x128xf32>
    %419 = arith.addf %417, %418 : vector<8x128xf32>
    %cst_167 = arith.constant 2.85714293 : f32
    %420 = vector.broadcast %cst_167 : f32 to vector<8x128xf32>
    %421 = arith.mulf %419, %420 : vector<8x128xf32>
    %422 = vector.broadcast %11 : vector<1x128xf32> to vector<8x128xf32>
    %423 = arith.subf %421, %422 : vector<8x128xf32>
    %424 = math.tanh %423 : vector<8x128xf32>
    %425 = vector.broadcast %14 : vector<1x128xf32> to vector<8x128xf32>
    %426 = arith.mulf %409, %425 : vector<8x128xf32>
    %cst_168 = arith.constant dense<0.000000e+00> : vector<128x128xf32>
    %427 = tpu.matmul %426, %424, %cst_168 {dimension_numbers = #tpu.dot_dimension_numbers<[0], [0], [1], [1], [0, 1, 1, 1], [], []>} : vector<8x128xf32>, vector<8x128xf32>, vector<128x128xf32> -> vector<128x128xf32>
    %cst_169 = arith.constant 0.949999988 : f32
    %428 = vector.broadcast %cst_169 : f32 to vector<128x128xf32>
    %429 = arith.mulf %428, %363 : vector<128x128xf32>
    %430 = arith.addf %429, %427 : vector<128x128xf32>
    %cst_170 = arith.constant -4.000000e+00 : f32
    %cst_171 = arith.constant 4.000000e+00 : f32
    %431 = vector.broadcast %cst_170 : f32 to vector<128x128xf32>
    %432 = arith.maximumf %431, %430 : vector<128x128xf32>
    %433 = vector.broadcast %cst_171 : f32 to vector<128x128xf32>
    %434 = arith.minimumf %433, %432 : vector<128x128xf32>
    %435 = arith.subf %419, %374 : vector<8x128xf32>
    %cst_172 = arith.constant 5.000000e-01 : f32
    %436 = vector.broadcast %cst_172 : f32 to vector<8x128xf32>
    %437 = arith.mulf %435, %436 : vector<8x128xf32>
    %438 = arith.addf %374, %437 : vector<8x128xf32>
    %cst_173 = arith.constant 1.000000e+00 : f32
    %439 = vector.broadcast %cst_173 : f32 to vector<8x128xf32>
    %440 = arith.cmpf oge, %438, %439 : vector<8x128xf32>
    %441 = arith.extui %440 : vector<8x128xi1> to vector<8x128xi32>
    %442 = arith.sitofp %441 : vector<8x128xi32> to vector<8x128xf32>
    %cst_174 = arith.constant 1.000000e+00 : f32
    %443 = vector.broadcast %cst_174 : f32 to vector<8x128xf32>
    %444 = arith.subf %443, %442 : vector<8x128xf32>
    %445 = arith.mulf %438, %444 : vector<8x128xf32>
    %446 = arith.addf %375, %442 : vector<8x128xf32>
    %c0_175 = arith.constant 0 : index
    %c0_176 = arith.constant 0 : index
    %447 = vector.load %arg15[%c0_175, %c0_176] : memref<256x128xf32, #tpu.memory_space<vmem>>, vector<256x128xf32>
    %cst_177 = arith.constant dense<0.000000e+00> : vector<8x128xf32>
    %448 = tpu.matmul %2, %447, %cst_177 {dimension_numbers = #tpu.dot_dimension_numbers<[1], [0], [0], [1], [0, 0, 1, 1], [], []>} : vector<8x256xf32>, vector<256x128xf32>, vector<8x128xf32> -> vector<8x128xf32>
    %cst_178 = arith.constant 0.860707879 : f32
    %449 = vector.broadcast %cst_178 : f32 to vector<8x128xf32>
    %450 = arith.mulf %449, %4 : vector<8x128xf32>
    %451 = vector.broadcast %8 : vector<1x128xf32> to vector<8x128xf32>
    %452 = arith.addf %450, %451 : vector<8x128xf32>
    %cst_179 = arith.constant 0.860707879 : f32
    %453 = arith.mulf %0, %cst_179 : f32
    %454 = vector.broadcast %453 : f32 to vector<8x128xf32>
    %455 = arith.mulf %454, %448 : vector<8x128xf32>
    %456 = arith.addf %452, %455 : vector<8x128xf32>
    %cst_180 = arith.constant 2.85714293 : f32
    %457 = vector.broadcast %cst_180 : f32 to vector<8x128xf32>
    %458 = arith.mulf %456, %457 : vector<8x128xf32>
    %459 = vector.broadcast %10 : vector<1x128xf32> to vector<8x128xf32>
    %460 = arith.subf %458, %459 : vector<8x128xf32>
    %461 = math.tanh %460 : vector<8x128xf32>
    %cst_181 = arith.constant 0.107588485 : f32
    %462 = vector.broadcast %cst_181 : f32 to vector<8x256xf32>
    %463 = arith.mulf %7, %462 : vector<8x256xf32>
    %cst_182 = arith.constant dense<0.000000e+00> : vector<256x128xf32>
    %464 = tpu.matmul %463, %461, %cst_182 {dimension_numbers = #tpu.dot_dimension_numbers<[0], [0], [1], [1], [0, 1, 1, 1], [], []>} : vector<8x256xf32>, vector<8x128xf32>, vector<256x128xf32> -> vector<256x128xf32>
    %cst_183 = arith.constant 0.949999988 : f32
    %465 = vector.broadcast %cst_183 : f32 to vector<256x128xf32>
    %466 = arith.mulf %465, %447 : vector<256x128xf32>
    %467 = arith.addf %466, %464 : vector<256x128xf32>
    %cst_184 = arith.constant -4.000000e+00 : f32
    %cst_185 = arith.constant 4.000000e+00 : f32
    %468 = vector.broadcast %cst_184 : f32 to vector<256x128xf32>
    %469 = arith.maximumf %468, %467 : vector<256x128xf32>
    %470 = vector.broadcast %cst_185 : f32 to vector<256x128xf32>
    %471 = arith.minimumf %470, %469 : vector<256x128xf32>
    %c0_186 = arith.constant 0 : index
    %c0_187 = arith.constant 0 : index
    %472 = vector.load %arg15[%c0_186, %c0_187] : memref<256x128xf32, #tpu.memory_space<vmem>>, vector<256x128xf32>
    tpu.vector_store %arg15[%c0_186, %c0_187], %471 {strides = array<i32>} : memref<256x128xf32, #tpu.memory_space<vmem>>, vector<256x128xf32>,
    %473 = arith.subf %456, %412 : vector<8x128xf32>
    %cst_188 = arith.constant 5.000000e-01 : f32
    %474 = vector.broadcast %cst_188 : f32 to vector<8x128xf32>
    %475 = arith.mulf %473, %474 : vector<8x128xf32>
    %476 = arith.addf %412, %475 : vector<8x128xf32>
    %cst_189 = arith.constant 1.000000e+00 : f32
    %477 = vector.broadcast %cst_189 : f32 to vector<8x128xf32>
    %478 = arith.cmpf oge, %476, %477 : vector<8x128xf32>
    %479 = arith.extui %478 : vector<8x128xi1> to vector<8x128xi32>
    %480 = arith.sitofp %479 : vector<8x128xi32> to vector<8x128xf32>
    %cst_190 = arith.constant 1.000000e+00 : f32
    %481 = vector.broadcast %cst_190 : f32 to vector<8x128xf32>
    %482 = arith.subf %481, %480 : vector<8x128xf32>
    %483 = arith.mulf %476, %482 : vector<8x128xf32>
    %484 = arith.addf %413, %480 : vector<8x128xf32>
    %485 = vector.broadcast %1 : f32 to vector<128x128xf32>
    %486 = arith.mulf %485, %434 : vector<128x128xf32>
    %487 = arith.addf %15, %486 : vector<128x128xf32>
    %cst_191 = arith.constant dense<0.000000e+00> : vector<8x128xf32>
    %488 = tpu.matmul %480, %487, %cst_191 {dimension_numbers = #tpu.dot_dimension_numbers<[1], [0], [0], [1], [0, 0, 1, 1], [], []>} : vector<8x128xf32>, vector<128x128xf32>, vector<8x128xf32> -> vector<8x128xf32>
    %489 = vector.broadcast %9 : vector<1x128xf32> to vector<8x128xf32>
    %490 = arith.addf %488, %489 : vector<8x128xf32>
    %cst_192 = arith.constant 2.85714293 : f32
    %491 = vector.broadcast %cst_192 : f32 to vector<8x128xf32>
    %492 = arith.mulf %490, %491 : vector<8x128xf32>
    %493 = vector.broadcast %11 : vector<1x128xf32> to vector<8x128xf32>
    %494 = arith.subf %492, %493 : vector<8x128xf32>
    %495 = math.tanh %494 : vector<8x128xf32>
    %496 = vector.broadcast %14 : vector<1x128xf32> to vector<8x128xf32>
    %497 = arith.mulf %480, %496 : vector<8x128xf32>
    %cst_193 = arith.constant dense<0.000000e+00> : vector<128x128xf32>
    %498 = tpu.matmul %497, %495, %cst_193 {dimension_numbers = #tpu.dot_dimension_numbers<[0], [0], [1], [1], [0, 1, 1, 1], [], []>} : vector<8x128xf32>, vector<8x128xf32>, vector<128x128xf32> -> vector<128x128xf32>
    %cst_194 = arith.constant 0.949999988 : f32
    %499 = vector.broadcast %cst_194 : f32 to vector<128x128xf32>
    %500 = arith.mulf %499, %434 : vector<128x128xf32>
    %501 = arith.addf %500, %498 : vector<128x128xf32>
    %cst_195 = arith.constant -4.000000e+00 : f32
    %cst_196 = arith.constant 4.000000e+00 : f32
    %502 = vector.broadcast %cst_195 : f32 to vector<128x128xf32>
    %503 = arith.maximumf %502, %501 : vector<128x128xf32>
    %504 = vector.broadcast %cst_196 : f32 to vector<128x128xf32>
    %505 = arith.minimumf %504, %503 : vector<128x128xf32>
    %506 = arith.subf %490, %445 : vector<8x128xf32>
    %cst_197 = arith.constant 5.000000e-01 : f32
    %507 = vector.broadcast %cst_197 : f32 to vector<8x128xf32>
    %508 = arith.mulf %506, %507 : vector<8x128xf32>
    %509 = arith.addf %445, %508 : vector<8x128xf32>
    %cst_198 = arith.constant 1.000000e+00 : f32
    %510 = vector.broadcast %cst_198 : f32 to vector<8x128xf32>
    %511 = arith.cmpf oge, %509, %510 : vector<8x128xf32>
    %512 = arith.extui %511 : vector<8x128xi1> to vector<8x128xi32>
    %513 = arith.sitofp %512 : vector<8x128xi32> to vector<8x128xf32>
    %cst_199 = arith.constant 1.000000e+00 : f32
    %514 = vector.broadcast %cst_199 : f32 to vector<8x128xf32>
    %515 = arith.subf %514, %513 : vector<8x128xf32>
    %516 = arith.mulf %509, %515 : vector<8x128xf32>
    %517 = arith.addf %446, %513 : vector<8x128xf32>
    %c0_200 = arith.constant 0 : index
    %c0_201 = arith.constant 0 : index
    %518 = vector.load %arg15[%c0_200, %c0_201] : memref<256x128xf32, #tpu.memory_space<vmem>>, vector<256x128xf32>
    %cst_202 = arith.constant dense<0.000000e+00> : vector<8x128xf32>
    %519 = tpu.matmul %2, %518, %cst_202 {dimension_numbers = #tpu.dot_dimension_numbers<[1], [0], [0], [1], [0, 0, 1, 1], [], []>} : vector<8x256xf32>, vector<256x128xf32>, vector<8x128xf32> -> vector<8x128xf32>
    %cst_203 = arith.constant 0.839457094 : f32
    %520 = vector.broadcast %cst_203 : f32 to vector<8x128xf32>
    %521 = arith.mulf %520, %4 : vector<8x128xf32>
    %522 = vector.broadcast %8 : vector<1x128xf32> to vector<8x128xf32>
    %523 = arith.addf %521, %522 : vector<8x128xf32>
    %cst_204 = arith.constant 0.839457094 : f32
    %524 = arith.mulf %0, %cst_204 : f32
    %525 = vector.broadcast %524 : f32 to vector<8x128xf32>
    %526 = arith.mulf %525, %519 : vector<8x128xf32>
    %527 = arith.addf %523, %526 : vector<8x128xf32>
    %cst_205 = arith.constant 2.85714293 : f32
    %528 = vector.broadcast %cst_205 : f32 to vector<8x128xf32>
    %529 = arith.mulf %527, %528 : vector<8x128xf32>
    %530 = vector.broadcast %10 : vector<1x128xf32> to vector<8x128xf32>
    %531 = arith.subf %529, %530 : vector<8x128xf32>
    %532 = math.tanh %531 : vector<8x128xf32>
    %cst_206 = arith.constant 0.104932137 : f32
    %533 = vector.broadcast %cst_206 : f32 to vector<8x256xf32>
    %534 = arith.mulf %7, %533 : vector<8x256xf32>
    %cst_207 = arith.constant dense<0.000000e+00> : vector<256x128xf32>
    %535 = tpu.matmul %534, %532, %cst_207 {dimension_numbers = #tpu.dot_dimension_numbers<[0], [0], [1], [1], [0, 1, 1, 1], [], []>} : vector<8x256xf32>, vector<8x128xf32>, vector<256x128xf32> -> vector<256x128xf32>
    %cst_208 = arith.constant 0.949999988 : f32
    %536 = vector.broadcast %cst_208 : f32 to vector<256x128xf32>
    %537 = arith.mulf %536, %518 : vector<256x128xf32>
    %538 = arith.addf %537, %535 : vector<256x128xf32>
    %cst_209 = arith.constant -4.000000e+00 : f32
    %cst_210 = arith.constant 4.000000e+00 : f32
    %539 = vector.broadcast %cst_209 : f32 to vector<256x128xf32>
    %540 = arith.maximumf %539, %538 : vector<256x128xf32>
    %541 = vector.broadcast %cst_210 : f32 to vector<256x128xf32>
    %542 = arith.minimumf %541, %540 : vector<256x128xf32>
    %c0_211 = arith.constant 0 : index
    %c0_212 = arith.constant 0 : index
    %543 = vector.load %arg15[%c0_211, %c0_212] : memref<256x128xf32, #tpu.memory_space<vmem>>, vector<256x128xf32>
    tpu.vector_store %arg15[%c0_211, %c0_212], %542 {strides = array<i32>} : memref<256x128xf32, #tpu.memory_space<vmem>>, vector<256x128xf32>,
    %544 = arith.subf %527, %483 : vector<8x128xf32>
    %cst_213 = arith.constant 5.000000e-01 : f32
    %545 = vector.broadcast %cst_213 : f32 to vector<8x128xf32>
    %546 = arith.mulf %544, %545 : vector<8x128xf32>
    %547 = arith.addf %483, %546 : vector<8x128xf32>
    %cst_214 = arith.constant 1.000000e+00 : f32
    %548 = vector.broadcast %cst_214 : f32 to vector<8x128xf32>
    %549 = arith.cmpf oge, %547, %548 : vector<8x128xf32>
    %550 = arith.extui %549 : vector<8x128xi1> to vector<8x128xi32>
    %551 = arith.sitofp %550 : vector<8x128xi32> to vector<8x128xf32>
    %cst_215 = arith.constant 1.000000e+00 : f32
    %552 = vector.broadcast %cst_215 : f32 to vector<8x128xf32>
    %553 = arith.subf %552, %551 : vector<8x128xf32>
    %554 = arith.mulf %547, %553 : vector<8x128xf32>
    %555 = arith.addf %484, %551 : vector<8x128xf32>
    %556 = vector.broadcast %1 : f32 to vector<128x128xf32>
    %557 = arith.mulf %556, %505 : vector<128x128xf32>
    %558 = arith.addf %15, %557 : vector<128x128xf32>
    %cst_216 = arith.constant dense<0.000000e+00> : vector<8x128xf32>
    %559 = tpu.matmul %551, %558, %cst_216 {dimension_numbers = #tpu.dot_dimension_numbers<[1], [0], [0], [1], [0, 0, 1, 1], [], []>} : vector<8x128xf32>, vector<128x128xf32>, vector<8x128xf32> -> vector<8x128xf32>
    %560 = vector.broadcast %9 : vector<1x128xf32> to vector<8x128xf32>
    %561 = arith.addf %559, %560 : vector<8x128xf32>
    %cst_217 = arith.constant 2.85714293 : f32
    %562 = vector.broadcast %cst_217 : f32 to vector<8x128xf32>
    %563 = arith.mulf %561, %562 : vector<8x128xf32>
    %564 = vector.broadcast %11 : vector<1x128xf32> to vector<8x128xf32>
    %565 = arith.subf %563, %564 : vector<8x128xf32>
    %566 = math.tanh %565 : vector<8x128xf32>
    %567 = vector.broadcast %14 : vector<1x128xf32> to vector<8x128xf32>
    %568 = arith.mulf %551, %567 : vector<8x128xf32>
    %cst_218 = arith.constant dense<0.000000e+00> : vector<128x128xf32>
    %569 = tpu.matmul %568, %566, %cst_218 {dimension_numbers = #tpu.dot_dimension_numbers<[0], [0], [1], [1], [0, 1, 1, 1], [], []>} : vector<8x128xf32>, vector<8x128xf32>, vector<128x128xf32> -> vector<128x128xf32>
    %cst_219 = arith.constant 0.949999988 : f32
    %570 = vector.broadcast %cst_219 : f32 to vector<128x128xf32>
    %571 = arith.mulf %570, %505 : vector<128x128xf32>
    %572 = arith.addf %571, %569 : vector<128x128xf32>
    %cst_220 = arith.constant -4.000000e+00 : f32
    %cst_221 = arith.constant 4.000000e+00 : f32
    %573 = vector.broadcast %cst_220 : f32 to vector<128x128xf32>
    %574 = arith.maximumf %573, %572 : vector<128x128xf32>
    %575 = vector.broadcast %cst_221 : f32 to vector<128x128xf32>
    %576 = arith.minimumf %575, %574 : vector<128x128xf32>
    %577 = arith.subf %561, %516 : vector<8x128xf32>
    %cst_222 = arith.constant 5.000000e-01 : f32
    %578 = vector.broadcast %cst_222 : f32 to vector<8x128xf32>
    %579 = arith.mulf %577, %578 : vector<8x128xf32>
    %580 = arith.addf %516, %579 : vector<8x128xf32>
    %cst_223 = arith.constant 1.000000e+00 : f32
    %581 = vector.broadcast %cst_223 : f32 to vector<8x128xf32>
    %582 = arith.cmpf oge, %580, %581 : vector<8x128xf32>
    %583 = arith.extui %582 : vector<8x128xi1> to vector<8x128xi32>
    %584 = arith.sitofp %583 : vector<8x128xi32> to vector<8x128xf32>
    %cst_224 = arith.constant 1.000000e+00 : f32
    %585 = vector.broadcast %cst_224 : f32 to vector<8x128xf32>
    %586 = arith.subf %585, %584 : vector<8x128xf32>
    %587 = arith.mulf %580, %586 : vector<8x128xf32>
    %588 = arith.addf %517, %584 : vector<8x128xf32>
    %c0_225 = arith.constant 0 : index
    %c0_226 = arith.constant 0 : index
    %589 = vector.load %arg15[%c0_225, %c0_226] : memref<256x128xf32, #tpu.memory_space<vmem>>, vector<256x128xf32>
    %cst_227 = arith.constant dense<0.000000e+00> : vector<8x128xf32>
    %590 = tpu.matmul %2, %589, %cst_227 {dimension_numbers = #tpu.dot_dimension_numbers<[1], [0], [0], [1], [0, 0, 1, 1], [], []>} : vector<8x256xf32>, vector<256x128xf32>, vector<8x128xf32> -> vector<8x128xf32>
    %cst_228 = arith.constant 0.818730711 : f32
    %591 = vector.broadcast %cst_228 : f32 to vector<8x128xf32>
    %592 = arith.mulf %591, %4 : vector<8x128xf32>
    %593 = vector.broadcast %8 : vector<1x128xf32> to vector<8x128xf32>
    %594 = arith.addf %592, %593 : vector<8x128xf32>
    %cst_229 = arith.constant 0.818730711 : f32
    %595 = arith.mulf %0, %cst_229 : f32
    %596 = vector.broadcast %595 : f32 to vector<8x128xf32>
    %597 = arith.mulf %596, %590 : vector<8x128xf32>
    %598 = arith.addf %594, %597 : vector<8x128xf32>
    %cst_230 = arith.constant 2.85714293 : f32
    %599 = vector.broadcast %cst_230 : f32 to vector<8x128xf32>
    %600 = arith.mulf %598, %599 : vector<8x128xf32>
    %601 = vector.broadcast %10 : vector<1x128xf32> to vector<8x128xf32>
    %602 = arith.subf %600, %601 : vector<8x128xf32>
    %603 = math.tanh %602 : vector<8x128xf32>
    %cst_231 = arith.constant 0.102341339 : f32
    %604 = vector.broadcast %cst_231 : f32 to vector<8x256xf32>
    %605 = arith.mulf %7, %604 : vector<8x256xf32>
    %cst_232 = arith.constant dense<0.000000e+00> : vector<256x128xf32>
    %606 = tpu.matmul %605, %603, %cst_232 {dimension_numbers = #tpu.dot_dimension_numbers<[0], [0], [1], [1], [0, 1, 1, 1], [], []>} : vector<8x256xf32>, vector<8x128xf32>, vector<256x128xf32> -> vector<256x128xf32>
    %cst_233 = arith.constant 0.949999988 : f32
    %607 = vector.broadcast %cst_233 : f32 to vector<256x128xf32>
    %608 = arith.mulf %607, %589 : vector<256x128xf32>
    %609 = arith.addf %608, %606 : vector<256x128xf32>
    %cst_234 = arith.constant -4.000000e+00 : f32
    %cst_235 = arith.constant 4.000000e+00 : f32
    %610 = vector.broadcast %cst_234 : f32 to vector<256x128xf32>
    %611 = arith.maximumf %610, %609 : vector<256x128xf32>
    %612 = vector.broadcast %cst_235 : f32 to vector<256x128xf32>
    %613 = arith.minimumf %612, %611 : vector<256x128xf32>
    %c0_236 = arith.constant 0 : index
    %c0_237 = arith.constant 0 : index
    %614 = vector.load %arg15[%c0_236, %c0_237] : memref<256x128xf32, #tpu.memory_space<vmem>>, vector<256x128xf32>
    tpu.vector_store %arg15[%c0_236, %c0_237], %613 {strides = array<i32>} : memref<256x128xf32, #tpu.memory_space<vmem>>, vector<256x128xf32>,
    %615 = arith.subf %598, %554 : vector<8x128xf32>
    %cst_238 = arith.constant 5.000000e-01 : f32
    %616 = vector.broadcast %cst_238 : f32 to vector<8x128xf32>
    %617 = arith.mulf %615, %616 : vector<8x128xf32>
    %618 = arith.addf %554, %617 : vector<8x128xf32>
    %cst_239 = arith.constant 1.000000e+00 : f32
    %619 = vector.broadcast %cst_239 : f32 to vector<8x128xf32>
    %620 = arith.cmpf oge, %618, %619 : vector<8x128xf32>
    %621 = arith.extui %620 : vector<8x128xi1> to vector<8x128xi32>
    %622 = arith.sitofp %621 : vector<8x128xi32> to vector<8x128xf32>
    %cst_240 = arith.constant 1.000000e+00 : f32
    %623 = vector.broadcast %cst_240 : f32 to vector<8x128xf32>
    %624 = arith.subf %623, %622 : vector<8x128xf32>
    %625 = arith.mulf %618, %624 : vector<8x128xf32>
    %626 = arith.addf %555, %622 : vector<8x128xf32>
    %627 = vector.broadcast %1 : f32 to vector<128x128xf32>
    %628 = arith.mulf %627, %576 : vector<128x128xf32>
    %629 = arith.addf %15, %628 : vector<128x128xf32>
    %cst_241 = arith.constant dense<0.000000e+00> : vector<8x128xf32>
    %630 = tpu.matmul %622, %629, %cst_241 {dimension_numbers = #tpu.dot_dimension_numbers<[1], [0], [0], [1], [0, 0, 1, 1], [], []>} : vector<8x128xf32>, vector<128x128xf32>, vector<8x128xf32> -> vector<8x128xf32>
    %631 = vector.broadcast %9 : vector<1x128xf32> to vector<8x128xf32>
    %632 = arith.addf %630, %631 : vector<8x128xf32>
    %cst_242 = arith.constant 2.85714293 : f32
    %633 = vector.broadcast %cst_242 : f32 to vector<8x128xf32>
    %634 = arith.mulf %632, %633 : vector<8x128xf32>
    %635 = vector.broadcast %11 : vector<1x128xf32> to vector<8x128xf32>
    %636 = arith.subf %634, %635 : vector<8x128xf32>
    %637 = math.tanh %636 : vector<8x128xf32>
    %638 = vector.broadcast %14 : vector<1x128xf32> to vector<8x128xf32>
    %639 = arith.mulf %622, %638 : vector<8x128xf32>
    %cst_243 = arith.constant dense<0.000000e+00> : vector<128x128xf32>
    %640 = tpu.matmul %639, %637, %cst_243 {dimension_numbers = #tpu.dot_dimension_numbers<[0], [0], [1], [1], [0, 1, 1, 1], [], []>} : vector<8x128xf32>, vector<8x128xf32>, vector<128x128xf32> -> vector<128x128xf32>
    %cst_244 = arith.constant 0.949999988 : f32
    %641 = vector.broadcast %cst_244 : f32 to vector<128x128xf32>
    %642 = arith.mulf %641, %576 : vector<128x128xf32>
    %643 = arith.addf %642, %640 : vector<128x128xf32>
    %cst_245 = arith.constant -4.000000e+00 : f32
    %cst_246 = arith.constant 4.000000e+00 : f32
    %644 = vector.broadcast %cst_245 : f32 to vector<128x128xf32>
    %645 = arith.maximumf %644, %643 : vector<128x128xf32>
    %646 = vector.broadcast %cst_246 : f32 to vector<128x128xf32>
    %647 = arith.minimumf %646, %645 : vector<128x128xf32>
    %648 = arith.subf %632, %587 : vector<8x128xf32>
    %cst_247 = arith.constant 5.000000e-01 : f32
    %649 = vector.broadcast %cst_247 : f32 to vector<8x128xf32>
    %650 = arith.mulf %648, %649 : vector<8x128xf32>
    %651 = arith.addf %587, %650 : vector<8x128xf32>
    %cst_248 = arith.constant 1.000000e+00 : f32
    %652 = vector.broadcast %cst_248 : f32 to vector<8x128xf32>
    %653 = arith.cmpf oge, %651, %652 : vector<8x128xf32>
    %654 = arith.extui %653 : vector<8x128xi1> to vector<8x128xi32>
    %655 = arith.sitofp %654 : vector<8x128xi32> to vector<8x128xf32>
    %cst_249 = arith.constant 1.000000e+00 : f32
    %656 = vector.broadcast %cst_249 : f32 to vector<8x128xf32>
    %657 = arith.subf %656, %655 : vector<8x128xf32>
    %658 = arith.mulf %651, %657 : vector<8x128xf32>
    %659 = arith.addf %588, %655 : vector<8x128xf32>
    %c0_250 = arith.constant 0 : index
    %c0_251 = arith.constant 0 : index
    %660 = vector.load %arg15[%c0_250, %c0_251] : memref<256x128xf32, #tpu.memory_space<vmem>>, vector<256x128xf32>
    %cst_252 = arith.constant dense<0.000000e+00> : vector<8x128xf32>
    %661 = tpu.matmul %2, %660, %cst_252 {dimension_numbers = #tpu.dot_dimension_numbers<[1], [0], [0], [1], [0, 0, 1, 1], [], []>} : vector<8x256xf32>, vector<256x128xf32>, vector<8x128xf32> -> vector<8x128xf32>
    %cst_253 = arith.constant 0.798516273 : f32
    %662 = vector.broadcast %cst_253 : f32 to vector<8x128xf32>
    %663 = arith.mulf %662, %4 : vector<8x128xf32>
    %664 = vector.broadcast %8 : vector<1x128xf32> to vector<8x128xf32>
    %665 = arith.addf %663, %664 : vector<8x128xf32>
    %cst_254 = arith.constant 0.798516273 : f32
    %666 = arith.mulf %0, %cst_254 : f32
    %667 = vector.broadcast %666 : f32 to vector<8x128xf32>
    %668 = arith.mulf %667, %661 : vector<8x128xf32>
    %669 = arith.addf %665, %668 : vector<8x128xf32>
    %cst_255 = arith.constant 2.85714293 : f32
    %670 = vector.broadcast %cst_255 : f32 to vector<8x128xf32>
    %671 = arith.mulf %669, %670 : vector<8x128xf32>
    %672 = vector.broadcast %10 : vector<1x128xf32> to vector<8x128xf32>
    %673 = arith.subf %671, %672 : vector<8x128xf32>
    %674 = math.tanh %673 : vector<8x128xf32>
    %cst_256 = arith.constant 0.0998145341 : f32
    %675 = vector.broadcast %cst_256 : f32 to vector<8x256xf32>
    %676 = arith.mulf %7, %675 : vector<8x256xf32>
    %cst_257 = arith.constant dense<0.000000e+00> : vector<256x128xf32>
    %677 = tpu.matmul %676, %674, %cst_257 {dimension_numbers = #tpu.dot_dimension_numbers<[0], [0], [1], [1], [0, 1, 1, 1], [], []>} : vector<8x256xf32>, vector<8x128xf32>, vector<256x128xf32> -> vector<256x128xf32>
    %cst_258 = arith.constant 0.949999988 : f32
    %678 = vector.broadcast %cst_258 : f32 to vector<256x128xf32>
    %679 = arith.mulf %678, %660 : vector<256x128xf32>
    %680 = arith.addf %679, %677 : vector<256x128xf32>
    %cst_259 = arith.constant -4.000000e+00 : f32
    %cst_260 = arith.constant 4.000000e+00 : f32
    %681 = vector.broadcast %cst_259 : f32 to vector<256x128xf32>
    %682 = arith.maximumf %681, %680 : vector<256x128xf32>
    %683 = vector.broadcast %cst_260 : f32 to vector<256x128xf32>
    %684 = arith.minimumf %683, %682 : vector<256x128xf32>
    %c0_261 = arith.constant 0 : index
    %c0_262 = arith.constant 0 : index
    %685 = vector.load %arg15[%c0_261, %c0_262] : memref<256x128xf32, #tpu.memory_space<vmem>>, vector<256x128xf32>
    tpu.vector_store %arg15[%c0_261, %c0_262], %684 {strides = array<i32>} : memref<256x128xf32, #tpu.memory_space<vmem>>, vector<256x128xf32>,
    %686 = arith.subf %669, %625 : vector<8x128xf32>
    %cst_263 = arith.constant 5.000000e-01 : f32
    %687 = vector.broadcast %cst_263 : f32 to vector<8x128xf32>
    %688 = arith.mulf %686, %687 : vector<8x128xf32>
    %689 = arith.addf %625, %688 : vector<8x128xf32>
    %cst_264 = arith.constant 1.000000e+00 : f32
    %690 = vector.broadcast %cst_264 : f32 to vector<8x128xf32>
    %691 = arith.cmpf oge, %689, %690 : vector<8x128xf32>
    %692 = arith.extui %691 : vector<8x128xi1> to vector<8x128xi32>
    %693 = arith.sitofp %692 : vector<8x128xi32> to vector<8x128xf32>
    %694 = arith.addf %626, %693 : vector<8x128xf32>
    %695 = vector.broadcast %1 : f32 to vector<128x128xf32>
    %696 = arith.mulf %695, %647 : vector<128x128xf32>
    %697 = arith.addf %15, %696 : vector<128x128xf32>
    %cst_265 = arith.constant dense<0.000000e+00> : vector<8x128xf32>
    %698 = tpu.matmul %693, %697, %cst_265 {dimension_numbers = #tpu.dot_dimension_numbers<[1], [0], [0], [1], [0, 0, 1, 1], [], []>} : vector<8x128xf32>, vector<128x128xf32>, vector<8x128xf32> -> vector<8x128xf32>
    %699 = vector.broadcast %9 : vector<1x128xf32> to vector<8x128xf32>
    %700 = arith.addf %698, %699 : vector<8x128xf32>
    %cst_266 = arith.constant 2.85714293 : f32
    %701 = vector.broadcast %cst_266 : f32 to vector<8x128xf32>
    %702 = arith.mulf %700, %701 : vector<8x128xf32>
    %703 = vector.broadcast %11 : vector<1x128xf32> to vector<8x128xf32>
    %704 = arith.subf %702, %703 : vector<8x128xf32>
    %705 = math.tanh %704 : vector<8x128xf32>
    %706 = vector.broadcast %14 : vector<1x128xf32> to vector<8x128xf32>
    %707 = arith.mulf %693, %706 : vector<8x128xf32>
    %cst_267 = arith.constant dense<0.000000e+00> : vector<128x128xf32>
    %708 = tpu.matmul %707, %705, %cst_267 {dimension_numbers = #tpu.dot_dimension_numbers<[0], [0], [1], [1], [0, 1, 1, 1], [], []>} : vector<8x128xf32>, vector<8x128xf32>, vector<128x128xf32> -> vector<128x128xf32>
    %cst_268 = arith.constant 0.949999988 : f32
    %709 = vector.broadcast %cst_268 : f32 to vector<128x128xf32>
    %710 = arith.mulf %709, %647 : vector<128x128xf32>
    %711 = arith.addf %710, %708 : vector<128x128xf32>
    %cst_269 = arith.constant -4.000000e+00 : f32
    %cst_270 = arith.constant 4.000000e+00 : f32
    %712 = vector.broadcast %cst_269 : f32 to vector<128x128xf32>
    %713 = arith.maximumf %712, %711 : vector<128x128xf32>
    %714 = vector.broadcast %cst_270 : f32 to vector<128x128xf32>
    %715 = arith.minimumf %714, %713 : vector<128x128xf32>
    %716 = arith.subf %700, %658 : vector<8x128xf32>
    %cst_271 = arith.constant 5.000000e-01 : f32
    %717 = vector.broadcast %cst_271 : f32 to vector<8x128xf32>
    %718 = arith.mulf %716, %717 : vector<8x128xf32>
    %719 = arith.addf %658, %718 : vector<8x128xf32>
    %cst_272 = arith.constant 1.000000e+00 : f32
    %720 = vector.broadcast %cst_272 : f32 to vector<8x128xf32>
    %721 = arith.cmpf oge, %719, %720 : vector<8x128xf32>
    %722 = arith.extui %721 : vector<8x128xi1> to vector<8x128xi32>
    %723 = arith.sitofp %722 : vector<8x128xi32> to vector<8x128xf32>
    %724 = arith.addf %659, %723 : vector<8x128xf32>
    %c0_273 = arith.constant 0 : index
    %c0_274 = arith.constant 0 : index
    %725 = vector.load %arg12[%c0_273, %c0_274] : memref<8x128xf32, #tpu.memory_space<vmem>>, vector<8x128xf32>
    tpu.vector_store %arg12[%c0_273, %c0_274], %723 {strides = array<i32>} : memref<8x128xf32, #tpu.memory_space<vmem>>, vector<8x128xf32>,
    %c0_275 = arith.constant 0 : index
    %c0_276 = arith.constant 0 : index
    %726 = vector.load %arg13[%c0_275, %c0_276] : memref<8x128xf32, #tpu.memory_space<vmem>>, vector<8x128xf32>
    tpu.vector_store %arg13[%c0_275, %c0_276], %694 {strides = array<i32>} : memref<8x128xf32, #tpu.memory_space<vmem>>, vector<8x128xf32>,
    %c0_277 = arith.constant 0 : index
    %c0_278 = arith.constant 0 : index
    %727 = vector.load %arg14[%c0_277, %c0_278] : memref<8x128xf32, #tpu.memory_space<vmem>>, vector<8x128xf32>
    tpu.vector_store %arg14[%c0_277, %c0_278], %724 {strides = array<i32>} : memref<8x128xf32, #tpu.memory_space<vmem>>, vector<8x128xf32>,
    %c0_279 = arith.constant 0 : index
    %c0_280 = arith.constant 0 : index
    %728 = vector.load %arg16[%c0_279, %c0_280] : memref<128x128xf32, #tpu.memory_space<vmem>>, vector<128x128xf32>
    tpu.vector_store %arg16[%c0_279, %c0_280], %715 {strides = array<i32>} : memref<128x128xf32, #tpu.memory_space<vmem>>, vector<128x128xf32>,
    return
  }
}

</mosaic_0001>

<llo_original>
// kernel: snn_forward.1
$region0: #{snn_forward.1}
  #allocation0 [shape = 'u32[]', space=smem, size = 0x4, offset = 0x4, fixed_abs, tag = 'smem constant byte address 0x4 - core index']
  #allocation1 [shape = 'u32[144,128]{1,0:T(1,128)}', space=vmem, size = 0x12000, scoped, tag = 'internal scratch']
  %s0 = inlined_call_operand.vmem [shape: f32[2], index: 0, kind: input, shape index: {}]
  %s1 = inlined_call_operand.vmem [shape: f32[8,256], index: 1, kind: input, shape index: {}]
  %s2 = inlined_call_operand.vmem [shape: f32[256,128], index: 2, kind: input, shape index: {}]
  %s3 = inlined_call_operand.vmem [shape: f32[1,128], index: 3, kind: input, shape index: {}]
  %s4 = inlined_call_operand.vmem [shape: f32[128,128], index: 4, kind: input, shape index: {}]
  %s5 = inlined_call_operand.vmem [shape: f32[1,128], index: 5, kind: input, shape index: {}]
  %s6 = inlined_call_operand.vmem [shape: f32[1,128], index: 6, kind: input, shape index: {}]
  %s7 = inlined_call_operand.vmem [shape: f32[1,128], index: 7, kind: input, shape index: {}]
  %s8 = inlined_call_operand.vmem [shape: f32[1,256], index: 8, kind: input, shape index: {}]
  %s9 = inlined_call_operand.vmem [shape: f32[1,128], index: 9, kind: input, shape index: {}]
  %s10 = inlined_call_operand.vmem [shape: f32[256,128], index: 10, kind: input, shape index: {}, may-alias: {10,15}]
  %s11 = inlined_call_operand.vmem [shape: f32[128,128], index: 11, kind: input, shape index: {}, may-alias: {11,16}]
  %s12 = inlined_call_operand.hbm [shape: f32[8,128], index: 12, kind: output, shape index: {0}]
  %s13 = inlined_call_operand.hbm [shape: f32[8,128], index: 13, kind: output, shape index: {1}]
  %s14 = inlined_call_operand.hbm [shape: f32[8,128], index: 14, kind: output, shape index: {2}]
  %s15 = inlined_call_operand.vmem [shape: f32[256,128], index: 15, kind: output, shape index: {3}, may-alias: {10,15}]
  %s16 = inlined_call_operand.vmem [shape: f32[128,128], index: 16, kind: output, shape index: {4}, may-alias: {11,16}]
  %17 = xla_tuple %s12, %s13, %s14, %s15, %s16
  %s18 = sld [smem:[#allocation0]]
  $region94: #{snn_forward.1} parent=0
    _
  %s20 = ssub.s32 1, %s18
  %s21 = scalar_select 0, %s20, %s18
  $region1: #{snn_forward.1} parent=0
    #allocation2 [shape = 'u8[512]{0}', space=smem, size = 0x200, scoped, tag = 'input window, operand 0, single buffered']
    #allocation3 [shape = 's32[1]{0}', space=sflag, size = 0x4, scoped, tag = 'scoped memory for snn_forward.1']
    #allocation4 [shape = 's32[1]{0}', space=sflag, size = 0x4, scoped, tag = 'scoped memory for snn_forward.1']
    #allocation5 [shape = 'u8[4096]{0}', space=vmem, size = 0x1000, scoped, tag = 'output window, operand 0, single buffered']
    #allocation6 [shape = 'u8[4096]{0}', space=vmem, size = 0x1000, scoped, tag = 'output window, operand 1, single buffered']
    #allocation7 [shape = 's32[1]{0}', space=sflag, size = 0x4, scoped, tag = 'scoped memory for snn_forward.1']
    #allocation8 [shape = 'u8[4096]{0}', space=vmem, size = 0x1000, scoped, tag = 'output window, operand 2, single buffered']
    %22 = vsyncpa [#allocation4], 0
    %23 = vsyncpa [#allocation3], 0
    %24 = vsyncpa [#allocation7], 0
    // Predicated region
    $region2: #{snn_forward.1} parent=1 // pred_check
      _
    $region3: #{snn_forward.1} parent=1 // pred_check_branch
      %26 = sbr.rel (0) target = $region5
    $region4: #{snn_forward.1} parent=1 // pred_region
      %s28 = ssub.s32 16, 16
      %29 = vsyncadd [#allocation4], %s28
      %s31 = sshll.u32 %s0, 4
      %s32 = int_to_ptr.vmem [resolvable:$true] %s31
      %34 = dma.vmem_to_smem %s32, 16, [#allocation2], [#allocation4]
    $region5: #{snn_forward.1} parent=1 // pred_fallthru
      _
    // Predicated region
    $region6: #{snn_forward.1} parent=1 // pred_check
      _
    $region7: #{snn_forward.1} parent=1 // pred_check_branch
      %36 = sbr.rel (0) target = $region9
    $region8: #{snn_forward.1} parent=1 // pred_region
      _
    $region9: #{snn_forward.1} parent=1 // pred_fallthru
      _
    // Predicated region
    $region10: #{snn_forward.1} parent=1 // pred_check
      _
    $region11: #{snn_forward.1} parent=1 // pred_check_branch
      %38 = sbr.rel (0) target = $region13
    $region12: #{snn_forward.1} parent=1 // pred_region
      _
    $region13: #{snn_forward.1} parent=1 // pred_fallthru
      _
    // Predicated region
    $region14: #{snn_forward.1} parent=1 // pred_check
      _
    $region15: #{snn_forward.1} parent=1 // pred_check_branch
      %40 = sbr.rel (0) target = $region17
    $region16: #{snn_forward.1} parent=1 // pred_region
      _
    $region17: #{snn_forward.1} parent=1 // pred_fallthru
      _
    // Predicated region
    $region18: #{snn_forward.1} parent=1 // pred_check
      _
    $region19: #{snn_forward.1} parent=1 // pred_check_branch
      %42 = sbr.rel (0) target = $region21
    $region20: #{snn_forward.1} parent=1 // pred_region
      _
    $region21: #{snn_forward.1} parent=1 // pred_fallthru
      _
    // Predicated region
    $region22: #{snn_forward.1} parent=1 // pred_check
      _
    $region23: #{snn_forward.1} parent=1 // pred_check_branch
      %44 = sbr.rel (0) target = $region25
    $region24: #{snn_forward.1} parent=1 // pred_region
      _
    $region25: #{snn_forward.1} parent=1 // pred_fallthru
      _
    // Predicated region
    $region26: #{snn_forward.1} parent=1 // pred_check
      _
    $region27: #{snn_forward.1} parent=1 // pred_check_branch
      %46 = sbr.rel (0) target = $region29
    $region28: #{snn_forward.1} parent=1 // pred_region
      _
    $region29: #{snn_forward.1} parent=1 // pred_fallthru
      _
    // Predicated region
    $region30: #{snn_forward.1} parent=1 // pred_check
      _
    $region31: #{snn_forward.1} parent=1 // pred_check_branch
      %48 = sbr.rel (0) target = $region33
    $region32: #{snn_forward.1} parent=1 // pred_region
      _
    $region33: #{snn_forward.1} parent=1 // pred_fallthru
      _
    // Predicated region
    $region34: #{snn_forward.1} parent=1 // pred_check
      _
    $region35: #{snn_forward.1} parent=1 // pred_check_branch
      %50 = sbr.rel (0) target = $region37
    $region36: #{snn_forward.1} parent=1 // pred_region
      _
    $region37: #{snn_forward.1} parent=1 // pred_fallthru
      _
    // Predicated region
    $region38: #{snn_forward.1} parent=1 // pred_check
      _
    $region39: #{snn_forward.1} parent=1 // pred_check_branch
      %52 = sbr.rel (0) target = $region41
    $region40: #{snn_forward.1} parent=1 // pred_region
      _
    $region41: #{snn_forward.1} parent=1 // pred_fallthru
      _
    // Predicated region
    $region42: #{snn_forward.1} parent=1 // pred_check
      _
    $region43: #{snn_forward.1} parent=1 // pred_check_branch
      %54 = sbr.rel (0) target = $region45
    $region44: #{snn_forward.1} parent=1 // pred_region
      _
    $region45: #{snn_forward.1} parent=1 // pred_fallthru
      _
    // Predicated region
    $region46: #{snn_forward.1} parent=1 // pred_check
      _
    $region47: #{snn_forward.1} parent=1 // pred_check_branch
      %56 = sbr.rel (0) target = $region49
    $region48: #{snn_forward.1} parent=1 // pred_region
      _
    $region49: #{snn_forward.1} parent=1 // pred_fallthru
      _
    // Predicated region
    $region50: #{snn_forward.1} parent=1 // pred_check
      _
    $region51: #{snn_forward.1} parent=1 // pred_check_branch
      %58 = sbr.rel (0) target = $region53
    $region52: #{snn_forward.1} parent=1 // pred_region
      %59 = dma.done [#allocation4], 16
    $region53: #{snn_forward.1} parent=1 // pred_fallthru
      _
    %60 = sfence
    %s61 = sld [smem:[#allocation2]]
    %s62 = sld [smem:[#allocation2 + $0x1]]
    %v63 = vld [vmem:[%s1] sm:$0xff]
    %v64 = vld [vmem:[%s1 + $0x8] sm:$0xff]
    %v65 = vld [vmem:[%s2] sm:$0xff]
    %v66 = vld [vmem:[%s2 + $0x8] sm:$0xff]
    %v67 = vld [vmem:[%s2 + $0x10] sm:$0xff]
    %v68 = vld [vmem:[%s2 + $0x18] sm:$0xff]
    %v69 = vld [vmem:[%s2 + $0x20] sm:$0xff]
    %v70 = vld [vmem:[%s2 + $0x28] sm:$0xff]
    %v71 = vld [vmem:[%s2 + $0x30] sm:$0xff]
    %v72 = vld [vmem:[%s2 + $0x38] sm:$0xff]
    %v73 = vld [vmem:[%s2 + $0x40] sm:$0xff]
    %v74 = vld [vmem:[%s2 + $0x48] sm:$0xff]
    %v75 = vld [vmem:[%s2 + $0x50] sm:$0xff]
    %v76 = vld [vmem:[%s2 + $0x58] sm:$0xff]
    %v77 = vld [vmem:[%s2 + $0x60] sm:$0xff]
    %v78 = vld [vmem:[%s2 + $0x68] sm:$0xff]
    %v79 = vld [vmem:[%s2 + $0x70] sm:$0xff]
    %v80 = vld [vmem:[%s2 + $0x78] sm:$0xff]
    %v81 = vld [vmem:[%s2 + $0x80] sm:$0xff]
    %v82 = vld [vmem:[%s2 + $0x88] sm:$0xff]
    %v83 = vld [vmem:[%s2 + $0x90] sm:$0xff]
    %v84 = vld [vmem:[%s2 + $0x98] sm:$0xff]
    %v85 = vld [vmem:[%s2 + $0xa0] sm:$0xff]
    %v86 = vld [vmem:[%s2 + $0xa8] sm:$0xff]
    %v87 = vld [vmem:[%s2 + $0xb0] sm:$0xff]
    %v88 = vld [vmem:[%s2 + $0xb8] sm:$0xff]
    %v89 = vld [vmem:[%s2 + $0xc0] sm:$0xff]
    %v90 = vld [vmem:[%s2 + $0xc8] sm:$0xff]
    %v91 = vld [vmem:[%s2 + $0xd0] sm:$0xff]
    %v92 = vld [vmem:[%s2 + $0xd8] sm:$0xff]
    %v93 = vld [vmem:[%s2 + $0xe0] sm:$0xff]
    %v94 = vld [vmem:[%s2 + $0xe8] sm:$0xff]
    %v95 = vld [vmem:[%s2 + $0xf0] sm:$0xff]
    %v96 = vld [vmem:[%s2 + $0xf8] sm:$0xff]
    %97 = vmatprep.subr.mxu0 0.0
    %98 = vmatpush1.msra.mxu0 %v65
    %99 = vmatprep.subr.mxu0 0.0
    %100 = vmatpush1.msra.mxu0 %v66
    %101 = vmatprep.subr.mxu0 0.0
    %102 = vmatpush1.msra.mxu0 %v67
    %103 = vmatprep.subr.mxu0 0.0
    %104 = vmatpush1.msra.mxu0 %v68
    %105 = vmatprep.subr.mxu0 0.0
    %106 = vmatpush1.msra.mxu0 %v69
    %107 = vmatprep.subr.mxu0 0.0
    %108 = vmatpush1.msra.mxu0 %v70
    %109 = vmatprep.subr.mxu0 0.0
    %110 = vmatpush1.msra.mxu0 %v71
    %111 = vmatprep.subr.mxu0 0.0
    %112 = vmatpush1.msra.mxu0 %v72
    %113 = vmatprep.subr.mxu0 0.0
    %114 = vmatpush1.msra.mxu0 %v73
    %115 = vmatprep.subr.mxu0 0.0
    %116 = vmatpush1.msra.mxu0 %v74
    %117 = vmatprep.subr.mxu0 0.0
    %118 = vmatpush1.msra.mxu0 %v75
    %119 = vmatprep.subr.mxu0 0.0
    %120 = vmatpush1.msra.mxu0 %v76
    %121 = vmatprep.subr.mxu0 0.0
    %122 = vmatpush1.msra.mxu0 %v77
    %123 = vmatprep.subr.mxu0 0.0
    %124 = vmatpush1.msra.mxu0 %v78
    %125 = vmatprep.subr.mxu0 0.0
    %126 = vmatpush1.msra.mxu0 %v79
    %127 = vmatprep.subr.mxu0 0.0
    %128 = vmatpush1.msra.mxu0 %v80
    %129 = vmatprep.subr.mxu0 0.0
    %130 = vmatpush1.msra.mxu0 %v81
    %131 = vmatprep.subr.mxu0 0.0
    %132 = vmatpush1.msra.mxu0 %v82
    %133 = vmatprep.subr.mxu0 0.0
    %134 = vmatpush1.msra.mxu0 %v83
    %135 = vmatprep.subr.mxu0 0.0
    %136 = vmatpush1.msra.mxu0 %v84
    %137 = vmatprep.subr.mxu0 0.0
    %138 = vmatpush1.msra.mxu0 %v85
    %139 = vmatprep.subr.mxu0 0.0
    %140 = vmatpush1.msra.mxu0 %v86
    %141 = vmatprep.subr.mxu0 0.0
    %142 = vmatpush1.msra.mxu0 %v87
    %143 = vmatprep.subr.mxu0 0.0
    %144 = vmatpush1.msra.mxu0 %v88
    %145 = vmatprep.subr.mxu0 0.0
    %146 = vmatpush1.msra.mxu0 %v89
    %147 = vmatprep.subr.mxu0 0.0
    %148 = vmatpush1.msra.mxu0 %v90
    %149 = vmatprep.subr.mxu0 0.0
    %150 = vmatpush1.msra.mxu0 %v91
    %151 = vmatprep.subr.mxu0 0.0
    %152 = vmatpush1.msra.mxu0 %v92
    %153 = vmatprep.subr.mxu0 0.0
    %154 = vmatpush1.msra.mxu0 %v93
    %155 = vmatprep.subr.mxu0 0.0
    %156 = vmatpush1.msra.mxu0 %v94
    %157 = vmatprep.subr.mxu0 0.0
    %158 = vmatpush1.msra.mxu0 %v95
    %159 = vmatprep.subr.mxu0 0.0
    %160 = vmatpush1.msra.mxu0 %v96
    %161 = vmatprep.mubr.f32.mxu0 %v64
    %162 = vmatmul.mubr.f32.gmra.mrb[0].mxu0 %v63
    %v163 = vpop.f32.mrb[0].mxu0
    %v164 = vadd.f32 0.0, %v163
    %v165 = vpop.f32.mrb[0].mxu0
    %166 = vdwg.mxu0
    %v167 = vld [vmem:[%s8] sm:$0x3]
    %v169 = vlaneseq
    %v170 = vshrl.u32 %v169, 7
    %v171 = vsub.s32 0, %v170
    %v172 = vrot.slane %v167, %v171
    %v173 = vlaneseq
    %v174 = vshrl.u32 %v173, 7
    %v175 = vsub.s32 1, %v174
    %v176 = vrot.slane %v167, %v175
    %v179 = vmul.f32 %v63, %v172
    %v180 = vmul.f32 %v64, %v176
    %v181 = vld [vmem:[%s3] sm:$0x1]
    %v182 = vld [vmem:[%s5] sm:$0x1]
    %v183 = vld [vmem:[%s6] sm:$0x1]
    %v184 = vld [vmem:[%s7] sm:$0x1]
    %v185 = vld [vmem:[%s9] sm:$0x1]
    %v186 = vmul.f32 %v185, 0.125
    %v187 = vld [vmem:[%s4] sm:$0xff]
    %v188 = vld [vmem:[%s4 + $0x8] sm:$0xff]
    %v189 = vld [vmem:[%s4 + $0x10] sm:$0xff]
    %v190 = vld [vmem:[%s4 + $0x18] sm:$0xff]
    %v191 = vld [vmem:[%s4 + $0x20] sm:$0xff]
    %v192 = vld [vmem:[%s4 + $0x28] sm:$0xff]
    %v193 = vld [vmem:[%s4 + $0x30] sm:$0xff]
    %v194 = vld [vmem:[%s4 + $0x38] sm:$0xff]
    %v195 = vld [vmem:[%s4 + $0x40] sm:$0xff]
    %v196 = vld [vmem:[%s4 + $0x48] sm:$0xff]
    %v197 = vld [vmem:[%s4 + $0x50] sm:$0xff]
    %v198 = vld [vmem:[%s4 + $0x58] sm:$0xff]
    %v199 = vld [vmem:[%s4 + $0x60] sm:$0xff]
    %v200 = vld [vmem:[%s4 + $0x68] sm:$0xff]
    %v201 = vld [vmem:[%s4 + $0x70] sm:$0xff]
    %v202 = vld [vmem:[%s4 + $0x78] sm:$0xff]
    %v203 = vld [vmem:[%s11] sm:$0xff]
    %v204 = vld [vmem:[%s11 + $0x8] sm:$0xff]
    %v205 = vld [vmem:[%s11 + $0x10] sm:$0xff]
    %v206 = vld [vmem:[%s11 + $0x18] sm:$0xff]
    %v207 = vld [vmem:[%s11 + $0x20] sm:$0xff]
    %v208 = vld [vmem:[%s11 + $0x28] sm:$0xff]
    %v209 = vld [vmem:[%s11 + $0x30] sm:$0xff]
    %v210 = vld [vmem:[%s11 + $0x38] sm:$0xff]
    %v211 = vld [vmem:[%s11 + $0x40] sm:$0xff]
    %v212 = vld [vmem:[%s11 + $0x48] sm:$0xff]
    %v213 = vld [vmem:[%s11 + $0x50] sm:$0xff]
    %v214 = vld [vmem:[%s11 + $0x58] sm:$0xff]
    %v215 = vld [vmem:[%s11 + $0x60] sm:$0xff]
    %v216 = vld [vmem:[%s11 + $0x68] sm:$0xff]
    %v217 = vld [vmem:[%s11 + $0x70] sm:$0xff]
    %v218 = vld [vmem:[%s11 + $0x78] sm:$0xff]
    %v219 = vld [vmem:[%s10] sm:$0xff]
    %v220 = vld [vmem:[%s10 + $0x8] sm:$0xff]
    %v221 = vld [vmem:[%s10 + $0x10] sm:$0xff]
    %v222 = vld [vmem:[%s10 + $0x18] sm:$0xff]
    %v223 = vld [vmem:[%s10 + $0x20] sm:$0xff]
    %v224 = vld [vmem:[%s10 + $0x28] sm:$0xff]
    %v225 = vld [vmem:[%s10 + $0x30] sm:$0xff]
    %v226 = vld [vmem:[%s10 + $0x38] sm:$0xff]
    %v227 = vld [vmem:[%s10 + $0x40] sm:$0xff]
    %v228 = vld [vmem:[%s10 + $0x48] sm:$0xff]
    %v229 = vld [vmem:[%s10 + $0x50] sm:$0xff]
    %v230 = vld [vmem:[%s10 + $0x58] sm:$0xff]
    %v231 = vld [vmem:[%s10 + $0x60] sm:$0xff]
    %v232 = vld [vmem:[%s10 + $0x68] sm:$0xff]
    %v233 = vld [vmem:[%s10 + $0x70] sm:$0xff]
    %v234 = vld [vmem:[%s10 + $0x78] sm:$0xff]
    %v235 = vld [vmem:[%s10 + $0x80] sm:$0xff]
    %v236 = vld [vmem:[%s10 + $0x88] sm:$0xff]
    %v237 = vld [vmem:[%s10 + $0x90] sm:$0xff]
    %v238 = vld [vmem:[%s10 + $0x98] sm:$0xff]
    %v239 = vld [vmem:[%s10 + $0xa0] sm:$0xff]
    %v240 = vld [vmem:[%s10 + $0xa8] sm:$0xff]
    %v241 = vld [vmem:[%s10 + $0xb0] sm:$0xff]
    %v242 = vld [vmem:[%s10 + $0xb8] sm:$0xff]
    %v243 = vld [vmem:[%s10 + $0xc0] sm:$0xff]
    %v244 = vld [vmem:[%s10 + $0xc8] sm:$0xff]
    %v245 = vld [vmem:[%s10 + $0xd0] sm:$0xff]
    %v246 = vld [vmem:[%s10 + $0xd8] sm:$0xff]
    %v247 = vld [vmem:[%s10 + $0xe0] sm:$0xff]
    %v248 = vld [vmem:[%s10 + $0xe8] sm:$0xff]
    %v249 = vld [vmem:[%s10 + $0xf0] sm:$0xff]
    %v250 = vld [vmem:[%s10 + $0xf8] sm:$0xff]
    %251 = vmatprep.subr.mxu0 0.0
    %252 = vmatpush1.msra.mxu0 %v219
    %253 = vmatprep.subr.mxu0 0.0
    %254 = vmatpush1.msra.mxu0 %v220
    %255 = vmatprep.subr.mxu0 0.0
    %256 = vmatpush1.msra.mxu0 %v221
    %257 = vmatprep.subr.mxu0 0.0
    %258 = vmatpush1.msra.mxu0 %v222
    %259 = vmatprep.subr.mxu0 0.0
    %260 = vmatpush1.msra.mxu0 %v223
    %261 = vmatprep.subr.mxu0 0.0
    %262 = vmatpush1.msra.mxu0 %v224
    %263 = vmatprep.subr.mxu0 0.0
    %264 = vmatpush1.msra.mxu0 %v225
    %265 = vmatprep.subr.mxu0 0.0
    %266 = vmatpush1.msra.mxu0 %v226
    %267 = vmatprep.subr.mxu0 0.0
    %268 = vmatpush1.msra.mxu0 %v227
    %269 = vmatprep.subr.mxu0 0.0
    %270 = vmatpush1.msra.mxu0 %v228
    %271 = vmatprep.subr.mxu0 0.0
    %272 = vmatpush1.msra.mxu0 %v229
    %273 = vmatprep.subr.mxu0 0.0
    %274 = vmatpush1.msra.mxu0 %v230
    %275 = vmatprep.subr.mxu0 0.0
    %276 = vmatpush1.msra.mxu0 %v231
    %277 = vmatprep.subr.mxu0 0.0
    %278 = vmatpush1.msra.mxu0 %v232
    %279 = vmatprep.subr.mxu0 0.0
    %280 = vmatpush1.msra.mxu0 %v233
    %281 = vmatprep.subr.mxu0 0.0
    %282 = vmatpush1.msra.mxu0 %v234
    %283 = vmatprep.subr.mxu0 0.0
    %284 = vmatpush1.msra.mxu0 %v235
    %285 = vmatprep.subr.mxu0 0.0
    %286 = vmatpush1.msra.mxu0 %v236
    %287 = vmatprep.subr.mxu0 0.0
    %288 = vmatpush1.msra.mxu0 %v237
    %289 = vmatprep.subr.mxu0 0.0
    %290 = vmatpush1.msra.mxu0 %v238
    %291 = vmatprep.subr.mxu0 0.0
    %292 = vmatpush1.msra.mxu0 %v239
    %293 = vmatprep.subr.mxu0 0.0
    %294 = vmatpush1.msra.mxu0 %v240
    %295 = vmatprep.subr.mxu0 0.0
    %296 = vmatpush1.msra.mxu0 %v241
    %297 = vmatprep.subr.mxu0 0.0
    %298 = vmatpush1.msra.mxu0 %v242
    %299 = vmatprep.subr.mxu0 0.0
    %300 = vmatpush1.msra.mxu0 %v243
    %301 = vmatprep.subr.mxu0 0.0
    %302 = vmatpush1.msra.mxu0 %v244
    %303 = vmatprep.subr.mxu0 0.0
    %304 = vmatpush1.msra.mxu0 %v245
    %305 = vmatprep.subr.mxu0 0.0
    %306 = vmatpush1.msra.mxu0 %v246
    %307 = vmatprep.subr.mxu0 0.0
    %308 = vmatpush1.msra.mxu0 %v247
    %309 = vmatprep.subr.mxu0 0.0
    %310 = vmatpush1.msra.mxu0 %v248
    %311 = vmatprep.subr.mxu0 0.0
    %312 = vmatpush1.msra.mxu0 %v249
    %313 = vmatprep.subr.mxu0 0.0
    %314 = vmatpush1.msra.mxu0 %v250
    %315 = vmatprep.mubr.f32.mxu0 %v64
    %316 = vmatmul.mubr.f32.gmra.mrb[0].mxu0 %v63
    %v317 = vpop.f32.mrb[0].mxu0
    %v318 = vadd.f32 0.0, %v317
    %v319 = vpop.f32.mrb[0].mxu0
    %320 = vdwg.mxu0
    %v322 = vlaneseq
    %v323 = vshrl.u32 %v322, 7
    %v324 = vsub.s32 0, %v323
    %v325 = vrot.slane %v181, %v324
    %v327 = vadd.f32 %v164, %v325
    %v328 = vstv %s61
    %v329 = vmul.f32 %v328, %v318
    %v330 = vadd.f32 %v327, %v329
    %v331 = vmul.f32 %v330, 2.857143
    %v333 = vlaneseq
    %v334 = vshrl.u32 %v333, 7
    %v335 = vsub.s32 0, %v334
    %v336 = vrot.slane %v183, %v335
    %v338 = vsub.f32 %v331, %v336
    %v339 = vtanh.pop %v338
    %v340 = vmul.f32 %v179, 0.125
    %v341 = vmul.f32 %v180, 0.125
    %342 = vxpose.xlu0.b32.start [1/16] %v340, 128
    %343 = vxpose.xlu0.b32.cont [2/16] 0.0, 128
    %344 = vxpose.xlu0.b32.cont [3/16] 0.0, 128
    %345 = vxpose.xlu0.b32.cont [4/16] 0.0, 128
    %346 = vxpose.xlu0.b32.cont [5/16] 0.0, 128
    %347 = vxpose.xlu0.b32.cont [6/16] 0.0, 128
    %348 = vxpose.xlu0.b32.cont [7/16] 0.0, 128
    %349 = vxpose.xlu0.b32.cont [8/16] 0.0, 128
    %350 = vxpose.xlu0.b32.cont [9/16] 0.0, 128
    %351 = vxpose.xlu0.b32.cont [10/16] 0.0, 128
    %352 = vxpose.xlu0.b32.cont [11/16] 0.0, 128
    %353 = vxpose.xlu0.b32.cont [12/16] 0.0, 128
    %354 = vxpose.xlu0.b32.cont [13/16] 0.0, 128
    %355 = vxpose.xlu0.b32.cont [14/16] 0.0, 128
    %356 = vxpose.xlu0.b32.cont [15/16] 0.0, 128
    %357 = vxpose.xlu0.b32.end [16/16] 0.0, 128
    %v358 = vpop.trf.xlu0
    %v359 = vpop.trf.xlu0
    %v360 = vpop.trf.xlu0
    %v361 = vpop.trf.xlu0
    %v362 = vpop.trf.xlu0
    %v363 = vpop.trf.xlu0
    %v364 = vpop.trf.xlu0
    %v365 = vpop.trf.xlu0
    %v366 = vpop.trf.xlu0
    %v367 = vpop.trf.xlu0
    %v368 = vpop.trf.xlu0
    %v369 = vpop.trf.xlu0
    %v370 = vpop.trf.xlu0
    %v371 = vpop.trf.xlu0
    %v372 = vpop.trf.xlu0
    %v373 = vpop.trf.xlu0
    %374 = vxpose.xlu0.b32.start [1/16] %v341, 128
    %375 = vxpose.xlu0.b32.cont [2/16] 0.0, 128
    %376 = vxpose.xlu0.b32.cont [3/16] 0.0, 128
    %377 = vxpose.xlu0.b32.cont [4/16] 0.0, 128
    %378 = vxpose.xlu0.b32.cont [5/16] 0.0, 128
    %379 = vxpose.xlu0.b32.cont [6/16] 0.0, 128
    %380 = vxpose.xlu0.b32.cont [7/16] 0.0, 128
    %381 = vxpose.xlu0.b32.cont [8/16] 0.0, 128
    %382 = vxpose.xlu0.b32.cont [9/16] 0.0, 128
    %383 = vxpose.xlu0.b32.cont [10/16] 0.0, 128
    %384 = vxpose.xlu0.b32.cont [11/16] 0.0, 128
    %385 = vxpose.xlu0.b32.cont [12/16] 0.0, 128
    %386 = vxpose.xlu0.b32.cont [13/16] 0.0, 128
    %387 = vxpose.xlu0.b32.cont [14/16] 0.0, 128
    %388 = vxpose.xlu0.b32.cont [15/16] 0.0, 128
    %389 = vxpose.xlu0.b32.end [16/16] 0.0, 128
    %v390 = vpop.trf.xlu0
    %v391 = vpop.trf.xlu0
    %v392 = vpop.trf.xlu0
    %v393 = vpop.trf.xlu0
    %v394 = vpop.trf.xlu0
    %v395 = vpop.trf.xlu0
    %v396 = vpop.trf.xlu0
    %v397 = vpop.trf.xlu0
    %v398 = vpop.trf.xlu0
    %v399 = vpop.trf.xlu0
    %v400 = vpop.trf.xlu0
    %v401 = vpop.trf.xlu0
    %v402 = vpop.trf.xlu0
    %v403 = vpop.trf.xlu0
    %v404 = vpop.trf.xlu0
    %v405 = vpop.trf.xlu0
    %vm406 = vcmask 64512
    %v408 = vsel %vm406, %v358, 0
    %v411 = vsel %vm406, %v359, 0
    %v414 = vsel %vm406, %v360, 0
    %v417 = vsel %vm406, %v361, 0
    %v420 = vsel %vm406, %v362, 0
    %v423 = vsel %vm406, %v363, 0
    %v426 = vsel %vm406, %v364, 0
    %v429 = vsel %vm406, %v365, 0
    %v432 = vsel %vm406, %v366, 0
    %v435 = vsel %vm406, %v367, 0
    %v438 = vsel %vm406, %v368, 0
    %v441 = vsel %vm406, %v369, 0
    %v444 = vsel %vm406, %v370, 0
    %v447 = vsel %vm406, %v371, 0
    %v450 = vsel %vm406, %v372, 0
    %v453 = vsel %vm406, %v373, 0
    %v456 = vsel %vm406, %v390, 0
    %v459 = vsel %vm406, %v391, 0
    %v462 = vsel %vm406, %v392, 0
    %v465 = vsel %vm406, %v393, 0
    %v468 = vsel %vm406, %v394, 0
    %v471 = vsel %vm406, %v395, 0
    %v474 = vsel %vm406, %v396, 0
    %v477 = vsel %vm406, %v397, 0
    %v480 = vsel %vm406, %v398, 0
    %v483 = vsel %vm406, %v399, 0
    %v486 = vsel %vm406, %v400, 0
    %v489 = vsel %vm406, %v401, 0
    %v492 = vsel %vm406, %v402, 0
    %v495 = vsel %vm406, %v403, 0
    %v498 = vsel %vm406, %v404, 0
    %v501 = vsel %vm406, %v405, 0
    %503 = vmatprep.subr.mxu0 0.0
    %504 = vmatpush1.msra.mxu0 %v339
    %505 = vmatprep.subr.mxu0 0.0
    %506 = vmatpush1.msra.mxu0 0.0
    %507 = vmatprep.subr.mxu0 0.0
    %508 = vmatpush1.msra.mxu0 0.0
    %509 = vmatprep.subr.mxu0 0.0
    %510 = vmatpush1.msra.mxu0 0.0
    %511 = vmatprep.subr.mxu0 0.0
    %512 = vmatpush1.msra.mxu0 0.0
    %513 = vmatprep.subr.mxu0 0.0
    %514 = vmatpush1.msra.mxu0 0.0
    %515 = vmatprep.subr.mxu0 0.0
    %516 = vmatpush1.msra.mxu0 0.0
    %517 = vmatprep.subr.mxu0 0.0
    %518 = vmatpush1.msra.mxu0 0.0
    %519 = vmatprep.subr.mxu0 0.0
    %520 = vmatpush1.msra.mxu0 0.0
    %521 = vmatprep.subr.mxu0 0.0
    %522 = vmatpush1.msra.mxu0 0.0
    %523 = vmatprep.subr.mxu0 0.0
    %524 = vmatpush1.msra.mxu0 0.0
    %525 = vmatprep.subr.mxu0 0.0
    %526 = vmatpush1.msra.mxu0 0.0
    %527 = vmatprep.subr.mxu0 0.0
    %528 = vmatpush1.msra.mxu0 0.0
    %529 = vmatprep.subr.mxu0 0.0
    %530 = vmatpush1.msra.mxu0 0.0
    %531 = vmatprep.subr.mxu0 0.0
    %532 = vmatpush1.msra.mxu0 0.0
    %533 = vmatprep.subr.mxu0 0.0
    %534 = vmatpush1.msra.mxu0 0.0
    %535 = vmatprep.subr.mxu0 0.0
    %536 = vmatpush1.msra.mxu0 0.0
    %537 = vmatprep.subr.mxu0 0.0
    %538 = vmatpush1.msra.mxu0 0.0
    %539 = vmatprep.subr.mxu0 0.0
    %540 = vmatpush1.msra.mxu0 0.0
    %541 = vmatprep.subr.mxu0 0.0
    %542 = vmatpush1.msra.mxu0 0.0
    %543 = vmatprep.subr.mxu0 0.0
    %544 = vmatpush1.msra.mxu0 0.0
    %545 = vmatprep.subr.mxu0 0.0
    %546 = vmatpush1.msra.mxu0 0.0
    %547 = vmatprep.subr.mxu0 0.0
    %548 = vmatpush1.msra.mxu0 0.0
    %549 = vmatprep.subr.mxu0 0.0
    %550 = vmatpush1.msra.mxu0 0.0
    %551 = vmatprep.subr.mxu0 0.0
    %552 = vmatpush1.msra.mxu0 0.0
    %553 = vmatprep.subr.mxu0 0.0
    %554 = vmatpush1.msra.mxu0 0.0
    %555 = vmatprep.subr.mxu0 0.0
    %556 = vmatpush1.msra.mxu0 0.0
    %557 = vmatprep.subr.mxu0 0.0
    %558 = vmatpush1.msra.mxu0 0.0
    %559 = vmatprep.subr.mxu0 0.0
    %560 = vmatpush1.msra.mxu0 0.0
    %561 = vmatprep.subr.mxu0 0.0
    %562 = vmatpush1.msra.mxu0 0.0
    %563 = vmatprep.subr.mxu0 0.0
    %564 = vmatpush1.msra.mxu0 0.0
    %565 = vmatprep.subr.mxu0 0.0
    %566 = vmatpush1.msra.mxu0 0.0
    %567 = vmatprep.mubr.f32.mxu0 0.0
    %568 = vmatmul.mubr.f32.gmra.mrb[0].mxu0 %v408
    %v569 = vpop.f32.mrb[0].mxu0
    %v570 = vadd.f32 0.0, %v569
    %v571 = vpop.f32.mrb[0].mxu0
    %572 = vmatprep.mubr.f32.mxu0 0.0
    %573 = vmatmul.mubr.f32.gmra.mrb[0].mxu0 %v411
    %v574 = vpop.f32.mrb[0].mxu0
    %v575 = vadd.f32 0.0, %v574
    %v576 = vpop.f32.mrb[0].mxu0
    %577 = vmatprep.mubr.f32.mxu0 0.0
    %578 = vmatmul.mubr.f32.gmra.mrb[0].mxu0 %v414
    %v579 = vpop.f32.mrb[0].mxu0
    %v580 = vadd.f32 0.0, %v579
    %v581 = vpop.f32.mrb[0].mxu0
    %582 = vmatprep.mubr.f32.mxu0 0.0
    %583 = vmatmul.mubr.f32.gmra.mrb[0].mxu0 %v417
    %v584 = vpop.f32.mrb[0].mxu0
    %v585 = vadd.f32 0.0, %v584
    %v586 = vpop.f32.mrb[0].mxu0
    %587 = vmatprep.mubr.f32.mxu0 0.0
    %588 = vmatmul.mubr.f32.gmra.mrb[0].mxu0 %v420
    %v589 = vpop.f32.mrb[0].mxu0
    %v590 = vadd.f32 0.0, %v589
    %v591 = vpop.f32.mrb[0].mxu0
    %592 = vmatprep.mubr.f32.mxu0 0.0
    %593 = vmatmul.mubr.f32.gmra.mrb[0].mxu0 %v423
    %v594 = vpop.f32.mrb[0].mxu0
    %v595 = vadd.f32 0.0, %v594
    %v596 = vpop.f32.mrb[0].mxu0
    %597 = vmatprep.mubr.f32.mxu0 0.0
    %598 = vmatmul.mubr.f32.gmra.mrb[0].mxu0 %v426
    %v599 = vpop.f32.mrb[0].mxu0
    %v600 = vadd.f32 0.0, %v599
    %v601 = vpop.f32.mrb[0].mxu0
    %602 = vmatprep.mubr.f32.mxu0 0.0
    %603 = vmatmul.mubr.f32.gmra.mrb[0].mxu0 %v429
    %v604 = vpop.f32.mrb[0].mxu0
    %v605 = vadd.f32 0.0, %v604
    %v606 = vpop.f32.mrb[0].mxu0
    %607 = vmatprep.mubr.f32.mxu0 0.0
    %608 = vmatmul.mubr.f32.gmra.mrb[0].mxu0 %v432
    %v609 = vpop.f32.mrb[0].mxu0
    %v610 = vadd.f32 0.0, %v609
    %v611 = vpop.f32.mrb[0].mxu0
    %612 = vmatprep.mubr.f32.mxu0 0.0
    %613 = vmatmul.mubr.f32.gmra.mrb[0].mxu0 %v435
    %v614 = vpop.f32.mrb[0].mxu0
    %v615 = vadd.f32 0.0, %v614
    %v616 = vpop.f32.mrb[0].mxu0
    %617 = vmatprep.mubr.f32.mxu0 0.0
    %618 = vmatmul.mubr.f32.gmra.mrb[0].mxu0 %v438
    %v619 = vpop.f32.mrb[0].mxu0
    %v620 = vadd.f32 0.0, %v619
    %v621 = vpop.f32.mrb[0].mxu0
    %622 = vmatprep.mubr.f32.mxu0 0.0
    %623 = vmatmul.mubr.f32.gmra.mrb[0].mxu0 %v441
    %v624 = vpop.f32.mrb[0].mxu0
    %v625 = vadd.f32 0.0, %v624
    %v626 = vpop.f32.mrb[0].mxu0
    %627 = vmatprep.mubr.f32.mxu0 0.0
    %628 = vmatmul.mubr.f32.gmra.mrb[0].mxu0 %v444
    %v629 = vpop.f32.mrb[0].mxu0
    %v630 = vadd.f32 0.0, %v629
    %v631 = vpop.f32.mrb[0].mxu0
    %632 = vmatprep.mubr.f32.mxu0 0.0
    %633 = vmatmul.mubr.f32.gmra.mrb[0].mxu0 %v447
    %v634 = vpop.f32.mrb[0].mxu0
    %v635 = vadd.f32 0.0, %v634
    %v636 = vpop.f32.mrb[0].mxu0
    %637 = vmatprep.mubr.f32.mxu0 0.0
    %638 = vmatmul.mubr.f32.gmra.mrb[0].mxu0 %v450
    %v639 = vpop.f32.mrb[0].mxu0
    %v640 = vadd.f32 0.0, %v639
    %v641 = vpop.f32.mrb[0].mxu0
    %642 = vmatprep.mubr.f32.mxu0 0.0
    %643 = vmatmul.mubr.f32.gmra.mrb[0].mxu0 %v453
    %v644 = vpop.f32.mrb[0].mxu0
    %v645 = vadd.f32 0.0, %v644
    %v646 = vpop.f32.mrb[0].mxu0
    %647 = vmatprep.mubr.f32.mxu0 0.0
    %648 = vmatmul.mubr.f32.gmra.mrb[0].mxu0 %v456
    %v649 = vpop.f32.mrb[0].mxu0
    %v650 = vadd.f32 0.0, %v649
    %v651 = vpop.f32.mrb[0].mxu0
    %652 = vmatprep.mubr.f32.mxu0 0.0
    %653 = vmatmul.mubr.f32.gmra.mrb[0].mxu0 %v459
    %v654 = vpop.f32.mrb[0].mxu0
    %v655 = vadd.f32 0.0, %v654
    %v656 = vpop.f32.mrb[0].mxu0
    %657 = vmatprep.mubr.f32.mxu0 0.0
    %658 = vmatmul.mubr.f32.gmra.mrb[0].mxu0 %v462
    %v659 = vpop.f32.mrb[0].mxu0
    %v660 = vadd.f32 0.0, %v659
    %v661 = vpop.f32.mrb[0].mxu0
    %662 = vmatprep.mubr.f32.mxu0 0.0
    %663 = vmatmul.mubr.f32.gmra.mrb[0].mxu0 %v465
    %v664 = vpop.f32.mrb[0].mxu0
    %v665 = vadd.f32 0.0, %v664
    %v666 = vpop.f32.mrb[0].mxu0
    %667 = vmatprep.mubr.f32.mxu0 0.0
    %668 = vmatmul.mubr.f32.gmra.mrb[0].mxu0 %v468
    %v669 = vpop.f32.mrb[0].mxu0
    %v670 = vadd.f32 0.0, %v669
    %v671 = vpop.f32.mrb[0].mxu0
    %672 = vmatprep.mubr.f32.mxu0 0.0
    %673 = vmatmul.mubr.f32.gmra.mrb[0].mxu0 %v471
    %v674 = vpop.f32.mrb[0].mxu0
    %v675 = vadd.f32 0.0, %v674
    %v676 = vpop.f32.mrb[0].mxu0
    %677 = vmatprep.mubr.f32.mxu0 0.0
    %678 = vmatmul.mubr.f32.gmra.mrb[0].mxu0 %v474
    %v679 = vpop.f32.mrb[0].mxu0
    %v680 = vadd.f32 0.0, %v679
    %v681 = vpop.f32.mrb[0].mxu0
    %682 = vmatprep.mubr.f32.mxu0 0.0
    %683 = vmatmul.mubr.f32.gmra.mrb[0].mxu0 %v477
    %v684 = vpop.f32.mrb[0].mxu0
    %v685 = vadd.f32 0.0, %v684
    %v686 = vpop.f32.mrb[0].mxu0
    %687 = vmatprep.mubr.f32.mxu0 0.0
    %688 = vmatmul.mubr.f32.gmra.mrb[0].mxu0 %v480
    %v689 = vpop.f32.mrb[0].mxu0
    %v690 = vadd.f32 0.0, %v689
    %v691 = vpop.f32.mrb[0].mxu0
    %692 = vmatprep.mubr.f32.mxu0 0.0
    %693 = vmatmul.mubr.f32.gmra.mrb[0].mxu0 %v483
    %v694 = vpop.f32.mrb[0].mxu0
    %v695 = vadd.f32 0.0, %v694
    %v696 = vpop.f32.mrb[0].mxu0
    %697 = vmatprep.mubr.f32.mxu0 0.0
    %698 = vmatmul.mubr.f32.gmra.mrb[0].mxu0 %v486
    %v699 = vpop.f32.mrb[0].mxu0
    %v700 = vadd.f32 0.0, %v699
    %v701 = vpop.f32.mrb[0].mxu0
    %702 = vmatprep.mubr.f32.mxu0 0.0
    %703 = vmatmul.mubr.f32.gmra.mrb[0].mxu0 %v489
    %v704 = vpop.f32.mrb[0].mxu0
    %v705 = vadd.f32 0.0, %v704
    %v706 = vpop.f32.mrb[0].mxu0
    %707 = vmatprep.mubr.f32.mxu0 0.0
    %708 = vmatmul.mubr.f32.gmra.mrb[0].mxu0 %v492
    %v709 = vpop.f32.mrb[0].mxu0
    %v710 = vadd.f32 0.0, %v709
    %v711 = vpop.f32.mrb[0].mxu0
    %712 = vmatprep.mubr.f32.mxu0 0.0
    %713 = vmatmul.mubr.f32.gmra.mrb[0].mxu0 %v495
    %v714 = vpop.f32.mrb[0].mxu0
    %v715 = vadd.f32 0.0, %v714
    %v716 = vpop.f32.mrb[0].mxu0
    %717 = vmatprep.mubr.f32.mxu0 0.0
    %718 = vmatmul.mubr.f32.gmra.mrb[0].mxu0 %v498
    %v719 = vpop.f32.mrb[0].mxu0
    %v720 = vadd.f32 0.0, %v719
    %v721 = vpop.f32.mrb[0].mxu0
    %722 = vmatprep.mubr.f32.mxu0 0.0
    %723 = vmatmul.mubr.f32.gmra.mrb[0].mxu0 %v501
    %v724 = vpop.f32.mrb[0].mxu0
    %v725 = vadd.f32 0.0, %v724
    %v726 = vpop.f32.mrb[0].mxu0
    %727 = vdwg.mxu0
    %v728 = vmul.f32 %v219, 0.95
    %v729 = vmul.f32 %v220, 0.95
    %v730 = vmul.f32 %v221, 0.95
    %v731 = vmul.f32 %v222, 0.95
    %v732 = vmul.f32 %v223, 0.95
    %v733 = vmul.f32 %v224, 0.95
    %v734 = vmul.f32 %v225, 0.95
    %v735 = vmul.f32 %v226, 0.95
    %v736 = vmul.f32 %v227, 0.95
    %v737 = vmul.f32 %v228, 0.95
    %v738 = vmul.f32 %v229, 0.95
    %v739 = vmul.f32 %v230, 0.95
    %v740 = vmul.f32 %v231, 0.95
    %v741 = vmul.f32 %v232, 0.95
    %v742 = vmul.f32 %v233, 0.95
    %v743 = vmul.f32 %v234, 0.95
    %v744 = vmul.f32 %v235, 0.95
    %v745 = vmul.f32 %v236, 0.95
    %v746 = vmul.f32 %v237, 0.95
    %v747 = vmul.f32 %v238, 0.95
    %v748 = vmul.f32 %v239, 0.95
    %v749 = vmul.f32 %v240, 0.95
    %v750 = vmul.f32 %v241, 0.95
    %v751 = vmul.f32 %v242, 0.95
    %v752 = vmul.f32 %v243, 0.95
    %v753 = vmul.f32 %v244, 0.95
    %v754 = vmul.f32 %v245, 0.95
    %v755 = vmul.f32 %v246, 0.95
    %v756 = vmul.f32 %v247, 0.95
    %v757 = vmul.f32 %v248, 0.95
    %v758 = vmul.f32 %v249, 0.95
    %v759 = vmul.f32 %v250, 0.95
    %v760 = vadd.f32 %v728, %v570
    %v761 = vadd.f32 %v729, %v575
    %v762 = vadd.f32 %v730, %v580
    %v763 = vadd.f32 %v731, %v585
    %v764 = vadd.f32 %v732, %v590
    %v765 = vadd.f32 %v733, %v595
    %v766 = vadd.f32 %v734, %v600
    %v767 = vadd.f32 %v735, %v605
    %v768 = vadd.f32 %v736, %v610
    %v769 = vadd.f32 %v737, %v615
    %v770 = vadd.f32 %v738, %v620
    %v771 = vadd.f32 %v739, %v625
    %v772 = vadd.f32 %v740, %v630
    %v773 = vadd.f32 %v741, %v635
    %v774 = vadd.f32 %v742, %v640
    %v775 = vadd.f32 %v743, %v645
    %v776 = vadd.f32 %v744, %v650
    %v777 = vadd.f32 %v745, %v655
    %v778 = vadd.f32 %v746, %v660
    %v779 = vadd.f32 %v747, %v665
    %v780 = vadd.f32 %v748, %v670
    %v781 = vadd.f32 %v749, %v675
    %v782 = vadd.f32 %v750, %v680
    %v783 = vadd.f32 %v751, %v685
    %v784 = vadd.f32 %v752, %v690
    %v785 = vadd.f32 %v753, %v695
    %v786 = vadd.f32 %v754, %v700
    %v787 = vadd.f32 %v755, %v705
    %v788 = vadd.f32 %v756, %v710
    %v789 = vadd.f32 %v757, %v715
    %v790 = vadd.f32 %v758, %v720
    %v791 = vadd.f32 %v759, %v725
    %v792 = vmax.f32 %v760, -4.0
    %v793 = vmax.f32 %v761, -4.0
    %v794 = vmax.f32 %v762, -4.0
    %v795 = vmax.f32 %v763, -4.0
    %v796 = vmax.f32 %v764, -4.0
    %v797 = vmax.f32 %v765, -4.0
    %v798 = vmax.f32 %v766, -4.0
    %v799 = vmax.f32 %v767, -4.0
    %v800 = vmax.f32 %v768, -4.0
    %v801 = vmax.f32 %v769, -4.0
    %v802 = vmax.f32 %v770, -4.0
    %v803 = vmax.f32 %v771, -4.0
    %v804 = vmax.f32 %v772, -4.0
    %v805 = vmax.f32 %v773, -4.0
    %v806 = vmax.f32 %v774, -4.0
    %v807 = vmax.f32 %v775, -4.0
    %v808 = vmax.f32 %v776, -4.0
    %v809 = vmax.f32 %v777, -4.0
    %v810 = vmax.f32 %v778, -4.0
    %v811 = vmax.f32 %v779, -4.0
    %v812 = vmax.f32 %v780, -4.0
    %v813 = vmax.f32 %v781, -4.0
    %v814 = vmax.f32 %v782, -4.0
    %v815 = vmax.f32 %v783, -4.0
    %v816 = vmax.f32 %v784, -4.0
    %v817 = vmax.f32 %v785, -4.0
    %v818 = vmax.f32 %v786, -4.0
    %v819 = vmax.f32 %v787, -4.0
    %v820 = vmax.f32 %v788, -4.0
    %v821 = vmax.f32 %v789, -4.0
    %v822 = vmax.f32 %v790, -4.0
    %v823 = vmax.f32 %v791, -4.0
    %v824 = vmin.f32 %v792, 4.0
    %v825 = vmin.f32 %v793, 4.0
    %v826 = vmin.f32 %v794, 4.0
    %v827 = vmin.f32 %v795, 4.0
    %v828 = vmin.f32 %v796, 4.0
    %v829 = vmin.f32 %v797, 4.0
    %v830 = vmin.f32 %v798, 4.0
    %v831 = vmin.f32 %v799, 4.0
    %v832 = vmin.f32 %v800, 4.0
    %v833 = vmin.f32 %v801, 4.0
    %v834 = vmin.f32 %v802, 4.0
    %v835 = vmin.f32 %v803, 4.0
    %v836 = vmin.f32 %v804, 4.0
    %v837 = vmin.f32 %v805, 4.0
    %v838 = vmin.f32 %v806, 4.0
    %v839 = vmin.f32 %v807, 4.0
    %v840 = vmin.f32 %v808, 4.0
    %v841 = vmin.f32 %v809, 4.0
    %v842 = vmin.f32 %v810, 4.0
    %v843 = vmin.f32 %v811, 4.0
    %v844 = vmin.f32 %v812, 4.0
    %v845 = vmin.f32 %v813, 4.0
    %v846 = vmin.f32 %v814, 4.0
    %v847 = vmin.f32 %v815, 4.0
    %v848 = vmin.f32 %v816, 4.0
    %v849 = vmin.f32 %v817, 4.0
    %v850 = vmin.f32 %v818, 4.0
    %v851 = vmin.f32 %v819, 4.0
    %v852 = vmin.f32 %v820, 4.0
    %v853 = vmin.f32 %v821, 4.0
    %v854 = vmin.f32 %v822, 4.0
    %v855 = vmin.f32 %v823, 4.0
    %856 = vst [vmem:[%s15] sm:$0xff] %v824
    %857 = vst [vmem:[%s15 + $0x8] sm:$0xff] %v825
    %858 = vst [vmem:[%s15 + $0x10] sm:$0xff] %v826
    %859 = vst [vmem:[%s15 + $0x18] sm:$0xff] %v827
    %860 = vst [vmem:[%s15 + $0x20] sm:$0xff] %v828
    %861 = vst [vmem:[%s15 + $0x28] sm:$0xff] %v829
    %862 = vst [vmem:[%s15 + $0x30] sm:$0xff] %v830
    %863 = vst [vmem:[%s15 + $0x38] sm:$0xff] %v831
    %864 = vst [vmem:[%s15 + $0x40] sm:$0xff] %v832
    %865 = vst [vmem:[%s15 + $0x48] sm:$0xff] %v833
    %866 = vst [vmem:[%s15 + $0x50] sm:$0xff] %v834
    %867 = vst [vmem:[%s15 + $0x58] sm:$0xff] %v835
    %868 = vst [vmem:[%s15 + $0x60] sm:$0xff] %v836
    %869 = vst [vmem:[%s15 + $0x68] sm:$0xff] %v837
    %870 = vst [vmem:[%s15 + $0x70] sm:$0xff] %v838
    %871 = vst [vmem:[%s15 + $0x78] sm:$0xff] %v839
    %872 = vst [vmem:[%s15 + $0x80] sm:$0xff] %v840
    %873 = vst [vmem:[%s15 + $0x88] sm:$0xff] %v841
    %874 = vst [vmem:[%s15 + $0x90] sm:$0xff] %v842
    %875 = vst [vmem:[%s15 + $0x98] sm:$0xff] %v843
    %876 = vst [vmem:[%s15 + $0xa0] sm:$0xff] %v844
    %877 = vst [vmem:[%s15 + $0xa8] sm:$0xff] %v845
    %878 = vst [vmem:[%s15 + $0xb0] sm:$0xff] %v846
    %879 = vst [vmem:[%s15 + $0xb8] sm:$0xff] %v847
    %880 = vst [vmem:[%s15 + $0xc0] sm:$0xff] %v848
    %881 = vst [vmem:[%s15 + $0xc8] sm:$0xff] %v849
    %882 = vst [vmem:[%s15 + $0xd0] sm:$0xff] %v850
    %883 = vst [vmem:[%s15 + $0xd8] sm:$0xff] %v851
    %884 = vst [vmem:[%s15 + $0xe0] sm:$0xff] %v852
    %885 = vst [vmem:[%s15 + $0xe8] sm:$0xff] %v853
    %886 = vst [vmem:[%s15 + $0xf0] sm:$0xff] %v854
    %887 = vst [vmem:[%s15 + $0xf8] sm:$0xff] %v855
    %v888 = vmul.f32 %v330, 0.5
    %v889 = vadd.f32 %v888, 0.0
    %vm890 = vcmp.ge.f32.partialorder %v889, 1.0
    %v891 = vsel %vm890, 1, 0
    %v892 = vcvt.s32.f32 %v891
    %v893 = vsub.f32 1.0, %v892
    %v894 = vmul.f32 %v889, %v893
    %v895 = vadd.f32 %v892, 0.0
    %v896 = vstv %s62
    %v897 = vmul.f32 %v896, %v203
    %v898 = vmul.f32 %v896, %v204
    %v899 = vmul.f32 %v896, %v205
    %v900 = vmul.f32 %v896, %v206
    %v901 = vmul.f32 %v896, %v207
    %v902 = vmul.f32 %v896, %v208
    %v903 = vmul.f32 %v896, %v209
    %v904 = vmul.f32 %v896, %v210
    %v905 = vmul.f32 %v896, %v211
    %v906 = vmul.f32 %v896, %v212
    %v907 = vmul.f32 %v896, %v213
    %v908 = vmul.f32 %v896, %v214
    %v909 = vmul.f32 %v896, %v215
    %v910 = vmul.f32 %v896, %v216
    %v911 = vmul.f32 %v896, %v217
    %v912 = vmul.f32 %v896, %v218
    %v913 = vadd.f32 %v187, %v897
    %v914 = vadd.f32 %v188, %v898
    %v915 = vadd.f32 %v189, %v899
    %v916 = vadd.f32 %v190, %v900
    %v917 = vadd.f32 %v191, %v901
    %v918 = vadd.f32 %v192, %v902
    %v919 = vadd.f32 %v193, %v903
    %v920 = vadd.f32 %v194, %v904
    %v921 = vadd.f32 %v195, %v905
    %v922 = vadd.f32 %v196, %v906
    %v923 = vadd.f32 %v197, %v907
    %v924 = vadd.f32 %v198, %v908
    %v925 = vadd.f32 %v199, %v909
    %v926 = vadd.f32 %v200, %v910
    %v927 = vadd.f32 %v201, %v911
    %v928 = vadd.f32 %v202, %v912
    %v930 = vlaneseq
    %v931 = vshrl.u32 %v930, 7
    %v932 = vsub.s32 0, %v931
    %v933 = vrot.slane %v182, %v932
    %935 = vmatprep.subr.mxu0 0.0
    %936 = vmatpush1.msra.mxu0 %v913
    %937 = vmatprep.subr.mxu0 0.0
    %938 = vmatpush1.msra.mxu0 %v914
    %939 = vmatprep.subr.mxu0 0.0
    %940 = vmatpush1.msra.mxu0 %v915
    %941 = vmatprep.subr.mxu0 0.0
    %942 = vmatpush1.msra.mxu0 %v916
    %943 = vmatprep.subr.mxu0 0.0
    %944 = vmatpush1.msra.mxu0 %v917
    %945 = vmatprep.subr.mxu0 0.0
    %946 = vmatpush1.msra.mxu0 %v918
    %947 = vmatprep.subr.mxu0 0.0
    %948 = vmatpush1.msra.mxu0 %v919
    %949 = vmatprep.subr.mxu0 0.0
    %950 = vmatpush1.msra.mxu0 %v920
    %951 = vmatprep.subr.mxu0 0.0
    %952 = vmatpush1.msra.mxu0 %v921
    %953 = vmatprep.subr.mxu0 0.0
    %954 = vmatpush1.msra.mxu0 %v922
    %955 = vmatprep.subr.mxu0 0.0
    %956 = vmatpush1.msra.mxu0 %v923
    %957 = vmatprep.subr.mxu0 0.0
    %958 = vmatpush1.msra.mxu0 %v924
    %959 = vmatprep.subr.mxu0 0.0
    %960 = vmatpush1.msra.mxu0 %v925
    %961 = vmatprep.subr.mxu0 0.0
    %962 = vmatpush1.msra.mxu0 %v926
    %963 = vmatprep.subr.mxu0 0.0
    %964 = vmatpush1.msra.mxu0 %v927
    %965 = vmatprep.subr.mxu0 0.0
    %966 = vmatpush1.msra.mxu0 %v928
    %967 = vmatprep.subr.mxu0 0.0
    %968 = vmatpush1.msra.mxu0 0.0
    %969 = vmatprep.subr.mxu0 0.0
    %970 = vmatpush1.msra.mxu0 0.0
    %971 = vmatprep.subr.mxu0 0.0
    %972 = vmatpush1.msra.mxu0 0.0
    %973 = vmatprep.subr.mxu0 0.0
    %974 = vmatpush1.msra.mxu0 0.0
    %975 = vmatprep.subr.mxu0 0.0
    %976 = vmatpush1.msra.mxu0 0.0
    %977 = vmatprep.subr.mxu0 0.0
    %978 = vmatpush1.msra.mxu0 0.0
    %979 = vmatprep.subr.mxu0 0.0
    %980 = vmatpush1.msra.mxu0 0.0
    %981 = vmatprep.subr.mxu0 0.0
    %982 = vmatpush1.msra.mxu0 0.0
    %983 = vmatprep.subr.mxu0 0.0
    %984 = vmatpush1.msra.mxu0 0.0
    %985 = vmatprep.subr.mxu0 0.0
    %986 = vmatpush1.msra.mxu0 0.0
    %987 = vmatprep.subr.mxu0 0.0
    %988 = vmatpush1.msra.mxu0 0.0
    %989 = vmatprep.subr.mxu0 0.0
    %990 = vmatpush1.msra.mxu0 0.0
    %991 = vmatprep.subr.mxu0 0.0
    %992 = vmatpush1.msra.mxu0 0.0
    %993 = vmatprep.subr.mxu0 0.0
    %994 = vmatpush1.msra.mxu0 0.0
    %995 = vmatprep.subr.mxu0 0.0
    %996 = vmatpush1.msra.mxu0 0.0
    %997 = vmatprep.subr.mxu0 0.0
    %998 = vmatpush1.msra.mxu0 0.0
    %999 = vmatprep.mubr.f32.mxu0 0.0
    %1000 = vmatmul.mubr.f32.gmra.mrb[0].mxu0 %v892
    %v1001 = vpop.f32.mrb[0].mxu0
    %v1002 = vadd.f32 %v933, %v1001
    %v1003 = vpop.f32.mrb[0].mxu0
    %1004 = vdwg.mxu0
    %v1005 = vmul.f32 %v1002, 2.857143
    %v1007 = vlaneseq
    %v1008 = vshrl.u32 %v1007, 7
    %v1009 = vsub.s32 0, %v1008
    %v1010 = vrot.slane %v184, %v1009
    %v1012 = vsub.f32 %v1005, %v1010
    %v1013 = vtanh.pop %v1012
    %v1015 = vlaneseq
    %v1016 = vshrl.u32 %v1015, 7
    %v1017 = vsub.s32 0, %v1016
    %v1018 = vrot.slane %v186, %v1017
    %v1020 = vmul.f32 %v892, %v1018
    %1021 = vxpose.xlu0.b32.start [1/16] %v1020, 128
    %1022 = vxpose.xlu0.b32.cont [2/16] 0.0, 128
    %1023 = vxpose.xlu0.b32.cont [3/16] 0.0, 128
    %1024 = vxpose.xlu0.b32.cont [4/16] 0.0, 128
    %1025 = vxpose.xlu0.b32.cont [5/16] 0.0, 128
    %1026 = vxpose.xlu0.b32.cont [6/16] 0.0, 128
    %1027 = vxpose.xlu0.b32.cont [7/16] 0.0, 128
    %1028 = vxpose.xlu0.b32.cont [8/16] 0.0, 128
    %1029 = vxpose.xlu0.b32.cont [9/16] 0.0, 128
    %1030 = vxpose.xlu0.b32.cont [10/16] 0.0, 128
    %1031 = vxpose.xlu0.b32.cont [11/16] 0.0, 128
    %1032 = vxpose.xlu0.b32.cont [12/16] 0.0, 128
    %1033 = vxpose.xlu0.b32.cont [13/16] 0.0, 128
    %1034 = vxpose.xlu0.b32.cont [14/16] 0.0, 128
    %1035 = vxpose.xlu0.b32.cont [15/16] 0.0, 128
    %1036 = vxpose.xlu0.b32.end [16/16] 0.0, 128
    %v1037 = vpop.trf.xlu0
    %v1038 = vpop.trf.xlu0
    %v1039 = vpop.trf.xlu0
    %v1040 = vpop.trf.xlu0
    %v1041 = vpop.trf.xlu0
    %v1042 = vpop.trf.xlu0
    %v1043 = vpop.trf.xlu0
    %v1044 = vpop.trf.xlu0
    %v1045 = vpop.trf.xlu0
    %v1046 = vpop.trf.xlu0
    %v1047 = vpop.trf.xlu0
    %v1048 = vpop.trf.xlu0
    %v1049 = vpop.trf.xlu0
    %v1050 = vpop.trf.xlu0
    %v1051 = vpop.trf.xlu0
    %v1052 = vpop.trf.xlu0
    %v1054 = vsel %vm406, %v1037, 0
    %v1057 = vsel %vm406, %v1038, 0
    %v1060 = vsel %vm406, %v1039, 0
    %v1063 = vsel %vm406, %v1040, 0
    %v1066 = vsel %vm406, %v1041, 0
    %v1069 = vsel %vm406, %v1042, 0
    %v1072 = vsel %vm406, %v1043, 0
    %v1075 = vsel %vm406, %v1044, 0
    %v1078 = vsel %vm406, %v1045, 0
    %v1081 = vsel %vm406, %v1046, 0
    %v1084 = vsel %vm406, %v1047, 0
    %v1087 = vsel %vm406, %v1048, 0
    %v1090 = vsel %vm406, %v1049, 0
    %v1093 = vsel %vm406, %v1050, 0
    %v1096 = vsel %vm406, %v1051, 0
    %v1099 = vsel %vm406, %v1052, 0
    %1101 = vmatprep.subr.mxu0 0.0
    %1102 = vmatpush1.msra.mxu0 %v1013
    %1103 = vmatprep.subr.mxu0 0.0
    %1104 = vmatpush1.msra.mxu0 0.0
    %1105 = vmatprep.subr.mxu0 0.0
    %1106 = vmatpush1.msra.mxu0 0.0
    %1107 = vmatprep.subr.mxu0 0.0
    %1108 = vmatpush1.msra.mxu0 0.0
    %1109 = vmatprep.subr.mxu0 0.0
    %1110 = vmatpush1.msra.mxu0 0.0
    %1111 = vmatprep.subr.mxu0 0.0
    %1112 = vmatpush1.msra.mxu0 0.0
    %1113 = vmatprep.subr.mxu0 0.0
    %1114 = vmatpush1.msra.mxu0 0.0
    %1115 = vmatprep.subr.mxu0 0.0
    %1116 = vmatpush1.msra.mxu0 0.0
    %1117 = vmatprep.subr.mxu0 0.0
    %1118 = vmatpush1.msra.mxu0 0.0
    %1119 = vmatprep.subr.mxu0 0.0
    %1120 = vmatpush1.msra.mxu0 0.0
    %1121 = vmatprep.subr.mxu0 0.0
    %1122 = vmatpush1.msra.mxu0 0.0
    %1123 = vmatprep.subr.mxu0 0.0
    %1124 = vmatpush1.msra.mxu0 0.0
    %1125 = vmatprep.subr.mxu0 0.0
    %1126 = vmatpush1.msra.mxu0 0.0
    %1127 = vmatprep.subr.mxu0 0.0
    %1128 = vmatpush1.msra.mxu0 0.0
    %1129 = vmatprep.subr.mxu0 0.0
    %1130 = vmatpush1.msra.mxu0 0.0
    %1131 = vmatprep.subr.mxu0 0.0
    %1132 = vmatpush1.msra.mxu0 0.0
    %1133 = vmatprep.subr.mxu0 0.0
    %1134 = vmatpush1.msra.mxu0 0.0
    %1135 = vmatprep.subr.mxu0 0.0
    %1136 = vmatpush1.msra.mxu0 0.0
    %1137 = vmatprep.subr.mxu0 0.0
    %1138 = vmatpush1.msra.mxu0 0.0
    %1139 = vmatprep.subr.mxu0 0.0
    %1140 = vmatpush1.msra.mxu0 0.0
    %1141 = vmatprep.subr.mxu0 0.0
    %1142 = vmatpush1.msra.mxu0 0.0
    %1143 = vmatprep.subr.mxu0 0.0
    %1144 = vmatpush1.msra.mxu0 0.0
    %1145 = vmatprep.subr.mxu0 0.0
    %1146 = vmatpush1.msra.mxu0 0.0
    %1147 = vmatprep.subr.mxu0 0.0
    %1148 = vmatpush1.msra.mxu0 0.0
    %1149 = vmatprep.subr.mxu0 0.0
    %1150 = vmatpush1.msra.mxu0 0.0
    %1151 = vmatprep.subr.mxu0 0.0
    %1152 = vmatpush1.msra.mxu0 0.0
    %1153 = vmatprep.subr.mxu0 0.0
    %1154 = vmatpush1.msra.mxu0 0.0
    %1155 = vmatprep.subr.mxu0 0.0
    %1156 = vmatpush1.msra.mxu0 0.0
    %1157 = vmatprep.subr.mxu0 0.0
    %1158 = vmatpush1.msra.mxu0 0.0
    %1159 = vmatprep.subr.mxu0 0.0
    %1160 = vmatpush1.msra.mxu0 0.0
    %1161 = vmatprep.subr.mxu0 0.0
    %1162 = vmatpush1.msra.mxu0 0.0
    %1163 = vmatprep.subr.mxu0 0.0
    %1164 = vmatpush1.msra.mxu0 0.0
    %1165 = vmatprep.mubr.f32.mxu0 0.0
    %1166 = vmatmul.mubr.f32.gmra.mrb[0].mxu0 %v1054
    %v1167 = vpop.f32.mrb[0].mxu0
    %v1168 = vadd.f32 0.0, %v1167
    %v1169 = vpop.f32.mrb[0].mxu0
    %1170 = vmatprep.mubr.f32.mxu0 0.0
    %1171 = vmatmul.mubr.f32.gmra.mrb[0].mxu0 %v1057
    %v1172 = vpop.f32.mrb[0].mxu0
    %v1173 = vadd.f32 0.0, %v1172
    %v1174 = vpop.f32.mrb[0].mxu0
    %1175 = vmatprep.mubr.f32.mxu0 0.0
    %1176 = vmatmul.mubr.f32.gmra.mrb[0].mxu0 %v1060
    %v1177 = vpop.f32.mrb[0].mxu0
    %v1178 = vadd.f32 0.0, %v1177
    %v1179 = vpop.f32.mrb[0].mxu0
    %1180 = vmatprep.mubr.f32.mxu0 0.0
    %1181 = vmatmul.mubr.f32.gmra.mrb[0].mxu0 %v1063
    %v1182 = vpop.f32.mrb[0].mxu0
    %v1183 = vadd.f32 0.0, %v1182
    %v1184 = vpop.f32.mrb[0].mxu0
    %1185 = vmatprep.mubr.f32.mxu0 0.0
    %1186 = vmatmul.mubr.f32.gmra.mrb[0].mxu0 %v1066
    %v1187 = vpop.f32.mrb[0].mxu0
    %v1188 = vadd.f32 0.0, %v1187
    %v1189 = vpop.f32.mrb[0].mxu0
    %1190 = vmatprep.mubr.f32.mxu0 0.0
    %1191 = vmatmul.mubr.f32.gmra.mrb[0].mxu0 %v1069
    %v1192 = vpop.f32.mrb[0].mxu0
    %v1193 = vadd.f32 0.0, %v1192
    %v1194 = vpop.f32.mrb[0].mxu0
    %1195 = vmatprep.mubr.f32.mxu0 0.0
    %1196 = vmatmul.mubr.f32.gmra.mrb[0].mxu0 %v1072
    %v1197 = vpop.f32.mrb[0].mxu0
    %v1198 = vadd.f32 0.0, %v1197
    %v1199 = vpop.f32.mrb[0].mxu0
    %1200 = vmatprep.mubr.f32.mxu0 0.0
    %1201 = vmatmul.mubr.f32.gmra.mrb[0].mxu0 %v1075
    %v1202 = vpop.f32.mrb[0].mxu0
    %v1203 = vadd.f32 0.0, %v1202
    %v1204 = vpop.f32.mrb[0].mxu0
    %1205 = vmatprep.mubr.f32.mxu0 0.0
    %1206 = vmatmul.mubr.f32.gmra.mrb[0].mxu0 %v1078
    %v1207 = vpop.f32.mrb[0].mxu0
    %v1208 = vadd.f32 0.0, %v1207
    %v1209 = vpop.f32.mrb[0].mxu0
    %1210 = vmatprep.mubr.f32.mxu0 0.0
    %1211 = vmatmul.mubr.f32.gmra.mrb[0].mxu0 %v1081
    %v1212 = vpop.f32.mrb[0].mxu0
    %v1213 = vadd.f32 0.0, %v1212
    %v1214 = vpop.f32.mrb[0].mxu0
    %1215 = vmatprep.mubr.f32.mxu0 0.0
    %1216 = vmatmul.mubr.f32.gmra.mrb[0].mxu0 %v1084
    %v1217 = vpop.f32.mrb[0].mxu0
    %v1218 = vadd.f32 0.0, %v1217
    %v1219 = vpop.f32.mrb[0].mxu0
    %1220 = vmatprep.mubr.f32.mxu0 0.0
    %1221 = vmatmul.mubr.f32.gmra.mrb[0].mxu0 %v1087
    %v1222 = vpop.f32.mrb[0].mxu0
    %v1223 = vadd.f32 0.0, %v1222
    %v1224 = vpop.f32.mrb[0].mxu0
    %1225 = vmatprep.mubr.f32.mxu0 0.0
    %1226 = vmatmul.mubr.f32.gmra.mrb[0].mxu0 %v1090
    %v1227 = vpop.f32.mrb[0].mxu0
    %v1228 = vadd.f32 0.0, %v1227
    %v1229 = vpop.f32.mrb[0].mxu0
    %1230 = vmatprep.mubr.f32.mxu0 0.0
    %1231 = vmatmul.mubr.f32.gmra.mrb[0].mxu0 %v1093
    %v1232 = vpop.f32.mrb[0].mxu0
    %v1233 = vadd.f32 0.0, %v1232
    %v1234 = vpop.f32.mrb[0].mxu0
    %1235 = vmatprep.mubr.f32.mxu0 0.0
    %1236 = vmatmul.mubr.f32.gmra.mrb[0].mxu0 %v1096
    %v1237 = vpop.f32.mrb[0].mxu0
    %v1238 = vadd.f32 0.0, %v1237
    %v1239 = vpop.f32.mrb[0].mxu0
    %1240 = vmatprep.mubr.f32.mxu0 0.0
    %1241 = vmatmul.mubr.f32.gmra.mrb[0].mxu0 %v1099
    %v1242 = vpop.f32.mrb[0].mxu0
    %v1243 = vadd.f32 0.0, %v1242
    %v1244 = vpop.f32.mrb[0].mxu0
    %1245 = vdwg.mxu0
    %v1246 = vmul.f32 %v203, 0.95
    %v1247 = vmul.f32 %v204, 0.95
    %v1248 = vmul.f32 %v205, 0.95
    %v1249 = vmul.f32 %v206, 0.95
    %v1250 = vmul.f32 %v207, 0.95
    %v1251 = vmul.f32 %v208, 0.95
    %v1252 = vmul.f32 %v209, 0.95
    %v1253 = vmul.f32 %v210, 0.95
    %v1254 = vmul.f32 %v211, 0.95
    %v1255 = vmul.f32 %v212, 0.95
    %v1256 = vmul.f32 %v213, 0.95
    %v1257 = vmul.f32 %v214, 0.95
    %v1258 = vmul.f32 %v215, 0.95
    %v1259 = vmul.f32 %v216, 0.95
    %v1260 = vmul.f32 %v217, 0.95
    %v1261 = vmul.f32 %v218, 0.95
    %v1262 = vadd.f32 %v1246, %v1168
    %v1263 = vadd.f32 %v1247, %v1173
    %v1264 = vadd.f32 %v1248, %v1178
    %v1265 = vadd.f32 %v1249, %v1183
    %v1266 = vadd.f32 %v1250, %v1188
    %v1267 = vadd.f32 %v1251, %v1193
    %v1268 = vadd.f32 %v1252, %v1198
    %v1269 = vadd.f32 %v1253, %v1203
    %v1270 = vadd.f32 %v1254, %v1208
    %v1271 = vadd.f32 %v1255, %v1213
    %v1272 = vadd.f32 %v1256, %v1218
    %v1273 = vadd.f32 %v1257, %v1223
    %v1274 = vadd.f32 %v1258, %v1228
    %v1275 = vadd.f32 %v1259, %v1233
    %v1276 = vadd.f32 %v1260, %v1238
    %v1277 = vadd.f32 %v1261, %v1243
    %v1278 = vmax.f32 %v1262, -4.0
    %v1279 = vmax.f32 %v1263, -4.0
    %v1280 = vmax.f32 %v1264, -4.0
    %v1281 = vmax.f32 %v1265, -4.0
    %v1282 = vmax.f32 %v1266, -4.0
    %v1283 = vmax.f32 %v1267, -4.0
    %v1284 = vmax.f32 %v1268, -4.0
    %v1285 = vmax.f32 %v1269, -4.0
    %v1286 = vmax.f32 %v1270, -4.0
    %v1287 = vmax.f32 %v1271, -4.0
    %v1288 = vmax.f32 %v1272, -4.0
    %v1289 = vmax.f32 %v1273, -4.0
    %v1290 = vmax.f32 %v1274, -4.0
    %v1291 = vmax.f32 %v1275, -4.0
    %v1292 = vmax.f32 %v1276, -4.0
    %v1293 = vmax.f32 %v1277, -4.0
    %v1294 = vmin.f32 %v1278, 4.0
    %v1295 = vmin.f32 %v1279, 4.0
    %v1296 = vmin.f32 %v1280, 4.0
    %v1297 = vmin.f32 %v1281, 4.0
    %v1298 = vmin.f32 %v1282, 4.0
    %v1299 = vmin.f32 %v1283, 4.0
    %v1300 = vmin.f32 %v1284, 4.0
    %v1301 = vmin.f32 %v1285, 4.0
    %v1302 = vmin.f32 %v1286, 4.0
    %v1303 = vmin.f32 %v1287, 4.0
    %v1304 = vmin.f32 %v1288, 4.0
    %v1305 = vmin.f32 %v1289, 4.0
    %v1306 = vmin.f32 %v1290, 4.0
    %v1307 = vmin.f32 %v1291, 4.0
    %v1308 = vmin.f32 %v1292, 4.0
    %v1309 = vmin.f32 %v1293, 4.0
    %v1310 = vmul.f32 %v1002, 0.5
    %v1311 = vadd.f32 %v1310, 0.0
    %vm1312 = vcmp.ge.f32.partialorder %v1311, 1.0
    %v1313 = vsel %vm1312, 1, 0
    %v1314 = vcvt.s32.f32 %v1313
    %v1315 = vsub.f32 1.0, %v1314
    %v1316 = vmul.f32 %v1311, %v1315
    %v1317 = vadd.f32 %v1314, 0.0
    %v1318 = vld [vmem:[%s15] sm:$0xff]
    %v1319 = vld [vmem:[%s15 + $0x8] sm:$0xff]
    %v1320 = vld [vmem:[%s15 + $0x10] sm:$0xff]
    %v1321 = vld [vmem:[%s15 + $0x18] sm:$0xff]
    %v1322 = vld [vmem:[%s15 + $0x20] sm:$0xff]
    %v1323 = vld [vmem:[%s15 + $0x28] sm:$0xff]
    %v1324 = vld [vmem:[%s15 + $0x30] sm:$0xff]
    %v1325 = vld [vmem:[%s15 + $0x38] sm:$0xff]
    %v1326 = vld [vmem:[%s15 + $0x40] sm:$0xff]
    %v1327 = vld [vmem:[%s15 + $0x48] sm:$0xff]
    %v1328 = vld [vmem:[%s15 + $0x50] sm:$0xff]
    %v1329 = vld [vmem:[%s15 + $0x58] sm:$0xff]
    %v1330 = vld [vmem:[%s15 + $0x60] sm:$0xff]
    %v1331 = vld [vmem:[%s15 + $0x68] sm:$0xff]
    %v1332 = vld [vmem:[%s15 + $0x70] sm:$0xff]
    %v1333 = vld [vmem:[%s15 + $0x78] sm:$0xff]
    %v1334 = vld [vmem:[%s15 + $0x80] sm:$0xff]
    %v1335 = vld [vmem:[%s15 + $0x88] sm:$0xff]
    %v1336 = vld [vmem:[%s15 + $0x90] sm:$0xff]
    %v1337 = vld [vmem:[%s15 + $0x98] sm:$0xff]
    %v1338 = vld [vmem:[%s15 + $0xa0] sm:$0xff]
    %v1339 = vld [vmem:[%s15 + $0xa8] sm:$0xff]
    %v1340 = vld [vmem:[%s15 + $0xb0] sm:$0xff]
    %v1341 = vld [vmem:[%s15 + $0xb8] sm:$0xff]
    %v1342 = vld [vmem:[%s15 + $0xc0] sm:$0xff]
    %v1343 = vld [vmem:[%s15 + $0xc8] sm:$0xff]
    %v1344 = vld [vmem:[%s15 + $0xd0] sm:$0xff]
    %v1345 = vld [vmem:[%s15 + $0xd8] sm:$0xff]
    %v1346 = vld [vmem:[%s15 + $0xe0] sm:$0xff]
    %v1347 = vld [vmem:[%s15 + $0xe8] sm:$0xff]
    %v1348 = vld [vmem:[%s15 + $0xf0] sm:$0xff]
    %v1349 = vld [vmem:[%s15 + $0xf8] sm:$0xff]
    %1350 = vmatprep.subr.mxu0 0.0
    %1351 = vmatpush1.msra.mxu0 %v1318
    %1352 = vmatprep.subr.mxu0 0.0
    %1353 = vmatpush1.msra.mxu0 %v1319
    %1354 = vmatprep.subr.mxu0 0.0
    %1355 = vmatpush1.msra.mxu0 %v1320
    %1356 = vmatprep.subr.mxu0 0.0
    %1357 = vmatpush1.msra.mxu0 %v1321
    %1358 = vmatprep.subr.mxu0 0.0
    %1359 = vmatpush1.msra.mxu0 %v1322
    %1360 = vmatprep.subr.mxu0 0.0
    %1361 = vmatpush1.msra.mxu0 %v1323
    %1362 = vmatprep.subr.mxu0 0.0
    %1363 = vmatpush1.msra.mxu0 %v1324
    %1364 = vmatprep.subr.mxu0 0.0
    %1365 = vmatpush1.msra.mxu0 %v1325
    %1366 = vmatprep.subr.mxu0 0.0
    %1367 = vmatpush1.msra.mxu0 %v1326
    %1368 = vmatprep.subr.mxu0 0.0
    %1369 = vmatpush1.msra.mxu0 %v1327
    %1370 = vmatprep.subr.mxu0 0.0
    %1371 = vmatpush1.msra.mxu0 %v1328
    %1372 = vmatprep.subr.mxu0 0.0
    %1373 = vmatpush1.msra.mxu0 %v1329
    %1374 = vmatprep.subr.mxu0 0.0
    %1375 = vmatpush1.msra.mxu0 %v1330
    %1376 = vmatprep.subr.mxu0 0.0
    %1377 = vmatpush1.msra.mxu0 %v1331
    %1378 = vmatprep.subr.mxu0 0.0
    %1379 = vmatpush1.msra.mxu0 %v1332
    %1380 = vmatprep.subr.mxu0 0.0
    %1381 = vmatpush1.msra.mxu0 %v1333
    %1382 = vmatprep.subr.mxu0 0.0
    %1383 = vmatpush1.msra.mxu0 %v1334
    %1384 = vmatprep.subr.mxu0 0.0
    %1385 = vmatpush1.msra.mxu0 %v1335
    %1386 = vmatprep.subr.mxu0 0.0
    %1387 = vmatpush1.msra.mxu0 %v1336
    %1388 = vmatprep.subr.mxu0 0.0
    %1389 = vmatpush1.msra.mxu0 %v1337
    %1390 = vmatprep.subr.mxu0 0.0
    %1391 = vmatpush1.msra.mxu0 %v1338
    %1392 = vmatprep.subr.mxu0 0.0
    %1393 = vmatpush1.msra.mxu0 %v1339
    %1394 = vmatprep.subr.mxu0 0.0
    %1395 = vmatpush1.msra.mxu0 %v1340
    %1396 = vmatprep.subr.mxu0 0.0
    %1397 = vmatpush1.msra.mxu0 %v1341
    %1398 = vmatprep.subr.mxu0 0.0
    %1399 = vmatpush1.msra.mxu0 %v1342
    %1400 = vmatprep.subr.mxu0 0.0
    %1401 = vmatpush1.msra.mxu0 %v1343
    %1402 = vmatprep.subr.mxu0 0.0
    %1403 = vmatpush1.msra.mxu0 %v1344
    %1404 = vmatprep.subr.mxu0 0.0
    %1405 = vmatpush1.msra.mxu0 %v1345
    %1406 = vmatprep.subr.mxu0 0.0
    %1407 = vmatpush1.msra.mxu0 %v1346
    %1408 = vmatprep.subr.mxu0 0.0
    %1409 = vmatpush1.msra.mxu0 %v1347
    %1410 = vmatprep.subr.mxu0 0.0
    %1411 = vmatpush1.msra.mxu0 %v1348
    %1412 = vmatprep.subr.mxu0 0.0
    %1413 = vmatpush1.msra.mxu0 %v1349
    %1414 = vmatprep.mubr.f32.mxu0 %v64
    %1415 = vmatmul.mubr.f32.gmra.mrb[0].mxu0 %v63
    %v1416 = vpop.f32.mrb[0].mxu0
    %v1417 = vadd.f32 0.0, %v1416
    %v1418 = vpop.f32.mrb[0].mxu0
    %1419 = vdwg.mxu0
    %v1420 = vmul.f32 %v164, 0.9753099
    %v1421 = vadd.f32 %v1420, %v325
    %s1422 = smul.f32 %s61, 0.9753099
    %v1423 = vstv %s1422
    %v1424 = vmul.f32 %v1423, %v1417
    %v1425 = vadd.f32 %v1421, %v1424
    %v1426 = vmul.f32 %v1425, 2.857143
    %v1427 = vsub.f32 %v1426, %v336
    %v1428 = vtanh.pop %v1427
    %v1429 = vmul.f32 %v179, 0.12191374
    %v1430 = vmul.f32 %v180, 0.12191374
    %1431 = vxpose.xlu0.b32.start [1/16] %v1429, 128
    %1432 = vxpose.xlu0.b32.cont [2/16] 0.0, 128
    %1433 = vxpose.xlu0.b32.cont [3/16] 0.0, 128
    %1434 = vxpose.xlu0.b32.cont [4/16] 0.0, 128
    %1435 = vxpose.xlu0.b32.cont [5/16] 0.0, 128
    %1436 = vxpose.xlu0.b32.cont [6/16] 0.0, 128
    %1437 = vxpose.xlu0.b32.cont [7/16] 0.0, 128
    %1438 = vxpose.xlu0.b32.cont [8/16] 0.0, 128
    %1439 = vxpose.xlu0.b32.cont [9/16] 0.0, 128
    %1440 = vxpose.xlu0.b32.cont [10/16] 0.0, 128
    %1441 = vxpose.xlu0.b32.cont [11/16] 0.0, 128
    %1442 = vxpose.xlu0.b32.cont [12/16] 0.0, 128
    %1443 = vxpose.xlu0.b32.cont [13/16] 0.0, 128
    %1444 = vxpose.xlu0.b32.cont [14/16] 0.0, 128
    %1445 = vxpose.xlu0.b32.cont [15/16] 0.0, 128
    %1446 = vxpose.xlu0.b32.end [16/16] 0.0, 128
    %v1447 = vpop.trf.xlu0
    %v1448 = vpop.trf.xlu0
    %v1449 = vpop.trf.xlu0
    %v1450 = vpop.trf.xlu0
    %v1451 = vpop.trf.xlu0
    %v1452 = vpop.trf.xlu0
    %v1453 = vpop.trf.xlu0
    %v1454 = vpop.trf.xlu0
    %v1455 = vpop.trf.xlu0
    %v1456 = vpop.trf.xlu0
    %v1457 = vpop.trf.xlu0
    %v1458 = vpop.trf.xlu0
    %v1459 = vpop.trf.xlu0
    %v1460 = vpop.trf.xlu0
    %v1461 = vpop.trf.xlu0
    %v1462 = vpop.trf.xlu0
    %1463 = vxpose.xlu0.b32.start [1/16] %v1430, 128
    %1464 = vxpose.xlu0.b32.cont [2/16] 0.0, 128
    %1465 = vxpose.xlu0.b32.cont [3/16] 0.0, 128
    %1466 = vxpose.xlu0.b32.cont [4/16] 0.0, 128
    %1467 = vxpose.xlu0.b32.cont [5/16] 0.0, 128
    %1468 = vxpose.xlu0.b32.cont [6/16] 0.0, 128
    %1469 = vxpose.xlu0.b32.cont [7/16] 0.0, 128
    %1470 = vxpose.xlu0.b32.cont [8/16] 0.0, 128
    %1471 = vxpose.xlu0.b32.cont [9/16] 0.0, 128
    %1472 = vxpose.xlu0.b32.cont [10/16] 0.0, 128
    %1473 = vxpose.xlu0.b32.cont [11/16] 0.0, 128
    %1474 = vxpose.xlu0.b32.cont [12/16] 0.0, 128
    %1475 = vxpose.xlu0.b32.cont [13/16] 0.0, 128
    %1476 = vxpose.xlu0.b32.cont [14/16] 0.0, 128
    %1477 = vxpose.xlu0.b32.cont [15/16] 0.0, 128
    %1478 = vxpose.xlu0.b32.end [16/16] 0.0, 128
    %v1479 = vpop.trf.xlu0
    %v1480 = vpop.trf.xlu0
    %v1481 = vpop.trf.xlu0
    %v1482 = vpop.trf.xlu0
    %v1483 = vpop.trf.xlu0
    %v1484 = vpop.trf.xlu0
    %v1485 = vpop.trf.xlu0
    %v1486 = vpop.trf.xlu0
    %v1487 = vpop.trf.xlu0
    %v1488 = vpop.trf.xlu0
    %v1489 = vpop.trf.xlu0
    %v1490 = vpop.trf.xlu0
    %v1491 = vpop.trf.xlu0
    %v1492 = vpop.trf.xlu0
    %v1493 = vpop.trf.xlu0
    %v1494 = vpop.trf.xlu0
    %v1496 = vsel %vm406, %v1447, 0
    %v1499 = vsel %vm406, %v1448, 0
    %v1502 = vsel %vm406, %v1449, 0
    %v1505 = vsel %vm406, %v1450, 0
    %v1508 = vsel %vm406, %v1451, 0
    %v1511 = vsel %vm406, %v1452, 0
    %v1514 = vsel %vm406, %v1453, 0
    %v1517 = vsel %vm406, %v1454, 0
    %v1520 = vsel %vm406, %v1455, 0
    %v1523 = vsel %vm406, %v1456, 0
    %v1526 = vsel %vm406, %v1457, 0
    %v1529 = vsel %vm406, %v1458, 0
    %v1532 = vsel %vm406, %v1459, 0
    %v1535 = vsel %vm406, %v1460, 0
    %v1538 = vsel %vm406, %v1461, 0
    %v1541 = vsel %vm406, %v1462, 0
    %v1544 = vsel %vm406, %v1479, 0
    %v1547 = vsel %vm406, %v1480, 0
    %v1550 = vsel %vm406, %v1481, 0
    %v1553 = vsel %vm406, %v1482, 0
    %v1556 = vsel %vm406, %v1483, 0
    %v1559 = vsel %vm406, %v1484, 0
    %v1562 = vsel %vm406, %v1485, 0
    %v1565 = vsel %vm406, %v1486, 0
    %v1568 = vsel %vm406, %v1487, 0
    %v1571 = vsel %vm406, %v1488, 0
    %v1574 = vsel %vm406, %v1489, 0
    %v1577 = vsel %vm406, %v1490, 0
    %v1580 = vsel %vm406, %v1491, 0
    %v1583 = vsel %vm406, %v1492, 0
    %v1586 = vsel %vm406, %v1493, 0
    %v1589 = vsel %vm406, %v1494, 0
    %1591 = vmatprep.subr.mxu0 0.0
    %1592 = vmatpush1.msra.mxu0 %v1428
    %1593 = vmatprep.subr.mxu0 0.0
    %1594 = vmatpush1.msra.mxu0 0.0
    %1595 = vmatprep.subr.mxu0 0.0
    %1596 = vmatpush1.msra.mxu0 0.0
    %1597 = vmatprep.subr.mxu0 0.0
    %1598 = vmatpush1.msra.mxu0 0.0
    %1599 = vmatprep.subr.mxu0 0.0
    %1600 = vmatpush1.msra.mxu0 0.0
    %1601 = vmatprep.subr.mxu0 0.0
    %1602 = vmatpush1.msra.mxu0 0.0
    %1603 = vmatprep.subr.mxu0 0.0
    %1604 = vmatpush1.msra.mxu0 0.0
    %1605 = vmatprep.subr.mxu0 0.0
    %1606 = vmatpush1.msra.mxu0 0.0
    %1607 = vmatprep.subr.mxu0 0.0
    %1608 = vmatpush1.msra.mxu0 0.0
    %1609 = vmatprep.subr.mxu0 0.0
    %1610 = vmatpush1.msra.mxu0 0.0
    %1611 = vmatprep.subr.mxu0 0.0
    %1612 = vmatpush1.msra.mxu0 0.0
    %1613 = vmatprep.subr.mxu0 0.0
    %1614 = vmatpush1.msra.mxu0 0.0
    %1615 = vmatprep.subr.mxu0 0.0
    %1616 = vmatpush1.msra.mxu0 0.0
    %1617 = vmatprep.subr.mxu0 0.0
    %1618 = vmatpush1.msra.mxu0 0.0
    %1619 = vmatprep.subr.mxu0 0.0
    %1620 = vmatpush1.msra.mxu0 0.0
    %1621 = vmatprep.subr.mxu0 0.0
    %1622 = vmatpush1.msra.mxu0 0.0
    %1623 = vmatprep.subr.mxu0 0.0
    %1624 = vmatpush1.msra.mxu0 0.0
    %1625 = vmatprep.subr.mxu0 0.0
    %1626 = vmatpush1.msra.mxu0 0.0
    %1627 = vmatprep.subr.mxu0 0.0
    %1628 = vmatpush1.msra.mxu0 0.0
    %1629 = vmatprep.subr.mxu0 0.0
    %1630 = vmatpush1.msra.mxu0 0.0
    %1631 = vmatprep.subr.mxu0 0.0
    %1632 = vmatpush1.msra.mxu0 0.0
    %1633 = vmatprep.subr.mxu0 0.0
    %1634 = vmatpush1.msra.mxu0 0.0
    %1635 = vmatprep.subr.mxu0 0.0
    %1636 = vmatpush1.msra.mxu0 0.0
    %1637 = vmatprep.subr.mxu0 0.0
    %1638 = vmatpush1.msra.mxu0 0.0
    %1639 = vmatprep.subr.mxu0 0.0
    %1640 = vmatpush1.msra.mxu0 0.0
    %1641 = vmatprep.subr.mxu0 0.0
    %1642 = vmatpush1.msra.mxu0 0.0
    %1643 = vmatprep.subr.mxu0 0.0
    %1644 = vmatpush1.msra.mxu0 0.0
    %1645 = vmatprep.subr.mxu0 0.0
    %1646 = vmatpush1.msra.mxu0 0.0
    %1647 = vmatprep.subr.mxu0 0.0
    %1648 = vmatpush1.msra.mxu0 0.0
    %1649 = vmatprep.subr.mxu0 0.0
    %1650 = vmatpush1.msra.mxu0 0.0
    %1651 = vmatprep.subr.mxu0 0.0
    %1652 = vmatpush1.msra.mxu0 0.0
    %1653 = vmatprep.subr.mxu0 0.0
    %1654 = vmatpush1.msra.mxu0 0.0
    %1655 = vmatprep.mubr.f32.mxu0 0.0
    %1656 = vmatmul.mubr.f32.gmra.mrb[0].mxu0 %v1496
    %v1657 = vpop.f32.mrb[0].mxu0
    %v1658 = vadd.f32 0.0, %v1657
    %v1659 = vpop.f32.mrb[0].mxu0
    %1660 = vmatprep.mubr.f32.mxu0 0.0
    %1661 = vmatmul.mubr.f32.gmra.mrb[0].mxu0 %v1499
    %v1662 = vpop.f32.mrb[0].mxu0
    %v1663 = vadd.f32 0.0, %v1662
    %v1664 = vpop.f32.mrb[0].mxu0
    %1665 = vmatprep.mubr.f32.mxu0 0.0
    %1666 = vmatmul.mubr.f32.gmra.mrb[0].mxu0 %v1502
    %v1667 = vpop.f32.mrb[0].mxu0
    %v1668 = vadd.f32 0.0, %v1667
    %v1669 = vpop.f32.mrb[0].mxu0
    %1670 = vmatprep.mubr.f32.mxu0 0.0
    %1671 = vmatmul.mubr.f32.gmra.mrb[0].mxu0 %v1505
    %v1672 = vpop.f32.mrb[0].mxu0
    %v1673 = vadd.f32 0.0, %v1672
    %v1674 = vpop.f32.mrb[0].mxu0
    %1675 = vmatprep.mubr.f32.mxu0 0.0
    %1676 = vmatmul.mubr.f32.gmra.mrb[0].mxu0 %v1508
    %v1677 = vpop.f32.mrb[0].mxu0
    %v1678 = vadd.f32 0.0, %v1677
    %v1679 = vpop.f32.mrb[0].mxu0
    %1680 = vmatprep.mubr.f32.mxu0 0.0
    %1681 = vmatmul.mubr.f32.gmra.mrb[0].mxu0 %v1511
    %v1682 = vpop.f32.mrb[0].mxu0
    %v1683 = vadd.f32 0.0, %v1682
    %v1684 = vpop.f32.mrb[0].mxu0
    %1685 = vmatprep.mubr.f32.mxu0 0.0
    %1686 = vmatmul.mubr.f32.gmra.mrb[0].mxu0 %v1514
    %v1687 = vpop.f32.mrb[0].mxu0
    %v1688 = vadd.f32 0.0, %v1687
    %v1689 = vpop.f32.mrb[0].mxu0
    %1690 = vmatprep.mubr.f32.mxu0 0.0
    %1691 = vmatmul.mubr.f32.gmra.mrb[0].mxu0 %v1517
    %v1692 = vpop.f32.mrb[0].mxu0
    %v1693 = vadd.f32 0.0, %v1692
    %v1694 = vpop.f32.mrb[0].mxu0
    %1695 = vmatprep.mubr.f32.mxu0 0.0
    %1696 = vmatmul.mubr.f32.gmra.mrb[0].mxu0 %v1520
    %v1697 = vpop.f32.mrb[0].mxu0
    %v1698 = vadd.f32 0.0, %v1697
    %v1699 = vpop.f32.mrb[0].mxu0
    %1700 = vmatprep.mubr.f32.mxu0 0.0
    %1701 = vmatmul.mubr.f32.gmra.mrb[0].mxu0 %v1523
    %v1702 = vpop.f32.mrb[0].mxu0
    %v1703 = vadd.f32 0.0, %v1702
    %v1704 = vpop.f32.mrb[0].mxu0
    %1705 = vmatprep.mubr.f32.mxu0 0.0
    %1706 = vmatmul.mubr.f32.gmra.mrb[0].mxu0 %v1526
    %v1707 = vpop.f32.mrb[0].mxu0
    %v1708 = vadd.f32 0.0, %v1707
    %v1709 = vpop.f32.mrb[0].mxu0
    %1710 = vmatprep.mubr.f32.mxu0 0.0
    %1711 = vmatmul.mubr.f32.gmra.mrb[0].mxu0 %v1529
    %v1712 = vpop.f32.mrb[0].mxu0
    %v1713 = vadd.f32 0.0, %v1712
    %v1714 = vpop.f32.mrb[0].mxu0
    %1715 = vmatprep.mubr.f32.mxu0 0.0
    %1716 = vmatmul.mubr.f32.gmra.mrb[0].mxu0 %v1532
    %v1717 = vpop.f32.mrb[0].mxu0
    %v1718 = vadd.f32 0.0, %v1717
    %v1719 = vpop.f32.mrb[0].mxu0
    %1720 = vmatprep.mubr.f32.mxu0 0.0
    %1721 = vmatmul.mubr.f32.gmra.mrb[0].mxu0 %v1535
    %v1722 = vpop.f32.mrb[0].mxu0
    %v1723 = vadd.f32 0.0, %v1722
    %v1724 = vpop.f32.mrb[0].mxu0
    %1725 = vmatprep.mubr.f32.mxu0 0.0
    %1726 = vmatmul.mubr.f32.gmra.mrb[0].mxu0 %v1538
    %v1727 = vpop.f32.mrb[0].mxu0
    %v1728 = vadd.f32 0.0, %v1727
    %v1729 = vpop.f32.mrb[0].mxu0
    %1730 = vmatprep.mubr.f32.mxu0 0.0
    %1731 = vmatmul.mubr.f32.gmra.mrb[0].mxu0 %v1541
    %v1732 = vpop.f32.mrb[0].mxu0
    %v1733 = vadd.f32 0.0, %v1732
    %v1734 = vpop.f32.mrb[0].mxu0
    %1735 = vmatprep.mubr.f32.mxu0 0.0
    %1736 = vmatmul.mubr.f32.gmra.mrb[0].mxu0 %v1544
    %v1737 = vpop.f32.mrb[0].mxu0
    %v1738 = vadd.f32 0.0, %v1737
    %v1739 = vpop.f32.mrb[0].mxu0
    %1740 = vmatprep.mubr.f32.mxu0 0.0
    %1741 = vmatmul.mubr.f32.gmra.mrb[0].mxu0 %v1547
    %v1742 = vpop.f32.mrb[0].mxu0
    %v1743 = vadd.f32 0.0, %v1742
    %v1744 = vpop.f32.mrb[0].mxu0
    %1745 = vmatprep.mubr.f32.mxu0 0.0
    %1746 = vmatmul.mubr.f32.gmra.mrb[0].mxu0 %v1550
    %v1747 = vpop.f32.mrb[0].mxu0
    %v1748 = vadd.f32 0.0, %v1747
    %v1749 = vpop.f32.mrb[0].mxu0
    %1750 = vmatprep.mubr.f32.mxu0 0.0
    %1751 = vmatmul.mubr.f32.gmra.mrb[0].mxu0 %v1553
    %v1752 = vpop.f32.mrb[0].mxu0
    %v1753 = vadd.f32 0.0, %v1752
    %v1754 = vpop.f32.mrb[0].mxu0
    %1755 = vmatprep.mubr.f32.mxu0 0.0
    %1756 = vmatmul.mubr.f32.gmra.mrb[0].mxu0 %v1556
    %v1757 = vpop.f32.mrb[0].mxu0
    %v1758 = vadd.f32 0.0, %v1757
    %v1759 = vpop.f32.mrb[0].mxu0
    %1760 = vmatprep.mubr.f32.mxu0 0.0
    %1761 = vmatmul.mubr.f32.gmra.mrb[0].mxu0 %v1559
    %v1762 = vpop.f32.mrb[0].mxu0
    %v1763 = vadd.f32 0.0, %v1762
    %v1764 = vpop.f32.mrb[0].mxu0
    %1765 = vmatprep.mubr.f32.mxu0 0.0
    %1766 = vmatmul.mubr.f32.gmra.mrb[0].mxu0 %v1562
    %v1767 = vpop.f32.mrb[0].mxu0
    %v1768 = vadd.f32 0.0, %v1767
    %v1769 = vpop.f32.mrb[0].mxu0
    %1770 = vmatprep.mubr.f32.mxu0 0.0
    %1771 = vmatmul.mubr.f32.gmra.mrb[0].mxu0 %v1565
    %v1772 = vpop.f32.mrb[0].mxu0
    %v1773 = vadd.f32 0.0, %v1772
    %v1774 = vpop.f32.mrb[0].mxu0
    %1775 = vmatprep.mubr.f32.mxu0 0.0
    %1776 = vmatmul.mubr.f32.gmra.mrb[0].mxu0 %v1568
    %v1777 = vpop.f32.mrb[0].mxu0
    %v1778 = vadd.f32 0.0, %v1777
    %v1779 = vpop.f32.mrb[0].mxu0
    %1780 = vmatprep.mubr.f32.mxu0 0.0
    %1781 = vmatmul.mubr.f32.gmra.mrb[0].mxu0 %v1571
    %v1782 = vpop.f32.mrb[0].mxu0
    %v1783 = vadd.f32 0.0, %v1782
    %v1784 = vpop.f32.mrb[0].mxu0
    %1785 = vmatprep.mubr.f32.mxu0 0.0
    %1786 = vmatmul.mubr.f32.gmra.mrb[0].mxu0 %v1574
    %v1787 = vpop.f32.mrb[0].mxu0
    %v1788 = vadd.f32 0.0, %v1787
    %v1789 = vpop.f32.mrb[0].mxu0
    %1790 = vmatprep.mubr.f32.mxu0 0.0
    %1791 = vmatmul.mubr.f32.gmra.mrb[0].mxu0 %v1577
    %v1792 = vpop.f32.mrb[0].mxu0
    %v1793 = vadd.f32 0.0, %v1792
    %v1794 = vpop.f32.mrb[0].mxu0
    %1795 = vmatprep.mubr.f32.mxu0 0.0
    %1796 = vmatmul.mubr.f32.gmra.mrb[0].mxu0 %v1580
    %v1797 = vpop.f32.mrb[0].mxu0
    %v1798 = vadd.f32 0.0, %v1797
    %v1799 = vpop.f32.mrb[0].mxu0
    %1800 = vmatprep.mubr.f32.mxu0 0.0
    %1801 = vmatmul.mubr.f32.gmra.mrb[0].mxu0 %v1583
    %v1802 = vpop.f32.mrb[0].mxu0
    %v1803 = vadd.f32 0.0, %v1802
    %v1804 = vpop.f32.mrb[0].mxu0
    %1805 = vmatprep.mubr.f32.mxu0 0.0
    %1806 = vmatmul.mubr.f32.gmra.mrb[0].mxu0 %v1586
    %v1807 = vpop.f32.mrb[0].mxu0
    %v1808 = vadd.f32 0.0, %v1807
    %v1809 = vpop.f32.mrb[0].mxu0
    %1810 = vmatprep.mubr.f32.mxu0 0.0
    %1811 = vmatmul.mubr.f32.gmra.mrb[0].mxu0 %v1589
    %v1812 = vpop.f32.mrb[0].mxu0
    %v1813 = vadd.f32 0.0, %v1812
    %v1814 = vpop.f32.mrb[0].mxu0
    %1815 = vdwg.mxu0
    %v1816 = vmul.f32 %v1318, 0.95
    %v1817 = vmul.f32 %v1319, 0.95
    %v1818 = vmul.f32 %v1320, 0.95
    %v1819 = vmul.f32 %v1321, 0.95
    %v1820 = vmul.f32 %v1322, 0.95
    %v1821 = vmul.f32 %v1323, 0.95
    %v1822 = vmul.f32 %v1324, 0.95
    %v1823 = vmul.f32 %v1325, 0.95
    %v1824 = vmul.f32 %v1326, 0.95
    %v1825 = vmul.f32 %v1327, 0.95
    %v1826 = vmul.f32 %v1328, 0.95
    %v1827 = vmul.f32 %v1329, 0.95
    %v1828 = vmul.f32 %v1330, 0.95
    %v1829 = vmul.f32 %v1331, 0.95
    %v1830 = vmul.f32 %v1332, 0.95
    %v1831 = vmul.f32 %v1333, 0.95
    %v1832 = vmul.f32 %v1334, 0.95
    %v1833 = vmul.f32 %v1335, 0.95
    %v1834 = vmul.f32 %v1336, 0.95
    %v1835 = vmul.f32 %v1337, 0.95
    %v1836 = vmul.f32 %v1338, 0.95
    %v1837 = vmul.f32 %v1339, 0.95
    %v1838 = vmul.f32 %v1340, 0.95
    %v1839 = vmul.f32 %v1341, 0.95
    %v1840 = vmul.f32 %v1342, 0.95
    %v1841 = vmul.f32 %v1343, 0.95
    %v1842 = vmul.f32 %v1344, 0.95
    %v1843 = vmul.f32 %v1345, 0.95
    %v1844 = vmul.f32 %v1346, 0.95
    %v1845 = vmul.f32 %v1347, 0.95
    %v1846 = vmul.f32 %v1348, 0.95
    %v1847 = vmul.f32 %v1349, 0.95
    %v1848 = vadd.f32 %v1816, %v1658
    %v1849 = vadd.f32 %v1817, %v1663
    %v1850 = vadd.f32 %v1818, %v1668
    %v1851 = vadd.f32 %v1819, %v1673
    %v1852 = vadd.f32 %v1820, %v1678
    %v1853 = vadd.f32 %v1821, %v1683
    %v1854 = vadd.f32 %v1822, %v1688
    %v1855 = vadd.f32 %v1823, %v1693
    %v1856 = vadd.f32 %v1824, %v1698
    %v1857 = vadd.f32 %v1825, %v1703
    %v1858 = vadd.f32 %v1826, %v1708
    %v1859 = vadd.f32 %v1827, %v1713
    %v1860 = vadd.f32 %v1828, %v1718
    %v1861 = vadd.f32 %v1829, %v1723
    %v1862 = vadd.f32 %v1830, %v1728
    %v1863 = vadd.f32 %v1831, %v1733
    %v1864 = vadd.f32 %v1832, %v1738
    %v1865 = vadd.f32 %v1833, %v1743
    %v1866 = vadd.f32 %v1834, %v1748
    %v1867 = vadd.f32 %v1835, %v1753
    %v1868 = vadd.f32 %v1836, %v1758
    %v1869 = vadd.f32 %v1837, %v1763
    %v1870 = vadd.f32 %v1838, %v1768
    %v1871 = vadd.f32 %v1839, %v1773
    %v1872 = vadd.f32 %v1840, %v1778
    %v1873 = vadd.f32 %v1841, %v1783
    %v1874 = vadd.f32 %v1842, %v1788
    %v1875 = vadd.f32 %v1843, %v1793
    %v1876 = vadd.f32 %v1844, %v1798
    %v1877 = vadd.f32 %v1845, %v1803
    %v1878 = vadd.f32 %v1846, %v1808
    %v1879 = vadd.f32 %v1847, %v1813
    %v1880 = vmax.f32 %v1848, -4.0
    %v1881 = vmax.f32 %v1849, -4.0
    %v1882 = vmax.f32 %v1850, -4.0
    %v1883 = vmax.f32 %v1851, -4.0
    %v1884 = vmax.f32 %v1852, -4.0
    %v1885 = vmax.f32 %v1853, -4.0
    %v1886 = vmax.f32 %v1854, -4.0
    %v1887 = vmax.f32 %v1855, -4.0
    %v1888 = vmax.f32 %v1856, -4.0
    %v1889 = vmax.f32 %v1857, -4.0
    %v1890 = vmax.f32 %v1858, -4.0
    %v1891 = vmax.f32 %v1859, -4.0
    %v1892 = vmax.f32 %v1860, -4.0
    %v1893 = vmax.f32 %v1861, -4.0
    %v1894 = vmax.f32 %v1862, -4.0
    %v1895 = vmax.f32 %v1863, -4.0
    %v1896 = vmax.f32 %v1864, -4.0
    %v1897 = vmax.f32 %v1865, -4.0
    %v1898 = vmax.f32 %v1866, -4.0
    %v1899 = vmax.f32 %v1867, -4.0
    %v1900 = vmax.f32 %v1868, -4.0
    %v1901 = vmax.f32 %v1869, -4.0
    %v1902 = vmax.f32 %v1870, -4.0
    %v1903 = vmax.f32 %v1871, -4.0
    %v1904 = vmax.f32 %v1872, -4.0
    %v1905 = vmax.f32 %v1873, -4.0
    %v1906 = vmax.f32 %v1874, -4.0
    %v1907 = vmax.f32 %v1875, -4.0
    %v1908 = vmax.f32 %v1876, -4.0
    %v1909 = vmax.f32 %v1877, -4.0
    %v1910 = vmax.f32 %v1878, -4.0
    %v1911 = vmax.f32 %v1879, -4.0
    %v1912 = vmin.f32 %v1880, 4.0
    %v1913 = vmin.f32 %v1881, 4.0
    %v1914 = vmin.f32 %v1882, 4.0
    %v1915 = vmin.f32 %v1883, 4.0
    %v1916 = vmin.f32 %v1884, 4.0
    %v1917 = vmin.f32 %v1885, 4.0
    %v1918 = vmin.f32 %v1886, 4.0
    %v1919 = vmin.f32 %v1887, 4.0
    %v1920 = vmin.f32 %v1888, 4.0
    %v1921 = vmin.f32 %v1889, 4.0
    %v1922 = vmin.f32 %v1890, 4.0
    %v1923 = vmin.f32 %v1891, 4.0
    %v1924 = vmin.f32 %v1892, 4.0
    %v1925 = vmin.f32 %v1893, 4.0
    %v1926 = vmin.f32 %v1894, 4.0
    %v1927 = vmin.f32 %v1895, 4.0
    %v1928 = vmin.f32 %v1896, 4.0
    %v1929 = vmin.f32 %v1897, 4.0
    %v1930 = vmin.f32 %v1898, 4.0
    %v1931 = vmin.f32 %v1899, 4.0
    %v1932 = vmin.f32 %v1900, 4.0
    %v1933 = vmin.f32 %v1901, 4.0
    %v1934 = vmin.f32 %v1902, 4.0
    %v1935 = vmin.f32 %v1903, 4.0
    %v1936 = vmin.f32 %v1904, 4.0
    %v1937 = vmin.f32 %v1905, 4.0
    %v1938 = vmin.f32 %v1906, 4.0
    %v1939 = vmin.f32 %v1907, 4.0
    %v1940 = vmin.f32 %v1908, 4.0
    %v1941 = vmin.f32 %v1909, 4.0
    %v1942 = vmin.f32 %v1910, 4.0
    %v1943 = vmin.f32 %v1911, 4.0
    %1944 = vst [vmem:[%s15] sm:$0xff] %v1912
    %1945 = vst [vmem:[%s15 + $0x8] sm:$0xff] %v1913
    %1946 = vst [vmem:[%s15 + $0x10] sm:$0xff] %v1914
    %1947 = vst [vmem:[%s15 + $0x18] sm:$0xff] %v1915
    %1948 = vst [vmem:[%s15 + $0x20] sm:$0xff] %v1916
    %1949 = vst [vmem:[%s15 + $0x28] sm:$0xff] %v1917
    %1950 = vst [vmem:[%s15 + $0x30] sm:$0xff] %v1918
    %1951 = vst [vmem:[%s15 + $0x38] sm:$0xff] %v1919
    %1952 = vst [vmem:[%s15 + $0x40] sm:$0xff] %v1920
    %1953 = vst [vmem:[%s15 + $0x48] sm:$0xff] %v1921
    %1954 = vst [vmem:[%s15 + $0x50] sm:$0xff] %v1922
    %1955 = vst [vmem:[%s15 + $0x58] sm:$0xff] %v1923
    %1956 = vst [vmem:[%s15 + $0x60] sm:$0xff] %v1924
    %1957 = vst [vmem:[%s15 + $0x68] sm:$0xff] %v1925
    %1958 = vst [vmem:[%s15 + $0x70] sm:$0xff] %v1926
    %1959 = vst [vmem:[%s15 + $0x78] sm:$0xff] %v1927
    %1960 = vst [vmem:[%s15 + $0x80] sm:$0xff] %v1928
    %1961 = vst [vmem:[%s15 + $0x88] sm:$0xff] %v1929
    %1962 = vst [vmem:[%s15 + $0x90] sm:$0xff] %v1930
    %1963 = vst [vmem:[%s15 + $0x98] sm:$0xff] %v1931
    %1964 = vst [vmem:[%s15 + $0xa0] sm:$0xff] %v1932
    %1965 = vst [vmem:[%s15 + $0xa8] sm:$0xff] %v1933
    %1966 = vst [vmem:[%s15 + $0xb0] sm:$0xff] %v1934
    %1967 = vst [vmem:[%s15 + $0xb8] sm:$0xff] %v1935
    %1968 = vst [vmem:[%s15 + $0xc0] sm:$0xff] %v1936
    %1969 = vst [vmem:[%s15 + $0xc8] sm:$0xff] %v1937
    %1970 = vst [vmem:[%s15 + $0xd0] sm:$0xff] %v1938
    %1971 = vst [vmem:[%s15 + $0xd8] sm:$0xff] %v1939
    %1972 = vst [vmem:[%s15 + $0xe0] sm:$0xff] %v1940
    %1973 = vst [vmem:[%s15 + $0xe8] sm:$0xff] %v1941
    %1974 = vst [vmem:[%s15 + $0xf0] sm:$0xff] %v1942
    %1975 = vst [vmem:[%s15 + $0xf8] sm:$0xff] %v1943
    %v1976 = vsub.f32 %v1425, %v894
    %v1977 = vmul.f32 %v1976, 0.5
    %v1978 = vadd.f32 %v894, %v1977
    %vm1979 = vcmp.ge.f32.partialorder %v1978, 1.0
    %v1980 = vsel %vm1979, 1, 0
    %v1981 = vcvt.s32.f32 %v1980
    %v1982 = vsub.f32 1.0, %v1981
    %v1983 = vmul.f32 %v1978, %v1982
    %v1984 = vadd.f32 %v895, %v1981
    %v1985 = vmul.f32 %v896, %v1294
    %v1986 = vmul.f32 %v896, %v1295
    %v1987 = vmul.f32 %v896, %v1296
    %v1988 = vmul.f32 %v896, %v1297
    %v1989 = vmul.f32 %v896, %v1298
    %v1990 = vmul.f32 %v896, %v1299
    %v1991 = vmul.f32 %v896, %v1300
    %v1992 = vmul.f32 %v896, %v1301
    %v1993 = vmul.f32 %v896, %v1302
    %v1994 = vmul.f32 %v896, %v1303
    %v1995 = vmul.f32 %v896, %v1304
    %v1996 = vmul.f32 %v896, %v1305
    %v1997 = vmul.f32 %v896, %v1306
    %v1998 = vmul.f32 %v896, %v1307
    %v1999 = vmul.f32 %v896, %v1308
    %v2000 = vmul.f32 %v896, %v1309
    %v2001 = vadd.f32 %v187, %v1985
    %v2002 = vadd.f32 %v188, %v1986
    %v2003 = vadd.f32 %v189, %v1987
    %v2004 = vadd.f32 %v190, %v1988
    %v2005 = vadd.f32 %v191, %v1989
    %v2006 = vadd.f32 %v192, %v1990
    %v2007 = vadd.f32 %v193, %v1991
    %v2008 = vadd.f32 %v194, %v1992
    %v2009 = vadd.f32 %v195, %v1993
    %v2010 = vadd.f32 %v196, %v1994
    %v2011 = vadd.f32 %v197, %v1995
    %v2012 = vadd.f32 %v198, %v1996
    %v2013 = vadd.f32 %v199, %v1997
    %v2014 = vadd.f32 %v200, %v1998
    %v2015 = vadd.f32 %v201, %v1999
    %v2016 = vadd.f32 %v202, %v2000
    %2017 = vmatprep.subr.mxu0 0.0
    %2018 = vmatpush1.msra.mxu0 %v2001
    %2019 = vmatprep.subr.mxu0 0.0
    %2020 = vmatpush1.msra.mxu0 %v2002
    %2021 = vmatprep.subr.mxu0 0.0
    %2022 = vmatpush1.msra.mxu0 %v2003
    %2023 = vmatprep.subr.mxu0 0.0
    %2024 = vmatpush1.msra.mxu0 %v2004
    %2025 = vmatprep.subr.mxu0 0.0
    %2026 = vmatpush1.msra.mxu0 %v2005
    %2027 = vmatprep.subr.mxu0 0.0
    %2028 = vmatpush1.msra.mxu0 %v2006
    %2029 = vmatprep.subr.mxu0 0.0
    %2030 = vmatpush1.msra.mxu0 %v2007
    %2031 = vmatprep.subr.mxu0 0.0
    %2032 = vmatpush1.msra.mxu0 %v2008
    %2033 = vmatprep.subr.mxu0 0.0
    %2034 = vmatpush1.msra.mxu0 %v2009
    %2035 = vmatprep.subr.mxu0 0.0
    %2036 = vmatpush1.msra.mxu0 %v2010
    %2037 = vmatprep.subr.mxu0 0.0
    %2038 = vmatpush1.msra.mxu0 %v2011
    %2039 = vmatprep.subr.mxu0 0.0
    %2040 = vmatpush1.msra.mxu0 %v2012
    %2041 = vmatprep.subr.mxu0 0.0
    %2042 = vmatpush1.msra.mxu0 %v2013
    %2043 = vmatprep.subr.mxu0 0.0
    %2044 = vmatpush1.msra.mxu0 %v2014
    %2045 = vmatprep.subr.mxu0 0.0
    %2046 = vmatpush1.msra.mxu0 %v2015
    %2047 = vmatprep.subr.mxu0 0.0
    %2048 = vmatpush1.msra.mxu0 %v2016
    %2049 = vmatprep.subr.mxu0 0.0
    %2050 = vmatpush1.msra.mxu0 0.0
    %2051 = vmatprep.subr.mxu0 0.0
    %2052 = vmatpush1.msra.mxu0 0.0
    %2053 = vmatprep.subr.mxu0 0.0
    %2054 = vmatpush1.msra.mxu0 0.0
    %2055 = vmatprep.subr.mxu0 0.0
    %2056 = vmatpush1.msra.mxu0 0.0
    %2057 = vmatprep.subr.mxu0 0.0
    %2058 = vmatpush1.msra.mxu0 0.0
    %2059 = vmatprep.subr.mxu0 0.0
    %2060 = vmatpush1.msra.mxu0 0.0
    %2061 = vmatprep.subr.mxu0 0.0
    %2062 = vmatpush1.msra.mxu0 0.0
    %2063 = vmatprep.subr.mxu0 0.0
    %2064 = vmatpush1.msra.mxu0 0.0
    %2065 = vmatprep.subr.mxu0 0.0
    %2066 = vmatpush1.msra.mxu0 0.0
    %2067 = vmatprep.subr.mxu0 0.0
    %2068 = vmatpush1.msra.mxu0 0.0
    %2069 = vmatprep.subr.mxu0 0.0
    %2070 = vmatpush1.msra.mxu0 0.0
    %2071 = vmatprep.subr.mxu0 0.0
    %2072 = vmatpush1.msra.mxu0 0.0
    %2073 = vmatprep.subr.mxu0 0.0
    %2074 = vmatpush1.msra.mxu0 0.0
    %2075 = vmatprep.subr.mxu0 0.0
    %2076 = vmatpush1.msra.mxu0 0.0
    %2077 = vmatprep.subr.mxu0 0.0
    %2078 = vmatpush1.msra.mxu0 0.0
    %2079 = vmatprep.subr.mxu0 0.0
    %2080 = vmatpush1.msra.mxu0 0.0
    %2081 = vmatprep.mubr.f32.mxu0 0.0
    %2082 = vmatmul.mubr.f32.gmra.mrb[0].mxu0 %v1981
    %v2083 = vpop.f32.mrb[0].mxu0
    %v2084 = vadd.f32 %v933, %v2083
    %v2085 = vpop.f32.mrb[0].mxu0
    %2086 = vdwg.mxu0
    %v2087 = vmul.f32 %v2084, 2.857143
    %v2088 = vsub.f32 %v2087, %v1010
    %v2089 = vtanh.pop %v2088
    %v2090 = vmul.f32 %v1981, %v1018
    %2091 = vxpose.xlu0.b32.start [1/16] %v2090, 128
    %2092 = vxpose.xlu0.b32.cont [2/16] 0.0, 128
    %2093 = vxpose.xlu0.b32.cont [3/16] 0.0, 128
    %2094 = vxpose.xlu0.b32.cont [4/16] 0.0, 128
    %2095 = vxpose.xlu0.b32.cont [5/16] 0.0, 128
    %2096 = vxpose.xlu0.b32.cont [6/16] 0.0, 128
    %2097 = vxpose.xlu0.b32.cont [7/16] 0.0, 128
    %2098 = vxpose.xlu0.b32.cont [8/16] 0.0, 128
    %2099 = vxpose.xlu0.b32.cont [9/16] 0.0, 128
    %2100 = vxpose.xlu0.b32.cont [10/16] 0.0, 128
    %2101 = vxpose.xlu0.b32.cont [11/16] 0.0, 128
    %2102 = vxpose.xlu0.b32.cont [12/16] 0.0, 128
    %2103 = vxpose.xlu0.b32.cont [13/16] 0.0, 128
    %2104 = vxpose.xlu0.b32.cont [14/16] 0.0, 128
    %2105 = vxpose.xlu0.b32.cont [15/16] 0.0, 128
    %2106 = vxpose.xlu0.b32.end [16/16] 0.0, 128
    %v2107 = vpop.trf.xlu0
    %v2108 = vpop.trf.xlu0
    %v2109 = vpop.trf.xlu0
    %v2110 = vpop.trf.xlu0
    %v2111 = vpop.trf.xlu0
    %v2112 = vpop.trf.xlu0
    %v2113 = vpop.trf.xlu0
    %v2114 = vpop.trf.xlu0
    %v2115 = vpop.trf.xlu0
    %v2116 = vpop.trf.xlu0
    %v2117 = vpop.trf.xlu0
    %v2118 = vpop.trf.xlu0
    %v2119 = vpop.trf.xlu0
    %v2120 = vpop.trf.xlu0
    %v2121 = vpop.trf.xlu0
    %v2122 = vpop.trf.xlu0
    %v2124 = vsel %vm406, %v2107, 0
    %v2127 = vsel %vm406, %v2108, 0
    %v2130 = vsel %vm406, %v2109, 0
    %v2133 = vsel %vm406, %v2110, 0
    %v2136 = vsel %vm406, %v2111, 0
    %v2139 = vsel %vm406, %v2112, 0
    %v2142 = vsel %vm406, %v2113, 0
    %v2145 = vsel %vm406, %v2114, 0
    %v2148 = vsel %vm406, %v2115, 0
    %v2151 = vsel %vm406, %v2116, 0
    %v2154 = vsel %vm406, %v2117, 0
    %v2157 = vsel %vm406, %v2118, 0
    %v2160 = vsel %vm406, %v2119, 0
    %v2163 = vsel %vm406, %v2120, 0
    %v2166 = vsel %vm406, %v2121, 0
    %v2169 = vsel %vm406, %v2122, 0
    %2171 = vmatprep.subr.mxu0 0.0
    %2172 = vmatpush1.msra.mxu0 %v2089
    %2173 = vmatprep.subr.mxu0 0.0
    %2174 = vmatpush1.msra.mxu0 0.0
    %2175 = vmatprep.subr.mxu0 0.0
    %2176 = vmatpush1.msra.mxu0 0.0
    %2177 = vmatprep.subr.mxu0 0.0
    %2178 = vmatpush1.msra.mxu0 0.0
    %2179 = vmatprep.subr.mxu0 0.0
    %2180 = vmatpush1.msra.mxu0 0.0
    %2181 = vmatprep.subr.mxu0 0.0
    %2182 = vmatpush1.msra.mxu0 0.0
    %2183 = vmatprep.subr.mxu0 0.0
    %2184 = vmatpush1.msra.mxu0 0.0
    %2185 = vmatprep.subr.mxu0 0.0
    %2186 = vmatpush1.msra.mxu0 0.0
    %2187 = vmatprep.subr.mxu0 0.0
    %2188 = vmatpush1.msra.mxu0 0.0
    %2189 = vmatprep.subr.mxu0 0.0
    %2190 = vmatpush1.msra.mxu0 0.0
    %2191 = vmatprep.subr.mxu0 0.0
    %2192 = vmatpush1.msra.mxu0 0.0
    %2193 = vmatprep.subr.mxu0 0.0
    %2194 = vmatpush1.msra.mxu0 0.0
    %2195 = vmatprep.subr.mxu0 0.0
    %2196 = vmatpush1.msra.mxu0 0.0
    %2197 = vmatprep.subr.mxu0 0.0
    %2198 = vmatpush1.msra.mxu0 0.0
    %2199 = vmatprep.subr.mxu0 0.0
    %2200 = vmatpush1.msra.mxu0 0.0
    %2201 = vmatprep.subr.mxu0 0.0
    %2202 = vmatpush1.msra.mxu0 0.0
    %2203 = vmatprep.subr.mxu0 0.0
    %2204 = vmatpush1.msra.mxu0 0.0
    %2205 = vmatprep.subr.mxu0 0.0
    %2206 = vmatpush1.msra.mxu0 0.0
    %2207 = vmatprep.subr.mxu0 0.0
    %2208 = vmatpush1.msra.mxu0 0.0
    %2209 = vmatprep.subr.mxu0 0.0
    %2210 = vmatpush1.msra.mxu0 0.0
    %2211 = vmatprep.subr.mxu0 0.0
    %2212 = vmatpush1.msra.mxu0 0.0
    %2213 = vmatprep.subr.mxu0 0.0
    %2214 = vmatpush1.msra.mxu0 0.0
    %2215 = vmatprep.subr.mxu0 0.0
    %2216 = vmatpush1.msra.mxu0 0.0
    %2217 = vmatprep.subr.mxu0 0.0
    %2218 = vmatpush1.msra.mxu0 0.0
    %2219 = vmatprep.subr.mxu0 0.0
    %2220 = vmatpush1.msra.mxu0 0.0
    %2221 = vmatprep.subr.mxu0 0.0
    %2222 = vmatpush1.msra.mxu0 0.0
    %2223 = vmatprep.subr.mxu0 0.0
    %2224 = vmatpush1.msra.mxu0 0.0
    %2225 = vmatprep.subr.mxu0 0.0
    %2226 = vmatpush1.msra.mxu0 0.0
    %2227 = vmatprep.subr.mxu0 0.0
    %2228 = vmatpush1.msra.mxu0 0.0
    %2229 = vmatprep.subr.mxu0 0.0
    %2230 = vmatpush1.msra.mxu0 0.0
    %2231 = vmatprep.subr.mxu0 0.0
    %2232 = vmatpush1.msra.mxu0 0.0
    %2233 = vmatprep.subr.mxu0 0.0
    %2234 = vmatpush1.msra.mxu0 0.0
    %2235 = vmatprep.mubr.f32.mxu0 0.0
    %2236 = vmatmul.mubr.f32.gmra.mrb[0].mxu0 %v2124
    %v2237 = vpop.f32.mrb[0].mxu0
    %v2238 = vadd.f32 0.0, %v2237
    %v2239 = vpop.f32.mrb[0].mxu0
    %2240 = vmatprep.mubr.f32.mxu0 0.0
    %2241 = vmatmul.mubr.f32.gmra.mrb[0].mxu0 %v2127
    %v2242 = vpop.f32.mrb[0].mxu0
    %v2243 = vadd.f32 0.0, %v2242
    %v2244 = vpop.f32.mrb[0].mxu0
    %2245 = vmatprep.mubr.f32.mxu0 0.0
    %2246 = vmatmul.mubr.f32.gmra.mrb[0].mxu0 %v2130
    %v2247 = vpop.f32.mrb[0].mxu0
    %v2248 = vadd.f32 0.0, %v2247
    %v2249 = vpop.f32.mrb[0].mxu0
    %2250 = vmatprep.mubr.f32.mxu0 0.0
    %2251 = vmatmul.mubr.f32.gmra.mrb[0].mxu0 %v2133
    %v2252 = vpop.f32.mrb[0].mxu0
    %v2253 = vadd.f32 0.0, %v2252
    %v2254 = vpop.f32.mrb[0].mxu0
    %2255 = vmatprep.mubr.f32.mxu0 0.0
    %2256 = vmatmul.mubr.f32.gmra.mrb[0].mxu0 %v2136
    %v2257 = vpop.f32.mrb[0].mxu0
    %v2258 = vadd.f32 0.0, %v2257
    %v2259 = vpop.f32.mrb[0].mxu0
    %2260 = vmatprep.mubr.f32.mxu0 0.0
    %2261 = vmatmul.mubr.f32.gmra.mrb[0].mxu0 %v2139
    %v2262 = vpop.f32.mrb[0].mxu0
    %v2263 = vadd.f32 0.0, %v2262
    %v2264 = vpop.f32.mrb[0].mxu0
    %2265 = vmatprep.mubr.f32.mxu0 0.0
    %2266 = vmatmul.mubr.f32.gmra.mrb[0].mxu0 %v2142
    %v2267 = vpop.f32.mrb[0].mxu0
    %v2268 = vadd.f32 0.0, %v2267
    %v2269 = vpop.f32.mrb[0].mxu0
    %2270 = vmatprep.mubr.f32.mxu0 0.0
    %2271 = vmatmul.mubr.f32.gmra.mrb[0].mxu0 %v2145
    %v2272 = vpop.f32.mrb[0].mxu0
    %v2273 = vadd.f32 0.0, %v2272
    %v2274 = vpop.f32.mrb[0].mxu0
    %2275 = vmatprep.mubr.f32.mxu0 0.0
    %2276 = vmatmul.mubr.f32.gmra.mrb[0].mxu0 %v2148
    %v2277 = vpop.f32.mrb[0].mxu0
    %v2278 = vadd.f32 0.0, %v2277
    %v2279 = vpop.f32.mrb[0].mxu0
    %2280 = vmatprep.mubr.f32.mxu0 0.0
    %2281 = vmatmul.mubr.f32.gmra.mrb[0].mxu0 %v2151
    %v2282 = vpop.f32.mrb[0].mxu0
    %v2283 = vadd.f32 0.0, %v2282
    %v2284 = vpop.f32.mrb[0].mxu0
    %2285 = vmatprep.mubr.f32.mxu0 0.0
    %2286 = vmatmul.mubr.f32.gmra.mrb[0].mxu0 %v2154
    %v2287 = vpop.f32.mrb[0].mxu0
    %v2288 = vadd.f32 0.0, %v2287
    %v2289 = vpop.f32.mrb[0].mxu0
    %2290 = vmatprep.mubr.f32.mxu0 0.0
    %2291 = vmatmul.mubr.f32.gmra.mrb[0].mxu0 %v2157
    %v2292 = vpop.f32.mrb[0].mxu0
    %v2293 = vadd.f32 0.0, %v2292
    %v2294 = vpop.f32.mrb[0].mxu0
    %2295 = vmatprep.mubr.f32.mxu0 0.0
    %2296 = vmatmul.mubr.f32.gmra.mrb[0].mxu0 %v2160
    %v2297 = vpop.f32.mrb[0].mxu0
    %v2298 = vadd.f32 0.0, %v2297
    %v2299 = vpop.f32.mrb[0].mxu0
    %2300 = vmatprep.mubr.f32.mxu0 0.0
    %2301 = vmatmul.mubr.f32.gmra.mrb[0].mxu0 %v2163
    %v2302 = vpop.f32.mrb[0].mxu0
    %v2303 = vadd.f32 0.0, %v2302
    %v2304 = vpop.f32.mrb[0].mxu0
    %2305 = vmatprep.mubr.f32.mxu0 0.0
    %2306 = vmatmul.mubr.f32.gmra.mrb[0].mxu0 %v2166
    %v2307 = vpop.f32.mrb[0].mxu0
    %v2308 = vadd.f32 0.0, %v2307
    %v2309 = vpop.f32.mrb[0].mxu0
    %2310 = vmatprep.mubr.f32.mxu0 0.0
    %2311 = vmatmul.mubr.f32.gmra.mrb[0].mxu0 %v2169
    %v2312 = vpop.f32.mrb[0].mxu0
    %v2313 = vadd.f32 0.0, %v2312
    %v2314 = vpop.f32.mrb[0].mxu0
    %2315 = vdwg.mxu0
    %v2316 = vmul.f32 %v1294, 0.95
    %v2317 = vmul.f32 %v1295, 0.95
    %v2318 = vmul.f32 %v1296, 0.95
    %v2319 = vmul.f32 %v1297, 0.95
    %v2320 = vmul.f32 %v1298, 0.95
    %v2321 = vmul.f32 %v1299, 0.95
    %v2322 = vmul.f32 %v1300, 0.95
    %v2323 = vmul.f32 %v1301, 0.95
    %v2324 = vmul.f32 %v1302, 0.95
    %v2325 = vmul.f32 %v1303, 0.95
    %v2326 = vmul.f32 %v1304, 0.95
    %v2327 = vmul.f32 %v1305, 0.95
    %v2328 = vmul.f32 %v1306, 0.95
    %v2329 = vmul.f32 %v1307, 0.95
    %v2330 = vmul.f32 %v1308, 0.95
    %v2331 = vmul.f32 %v1309, 0.95
    %v2332 = vadd.f32 %v2316, %v2238
    %v2333 = vadd.f32 %v2317, %v2243
    %v2334 = vadd.f32 %v2318, %v2248
    %v2335 = vadd.f32 %v2319, %v2253
    %v2336 = vadd.f32 %v2320, %v2258
    %v2337 = vadd.f32 %v2321, %v2263
    %v2338 = vadd.f32 %v2322, %v2268
    %v2339 = vadd.f32 %v2323, %v2273
    %v2340 = vadd.f32 %v2324, %v2278
    %v2341 = vadd.f32 %v2325, %v2283
    %v2342 = vadd.f32 %v2326, %v2288
    %v2343 = vadd.f32 %v2327, %v2293
    %v2344 = vadd.f32 %v2328, %v2298
    %v2345 = vadd.f32 %v2329, %v2303
    %v2346 = vadd.f32 %v2330, %v2308
    %v2347 = vadd.f32 %v2331, %v2313
    %v2348 = vmax.f32 %v2332, -4.0
    %v2349 = vmax.f32 %v2333, -4.0
    %v2350 = vmax.f32 %v2334, -4.0
    %v2351 = vmax.f32 %v2335, -4.0
    %v2352 = vmax.f32 %v2336, -4.0
    %v2353 = vmax.f32 %v2337, -4.0
    %v2354 = vmax.f32 %v2338, -4.0
    %v2355 = vmax.f32 %v2339, -4.0
    %v2356 = vmax.f32 %v2340, -4.0
    %v2357 = vmax.f32 %v2341, -4.0
    %v2358 = vmax.f32 %v2342, -4.0
    %v2359 = vmax.f32 %v2343, -4.0
    %v2360 = vmax.f32 %v2344, -4.0
    %v2361 = vmax.f32 %v2345, -4.0
    %v2362 = vmax.f32 %v2346, -4.0
    %v2363 = vmax.f32 %v2347, -4.0
    %v2364 = vmin.f32 %v2348, 4.0
    %v2365 = vmin.f32 %v2349, 4.0
    %v2366 = vmin.f32 %v2350, 4.0
    %v2367 = vmin.f32 %v2351, 4.0
    %v2368 = vmin.f32 %v2352, 4.0
    %v2369 = vmin.f32 %v2353, 4.0
    %v2370 = vmin.f32 %v2354, 4.0
    %v2371 = vmin.f32 %v2355, 4.0
    %v2372 = vmin.f32 %v2356, 4.0
    %v2373 = vmin.f32 %v2357, 4.0
    %v2374 = vmin.f32 %v2358, 4.0
    %v2375 = vmin.f32 %v2359, 4.0
    %v2376 = vmin.f32 %v2360, 4.0
    %v2377 = vmin.f32 %v2361, 4.0
    %v2378 = vmin.f32 %v2362, 4.0
    %v2379 = vmin.f32 %v2363, 4.0
    %v2380 = vsub.f32 %v2084, %v1316
    %v2381 = vmul.f32 %v2380, 0.5
    %v2382 = vadd.f32 %v1316, %v2381
    %vm2383 = vcmp.ge.f32.partialorder %v2382, 1.0
    %v2384 = vsel %vm2383, 1, 0
    %v2385 = vcvt.s32.f32 %v2384
    %v2386 = vsub.f32 1.0, %v2385
    %v2387 = vmul.f32 %v2382, %v2386
    %v2388 = vadd.f32 %v1317, %v2385
    %v2389 = vld [vmem:[%s15] sm:$0xff]
    %v2390 = vld [vmem:[%s15 + $0x8] sm:$0xff]
    %v2391 = vld [vmem:[%s15 + $0x10] sm:$0xff]
    %v2392 = vld [vmem:[%s15 + $0x18] sm:$0xff]
    %v2393 = vld [vmem:[%s15 + $0x20] sm:$0xff]
    %v2394 = vld [vmem:[%s15 + $0x28] sm:$0xff]
    %v2395 = vld [vmem:[%s15 + $0x30] sm:$0xff]
    %v2396 = vld [vmem:[%s15 + $0x38] sm:$0xff]
    %v2397 = vld [vmem:[%s15 + $0x40] sm:$0xff]
    %v2398 = vld [vmem:[%s15 + $0x48] sm:$0xff]
    %v2399 = vld [vmem:[%s15 + $0x50] sm:$0xff]
    %v2400 = vld [vmem:[%s15 + $0x58] sm:$0xff]
    %v2401 = vld [vmem:[%s15 + $0x60] sm:$0xff]
    %v2402 = vld [vmem:[%s15 + $0x68] sm:$0xff]
    %v2403 = vld [vmem:[%s15 + $0x70] sm:$0xff]
    %v2404 = vld [vmem:[%s15 + $0x78] sm:$0xff]
    %v2405 = vld [vmem:[%s15 + $0x80] sm:$0xff]
    %v2406 = vld [vmem:[%s15 + $0x88] sm:$0xff]
    %v2407 = vld [vmem:[%s15 + $0x90] sm:$0xff]
    %v2408 = vld [vmem:[%s15 + $0x98] sm:$0xff]
    %v2409 = vld [vmem:[%s15 + $0xa0] sm:$0xff]
    %v2410 = vld [vmem:[%s15 + $0xa8] sm:$0xff]
    %v2411 = vld [vmem:[%s15 + $0xb0] sm:$0xff]
    %v2412 = vld [vmem:[%s15 + $0xb8] sm:$0xff]
    %v2413 = vld [vmem:[%s15 + $0xc0] sm:$0xff]
    %v2414 = vld [vmem:[%s15 + $0xc8] sm:$0xff]
    %v2415 = vld [vmem:[%s15 + $0xd0] sm:$0xff]
    %v2416 = vld [vmem:[%s15 + $0xd8] sm:$0xff]
    %v2417 = vld [vmem:[%s15 + $0xe0] sm:$0xff]
    %v2418 = vld [vmem:[%s15 + $0xe8] sm:$0xff]
    %v2419 = vld [vmem:[%s15 + $0xf0] sm:$0xff]
    %v2420 = vld [vmem:[%s15 + $0xf8] sm:$0xff]
    %2421 = vmatprep.subr.mxu0 0.0
    %2422 = vmatpush1.msra.mxu0 %v2389
    %2423 = vmatprep.subr.mxu0 0.0
    %2424 = vmatpush1.msra.mxu0 %v2390
    %2425 = vmatprep.subr.mxu0 0.0
    %2426 = vmatpush1.msra.mxu0 %v2391
    %2427 = vmatprep.subr.mxu0 0.0
    %2428 = vmatpush1.msra.mxu0 %v2392
    %2429 = vmatprep.subr.mxu0 0.0
    %2430 = vmatpush1.msra.mxu0 %v2393
    %2431 = vmatprep.subr.mxu0 0.0
    %2432 = vmatpush1.msra.mxu0 %v2394
    %2433 = vmatprep.subr.mxu0 0.0
    %2434 = vmatpush1.msra.mxu0 %v2395
    %2435 = vmatprep.subr.mxu0 0.0
    %2436 = vmatpush1.msra.mxu0 %v2396
    %2437 = vmatprep.subr.mxu0 0.0
    %2438 = vmatpush1.msra.mxu0 %v2397
    %2439 = vmatprep.subr.mxu0 0.0
    %2440 = vmatpush1.msra.mxu0 %v2398
    %2441 = vmatprep.subr.mxu0 0.0
    %2442 = vmatpush1.msra.mxu0 %v2399
    %2443 = vmatprep.subr.mxu0 0.0
    %2444 = vmatpush1.msra.mxu0 %v2400
    %2445 = vmatprep.subr.mxu0 0.0
    %2446 = vmatpush1.msra.mxu0 %v2401
    %2447 = vmatprep.subr.mxu0 0.0
    %2448 = vmatpush1.msra.mxu0 %v2402
    %2449 = vmatprep.subr.mxu0 0.0
    %2450 = vmatpush1.msra.mxu0 %v2403
    %2451 = vmatprep.subr.mxu0 0.0
    %2452 = vmatpush1.msra.mxu0 %v2404
    %2453 = vmatprep.subr.mxu0 0.0
    %2454 = vmatpush1.msra.mxu0 %v2405
    %2455 = vmatprep.subr.mxu0 0.0
    %2456 = vmatpush1.msra.mxu0 %v2406
    %2457 = vmatprep.subr.mxu0 0.0
    %2458 = vmatpush1.msra.mxu0 %v2407
    %2459 = vmatprep.subr.mxu0 0.0
    %2460 = vmatpush1.msra.mxu0 %v2408
    %2461 = vmatprep.subr.mxu0 0.0
    %2462 = vmatpush1.msra.mxu0 %v2409
    %2463 = vmatprep.subr.mxu0 0.0
    %2464 = vmatpush1.msra.mxu0 %v2410
    %2465 = vmatprep.subr.mxu0 0.0
    %2466 = vmatpush1.msra.mxu0 %v2411
    %2467 = vmatprep.subr.mxu0 0.0
    %2468 = vmatpush1.msra.mxu0 %v2412
    %2469 = vmatprep.subr.mxu0 0.0
    %2470 = vmatpush1.msra.mxu0 %v2413
    %2471 = vmatprep.subr.mxu0 0.0
    %2472 = vmatpush1.msra.mxu0 %v2414
    %2473 = vmatprep.subr.mxu0 0.0
    %2474 = vmatpush1.msra.mxu0 %v2415
    %2475 = vmatprep.subr.mxu0 0.0
    %2476 = vmatpush1.msra.mxu0 %v2416
    %2477 = vmatprep.subr.mxu0 0.0
    %2478 = vmatpush1.msra.mxu0 %v2417
    %2479 = vmatprep.subr.mxu0 0.0
    %2480 = vmatpush1.msra.mxu0 %v2418
    %2481 = vmatprep.subr.mxu0 0.0
    %2482 = vmatpush1.msra.mxu0 %v2419
    %2483 = vmatprep.subr.mxu0 0.0
    %2484 = vmatpush1.msra.mxu0 %v2420
    %2485 = vmatprep.mubr.f32.mxu0 %v64
    %2486 = vmatmul.mubr.f32.gmra.mrb[0].mxu0 %v63
    %v2487 = vpop.f32.mrb[0].mxu0
    %v2488 = vadd.f32 0.0, %v2487
    %v2489 = vpop.f32.mrb[0].mxu0
    %2490 = vdwg.mxu0
    %v2491 = vmul.f32 %v164, 0.9512294
    %v2492 = vadd.f32 %v2491, %v325
    %s2493 = smul.f32 %s61, 0.9512294
    %v2494 = vstv %s2493
    %v2495 = vmul.f32 %v2494, %v2488
    %v2496 = vadd.f32 %v2492, %v2495
    %v2497 = vmul.f32 %v2496, 2.857143
    %v2498 = vsub.f32 %v2497, %v336
    %v2499 = vtanh.pop %v2498
    %v2500 = vmul.f32 %v179, 0.118903674
    %v2501 = vmul.f32 %v180, 0.118903674
    %2502 = vxpose.xlu0.b32.start [1/16] %v2500, 128
    %2503 = vxpose.xlu0.b32.cont [2/16] 0.0, 128
    %2504 = vxpose.xlu0.b32.cont [3/16] 0.0, 128
    %2505 = vxpose.xlu0.b32.cont [4/16] 0.0, 128
    %2506 = vxpose.xlu0.b32.cont [5/16] 0.0, 128
    %2507 = vxpose.xlu0.b32.cont [6/16] 0.0, 128
    %2508 = vxpose.xlu0.b32.cont [7/16] 0.0, 128
    %2509 = vxpose.xlu0.b32.cont [8/16] 0.0, 128
    %2510 = vxpose.xlu0.b32.cont [9/16] 0.0, 128
    %2511 = vxpose.xlu0.b32.cont [10/16] 0.0, 128
    %2512 = vxpose.xlu0.b32.cont [11/16] 0.0, 128
    %2513 = vxpose.xlu0.b32.cont [12/16] 0.0, 128
    %2514 = vxpose.xlu0.b32.cont [13/16] 0.0, 128
    %2515 = vxpose.xlu0.b32.cont [14/16] 0.0, 128
    %2516 = vxpose.xlu0.b32.cont [15/16] 0.0, 128
    %2517 = vxpose.xlu0.b32.end [16/16] 0.0, 128
    %v2518 = vpop.trf.xlu0
    %v2519 = vpop.trf.xlu0
    %v2520 = vpop.trf.xlu0
    %v2521 = vpop.trf.xlu0
    %v2522 = vpop.trf.xlu0
    %v2523 = vpop.trf.xlu0
    %v2524 = vpop.trf.xlu0
    %v2525 = vpop.trf.xlu0
    %v2526 = vpop.trf.xlu0
    %v2527 = vpop.trf.xlu0
    %v2528 = vpop.trf.xlu0
    %v2529 = vpop.trf.xlu0
    %v2530 = vpop.trf.xlu0
    %v2531 = vpop.trf.xlu0
    %v2532 = vpop.trf.xlu0
    %v2533 = vpop.trf.xlu0
    %2534 = vxpose.xlu0.b32.start [1/16] %v2501, 128
    %2535 = vxpose.xlu0.b32.cont [2/16] 0.0, 128
    %2536 = vxpose.xlu0.b32.cont [3/16] 0.0, 128
    %2537 = vxpose.xlu0.b32.cont [4/16] 0.0, 128
    %2538 = vxpose.xlu0.b32.cont [5/16] 0.0, 128
    %2539 = vxpose.xlu0.b32.cont [6/16] 0.0, 128
    %2540 = vxpose.xlu0.b32.cont [7/16] 0.0, 128
    %2541 = vxpose.xlu0.b32.cont [8/16] 0.0, 128
    %2542 = vxpose.xlu0.b32.cont [9/16] 0.0, 128
    %2543 = vxpose.xlu0.b32.cont [10/16] 0.0, 128
    %2544 = vxpose.xlu0.b32.cont [11/16] 0.0, 128
    %2545 = vxpose.xlu0.b32.cont [12/16] 0.0, 128
    %2546 = vxpose.xlu0.b32.cont [13/16] 0.0, 128
    %2547 = vxpose.xlu0.b32.cont [14/16] 0.0, 128
    %2548 = vxpose.xlu0.b32.cont [15/16] 0.0, 128
    %2549 = vxpose.xlu0.b32.end [16/16] 0.0, 128
    %v2550 = vpop.trf.xlu0
    %v2551 = vpop.trf.xlu0
    %v2552 = vpop.trf.xlu0
    %v2553 = vpop.trf.xlu0
    %v2554 = vpop.trf.xlu0
    %v2555 = vpop.trf.xlu0
    %v2556 = vpop.trf.xlu0
    %v2557 = vpop.trf.xlu0
    %v2558 = vpop.trf.xlu0
    %v2559 = vpop.trf.xlu0
    %v2560 = vpop.trf.xlu0
    %v2561 = vpop.trf.xlu0
    %v2562 = vpop.trf.xlu0
    %v2563 = vpop.trf.xlu0
    %v2564 = vpop.trf.xlu0
    %v2565 = vpop.trf.xlu0
    %v2567 = vsel %vm406, %v2518, 0
    %v2570 = vsel %vm406, %v2519, 0
    %v2573 = vsel %vm406, %v2520, 0
    %v2576 = vsel %vm406, %v2521, 0
    %v2579 = vsel %vm406, %v2522, 0
    %v2582 = vsel %vm406, %v2523, 0
    %v2585 = vsel %vm406, %v2524, 0
    %v2588 = vsel %vm406, %v2525, 0
    %v2591 = vsel %vm406, %v2526, 0
    %v2594 = vsel %vm406, %v2527, 0
    %v2597 = vsel %vm406, %v2528, 0
    %v2600 = vsel %vm406, %v2529, 0
    %v2603 = vsel %vm406, %v2530, 0
    %v2606 = vsel %vm406, %v2531, 0
    %v2609 = vsel %vm406, %v2532, 0
    %v2612 = vsel %vm406, %v2533, 0
    %v2615 = vsel %vm406, %v2550, 0
    %v2618 = vsel %vm406, %v2551, 0
    %v2621 = vsel %vm406, %v2552, 0
    %v2624 = vsel %vm406, %v2553, 0
    %v2627 = vsel %vm406, %v2554, 0
    %v2630 = vsel %vm406, %v2555, 0
    %v2633 = vsel %vm406, %v2556, 0
    %v2636 = vsel %vm406, %v2557, 0
    %v2639 = vsel %vm406, %v2558, 0
    %v2642 = vsel %vm406, %v2559, 0
    %v2645 = vsel %vm406, %v2560, 0
    %v2648 = vsel %vm406, %v2561, 0
    %v2651 = vsel %vm406, %v2562, 0
    %v2654 = vsel %vm406, %v2563, 0
    %v2657 = vsel %vm406, %v2564, 0
    %v2660 = vsel %vm406, %v2565, 0
    %2662 = vmatprep.subr.mxu0 0.0
    %2663 = vmatpush1.msra.mxu0 %v2499
    %2664 = vmatprep.subr.mxu0 0.0
    %2665 = vmatpush1.msra.mxu0 0.0
    %2666 = vmatprep.subr.mxu0 0.0
    %2667 = vmatpush1.msra.mxu0 0.0
    %2668 = vmatprep.subr.mxu0 0.0
    %2669 = vmatpush1.msra.mxu0 0.0
    %2670 = vmatprep.subr.mxu0 0.0
    %2671 = vmatpush1.msra.mxu0 0.0
    %2672 = vmatprep.subr.mxu0 0.0
    %2673 = vmatpush1.msra.mxu0 0.0
    %2674 = vmatprep.subr.mxu0 0.0
    %2675 = vmatpush1.msra.mxu0 0.0
    %2676 = vmatprep.subr.mxu0 0.0
    %2677 = vmatpush1.msra.mxu0 0.0
    %2678 = vmatprep.subr.mxu0 0.0
    %2679 = vmatpush1.msra.mxu0 0.0
    %2680 = vmatprep.subr.mxu0 0.0
    %2681 = vmatpush1.msra.mxu0 0.0
    %2682 = vmatprep.subr.mxu0 0.0
    %2683 = vmatpush1.msra.mxu0 0.0
    %2684 = vmatprep.subr.mxu0 0.0
    %2685 = vmatpush1.msra.mxu0 0.0
    %2686 = vmatprep.subr.mxu0 0.0
    %2687 = vmatpush1.msra.mxu0 0.0
    %2688 = vmatprep.subr.mxu0 0.0
    %2689 = vmatpush1.msra.mxu0 0.0
    %2690 = vmatprep.subr.mxu0 0.0
    %2691 = vmatpush1.msra.mxu0 0.0
    %2692 = vmatprep.subr.mxu0 0.0
    %2693 = vmatpush1.msra.mxu0 0.0
    %2694 = vmatprep.subr.mxu0 0.0
    %2695 = vmatpush1.msra.mxu0 0.0
    %2696 = vmatprep.subr.mxu0 0.0
    %2697 = vmatpush1.msra.mxu0 0.0
    %2698 = vmatprep.subr.mxu0 0.0
    %2699 = vmatpush1.msra.mxu0 0.0
    %2700 = vmatprep.subr.mxu0 0.0
    %2701 = vmatpush1.msra.mxu0 0.0
    %2702 = vmatprep.subr.mxu0 0.0
    %2703 = vmatpush1.msra.mxu0 0.0
    %2704 = vmatprep.subr.mxu0 0.0
    %2705 = vmatpush1.msra.mxu0 0.0
    %2706 = vmatprep.subr.mxu0 0.0
    %2707 = vmatpush1.msra.mxu0 0.0
    %2708 = vmatprep.subr.mxu0 0.0
    %2709 = vmatpush1.msra.mxu0 0.0
    %2710 = vmatprep.subr.mxu0 0.0
    %2711 = vmatpush1.msra.mxu0 0.0
    %2712 = vmatprep.subr.mxu0 0.0
    %2713 = vmatpush1.msra.mxu0 0.0
    %2714 = vmatprep.subr.mxu0 0.0
    %2715 = vmatpush1.msra.mxu0 0.0
    %2716 = vmatprep.subr.mxu0 0.0
    %2717 = vmatpush1.msra.mxu0 0.0
    %2718 = vmatprep.subr.mxu0 0.0
    %2719 = vmatpush1.msra.mxu0 0.0
    %2720 = vmatprep.subr.mxu0 0.0
    %2721 = vmatpush1.msra.mxu0 0.0
    %2722 = vmatprep.subr.mxu0 0.0
    %2723 = vmatpush1.msra.mxu0 0.0
    %2724 = vmatprep.subr.mxu0 0.0
    %2725 = vmatpush1.msra.mxu0 0.0
    %2726 = vmatprep.mubr.f32.mxu0 0.0
    %2727 = vmatmul.mubr.f32.gmra.mrb[0].mxu0 %v2567
    %v2728 = vpop.f32.mrb[0].mxu0
    %v2729 = vadd.f32 0.0, %v2728
    %v2730 = vpop.f32.mrb[0].mxu0
    %2731 = vmatprep.mubr.f32.mxu0 0.0
    %2732 = vmatmul.mubr.f32.gmra.mrb[0].mxu0 %v2570
    %v2733 = vpop.f32.mrb[0].mxu0
    %v2734 = vadd.f32 0.0, %v2733
    %v2735 = vpop.f32.mrb[0].mxu0
    %2736 = vmatprep.mubr.f32.mxu0 0.0
    %2737 = vmatmul.mubr.f32.gmra.mrb[0].mxu0 %v2573
    %v2738 = vpop.f32.mrb[0].mxu0
    %v2739 = vadd.f32 0.0, %v2738
    %v2740 = vpop.f32.mrb[0].mxu0
    %2741 = vmatprep.mubr.f32.mxu0 0.0
    %2742 = vmatmul.mubr.f32.gmra.mrb[0].mxu0 %v2576
    %v2743 = vpop.f32.mrb[0].mxu0
    %v2744 = vadd.f32 0.0, %v2743
    %v2745 = vpop.f32.mrb[0].mxu0
    %2746 = vmatprep.mubr.f32.mxu0 0.0
    %2747 = vmatmul.mubr.f32.gmra.mrb[0].mxu0 %v2579
    %v2748 = vpop.f32.mrb[0].mxu0
    %v2749 = vadd.f32 0.0, %v2748
    %v2750 = vpop.f32.mrb[0].mxu0
    %2751 = vmatprep.mubr.f32.mxu0 0.0
    %2752 = vmatmul.mubr.f32.gmra.mrb[0].mxu0 %v2582
    %v2753 = vpop.f32.mrb[0].mxu0
    %v2754 = vadd.f32 0.0, %v2753
    %v2755 = vpop.f32.mrb[0].mxu0
    %2756 = vmatprep.mubr.f32.mxu0 0.0
    %2757 = vmatmul.mubr.f32.gmra.mrb[0].mxu0 %v2585
    %v2758 = vpop.f32.mrb[0].mxu0
    %v2759 = vadd.f32 0.0, %v2758
    %v2760 = vpop.f32.mrb[0].mxu0
    %2761 = vmatprep.mubr.f32.mxu0 0.0
    %2762 = vmatmul.mubr.f32.gmra.mrb[0].mxu0 %v2588
    %v2763 = vpop.f32.mrb[0].mxu0
    %v2764 = vadd.f32 0.0, %v2763
    %v2765 = vpop.f32.mrb[0].mxu0
    %2766 = vmatprep.mubr.f32.mxu0 0.0
    %2767 = vmatmul.mubr.f32.gmra.mrb[0].mxu0 %v2591
    %v2768 = vpop.f32.mrb[0].mxu0
    %v2769 = vadd.f32 0.0, %v2768
    %v2770 = vpop.f32.mrb[0].mxu0
    %2771 = vmatprep.mubr.f32.mxu0 0.0
    %2772 = vmatmul.mubr.f32.gmra.mrb[0].mxu0 %v2594
    %v2773 = vpop.f32.mrb[0].mxu0
    %v2774 = vadd.f32 0.0, %v2773
    %v2775 = vpop.f32.mrb[0].mxu0
    %2776 = vmatprep.mubr.f32.mxu0 0.0
    %2777 = vmatmul.mubr.f32.gmra.mrb[0].mxu0 %v2597
    %v2778 = vpop.f32.mrb[0].mxu0
    %v2779 = vadd.f32 0.0, %v2778
    %v2780 = vpop.f32.mrb[0].mxu0
    %2781 = vmatprep.mubr.f32.mxu0 0.0
    %2782 = vmatmul.mubr.f32.gmra.mrb[0].mxu0 %v2600
    %v2783 = vpop.f32.mrb[0].mxu0
    %v2784 = vadd.f32 0.0, %v2783
    %v2785 = vpop.f32.mrb[0].mxu0
    %2786 = vmatprep.mubr.f32.mxu0 0.0
    %2787 = vmatmul.mubr.f32.gmra.mrb[0].mxu0 %v2603
    %v2788 = vpop.f32.mrb[0].mxu0
    %v2789 = vadd.f32 0.0, %v2788
    %v2790 = vpop.f32.mrb[0].mxu0
    %2791 = vmatprep.mubr.f32.mxu0 0.0
    %2792 = vmatmul.mubr.f32.gmra.mrb[0].mxu0 %v2606
    %v2793 = vpop.f32.mrb[0].mxu0
    %v2794 = vadd.f32 0.0, %v2793
    %v2795 = vpop.f32.mrb[0].mxu0
    %2796 = vmatprep.mubr.f32.mxu0 0.0
    %2797 = vmatmul.mubr.f32.gmra.mrb[0].mxu0 %v2609
    %v2798 = vpop.f32.mrb[0].mxu0
    %v2799 = vadd.f32 0.0, %v2798
    %v2800 = vpop.f32.mrb[0].mxu0
    %2801 = vmatprep.mubr.f32.mxu0 0.0
    %2802 = vmatmul.mubr.f32.gmra.mrb[0].mxu0 %v2612
    %v2803 = vpop.f32.mrb[0].mxu0
    %v2804 = vadd.f32 0.0, %v2803
    %v2805 = vpop.f32.mrb[0].mxu0
    %2806 = vmatprep.mubr.f32.mxu0 0.0
    %2807 = vmatmul.mubr.f32.gmra.mrb[0].mxu0 %v2615
    %v2808 = vpop.f32.mrb[0].mxu0
    %v2809 = vadd.f32 0.0, %v2808
    %v2810 = vpop.f32.mrb[0].mxu0
    %2811 = vmatprep.mubr.f32.mxu0 0.0
    %2812 = vmatmul.mubr.f32.gmra.mrb[0].mxu0 %v2618
    %v2813 = vpop.f32.mrb[0].mxu0
    %v2814 = vadd.f32 0.0, %v2813
    %v2815 = vpop.f32.mrb[0].mxu0
    %2816 = vmatprep.mubr.f32.mxu0 0.0
    %2817 = vmatmul.mubr.f32.gmra.mrb[0].mxu0 %v2621
    %v2818 = vpop.f32.mrb[0].mxu0
    %v2819 = vadd.f32 0.0, %v2818
    %v2820 = vpop.f32.mrb[0].mxu0
    %2821 = vmatprep.mubr.f32.mxu0 0.0
    %2822 = vmatmul.mubr.f32.gmra.mrb[0].mxu0 %v2624
    %v2823 = vpop.f32.mrb[0].mxu0
    %v2824 = vadd.f32 0.0, %v2823
    %v2825 = vpop.f32.mrb[0].mxu0
    %2826 = vmatprep.mubr.f32.mxu0 0.0
    %2827 = vmatmul.mubr.f32.gmra.mrb[0].mxu0 %v2627
    %v2828 = vpop.f32.mrb[0].mxu0
    %v2829 = vadd.f32 0.0, %v2828
    %v2830 = vpop.f32.mrb[0].mxu0
    %2831 = vmatprep.mubr.f32.mxu0 0.0
    %2832 = vmatmul.mubr.f32.gmra.mrb[0].mxu0 %v2630
    %v2833 = vpop.f32.mrb[0].mxu0
    %v2834 = vadd.f32 0.0, %v2833
    %v2835 = vpop.f32.mrb[0].mxu0
    %2836 = vmatprep.mubr.f32.mxu0 0.0
    %2837 = vmatmul.mubr.f32.gmra.mrb[0].mxu0 %v2633
    %v2838 = vpop.f32.mrb[0].mxu0
    %v2839 = vadd.f32 0.0, %v2838
    %v2840 = vpop.f32.mrb[0].mxu0
    %2841 = vmatprep.mubr.f32.mxu0 0.0
    %2842 = vmatmul.mubr.f32.gmra.mrb[0].mxu0 %v2636
    %v2843 = vpop.f32.mrb[0].mxu0
    %v2844 = vadd.f32 0.0, %v2843
    %v2845 = vpop.f32.mrb[0].mxu0
    %2846 = vmatprep.mubr.f32.mxu0 0.0
    %2847 = vmatmul.mubr.f32.gmra.mrb[0].mxu0 %v2639
    %v2848 = vpop.f32.mrb[0].mxu0
    %v2849 = vadd.f32 0.0, %v2848
    %v2850 = vpop.f32.mrb[0].mxu0
    %2851 = vmatprep.mubr.f32.mxu0 0.0
    %2852 = vmatmul.mubr.f32.gmra.mrb[0].mxu0 %v2642
    %v2853 = vpop.f32.mrb[0].mxu0
    %v2854 = vadd.f32 0.0, %v2853
    %v2855 = vpop.f32.mrb[0].mxu0
    %2856 = vmatprep.mubr.f32.mxu0 0.0
    %2857 = vmatmul.mubr.f32.gmra.mrb[0].mxu0 %v2645
    %v2858 = vpop.f32.mrb[0].mxu0
    %v2859 = vadd.f32 0.0, %v2858
    %v2860 = vpop.f32.mrb[0].mxu0
    %2861 = vmatprep.mubr.f32.mxu0 0.0
    %2862 = vmatmul.mubr.f32.gmra.mrb[0].mxu0 %v2648
    %v2863 = vpop.f32.mrb[0].mxu0
    %v2864 = vadd.f32 0.0, %v2863
    %v2865 = vpop.f32.mrb[0].mxu0
    %2866 = vmatprep.mubr.f32.mxu0 0.0
    %2867 = vmatmul.mubr.f32.gmra.mrb[0].mxu0 %v2651
    %v2868 = vpop.f32.mrb[0].mxu0
    %v2869 = vadd.f32 0.0, %v2868
    %v2870 = vpop.f32.mrb[0].mxu0
    %2871 = vmatprep.mubr.f32.mxu0 0.0
    %2872 = vmatmul.mubr.f32.gmra.mrb[0].mxu0 %v2654
    %v2873 = vpop.f32.mrb[0].mxu0
    %v2874 = vadd.f32 0.0, %v2873
    %v2875 = vpop.f32.mrb[0].mxu0
    %2876 = vmatprep.mubr.f32.mxu0 0.0
    %2877 = vmatmul.mubr.f32.gmra.mrb[0].mxu0 %v2657
    %v2878 = vpop.f32.mrb[0].mxu0
    %v2879 = vadd.f32 0.0, %v2878
    %v2880 = vpop.f32.mrb[0].mxu0
    %2881 = vmatprep.mubr.f32.mxu0 0.0
    %2882 = vmatmul.mubr.f32.gmra.mrb[0].mxu0 %v2660
    %v2883 = vpop.f32.mrb[0].mxu0
    %v2884 = vadd.f32 0.0, %v2883
    %v2885 = vpop.f32.mrb[0].mxu0
    %2886 = vdwg.mxu0
    %v2887 = vmul.f32 %v2389, 0.95
    %v2888 = vmul.f32 %v2390, 0.95
    %v2889 = vmul.f32 %v2391, 0.95
    %v2890 = vmul.f32 %v2392, 0.95
    %v2891 = vmul.f32 %v2393, 0.95
    %v2892 = vmul.f32 %v2394, 0.95
    %v2893 = vmul.f32 %v2395, 0.95
    %v2894 = vmul.f32 %v2396, 0.95
    %v2895 = vmul.f32 %v2397, 0.95
    %v2896 = vmul.f32 %v2398, 0.95
    %v2897 = vmul.f32 %v2399, 0.95
    %v2898 = vmul.f32 %v2400, 0.95
    %v2899 = vmul.f32 %v2401, 0.95
    %v2900 = vmul.f32 %v2402, 0.95
    %v2901 = vmul.f32 %v2403, 0.95
    %v2902 = vmul.f32 %v2404, 0.95
    %v2903 = vmul.f32 %v2405, 0.95
    %v2904 = vmul.f32 %v2406, 0.95
    %v2905 = vmul.f32 %v2407, 0.95
    %v2906 = vmul.f32 %v2408, 0.95
    %v2907 = vmul.f32 %v2409, 0.95
    %v2908 = vmul.f32 %v2410, 0.95
    %v2909 = vmul.f32 %v2411, 0.95
    %v2910 = vmul.f32 %v2412, 0.95
    %v2911 = vmul.f32 %v2413, 0.95
    %v2912 = vmul.f32 %v2414, 0.95
    %v2913 = vmul.f32 %v2415, 0.95
    %v2914 = vmul.f32 %v2416, 0.95
    %v2915 = vmul.f32 %v2417, 0.95
    %v2916 = vmul.f32 %v2418, 0.95
    %v2917 = vmul.f32 %v2419, 0.95
    %v2918 = vmul.f32 %v2420, 0.95
    %v2919 = vadd.f32 %v2887, %v2729
    %v2920 = vadd.f32 %v2888, %v2734
    %v2921 = vadd.f32 %v2889, %v2739
    %v2922 = vadd.f32 %v2890, %v2744
    %v2923 = vadd.f32 %v2891, %v2749
    %v2924 = vadd.f32 %v2892, %v2754
    %v2925 = vadd.f32 %v2893, %v2759
    %v2926 = vadd.f32 %v2894, %v2764
    %v2927 = vadd.f32 %v2895, %v2769
    %v2928 = vadd.f32 %v2896, %v2774
    %v2929 = vadd.f32 %v2897, %v2779
    %v2930 = vadd.f32 %v2898, %v2784
    %v2931 = vadd.f32 %v2899, %v2789
    %v2932 = vadd.f32 %v2900, %v2794
    %v2933 = vadd.f32 %v2901, %v2799
    %v2934 = vadd.f32 %v2902, %v2804
    %v2935 = vadd.f32 %v2903, %v2809
    %v2936 = vadd.f32 %v2904, %v2814
    %v2937 = vadd.f32 %v2905, %v2819
    %v2938 = vadd.f32 %v2906, %v2824
    %v2939 = vadd.f32 %v2907, %v2829
    %v2940 = vadd.f32 %v2908, %v2834
    %v2941 = vadd.f32 %v2909, %v2839
    %v2942 = vadd.f32 %v2910, %v2844
    %v2943 = vadd.f32 %v2911, %v2849
    %v2944 = vadd.f32 %v2912, %v2854
    %v2945 = vadd.f32 %v2913, %v2859
    %v2946 = vadd.f32 %v2914, %v2864
    %v2947 = vadd.f32 %v2915, %v2869
    %v2948 = vadd.f32 %v2916, %v2874
    %v2949 = vadd.f32 %v2917, %v2879
    %v2950 = vadd.f32 %v2918, %v2884
    %v2951 = vmax.f32 %v2919, -4.0
    %v2952 = vmax.f32 %v2920, -4.0
    %v2953 = vmax.f32 %v2921, -4.0
    %v2954 = vmax.f32 %v2922, -4.0
    %v2955 = vmax.f32 %v2923, -4.0
    %v2956 = vmax.f32 %v2924, -4.0
    %v2957 = vmax.f32 %v2925, -4.0
    %v2958 = vmax.f32 %v2926, -4.0
    %v2959 = vmax.f32 %v2927, -4.0
    %v2960 = vmax.f32 %v2928, -4.0
    %v2961 = vmax.f32 %v2929, -4.0
    %v2962 = vmax.f32 %v2930, -4.0
    %v2963 = vmax.f32 %v2931, -4.0
    %v2964 = vmax.f32 %v2932, -4.0
    %v2965 = vmax.f32 %v2933, -4.0
    %v2966 = vmax.f32 %v2934, -4.0
    %v2967 = vmax.f32 %v2935, -4.0
    %v2968 = vmax.f32 %v2936, -4.0
    %v2969 = vmax.f32 %v2937, -4.0
    %v2970 = vmax.f32 %v2938, -4.0
    %v2971 = vmax.f32 %v2939, -4.0
    %v2972 = vmax.f32 %v2940, -4.0
    %v2973 = vmax.f32 %v2941, -4.0
    %v2974 = vmax.f32 %v2942, -4.0
    %v2975 = vmax.f32 %v2943, -4.0
    %v2976 = vmax.f32 %v2944, -4.0
    %v2977 = vmax.f32 %v2945, -4.0
    %v2978 = vmax.f32 %v2946, -4.0
    %v2979 = vmax.f32 %v2947, -4.0
    %v2980 = vmax.f32 %v2948, -4.0
    %v2981 = vmax.f32 %v2949, -4.0
    %v2982 = vmax.f32 %v2950, -4.0
    %v2983 = vmin.f32 %v2951, 4.0
    %v2984 = vmin.f32 %v2952, 4.0
    %v2985 = vmin.f32 %v2953, 4.0
    %v2986 = vmin.f32 %v2954, 4.0
    %v2987 = vmin.f32 %v2955, 4.0
    %v2988 = vmin.f32 %v2956, 4.0
    %v2989 = vmin.f32 %v2957, 4.0
    %v2990 = vmin.f32 %v2958, 4.0
    %v2991 = vmin.f32 %v2959, 4.0
    %v2992 = vmin.f32 %v2960, 4.0
    %v2993 = vmin.f32 %v2961, 4.0
    %v2994 = vmin.f32 %v2962, 4.0
    %v2995 = vmin.f32 %v2963, 4.0
    %v2996 = vmin.f32 %v2964, 4.0
    %v2997 = vmin.f32 %v2965, 4.0
    %v2998 = vmin.f32 %v2966, 4.0
    %v2999 = vmin.f32 %v2967, 4.0
    %v3000 = vmin.f32 %v2968, 4.0
    %v3001 = vmin.f32 %v2969, 4.0
    %v3002 = vmin.f32 %v2970, 4.0
    %v3003 = vmin.f32 %v2971, 4.0
    %v3004 = vmin.f32 %v2972, 4.0
    %v3005 = vmin.f32 %v2973, 4.0
    %v3006 = vmin.f32 %v2974, 4.0
    %v3007 = vmin.f32 %v2975, 4.0
    %v3008 = vmin.f32 %v2976, 4.0
    %v3009 = vmin.f32 %v2977, 4.0
    %v3010 = vmin.f32 %v2978, 4.0
    %v3011 = vmin.f32 %v2979, 4.0
    %v3012 = vmin.f32 %v2980, 4.0
    %v3013 = vmin.f32 %v2981, 4.0
    %v3014 = vmin.f32 %v2982, 4.0
    %3015 = vst [vmem:[%s15] sm:$0xff] %v2983
    %3016 = vst [vmem:[%s15 + $0x8] sm:$0xff] %v2984
    %3017 = vst [vmem:[%s15 + $0x10] sm:$0xff] %v2985
    %3018 = vst [vmem:[%s15 + $0x18] sm:$0xff] %v2986
    %3019 = vst [vmem:[%s15 + $0x20] sm:$0xff] %v2987
    %3020 = vst [vmem:[%s15 + $0x28] sm:$0xff] %v2988
    %3021 = vst [vmem:[%s15 + $0x30] sm:$0xff] %v2989
    %3022 = vst [vmem:[%s15 + $0x38] sm:$0xff] %v2990
    %3023 = vst [vmem:[%s15 + $0x40] sm:$0xff] %v2991
    %3024 = vst [vmem:[%s15 + $0x48] sm:$0xff] %v2992
    %3025 = vst [vmem:[%s15 + $0x50] sm:$0xff] %v2993
    %3026 = vst [vmem:[%s15 + $0x58] sm:$0xff] %v2994
    %3027 = vst [vmem:[%s15 + $0x60] sm:$0xff] %v2995
    %3028 = vst [vmem:[%s15 + $0x68] sm:$0xff] %v2996
    %3029 = vst [vmem:[%s15 + $0x70] sm:$0xff] %v2997
    %3030 = vst [vmem:[%s15 + $0x78] sm:$0xff] %v2998
    %3031 = vst [vmem:[%s15 + $0x80] sm:$0xff] %v2999
    %3032 = vst [vmem:[%s15 + $0x88] sm:$0xff] %v3000
    %3033 = vst [vmem:[%s15 + $0x90] sm:$0xff] %v3001
    %3034 = vst [vmem:[%s15 + $0x98] sm:$0xff] %v3002
    %3035 = vst [vmem:[%s15 + $0xa0] sm:$0xff] %v3003
    %3036 = vst [vmem:[%s15 + $0xa8] sm:$0xff] %v3004
    %3037 = vst [vmem:[%s15 + $0xb0] sm:$0xff] %v3005
    %3038 = vst [vmem:[%s15 + $0xb8] sm:$0xff] %v3006
    %3039 = vst [vmem:[%s15 + $0xc0] sm:$0xff] %v3007
    %3040 = vst [vmem:[%s15 + $0xc8] sm:$0xff] %v3008
    %3041 = vst [vmem:[%s15 + $0xd0] sm:$0xff] %v3009
    %3042 = vst [vmem:[%s15 + $0xd8] sm:$0xff] %v3010
    %3043 = vst [vmem:[%s15 + $0xe0] sm:$0xff] %v3011
    %3044 = vst [vmem:[%s15 + $0xe8] sm:$0xff] %v3012
    %3045 = vst [vmem:[%s15 + $0xf0] sm:$0xff] %v3013
    %3046 = vst [vmem:[%s15 + $0xf8] sm:$0xff] %v3014
    %v3047 = vsub.f32 %v2496, %v1983
    %v3048 = vmul.f32 %v3047, 0.5
    %v3049 = vadd.f32 %v1983, %v3048
    %vm3050 = vcmp.ge.f32.partialorder %v3049, 1.0
    %v3051 = vsel %vm3050, 1, 0
    %v3052 = vcvt.s32.f32 %v3051
    %v3053 = vsub.f32 1.0, %v3052
    %v3054 = vmul.f32 %v3049, %v3053
    %v3055 = vadd.f32 %v1984, %v3052
    %v3056 = vmul.f32 %v896, %v2364
    %v3057 = vmul.f32 %v896, %v2365
    %v3058 = vmul.f32 %v896, %v2366
    %v3059 = vmul.f32 %v896, %v2367
    %v3060 = vmul.f32 %v896, %v2368
    %v3061 = vmul.f32 %v896, %v2369
    %v3062 = vmul.f32 %v896, %v2370
    %v3063 = vmul.f32 %v896, %v2371
    %v3064 = vmul.f32 %v896, %v2372
    %v3065 = vmul.f32 %v896, %v2373
    %v3066 = vmul.f32 %v896, %v2374
    %v3067 = vmul.f32 %v896, %v2375
    %v3068 = vmul.f32 %v896, %v2376
    %v3069 = vmul.f32 %v896, %v2377
    %v3070 = vmul.f32 %v896, %v2378
    %v3071 = vmul.f32 %v896, %v2379
    %v3072 = vadd.f32 %v187, %v3056
    %v3073 = vadd.f32 %v188, %v3057
    %v3074 = vadd.f32 %v189, %v3058
    %v3075 = vadd.f32 %v190, %v3059
    %v3076 = vadd.f32 %v191, %v3060
    %v3077 = vadd.f32 %v192, %v3061
    %v3078 = vadd.f32 %v193, %v3062
    %v3079 = vadd.f32 %v194, %v3063
    %v3080 = vadd.f32 %v195, %v3064
    %v3081 = vadd.f32 %v196, %v3065
    %v3082 = vadd.f32 %v197, %v3066
    %v3083 = vadd.f32 %v198, %v3067
    %v3084 = vadd.f32 %v199, %v3068
    %v3085 = vadd.f32 %v200, %v3069
    %v3086 = vadd.f32 %v201, %v3070
    %v3087 = vadd.f32 %v202, %v3071
    %3088 = vmatprep.subr.mxu0 0.0
    %3089 = vmatpush1.msra.mxu0 %v3072
    %3090 = vmatprep.subr.mxu0 0.0
    %3091 = vmatpush1.msra.mxu0 %v3073
    %3092 = vmatprep.subr.mxu0 0.0
    %3093 = vmatpush1.msra.mxu0 %v3074
    %3094 = vmatprep.subr.mxu0 0.0
    %3095 = vmatpush1.msra.mxu0 %v3075
    %3096 = vmatprep.subr.mxu0 0.0
    %3097 = vmatpush1.msra.mxu0 %v3076
    %3098 = vmatprep.subr.mxu0 0.0
    %3099 = vmatpush1.msra.mxu0 %v3077
    %3100 = vmatprep.subr.mxu0 0.0
    %3101 = vmatpush1.msra.mxu0 %v3078
    %3102 = vmatprep.subr.mxu0 0.0
    %3103 = vmatpush1.msra.mxu0 %v3079
    %3104 = vmatprep.subr.mxu0 0.0
    %3105 = vmatpush1.msra.mxu0 %v3080
    %3106 = vmatprep.subr.mxu0 0.0
    %3107 = vmatpush1.msra.mxu0 %v3081
    %3108 = vmatprep.subr.mxu0 0.0
    %3109 = vmatpush1.msra.mxu0 %v3082
    %3110 = vmatprep.subr.mxu0 0.0
    %3111 = vmatpush1.msra.mxu0 %v3083
    %3112 = vmatprep.subr.mxu0 0.0
    %3113 = vmatpush1.msra.mxu0 %v3084
    %3114 = vmatprep.subr.mxu0 0.0
    %3115 = vmatpush1.msra.mxu0 %v3085
    %3116 = vmatprep.subr.mxu0 0.0
    %3117 = vmatpush1.msra.mxu0 %v3086
    %3118 = vmatprep.subr.mxu0 0.0
    %3119 = vmatpush1.msra.mxu0 %v3087
    %3120 = vmatprep.subr.mxu0 0.0
    %3121 = vmatpush1.msra.mxu0 0.0
    %3122 = vmatprep.subr.mxu0 0.0
    %3123 = vmatpush1.msra.mxu0 0.0
    %3124 = vmatprep.subr.mxu0 0.0
    %3125 = vmatpush1.msra.mxu0 0.0
    %3126 = vmatprep.subr.mxu0 0.0
    %3127 = vmatpush1.msra.mxu0 0.0
    %3128 = vmatprep.subr.mxu0 0.0
    %3129 = vmatpush1.msra.mxu0 0.0
    %3130 = vmatprep.subr.mxu0 0.0
    %3131 = vmatpush1.msra.mxu0 0.0
    %3132 = vmatprep.subr.mxu0 0.0
    %3133 = vmatpush1.msra.mxu0 0.0
    %3134 = vmatprep.subr.mxu0 0.0
    %3135 = vmatpush1.msra.mxu0 0.0
    %3136 = vmatprep.subr.mxu0 0.0
    %3137 = vmatpush1.msra.mxu0 0.0
    %3138 = vmatprep.subr.mxu0 0.0
    %3139 = vmatpush1.msra.mxu0 0.0
    %3140 = vmatprep.subr.mxu0 0.0
    %3141 = vmatpush1.msra.mxu0 0.0
    %3142 = vmatprep.subr.mxu0 0.0
    %3143 = vmatpush1.msra.mxu0 0.0
    %3144 = vmatprep.subr.mxu0 0.0
    %3145 = vmatpush1.msra.mxu0 0.0
    %3146 = vmatprep.subr.mxu0 0.0
    %3147 = vmatpush1.msra.mxu0 0.0
    %3148 = vmatprep.subr.mxu0 0.0
    %3149 = vmatpush1.msra.mxu0 0.0
    %3150 = vmatprep.subr.mxu0 0.0
    %3151 = vmatpush1.msra.mxu0 0.0
    %3152 = vmatprep.mubr.f32.mxu0 0.0
    %3153 = vmatmul.mubr.f32.gmra.mrb[0].mxu0 %v3052
    %v3154 = vpop.f32.mrb[0].mxu0
    %v3155 = vadd.f32 %v933, %v3154
    %v3156 = vpop.f32.mrb[0].mxu0
    %3157 = vdwg.mxu0
    %v3158 = vmul.f32 %v3155, 2.857143
    %v3159 = vsub.f32 %v3158, %v1010
    %v3160 = vtanh.pop %v3159
    %v3161 = vmul.f32 %v3052, %v1018
    %3162 = vxpose.xlu0.b32.start [1/16] %v3161, 128
    %3163 = vxpose.xlu0.b32.cont [2/16] 0.0, 128
    %3164 = vxpose.xlu0.b32.cont [3/16] 0.0, 128
    %3165 = vxpose.xlu0.b32.cont [4/16] 0.0, 128
    %3166 = vxpose.xlu0.b32.cont [5/16] 0.0, 128
    %3167 = vxpose.xlu0.b32.cont [6/16] 0.0, 128
    %3168 = vxpose.xlu0.b32.cont [7/16] 0.0, 128
    %3169 = vxpose.xlu0.b32.cont [8/16] 0.0, 128
    %3170 = vxpose.xlu0.b32.cont [9/16] 0.0, 128
    %3171 = vxpose.xlu0.b32.cont [10/16] 0.0, 128
    %3172 = vxpose.xlu0.b32.cont [11/16] 0.0, 128
    %3173 = vxpose.xlu0.b32.cont [12/16] 0.0, 128
    %3174 = vxpose.xlu0.b32.cont [13/16] 0.0, 128
    %3175 = vxpose.xlu0.b32.cont [14/16] 0.0, 128
    %3176 = vxpose.xlu0.b32.cont [15/16] 0.0, 128
    %3177 = vxpose.xlu0.b32.end [16/16] 0.0, 128
    %v3178 = vpop.trf.xlu0
    %v3179 = vpop.trf.xlu0
    %v3180 = vpop.trf.xlu0
    %v3181 = vpop.trf.xlu0
    %v3182 = vpop.trf.xlu0
    %v3183 = vpop.trf.xlu0
    %v3184 = vpop.trf.xlu0
    %v3185 = vpop.trf.xlu0
    %v3186 = vpop.trf.xlu0
    %v3187 = vpop.trf.xlu0
    %v3188 = vpop.trf.xlu0
    %v3189 = vpop.trf.xlu0
    %v3190 = vpop.trf.xlu0
    %v3191 = vpop.trf.xlu0
    %v3192 = vpop.trf.xlu0
    %v3193 = vpop.trf.xlu0
    %v3195 = vsel %vm406, %v3178, 0
    %v3198 = vsel %vm406, %v3179, 0
    %v3201 = vsel %vm406, %v3180, 0
    %v3204 = vsel %vm406, %v3181, 0
    %v3207 = vsel %vm406, %v3182, 0
    %v3210 = vsel %vm406, %v3183, 0
    %v3213 = vsel %vm406, %v3184, 0
    %v3216 = vsel %vm406, %v3185, 0
    %v3219 = vsel %vm406, %v3186, 0
    %v3222 = vsel %vm406, %v3187, 0
    %v3225 = vsel %vm406, %v3188, 0
    %v3228 = vsel %vm406, %v3189, 0
    %v3231 = vsel %vm406, %v3190, 0
    %v3234 = vsel %vm406, %v3191, 0
    %v3237 = vsel %vm406, %v3192, 0
    %v3240 = vsel %vm406, %v3193, 0
    %3242 = vmatprep.subr.mxu0 0.0
    %3243 = vmatpush1.msra.mxu0 %v3160
    %3244 = vmatprep.subr.mxu0 0.0
    %3245 = vmatpush1.msra.mxu0 0.0
    %3246 = vmatprep.subr.mxu0 0.0
    %3247 = vmatpush1.msra.mxu0 0.0
    %3248 = vmatprep.subr.mxu0 0.0
    %3249 = vmatpush1.msra.mxu0 0.0
    %3250 = vmatprep.subr.mxu0 0.0
    %3251 = vmatpush1.msra.mxu0 0.0
    %3252 = vmatprep.subr.mxu0 0.0
    %3253 = vmatpush1.msra.mxu0 0.0
    %3254 = vmatprep.subr.mxu0 0.0
    %3255 = vmatpush1.msra.mxu0 0.0
    %3256 = vmatprep.subr.mxu0 0.0
    %3257 = vmatpush1.msra.mxu0 0.0
    %3258 = vmatprep.subr.mxu0 0.0
    %3259 = vmatpush1.msra.mxu0 0.0
    %3260 = vmatprep.subr.mxu0 0.0
    %3261 = vmatpush1.msra.mxu0 0.0
    %3262 = vmatprep.subr.mxu0 0.0
    %3263 = vmatpush1.msra.mxu0 0.0
    %3264 = vmatprep.subr.mxu0 0.0
    %3265 = vmatpush1.msra.mxu0 0.0
    %3266 = vmatprep.subr.mxu0 0.0
    %3267 = vmatpush1.msra.mxu0 0.0
    %3268 = vmatprep.subr.mxu0 0.0
    %3269 = vmatpush1.msra.mxu0 0.0
    %3270 = vmatprep.subr.mxu0 0.0
    %3271 = vmatpush1.msra.mxu0 0.0
    %3272 = vmatprep.subr.mxu0 0.0
    %3273 = vmatpush1.msra.mxu0 0.0
    %3274 = vmatprep.subr.mxu0 0.0
    %3275 = vmatpush1.msra.mxu0 0.0
    %3276 = vmatprep.subr.mxu0 0.0
    %3277 = vmatpush1.msra.mxu0 0.0
    %3278 = vmatprep.subr.mxu0 0.0
    %3279 = vmatpush1.msra.mxu0 0.0
    %3280 = vmatprep.subr.mxu0 0.0
    %3281 = vmatpush1.msra.mxu0 0.0
    %3282 = vmatprep.subr.mxu0 0.0
    %3283 = vmatpush1.msra.mxu0 0.0
    %3284 = vmatprep.subr.mxu0 0.0
    %3285 = vmatpush1.msra.mxu0 0.0
    %3286 = vmatprep.subr.mxu0 0.0
    %3287 = vmatpush1.msra.mxu0 0.0
    %3288 = vmatprep.subr.mxu0 0.0
    %3289 = vmatpush1.msra.mxu0 0.0
    %3290 = vmatprep.subr.mxu0 0.0
    %3291 = vmatpush1.msra.mxu0 0.0
    %3292 = vmatprep.subr.mxu0 0.0
    %3293 = vmatpush1.msra.mxu0 0.0
    %3294 = vmatprep.subr.mxu0 0.0
    %3295 = vmatpush1.msra.mxu0 0.0
    %3296 = vmatprep.subr.mxu0 0.0
    %3297 = vmatpush1.msra.mxu0 0.0
    %3298 = vmatprep.subr.mxu0 0.0
    %3299 = vmatpush1.msra.mxu0 0.0
    %3300 = vmatprep.subr.mxu0 0.0
    %3301 = vmatpush1.msra.mxu0 0.0
    %3302 = vmatprep.subr.mxu0 0.0
    %3303 = vmatpush1.msra.mxu0 0.0
    %3304 = vmatprep.subr.mxu0 0.0
    %3305 = vmatpush1.msra.mxu0 0.0
    %3306 = vmatprep.mubr.f32.mxu0 0.0
    %3307 = vmatmul.mubr.f32.gmra.mrb[0].mxu0 %v3195
    %v3308 = vpop.f32.mrb[0].mxu0
    %v3309 = vadd.f32 0.0, %v3308
    %v3310 = vpop.f32.mrb[0].mxu0
    %3311 = vmatprep.mubr.f32.mxu0 0.0
    %3312 = vmatmul.mubr.f32.gmra.mrb[0].mxu0 %v3198
    %v3313 = vpop.f32.mrb[0].mxu0
    %v3314 = vadd.f32 0.0, %v3313
    %v3315 = vpop.f32.mrb[0].mxu0
    %3316 = vmatprep.mubr.f32.mxu0 0.0
    %3317 = vmatmul.mubr.f32.gmra.mrb[0].mxu0 %v3201
    %v3318 = vpop.f32.mrb[0].mxu0
    %v3319 = vadd.f32 0.0, %v3318
    %v3320 = vpop.f32.mrb[0].mxu0
    %3321 = vmatprep.mubr.f32.mxu0 0.0
    %3322 = vmatmul.mubr.f32.gmra.mrb[0].mxu0 %v3204
    %v3323 = vpop.f32.mrb[0].mxu0
    %v3324 = vadd.f32 0.0, %v3323
    %v3325 = vpop.f32.mrb[0].mxu0
    %3326 = vmatprep.mubr.f32.mxu0 0.0
    %3327 = vmatmul.mubr.f32.gmra.mrb[0].mxu0 %v3207
    %v3328 = vpop.f32.mrb[0].mxu0
    %v3329 = vadd.f32 0.0, %v3328
    %v3330 = vpop.f32.mrb[0].mxu0
    %3331 = vmatprep.mubr.f32.mxu0 0.0
    %3332 = vmatmul.mubr.f32.gmra.mrb[0].mxu0 %v3210
    %v3333 = vpop.f32.mrb[0].mxu0
    %v3334 = vadd.f32 0.0, %v3333
    %v3335 = vpop.f32.mrb[0].mxu0
    %3336 = vmatprep.mubr.f32.mxu0 0.0
    %3337 = vmatmul.mubr.f32.gmra.mrb[0].mxu0 %v3213
    %v3338 = vpop.f32.mrb[0].mxu0
    %v3339 = vadd.f32 0.0, %v3338
    %v3340 = vpop.f32.mrb[0].mxu0
    %3341 = vmatprep.mubr.f32.mxu0 0.0
    %3342 = vmatmul.mubr.f32.gmra.mrb[0].mxu0 %v3216
    %v3343 = vpop.f32.mrb[0].mxu0
    %v3344 = vadd.f32 0.0, %v3343
    %v3345 = vpop.f32.mrb[0].mxu0
    %3346 = vmatprep.mubr.f32.mxu0 0.0
    %3347 = vmatmul.mubr.f32.gmra.mrb[0].mxu0 %v3219
    %v3348 = vpop.f32.mrb[0].mxu0
    %v3349 = vadd.f32 0.0, %v3348
    %v3350 = vpop.f32.mrb[0].mxu0
    %3351 = vmatprep.mubr.f32.mxu0 0.0
    %3352 = vmatmul.mubr.f32.gmra.mrb[0].mxu0 %v3222
    %v3353 = vpop.f32.mrb[0].mxu0
    %v3354 = vadd.f32 0.0, %v3353
    %v3355 = vpop.f32.mrb[0].mxu0
    %3356 = vmatprep.mubr.f32.mxu0 0.0
    %3357 = vmatmul.mubr.f32.gmra.mrb[0].mxu0 %v3225
    %v3358 = vpop.f32.mrb[0].mxu0
    %v3359 = vadd.f32 0.0, %v3358
    %v3360 = vpop.f32.mrb[0].mxu0
    %3361 = vmatprep.mubr.f32.mxu0 0.0
    %3362 = vmatmul.mubr.f32.gmra.mrb[0].mxu0 %v3228
    %v3363 = vpop.f32.mrb[0].mxu0
    %v3364 = vadd.f32 0.0, %v3363
    %v3365 = vpop.f32.mrb[0].mxu0
    %3366 = vmatprep.mubr.f32.mxu0 0.0
    %3367 = vmatmul.mubr.f32.gmra.mrb[0].mxu0 %v3231
    %v3368 = vpop.f32.mrb[0].mxu0
    %v3369 = vadd.f32 0.0, %v3368
    %v3370 = vpop.f32.mrb[0].mxu0
    %3371 = vmatprep.mubr.f32.mxu0 0.0
    %3372 = vmatmul.mubr.f32.gmra.mrb[0].mxu0 %v3234
    %v3373 = vpop.f32.mrb[0].mxu0
    %v3374 = vadd.f32 0.0, %v3373
    %v3375 = vpop.f32.mrb[0].mxu0
    %3376 = vmatprep.mubr.f32.mxu0 0.0
    %3377 = vmatmul.mubr.f32.gmra.mrb[0].mxu0 %v3237
    %v3378 = vpop.f32.mrb[0].mxu0
    %v3379 = vadd.f32 0.0, %v3378
    %v3380 = vpop.f32.mrb[0].mxu0
    %3381 = vmatprep.mubr.f32.mxu0 0.0
    %3382 = vmatmul.mubr.f32.gmra.mrb[0].mxu0 %v3240
    %v3383 = vpop.f32.mrb[0].mxu0
    %v3384 = vadd.f32 0.0, %v3383
    %v3385 = vpop.f32.mrb[0].mxu0
    %3386 = vdwg.mxu0
    %v3387 = vmul.f32 %v2364, 0.95
    %v3388 = vmul.f32 %v2365, 0.95
    %v3389 = vmul.f32 %v2366, 0.95
    %v3390 = vmul.f32 %v2367, 0.95
    %v3391 = vmul.f32 %v2368, 0.95
    %v3392 = vmul.f32 %v2369, 0.95
    %v3393 = vmul.f32 %v2370, 0.95
    %v3394 = vmul.f32 %v2371, 0.95
    %v3395 = vmul.f32 %v2372, 0.95
    %v3396 = vmul.f32 %v2373, 0.95
    %v3397 = vmul.f32 %v2374, 0.95
    %v3398 = vmul.f32 %v2375, 0.95
    %v3399 = vmul.f32 %v2376, 0.95
    %v3400 = vmul.f32 %v2377, 0.95
    %v3401 = vmul.f32 %v2378, 0.95
    %v3402 = vmul.f32 %v2379, 0.95
    %v3403 = vadd.f32 %v3387, %v3309
    %v3404 = vadd.f32 %v3388, %v3314
    %v3405 = vadd.f32 %v3389, %v3319
    %v3406 = vadd.f32 %v3390, %v3324
    %v3407 = vadd.f32 %v3391, %v3329
    %v3408 = vadd.f32 %v3392, %v3334
    %v3409 = vadd.f32 %v3393, %v3339
    %v3410 = vadd.f32 %v3394, %v3344
    %v3411 = vadd.f32 %v3395, %v3349
    %v3412 = vadd.f32 %v3396, %v3354
    %v3413 = vadd.f32 %v3397, %v3359
    %v3414 = vadd.f32 %v3398, %v3364
    %v3415 = vadd.f32 %v3399, %v3369
    %v3416 = vadd.f32 %v3400, %v3374
    %v3417 = vadd.f32 %v3401, %v3379
    %v3418 = vadd.f32 %v3402, %v3384
    %v3419 = vmax.f32 %v3403, -4.0
    %v3420 = vmax.f32 %v3404, -4.0
    %v3421 = vmax.f32 %v3405, -4.0
    %v3422 = vmax.f32 %v3406, -4.0
    %v3423 = vmax.f32 %v3407, -4.0
    %v3424 = vmax.f32 %v3408, -4.0
    %v3425 = vmax.f32 %v3409, -4.0
    %v3426 = vmax.f32 %v3410, -4.0
    %v3427 = vmax.f32 %v3411, -4.0
    %v3428 = vmax.f32 %v3412, -4.0
    %v3429 = vmax.f32 %v3413, -4.0
    %v3430 = vmax.f32 %v3414, -4.0
    %v3431 = vmax.f32 %v3415, -4.0
    %v3432 = vmax.f32 %v3416, -4.0
    %v3433 = vmax.f32 %v3417, -4.0
    %v3434 = vmax.f32 %v3418, -4.0
    %v3435 = vmin.f32 %v3419, 4.0
    %v3436 = vmin.f32 %v3420, 4.0
    %v3437 = vmin.f32 %v3421, 4.0
    %v3438 = vmin.f32 %v3422, 4.0
    %v3439 = vmin.f32 %v3423, 4.0
    %v3440 = vmin.f32 %v3424, 4.0
    %v3441 = vmin.f32 %v3425, 4.0
    %v3442 = vmin.f32 %v3426, 4.0
    %v3443 = vmin.f32 %v3427, 4.0
    %v3444 = vmin.f32 %v3428, 4.0
    %v3445 = vmin.f32 %v3429, 4.0
    %v3446 = vmin.f32 %v3430, 4.0
    %v3447 = vmin.f32 %v3431, 4.0
    %v3448 = vmin.f32 %v3432, 4.0
    %v3449 = vmin.f32 %v3433, 4.0
    %v3450 = vmin.f32 %v3434, 4.0
    %v3451 = vsub.f32 %v3155, %v2387
    %v3452 = vmul.f32 %v3451, 0.5
    %v3453 = vadd.f32 %v2387, %v3452
    %vm3454 = vcmp.ge.f32.partialorder %v3453, 1.0
    %v3455 = vsel %vm3454, 1, 0
    %v3456 = vcvt.s32.f32 %v3455
    %v3457 = vsub.f32 1.0, %v3456
    %v3458 = vmul.f32 %v3453, %v3457
    %v3459 = vadd.f32 %v2388, %v3456
    %v3460 = vld [vmem:[%s15] sm:$0xff]
    %v3461 = vld [vmem:[%s15 + $0x8] sm:$0xff]
    %v3462 = vld [vmem:[%s15 + $0x10] sm:$0xff]
    %v3463 = vld [vmem:[%s15 + $0x18] sm:$0xff]
    %v3464 = vld [vmem:[%s15 + $0x20] sm:$0xff]
    %v3465 = vld [vmem:[%s15 + $0x28] sm:$0xff]
    %v3466 = vld [vmem:[%s15 + $0x30] sm:$0xff]
    %v3467 = vld [vmem:[%s15 + $0x38] sm:$0xff]
    %v3468 = vld [vmem:[%s15 + $0x40] sm:$0xff]
    %v3469 = vld [vmem:[%s15 + $0x48] sm:$0xff]
    %v3470 = vld [vmem:[%s15 + $0x50] sm:$0xff]
    %v3471 = vld [vmem:[%s15 + $0x58] sm:$0xff]
    %v3472 = vld [vmem:[%s15 + $0x60] sm:$0xff]
    %v3473 = vld [vmem:[%s15 + $0x68] sm:$0xff]
    %v3474 = vld [vmem:[%s15 + $0x70] sm:$0xff]
    %v3475 = vld [vmem:[%s15 + $0x78] sm:$0xff]
    %v3476 = vld [vmem:[%s15 + $0x80] sm:$0xff]
    %v3477 = vld [vmem:[%s15 + $0x88] sm:$0xff]
    %v3478 = vld [vmem:[%s15 + $0x90] sm:$0xff]
    %v3479 = vld [vmem:[%s15 + $0x98] sm:$0xff]
    %v3480 = vld [vmem:[%s15 + $0xa0] sm:$0xff]
    %v3481 = vld [vmem:[%s15 + $0xa8] sm:$0xff]
    %v3482 = vld [vmem:[%s15 + $0xb0] sm:$0xff]
    %v3483 = vld [vmem:[%s15 + $0xb8] sm:$0xff]
    %v3484 = vld [vmem:[%s15 + $0xc0] sm:$0xff]
    %v3485 = vld [vmem:[%s15 + $0xc8] sm:$0xff]
    %v3486 = vld [vmem:[%s15 + $0xd0] sm:$0xff]
    %v3487 = vld [vmem:[%s15 + $0xd8] sm:$0xff]
    %v3488 = vld [vmem:[%s15 + $0xe0] sm:$0xff]
    %v3489 = vld [vmem:[%s15 + $0xe8] sm:$0xff]
    %v3490 = vld [vmem:[%s15 + $0xf0] sm:$0xff]
    %v3491 = vld [vmem:[%s15 + $0xf8] sm:$0xff]
    %3492 = vmatprep.subr.mxu0 0.0
    %3493 = vmatpush1.msra.mxu0 %v3460
    %3494 = vmatprep.subr.mxu0 0.0
    %3495 = vmatpush1.msra.mxu0 %v3461
    %3496 = vmatprep.subr.mxu0 0.0
    %3497 = vmatpush1.msra.mxu0 %v3462
    %3498 = vmatprep.subr.mxu0 0.0
    %3499 = vmatpush1.msra.mxu0 %v3463
    %3500 = vmatprep.subr.mxu0 0.0
    %3501 = vmatpush1.msra.mxu0 %v3464
    %3502 = vmatprep.subr.mxu0 0.0
    %3503 = vmatpush1.msra.mxu0 %v3465
    %3504 = vmatprep.subr.mxu0 0.0
    %3505 = vmatpush1.msra.mxu0 %v3466
    %3506 = vmatprep.subr.mxu0 0.0
    %3507 = vmatpush1.msra.mxu0 %v3467
    %3508 = vmatprep.subr.mxu0 0.0
    %3509 = vmatpush1.msra.mxu0 %v3468
    %3510 = vmatprep.subr.mxu0 0.0
    %3511 = vmatpush1.msra.mxu0 %v3469
    %3512 = vmatprep.subr.mxu0 0.0
    %3513 = vmatpush1.msra.mxu0 %v3470
    %3514 = vmatprep.subr.mxu0 0.0
    %3515 = vmatpush1.msra.mxu0 %v3471
    %3516 = vmatprep.subr.mxu0 0.0
    %3517 = vmatpush1.msra.mxu0 %v3472
    %3518 = vmatprep.subr.mxu0 0.0
    %3519 = vmatpush1.msra.mxu0 %v3473
    %3520 = vmatprep.subr.mxu0 0.0
    %3521 = vmatpush1.msra.mxu0 %v3474
    %3522 = vmatprep.subr.mxu0 0.0
    %3523 = vmatpush1.msra.mxu0 %v3475
    %3524 = vmatprep.subr.mxu0 0.0
    %3525 = vmatpush1.msra.mxu0 %v3476
    %3526 = vmatprep.subr.mxu0 0.0
    %3527 = vmatpush1.msra.mxu0 %v3477
    %3528 = vmatprep.subr.mxu0 0.0
    %3529 = vmatpush1.msra.mxu0 %v3478
    %3530 = vmatprep.subr.mxu0 0.0
    %3531 = vmatpush1.msra.mxu0 %v3479
    %3532 = vmatprep.subr.mxu0 0.0
    %3533 = vmatpush1.msra.mxu0 %v3480
    %3534 = vmatprep.subr.mxu0 0.0
    %3535 = vmatpush1.msra.mxu0 %v3481
    %3536 = vmatprep.subr.mxu0 0.0
    %3537 = vmatpush1.msra.mxu0 %v3482
    %3538 = vmatprep.subr.mxu0 0.0
    %3539 = vmatpush1.msra.mxu0 %v3483
    %3540 = vmatprep.subr.mxu0 0.0
    %3541 = vmatpush1.msra.mxu0 %v3484
    %3542 = vmatprep.subr.mxu0 0.0
    %3543 = vmatpush1.msra.mxu0 %v3485
    %3544 = vmatprep.subr.mxu0 0.0
    %3545 = vmatpush1.msra.mxu0 %v3486
    %3546 = vmatprep.subr.mxu0 0.0
    %3547 = vmatpush1.msra.mxu0 %v3487
    %3548 = vmatprep.subr.mxu0 0.0
    %3549 = vmatpush1.msra.mxu0 %v3488
    %3550 = vmatprep.subr.mxu0 0.0
    %3551 = vmatpush1.msra.mxu0 %v3489
    %3552 = vmatprep.subr.mxu0 0.0
    %3553 = vmatpush1.msra.mxu0 %v3490
    %3554 = vmatprep.subr.mxu0 0.0
    %3555 = vmatpush1.msra.mxu0 %v3491
    %3556 = vmatprep.mubr.f32.mxu0 %v64
    %3557 = vmatmul.mubr.f32.gmra.mrb[0].mxu0 %v63
    %v3558 = vpop.f32.mrb[0].mxu0
    %v3559 = vadd.f32 0.0, %v3558
    %v3560 = vpop.f32.mrb[0].mxu0
    %3561 = vdwg.mxu0
    %v3562 = vmul.f32 %v164, 0.9277435
    %v3563 = vadd.f32 %v3562, %v325
    %s3564 = smul.f32 %s61, 0.9277435
    %v3565 = vstv %s3564
    %v3566 = vmul.f32 %v3565, %v3559
    %v3567 = vadd.f32 %v3563, %v3566
    %v3568 = vmul.f32 %v3567, 2.857143
    %v3569 = vsub.f32 %v3568, %v336
    %v3570 = vtanh.pop %v3569
    %v3571 = vmul.f32 %v179, 0.11596794
    %v3572 = vmul.f32 %v180, 0.11596794
    %3573 = vxpose.xlu0.b32.start [1/16] %v3571, 128
    %3574 = vxpose.xlu0.b32.cont [2/16] 0.0, 128
    %3575 = vxpose.xlu0.b32.cont [3/16] 0.0, 128
    %3576 = vxpose.xlu0.b32.cont [4/16] 0.0, 128
    %3577 = vxpose.xlu0.b32.cont [5/16] 0.0, 128
    %3578 = vxpose.xlu0.b32.cont [6/16] 0.0, 128
    %3579 = vxpose.xlu0.b32.cont [7/16] 0.0, 128
    %3580 = vxpose.xlu0.b32.cont [8/16] 0.0, 128
    %3581 = vxpose.xlu0.b32.cont [9/16] 0.0, 128
    %3582 = vxpose.xlu0.b32.cont [10/16] 0.0, 128
    %3583 = vxpose.xlu0.b32.cont [11/16] 0.0, 128
    %3584 = vxpose.xlu0.b32.cont [12/16] 0.0, 128
    %3585 = vxpose.xlu0.b32.cont [13/16] 0.0, 128
    %3586 = vxpose.xlu0.b32.cont [14/16] 0.0, 128
    %3587 = vxpose.xlu0.b32.cont [15/16] 0.0, 128
    %3588 = vxpose.xlu0.b32.end [16/16] 0.0, 128
    %v3589 = vpop.trf.xlu0
    %v3590 = vpop.trf.xlu0
    %v3591 = vpop.trf.xlu0
    %v3592 = vpop.trf.xlu0
    %v3593 = vpop.trf.xlu0
    %v3594 = vpop.trf.xlu0
    %v3595 = vpop.trf.xlu0
    %v3596 = vpop.trf.xlu0
    %v3597 = vpop.trf.xlu0
    %v3598 = vpop.trf.xlu0
    %v3599 = vpop.trf.xlu0
    %v3600 = vpop.trf.xlu0
    %v3601 = vpop.trf.xlu0
    %v3602 = vpop.trf.xlu0
    %v3603 = vpop.trf.xlu0
    %v3604 = vpop.trf.xlu0
    %3605 = vxpose.xlu0.b32.start [1/16] %v3572, 128
    %3606 = vxpose.xlu0.b32.cont [2/16] 0.0, 128
    %3607 = vxpose.xlu0.b32.cont [3/16] 0.0, 128
    %3608 = vxpose.xlu0.b32.cont [4/16] 0.0, 128
    %3609 = vxpose.xlu0.b32.cont [5/16] 0.0, 128
    %3610 = vxpose.xlu0.b32.cont [6/16] 0.0, 128
    %3611 = vxpose.xlu0.b32.cont [7/16] 0.0, 128
    %3612 = vxpose.xlu0.b32.cont [8/16] 0.0, 128
    %3613 = vxpose.xlu0.b32.cont [9/16] 0.0, 128
    %3614 = vxpose.xlu0.b32.cont [10/16] 0.0, 128
    %3615 = vxpose.xlu0.b32.cont [11/16] 0.0, 128
    %3616 = vxpose.xlu0.b32.cont [12/16] 0.0, 128
    %3617 = vxpose.xlu0.b32.cont [13/16] 0.0, 128
    %3618 = vxpose.xlu0.b32.cont [14/16] 0.0, 128
    %3619 = vxpose.xlu0.b32.cont [15/16] 0.0, 128
    %3620 = vxpose.xlu0.b32.end [16/16] 0.0, 128
    %v3621 = vpop.trf.xlu0
    %v3622 = vpop.trf.xlu0
    %v3623 = vpop.trf.xlu0
    %v3624 = vpop.trf.xlu0
    %v3625 = vpop.trf.xlu0
    %v3626 = vpop.trf.xlu0
    %v3627 = vpop.trf.xlu0
    %v3628 = vpop.trf.xlu0
    %v3629 = vpop.trf.xlu0
    %v3630 = vpop.trf.xlu0
    %v3631 = vpop.trf.xlu0
    %v3632 = vpop.trf.xlu0
    %v3633 = vpop.trf.xlu0
    %v3634 = vpop.trf.xlu0
    %v3635 = vpop.trf.xlu0
    %v3636 = vpop.trf.xlu0
    %v3638 = vsel %vm406, %v3589, 0
    %v3641 = vsel %vm406, %v3590, 0
    %v3644 = vsel %vm406, %v3591, 0
    %v3647 = vsel %vm406, %v3592, 0
    %v3650 = vsel %vm406, %v3593, 0
    %v3653 = vsel %vm406, %v3594, 0
    %v3656 = vsel %vm406, %v3595, 0
    %v3659 = vsel %vm406, %v3596, 0
    %v3662 = vsel %vm406, %v3597, 0
    %v3665 = vsel %vm406, %v3598, 0
    %v3668 = vsel %vm406, %v3599, 0
    %v3671 = vsel %vm406, %v3600, 0
    %v3674 = vsel %vm406, %v3601, 0
    %v3677 = vsel %vm406, %v3602, 0
    %v3680 = vsel %vm406, %v3603, 0
    %v3683 = vsel %vm406, %v3604, 0
    %v3686 = vsel %vm406, %v3621, 0
    %v3689 = vsel %vm406, %v3622, 0
    %v3692 = vsel %vm406, %v3623, 0
    %v3695 = vsel %vm406, %v3624, 0
    %v3698 = vsel %vm406, %v3625, 0
    %v3701 = vsel %vm406, %v3626, 0
    %v3704 = vsel %vm406, %v3627, 0
    %v3707 = vsel %vm406, %v3628, 0
    %v3710 = vsel %vm406, %v3629, 0
    %v3713 = vsel %vm406, %v3630, 0
    %v3716 = vsel %vm406, %v3631, 0
    %v3719 = vsel %vm406, %v3632, 0
    %v3722 = vsel %vm406, %v3633, 0
    %v3725 = vsel %vm406, %v3634, 0
    %v3728 = vsel %vm406, %v3635, 0
    %v3731 = vsel %vm406, %v3636, 0
    %3733 = vmatprep.subr.mxu0 0.0
    %3734 = vmatpush1.msra.mxu0 %v3570
    %3735 = vmatprep.subr.mxu0 0.0
    %3736 = vmatpush1.msra.mxu0 0.0
    %3737 = vmatprep.subr.mxu0 0.0
    %3738 = vmatpush1.msra.mxu0 0.0
    %3739 = vmatprep.subr.mxu0 0.0
    %3740 = vmatpush1.msra.mxu0 0.0
    %3741 = vmatprep.subr.mxu0 0.0
    %3742 = vmatpush1.msra.mxu0 0.0
    %3743 = vmatprep.subr.mxu0 0.0
    %3744 = vmatpush1.msra.mxu0 0.0
    %3745 = vmatprep.subr.mxu0 0.0
    %3746 = vmatpush1.msra.mxu0 0.0
    %3747 = vmatprep.subr.mxu0 0.0
    %3748 = vmatpush1.msra.mxu0 0.0
    %3749 = vmatprep.subr.mxu0 0.0
    %3750 = vmatpush1.msra.mxu0 0.0
    %3751 = vmatprep.subr.mxu0 0.0
    %3752 = vmatpush1.msra.mxu0 0.0
    %3753 = vmatprep.subr.mxu0 0.0
    %3754 = vmatpush1.msra.mxu0 0.0
    %3755 = vmatprep.subr.mxu0 0.0
    %3756 = vmatpush1.msra.mxu0 0.0
    %3757 = vmatprep.subr.mxu0 0.0
    %3758 = vmatpush1.msra.mxu0 0.0
    %3759 = vmatprep.subr.mxu0 0.0
    %3760 = vmatpush1.msra.mxu0 0.0
    %3761 = vmatprep.subr.mxu0 0.0
    %3762 = vmatpush1.msra.mxu0 0.0
    %3763 = vmatprep.subr.mxu0 0.0
    %3764 = vmatpush1.msra.mxu0 0.0
    %3765 = vmatprep.subr.mxu0 0.0
    %3766 = vmatpush1.msra.mxu0 0.0
    %3767 = vmatprep.subr.mxu0 0.0
    %3768 = vmatpush1.msra.mxu0 0.0
    %3769 = vmatprep.subr.mxu0 0.0
    %3770 = vmatpush1.msra.mxu0 0.0
    %3771 = vmatprep.subr.mxu0 0.0
    %3772 = vmatpush1.msra.mxu0 0.0
    %3773 = vmatprep.subr.mxu0 0.0
    %3774 = vmatpush1.msra.mxu0 0.0
    %3775 = vmatprep.subr.mxu0 0.0
    %3776 = vmatpush1.msra.mxu0 0.0
    %3777 = vmatprep.subr.mxu0 0.0
    %3778 = vmatpush1.msra.mxu0 0.0
    %3779 = vmatprep.subr.mxu0 0.0
    %3780 = vmatpush1.msra.mxu0 0.0
    %3781 = vmatprep.subr.mxu0 0.0
    %3782 = vmatpush1.msra.mxu0 0.0
    %3783 = vmatprep.subr.mxu0 0.0
    %3784 = vmatpush1.msra.mxu0 0.0
    %3785 = vmatprep.subr.mxu0 0.0
    %3786 = vmatpush1.msra.mxu0 0.0
    %3787 = vmatprep.subr.mxu0 0.0
    %3788 = vmatpush1.msra.mxu0 0.0
    %3789 = vmatprep.subr.mxu0 0.0
    %3790 = vmatpush1.msra.mxu0 0.0
    %3791 = vmatprep.subr.mxu0 0.0
    %3792 = vmatpush1.msra.mxu0 0.0
    %3793 = vmatprep.subr.mxu0 0.0
    %3794 = vmatpush1.msra.mxu0 0.0
    %3795 = vmatprep.subr.mxu0 0.0
    %3796 = vmatpush1.msra.mxu0 0.0
    %3797 = vmatprep.mubr.f32.mxu0 0.0
    %3798 = vmatmul.mubr.f32.gmra.mrb[0].mxu0 %v3638
    %v3799 = vpop.f32.mrb[0].mxu0
    %v3800 = vadd.f32 0.0, %v3799
    %v3801 = vpop.f32.mrb[0].mxu0
    %3802 = vmatprep.mubr.f32.mxu0 0.0
    %3803 = vmatmul.mubr.f32.gmra.mrb[0].mxu0 %v3641
    %v3804 = vpop.f32.mrb[0].mxu0
    %v3805 = vadd.f32 0.0, %v3804
    %v3806 = vpop.f32.mrb[0].mxu0
    %3807 = vmatprep.mubr.f32.mxu0 0.0
    %3808 = vmatmul.mubr.f32.gmra.mrb[0].mxu0 %v3644
    %v3809 = vpop.f32.mrb[0].mxu0
    %v3810 = vadd.f32 0.0, %v3809
    %v3811 = vpop.f32.mrb[0].mxu0
    %3812 = vmatprep.mubr.f32.mxu0 0.0
    %3813 = vmatmul.mubr.f32.gmra.mrb[0].mxu0 %v3647
    %v3814 = vpop.f32.mrb[0].mxu0
    %v3815 = vadd.f32 0.0, %v3814
    %v3816 = vpop.f32.mrb[0].mxu0
    %3817 = vmatprep.mubr.f32.mxu0 0.0
    %3818 = vmatmul.mubr.f32.gmra.mrb[0].mxu0 %v3650
    %v3819 = vpop.f32.mrb[0].mxu0
    %v3820 = vadd.f32 0.0, %v3819
    %v3821 = vpop.f32.mrb[0].mxu0
    %3822 = vmatprep.mubr.f32.mxu0 0.0
    %3823 = vmatmul.mubr.f32.gmra.mrb[0].mxu0 %v3653
    %v3824 = vpop.f32.mrb[0].mxu0
    %v3825 = vadd.f32 0.0, %v3824
    %v3826 = vpop.f32.mrb[0].mxu0
    %3827 = vmatprep.mubr.f32.mxu0 0.0
    %3828 = vmatmul.mubr.f32.gmra.mrb[0].mxu0 %v3656
    %v3829 = vpop.f32.mrb[0].mxu0
    %v3830 = vadd.f32 0.0, %v3829
    %v3831 = vpop.f32.mrb[0].mxu0
    %3832 = vmatprep.mubr.f32.mxu0 0.0
    %3833 = vmatmul.mubr.f32.gmra.mrb[0].mxu0 %v3659
    %v3834 = vpop.f32.mrb[0].mxu0
    %v3835 = vadd.f32 0.0, %v3834
    %v3836 = vpop.f32.mrb[0].mxu0
    %3837 = vmatprep.mubr.f32.mxu0 0.0
    %3838 = vmatmul.mubr.f32.gmra.mrb[0].mxu0 %v3662
    %v3839 = vpop.f32.mrb[0].mxu0
    %v3840 = vadd.f32 0.0, %v3839
    %v3841 = vpop.f32.mrb[0].mxu0
    %3842 = vmatprep.mubr.f32.mxu0 0.0
    %3843 = vmatmul.mubr.f32.gmra.mrb[0].mxu0 %v3665
    %v3844 = vpop.f32.mrb[0].mxu0
    %v3845 = vadd.f32 0.0, %v3844
    %v3846 = vpop.f32.mrb[0].mxu0
    %3847 = vmatprep.mubr.f32.mxu0 0.0
    %3848 = vmatmul.mubr.f32.gmra.mrb[0].mxu0 %v3668
    %v3849 = vpop.f32.mrb[0].mxu0
    %v3850 = vadd.f32 0.0, %v3849
    %v3851 = vpop.f32.mrb[0].mxu0
    %3852 = vmatprep.mubr.f32.mxu0 0.0
    %3853 = vmatmul.mubr.f32.gmra.mrb[0].mxu0 %v3671
    %v3854 = vpop.f32.mrb[0].mxu0
    %v3855 = vadd.f32 0.0, %v3854
    %v3856 = vpop.f32.mrb[0].mxu0
    %3857 = vmatprep.mubr.f32.mxu0 0.0
    %3858 = vmatmul.mubr.f32.gmra.mrb[0].mxu0 %v3674
    %v3859 = vpop.f32.mrb[0].mxu0
    %v3860 = vadd.f32 0.0, %v3859
    %v3861 = vpop.f32.mrb[0].mxu0
    %3862 = vmatprep.mubr.f32.mxu0 0.0
    %3863 = vmatmul.mubr.f32.gmra.mrb[0].mxu0 %v3677
    %v3864 = vpop.f32.mrb[0].mxu0
    %v3865 = vadd.f32 0.0, %v3864
    %v3866 = vpop.f32.mrb[0].mxu0
    %3867 = vmatprep.mubr.f32.mxu0 0.0
    %3868 = vmatmul.mubr.f32.gmra.mrb[0].mxu0 %v3680
    %v3869 = vpop.f32.mrb[0].mxu0
    %v3870 = vadd.f32 0.0, %v3869
    %v3871 = vpop.f32.mrb[0].mxu0
    %3872 = vmatprep.mubr.f32.mxu0 0.0
    %3873 = vmatmul.mubr.f32.gmra.mrb[0].mxu0 %v3683
    %v3874 = vpop.f32.mrb[0].mxu0
    %v3875 = vadd.f32 0.0, %v3874
    %v3876 = vpop.f32.mrb[0].mxu0
    %3877 = vmatprep.mubr.f32.mxu0 0.0
    %3878 = vmatmul.mubr.f32.gmra.mrb[0].mxu0 %v3686
    %v3879 = vpop.f32.mrb[0].mxu0
    %v3880 = vadd.f32 0.0, %v3879
    %v3881 = vpop.f32.mrb[0].mxu0
    %3882 = vmatprep.mubr.f32.mxu0 0.0
    %3883 = vmatmul.mubr.f32.gmra.mrb[0].mxu0 %v3689
    %v3884 = vpop.f32.mrb[0].mxu0
    %v3885 = vadd.f32 0.0, %v3884
    %v3886 = vpop.f32.mrb[0].mxu0
    %3887 = vmatprep.mubr.f32.mxu0 0.0
    %3888 = vmatmul.mubr.f32.gmra.mrb[0].mxu0 %v3692
    %v3889 = vpop.f32.mrb[0].mxu0
    %v3890 = vadd.f32 0.0, %v3889
    %v3891 = vpop.f32.mrb[0].mxu0
    %3892 = vmatprep.mubr.f32.mxu0 0.0
    %3893 = vmatmul.mubr.f32.gmra.mrb[0].mxu0 %v3695
    %v3894 = vpop.f32.mrb[0].mxu0
    %v3895 = vadd.f32 0.0, %v3894
    %v3896 = vpop.f32.mrb[0].mxu0
    %3897 = vmatprep.mubr.f32.mxu0 0.0
    %3898 = vmatmul.mubr.f32.gmra.mrb[0].mxu0 %v3698
    %v3899 = vpop.f32.mrb[0].mxu0
    %v3900 = vadd.f32 0.0, %v3899
    %v3901 = vpop.f32.mrb[0].mxu0
    %3902 = vmatprep.mubr.f32.mxu0 0.0
    %3903 = vmatmul.mubr.f32.gmra.mrb[0].mxu0 %v3701
    %v3904 = vpop.f32.mrb[0].mxu0
    %v3905 = vadd.f32 0.0, %v3904
    %v3906 = vpop.f32.mrb[0].mxu0
    %3907 = vmatprep.mubr.f32.mxu0 0.0
    %3908 = vmatmul.mubr.f32.gmra.mrb[0].mxu0 %v3704
    %v3909 = vpop.f32.mrb[0].mxu0
    %v3910 = vadd.f32 0.0, %v3909
    %v3911 = vpop.f32.mrb[0].mxu0
    %3912 = vmatprep.mubr.f32.mxu0 0.0
    %3913 = vmatmul.mubr.f32.gmra.mrb[0].mxu0 %v3707
    %v3914 = vpop.f32.mrb[0].mxu0
    %v3915 = vadd.f32 0.0, %v3914
    %v3916 = vpop.f32.mrb[0].mxu0
    %3917 = vmatprep.mubr.f32.mxu0 0.0
    %3918 = vmatmul.mubr.f32.gmra.mrb[0].mxu0 %v3710
    %v3919 = vpop.f32.mrb[0].mxu0
    %v3920 = vadd.f32 0.0, %v3919
    %v3921 = vpop.f32.mrb[0].mxu0
    %3922 = vmatprep.mubr.f32.mxu0 0.0
    %3923 = vmatmul.mubr.f32.gmra.mrb[0].mxu0 %v3713
    %v3924 = vpop.f32.mrb[0].mxu0
    %v3925 = vadd.f32 0.0, %v3924
    %v3926 = vpop.f32.mrb[0].mxu0
    %3927 = vmatprep.mubr.f32.mxu0 0.0
    %3928 = vmatmul.mubr.f32.gmra.mrb[0].mxu0 %v3716
    %v3929 = vpop.f32.mrb[0].mxu0
    %v3930 = vadd.f32 0.0, %v3929
    %v3931 = vpop.f32.mrb[0].mxu0
    %3932 = vmatprep.mubr.f32.mxu0 0.0
    %3933 = vmatmul.mubr.f32.gmra.mrb[0].mxu0 %v3719
    %v3934 = vpop.f32.mrb[0].mxu0
    %v3935 = vadd.f32 0.0, %v3934
    %v3936 = vpop.f32.mrb[0].mxu0
    %3937 = vmatprep.mubr.f32.mxu0 0.0
    %3938 = vmatmul.mubr.f32.gmra.mrb[0].mxu0 %v3722
    %v3939 = vpop.f32.mrb[0].mxu0
    %v3940 = vadd.f32 0.0, %v3939
    %v3941 = vpop.f32.mrb[0].mxu0
    %3942 = vmatprep.mubr.f32.mxu0 0.0
    %3943 = vmatmul.mubr.f32.gmra.mrb[0].mxu0 %v3725
    %v3944 = vpop.f32.mrb[0].mxu0
    %v3945 = vadd.f32 0.0, %v3944
    %v3946 = vpop.f32.mrb[0].mxu0
    %3947 = vmatprep.mubr.f32.mxu0 0.0
    %3948 = vmatmul.mubr.f32.gmra.mrb[0].mxu0 %v3728
    %v3949 = vpop.f32.mrb[0].mxu0
    %v3950 = vadd.f32 0.0, %v3949
    %v3951 = vpop.f32.mrb[0].mxu0
    %3952 = vmatprep.mubr.f32.mxu0 0.0
    %3953 = vmatmul.mubr.f32.gmra.mrb[0].mxu0 %v3731
    %v3954 = vpop.f32.mrb[0].mxu0
    %v3955 = vadd.f32 0.0, %v3954
    %v3956 = vpop.f32.mrb[0].mxu0
    %3957 = vdwg.mxu0
    %v3958 = vmul.f32 %v3460, 0.95
    %v3959 = vmul.f32 %v3461, 0.95
    %v3960 = vmul.f32 %v3462, 0.95
    %v3961 = vmul.f32 %v3463, 0.95
    %v3962 = vmul.f32 %v3464, 0.95
    %v3963 = vmul.f32 %v3465, 0.95
    %v3964 = vmul.f32 %v3466, 0.95
    %v3965 = vmul.f32 %v3467, 0.95
    %v3966 = vmul.f32 %v3468, 0.95
    %v3967 = vmul.f32 %v3469, 0.95
    %v3968 = vmul.f32 %v3470, 0.95
    %v3969 = vmul.f32 %v3471, 0.95
    %v3970 = vmul.f32 %v3472, 0.95
    %v3971 = vmul.f32 %v3473, 0.95
    %v3972 = vmul.f32 %v3474, 0.95
    %v3973 = vmul.f32 %v3475, 0.95
    %v3974 = vmul.f32 %v3476, 0.95
    %v3975 = vmul.f32 %v3477, 0.95
    %v3976 = vmul.f32 %v3478, 0.95
    %v3977 = vmul.f32 %v3479, 0.95
    %v3978 = vmul.f32 %v3480, 0.95
    %v3979 = vmul.f32 %v3481, 0.95
    %v3980 = vmul.f32 %v3482, 0.95
    %v3981 = vmul.f32 %v3483, 0.95
    %v3982 = vmul.f32 %v3484, 0.95
    %v3983 = vmul.f32 %v3485, 0.95
    %v3984 = vmul.f32 %v3486, 0.95
    %v3985 = vmul.f32 %v3487, 0.95
    %v3986 = vmul.f32 %v3488, 0.95
    %v3987 = vmul.f32 %v3489, 0.95
    %v3988 = vmul.f32 %v3490, 0.95
    %v3989 = vmul.f32 %v3491, 0.95
    %v3990 = vadd.f32 %v3958, %v3800
    %v3991 = vadd.f32 %v3959, %v3805
    %v3992 = vadd.f32 %v3960, %v3810
    %v3993 = vadd.f32 %v3961, %v3815
    %v3994 = vadd.f32 %v3962, %v3820
    %v3995 = vadd.f32 %v3963, %v3825
    %v3996 = vadd.f32 %v3964, %v3830
    %v3997 = vadd.f32 %v3965, %v3835
    %v3998 = vadd.f32 %v3966, %v3840
    %v3999 = vadd.f32 %v3967, %v3845
    %v4000 = vadd.f32 %v3968, %v3850
    %v4001 = vadd.f32 %v3969, %v3855
    %v4002 = vadd.f32 %v3970, %v3860
    %v4003 = vadd.f32 %v3971, %v3865
    %v4004 = vadd.f32 %v3972, %v3870
    %v4005 = vadd.f32 %v3973, %v3875
    %v4006 = vadd.f32 %v3974, %v3880
    %v4007 = vadd.f32 %v3975, %v3885
    %v4008 = vadd.f32 %v3976, %v3890
    %v4009 = vadd.f32 %v3977, %v3895
    %v4010 = vadd.f32 %v3978, %v3900
    %v4011 = vadd.f32 %v3979, %v3905
    %v4012 = vadd.f32 %v3980, %v3910
    %v4013 = vadd.f32 %v3981, %v3915
    %v4014 = vadd.f32 %v3982, %v3920
    %v4015 = vadd.f32 %v3983, %v3925
    %v4016 = vadd.f32 %v3984, %v3930
    %v4017 = vadd.f32 %v3985, %v3935
    %v4018 = vadd.f32 %v3986, %v3940
    %v4019 = vadd.f32 %v3987, %v3945
    %v4020 = vadd.f32 %v3988, %v3950
    %v4021 = vadd.f32 %v3989, %v3955
    %v4022 = vmax.f32 %v3990, -4.0
    %v4023 = vmax.f32 %v3991, -4.0
    %v4024 = vmax.f32 %v3992, -4.0
    %v4025 = vmax.f32 %v3993, -4.0
    %v4026 = vmax.f32 %v3994, -4.0
    %v4027 = vmax.f32 %v3995, -4.0
    %v4028 = vmax.f32 %v3996, -4.0
    %v4029 = vmax.f32 %v3997, -4.0
    %v4030 = vmax.f32 %v3998, -4.0
    %v4031 = vmax.f32 %v3999, -4.0
    %v4032 = vmax.f32 %v4000, -4.0
    %v4033 = vmax.f32 %v4001, -4.0
    %v4034 = vmax.f32 %v4002, -4.0
    %v4035 = vmax.f32 %v4003, -4.0
    %v4036 = vmax.f32 %v4004, -4.0
    %v4037 = vmax.f32 %v4005, -4.0
    %v4038 = vmax.f32 %v4006, -4.0
    %v4039 = vmax.f32 %v4007, -4.0
    %v4040 = vmax.f32 %v4008, -4.0
    %v4041 = vmax.f32 %v4009, -4.0
    %v4042 = vmax.f32 %v4010, -4.0
    %v4043 = vmax.f32 %v4011, -4.0
    %v4044 = vmax.f32 %v4012, -4.0
    %v4045 = vmax.f32 %v4013, -4.0
    %v4046 = vmax.f32 %v4014, -4.0
    %v4047 = vmax.f32 %v4015, -4.0
    %v4048 = vmax.f32 %v4016, -4.0
    %v4049 = vmax.f32 %v4017, -4.0
    %v4050 = vmax.f32 %v4018, -4.0
    %v4051 = vmax.f32 %v4019, -4.0
    %v4052 = vmax.f32 %v4020, -4.0
    %v4053 = vmax.f32 %v4021, -4.0
    %v4054 = vmin.f32 %v4022, 4.0
    %v4055 = vmin.f32 %v4023, 4.0
    %v4056 = vmin.f32 %v4024, 4.0
    %v4057 = vmin.f32 %v4025, 4.0
    %v4058 = vmin.f32 %v4026, 4.0
    %v4059 = vmin.f32 %v4027, 4.0
    %v4060 = vmin.f32 %v4028, 4.0
    %v4061 = vmin.f32 %v4029, 4.0
    %v4062 = vmin.f32 %v4030, 4.0
    %v4063 = vmin.f32 %v4031, 4.0
    %v4064 = vmin.f32 %v4032, 4.0
    %v4065 = vmin.f32 %v4033, 4.0
    %v4066 = vmin.f32 %v4034, 4.0
    %v4067 = vmin.f32 %v4035, 4.0
    %v4068 = vmin.f32 %v4036, 4.0
    %v4069 = vmin.f32 %v4037, 4.0
    %v4070 = vmin.f32 %v4038, 4.0
    %v4071 = vmin.f32 %v4039, 4.0
    %v4072 = vmin.f32 %v4040, 4.0
    %v4073 = vmin.f32 %v4041, 4.0
    %v4074 = vmin.f32 %v4042, 4.0
    %v4075 = vmin.f32 %v4043, 4.0
    %v4076 = vmin.f32 %v4044, 4.0
    %v4077 = vmin.f32 %v4045, 4.0
    %v4078 = vmin.f32 %v4046, 4.0
    %v4079 = vmin.f32 %v4047, 4.0
    %v4080 = vmin.f32 %v4048, 4.0
    %v4081 = vmin.f32 %v4049, 4.0
    %v4082 = vmin.f32 %v4050, 4.0
    %v4083 = vmin.f32 %v4051, 4.0
    %v4084 = vmin.f32 %v4052, 4.0
    %v4085 = vmin.f32 %v4053, 4.0
    %4086 = vst [vmem:[%s15] sm:$0xff] %v4054
    %4087 = vst [vmem:[%s15 + $0x8] sm:$0xff] %v4055
    %4088 = vst [vmem:[%s15 + $0x10] sm:$0xff] %v4056
    %4089 = vst [vmem:[%s15 + $0x18] sm:$0xff] %v4057
    %4090 = vst [vmem:[%s15 + $0x20] sm:$0xff] %v4058
    %4091 = vst [vmem:[%s15 + $0x28] sm:$0xff] %v4059
    %4092 = vst [vmem:[%s15 + $0x30] sm:$0xff] %v4060
    %4093 = vst [vmem:[%s15 + $0x38] sm:$0xff] %v4061
    %4094 = vst [vmem:[%s15 + $0x40] sm:$0xff] %v4062
    %4095 = vst [vmem:[%s15 + $0x48] sm:$0xff] %v4063
    %4096 = vst [vmem:[%s15 + $0x50] sm:$0xff] %v4064
    %4097 = vst [vmem:[%s15 + $0x58] sm:$0xff] %v4065
    %4098 = vst [vmem:[%s15 + $0x60] sm:$0xff] %v4066
    %4099 = vst [vmem:[%s15 + $0x68] sm:$0xff] %v4067
    %4100 = vst [vmem:[%s15 + $0x70] sm:$0xff] %v4068
    %4101 = vst [vmem:[%s15 + $0x78] sm:$0xff] %v4069
    %4102 = vst [vmem:[%s15 + $0x80] sm:$0xff] %v4070
    %4103 = vst [vmem:[%s15 + $0x88] sm:$0xff] %v4071
    %4104 = vst [vmem:[%s15 + $0x90] sm:$0xff] %v4072
    %4105 = vst [vmem:[%s15 + $0x98] sm:$0xff] %v4073
    %4106 = vst [vmem:[%s15 + $0xa0] sm:$0xff] %v4074
    %4107 = vst [vmem:[%s15 + $0xa8] sm:$0xff] %v4075
    %4108 = vst [vmem:[%s15 + $0xb0] sm:$0xff] %v4076
    %4109 = vst [vmem:[%s15 + $0xb8] sm:$0xff] %v4077
    %4110 = vst [vmem:[%s15 + $0xc0] sm:$0xff] %v4078
    %4111 = vst [vmem:[%s15 + $0xc8] sm:$0xff] %v4079
    %4112 = vst [vmem:[%s15 + $0xd0] sm:$0xff] %v4080
    %4113 = vst [vmem:[%s15 + $0xd8] sm:$0xff] %v4081
    %4114 = vst [vmem:[%s15 + $0xe0] sm:$0xff] %v4082
    %4115 = vst [vmem:[%s15 + $0xe8] sm:$0xff] %v4083
    %4116 = vst [vmem:[%s15 + $0xf0] sm:$0xff] %v4084
    %4117 = vst [vmem:[%s15 + $0xf8] sm:$0xff] %v4085
    %v4118 = vsub.f32 %v3567, %v3054
    %v4119 = vmul.f32 %v4118, 0.5
    %v4120 = vadd.f32 %v3054, %v4119
    %vm4121 = vcmp.ge.f32.partialorder %v4120, 1.0
    %v4122 = vsel %vm4121, 1, 0
    %v4123 = vcvt.s32.f32 %v4122
    %v4124 = vsub.f32 1.0, %v4123
    %v4125 = vmul.f32 %v4120, %v4124
    %v4126 = vadd.f32 %v3055, %v4123
    %v4127 = vmul.f32 %v896, %v3435
    %v4128 = vmul.f32 %v896, %v3436
    %v4129 = vmul.f32 %v896, %v3437
    %v4130 = vmul.f32 %v896, %v3438
    %v4131 = vmul.f32 %v896, %v3439
    %v4132 = vmul.f32 %v896, %v3440
    %v4133 = vmul.f32 %v896, %v3441
    %v4134 = vmul.f32 %v896, %v3442
    %v4135 = vmul.f32 %v896, %v3443
    %v4136 = vmul.f32 %v896, %v3444
    %v4137 = vmul.f32 %v896, %v3445
    %v4138 = vmul.f32 %v896, %v3446
    %v4139 = vmul.f32 %v896, %v3447
    %v4140 = vmul.f32 %v896, %v3448
    %v4141 = vmul.f32 %v896, %v3449
    %v4142 = vmul.f32 %v896, %v3450
    %v4143 = vadd.f32 %v187, %v4127
    %v4144 = vadd.f32 %v188, %v4128
    %v4145 = vadd.f32 %v189, %v4129
    %v4146 = vadd.f32 %v190, %v4130
    %v4147 = vadd.f32 %v191, %v4131
    %v4148 = vadd.f32 %v192, %v4132
    %v4149 = vadd.f32 %v193, %v4133
    %v4150 = vadd.f32 %v194, %v4134
    %v4151 = vadd.f32 %v195, %v4135
    %v4152 = vadd.f32 %v196, %v4136
    %v4153 = vadd.f32 %v197, %v4137
    %v4154 = vadd.f32 %v198, %v4138
    %v4155 = vadd.f32 %v199, %v4139
    %v4156 = vadd.f32 %v200, %v4140
    %v4157 = vadd.f32 %v201, %v4141
    %v4158 = vadd.f32 %v202, %v4142
    %4159 = vmatprep.subr.mxu0 0.0
    %4160 = vmatpush1.msra.mxu0 %v4143
    %4161 = vmatprep.subr.mxu0 0.0
    %4162 = vmatpush1.msra.mxu0 %v4144
    %4163 = vmatprep.subr.mxu0 0.0
    %4164 = vmatpush1.msra.mxu0 %v4145
    %4165 = vmatprep.subr.mxu0 0.0
    %4166 = vmatpush1.msra.mxu0 %v4146
    %4167 = vmatprep.subr.mxu0 0.0
    %4168 = vmatpush1.msra.mxu0 %v4147
    %4169 = vmatprep.subr.mxu0 0.0
    %4170 = vmatpush1.msra.mxu0 %v4148
    %4171 = vmatprep.subr.mxu0 0.0
    %4172 = vmatpush1.msra.mxu0 %v4149
    %4173 = vmatprep.subr.mxu0 0.0
    %4174 = vmatpush1.msra.mxu0 %v4150
    %4175 = vmatprep.subr.mxu0 0.0
    %4176 = vmatpush1.msra.mxu0 %v4151
    %4177 = vmatprep.subr.mxu0 0.0
    %4178 = vmatpush1.msra.mxu0 %v4152
    %4179 = vmatprep.subr.mxu0 0.0
    %4180 = vmatpush1.msra.mxu0 %v4153
    %4181 = vmatprep.subr.mxu0 0.0
    %4182 = vmatpush1.msra.mxu0 %v4154
    %4183 = vmatprep.subr.mxu0 0.0
    %4184 = vmatpush1.msra.mxu0 %v4155
    %4185 = vmatprep.subr.mxu0 0.0
    %4186 = vmatpush1.msra.mxu0 %v4156
    %4187 = vmatprep.subr.mxu0 0.0
    %4188 = vmatpush1.msra.mxu0 %v4157
    %4189 = vmatprep.subr.mxu0 0.0
    %4190 = vmatpush1.msra.mxu0 %v4158
    %4191 = vmatprep.subr.mxu0 0.0
    %4192 = vmatpush1.msra.mxu0 0.0
    %4193 = vmatprep.subr.mxu0 0.0
    %4194 = vmatpush1.msra.mxu0 0.0
    %4195 = vmatprep.subr.mxu0 0.0
    %4196 = vmatpush1.msra.mxu0 0.0
    %4197 = vmatprep.subr.mxu0 0.0
    %4198 = vmatpush1.msra.mxu0 0.0
    %4199 = vmatprep.subr.mxu0 0.0
    %4200 = vmatpush1.msra.mxu0 0.0
    %4201 = vmatprep.subr.mxu0 0.0
    %4202 = vmatpush1.msra.mxu0 0.0
    %4203 = vmatprep.subr.mxu0 0.0
    %4204 = vmatpush1.msra.mxu0 0.0
    %4205 = vmatprep.subr.mxu0 0.0
    %4206 = vmatpush1.msra.mxu0 0.0
    %4207 = vmatprep.subr.mxu0 0.0
    %4208 = vmatpush1.msra.mxu0 0.0
    %4209 = vmatprep.subr.mxu0 0.0
    %4210 = vmatpush1.msra.mxu0 0.0
    %4211 = vmatprep.subr.mxu0 0.0
    %4212 = vmatpush1.msra.mxu0 0.0
    %4213 = vmatprep.subr.mxu0 0.0
    %4214 = vmatpush1.msra.mxu0 0.0
    %4215 = vmatprep.subr.mxu0 0.0
    %4216 = vmatpush1.msra.mxu0 0.0
    %4217 = vmatprep.subr.mxu0 0.0
    %4218 = vmatpush1.msra.mxu0 0.0
    %4219 = vmatprep.subr.mxu0 0.0
    %4220 = vmatpush1.msra.mxu0 0.0
    %4221 = vmatprep.subr.mxu0 0.0
    %4222 = vmatpush1.msra.mxu0 0.0
    %4223 = vmatprep.mubr.f32.mxu0 0.0
    %4224 = vmatmul.mubr.f32.gmra.mrb[0].mxu0 %v4123
    %v4225 = vpop.f32.mrb[0].mxu0
    %v4226 = vadd.f32 %v933, %v4225
    %v4227 = vpop.f32.mrb[0].mxu0
    %4228 = vdwg.mxu0
    %v4229 = vmul.f32 %v4226, 2.857143
    %v4230 = vsub.f32 %v4229, %v1010
    %v4231 = vtanh.pop %v4230
    %v4232 = vmul.f32 %v4123, %v1018
    %4233 = vxpose.xlu0.b32.start [1/16] %v4232, 128
    %4234 = vxpose.xlu0.b32.cont [2/16] 0.0, 128
    %4235 = vxpose.xlu0.b32.cont [3/16] 0.0, 128
    %4236 = vxpose.xlu0.b32.cont [4/16] 0.0, 128
    %4237 = vxpose.xlu0.b32.cont [5/16] 0.0, 128
    %4238 = vxpose.xlu0.b32.cont [6/16] 0.0, 128
    %4239 = vxpose.xlu0.b32.cont [7/16] 0.0, 128
    %4240 = vxpose.xlu0.b32.cont [8/16] 0.0, 128
    %4241 = vxpose.xlu0.b32.cont [9/16] 0.0, 128
    %4242 = vxpose.xlu0.b32.cont [10/16] 0.0, 128
    %4243 = vxpose.xlu0.b32.cont [11/16] 0.0, 128
    %4244 = vxpose.xlu0.b32.cont [12/16] 0.0, 128
    %4245 = vxpose.xlu0.b32.cont [13/16] 0.0, 128
    %4246 = vxpose.xlu0.b32.cont [14/16] 0.0, 128
    %4247 = vxpose.xlu0.b32.cont [15/16] 0.0, 128
    %4248 = vxpose.xlu0.b32.end [16/16] 0.0, 128
    %v4249 = vpop.trf.xlu0
    %v4250 = vpop.trf.xlu0
    %v4251 = vpop.trf.xlu0
    %v4252 = vpop.trf.xlu0
    %v4253 = vpop.trf.xlu0
    %v4254 = vpop.trf.xlu0
    %v4255 = vpop.trf.xlu0
    %v4256 = vpop.trf.xlu0
    %v4257 = vpop.trf.xlu0
    %v4258 = vpop.trf.xlu0
    %v4259 = vpop.trf.xlu0
    %v4260 = vpop.trf.xlu0
    %v4261 = vpop.trf.xlu0
    %v4262 = vpop.trf.xlu0
    %v4263 = vpop.trf.xlu0
    %v4264 = vpop.trf.xlu0
    %v4266 = vsel %vm406, %v4249, 0
    %v4269 = vsel %vm406, %v4250, 0
    %v4272 = vsel %vm406, %v4251, 0
    %v4275 = vsel %vm406, %v4252, 0
    %v4278 = vsel %vm406, %v4253, 0
    %v4281 = vsel %vm406, %v4254, 0
    %v4284 = vsel %vm406, %v4255, 0
    %v4287 = vsel %vm406, %v4256, 0
    %v4290 = vsel %vm406, %v4257, 0
    %v4293 = vsel %vm406, %v4258, 0
    %v4296 = vsel %vm406, %v4259, 0
    %v4299 = vsel %vm406, %v4260, 0
    %v4302 = vsel %vm406, %v4261, 0
    %v4305 = vsel %vm406, %v4262, 0
    %v4308 = vsel %vm406, %v4263, 0
    %v4311 = vsel %vm406, %v4264, 0
    %4313 = vmatprep.subr.mxu0 0.0
    %4314 = vmatpush1.msra.mxu0 %v4231
    %4315 = vmatprep.subr.mxu0 0.0
    %4316 = vmatpush1.msra.mxu0 0.0
    %4317 = vmatprep.subr.mxu0 0.0
    %4318 = vmatpush1.msra.mxu0 0.0
    %4319 = vmatprep.subr.mxu0 0.0
    %4320 = vmatpush1.msra.mxu0 0.0
    %4321 = vmatprep.subr.mxu0 0.0
    %4322 = vmatpush1.msra.mxu0 0.0
    %4323 = vmatprep.subr.mxu0 0.0
    %4324 = vmatpush1.msra.mxu0 0.0
    %4325 = vmatprep.subr.mxu0 0.0
    %4326 = vmatpush1.msra.mxu0 0.0
    %4327 = vmatprep.subr.mxu0 0.0
    %4328 = vmatpush1.msra.mxu0 0.0
    %4329 = vmatprep.subr.mxu0 0.0
    %4330 = vmatpush1.msra.mxu0 0.0
    %4331 = vmatprep.subr.mxu0 0.0
    %4332 = vmatpush1.msra.mxu0 0.0
    %4333 = vmatprep.subr.mxu0 0.0
    %4334 = vmatpush1.msra.mxu0 0.0
    %4335 = vmatprep.subr.mxu0 0.0
    %4336 = vmatpush1.msra.mxu0 0.0
    %4337 = vmatprep.subr.mxu0 0.0
    %4338 = vmatpush1.msra.mxu0 0.0
    %4339 = vmatprep.subr.mxu0 0.0
    %4340 = vmatpush1.msra.mxu0 0.0
    %4341 = vmatprep.subr.mxu0 0.0
    %4342 = vmatpush1.msra.mxu0 0.0
    %4343 = vmatprep.subr.mxu0 0.0
    %4344 = vmatpush1.msra.mxu0 0.0
    %4345 = vmatprep.subr.mxu0 0.0
    %4346 = vmatpush1.msra.mxu0 0.0
    %4347 = vmatprep.subr.mxu0 0.0
    %4348 = vmatpush1.msra.mxu0 0.0
    %4349 = vmatprep.subr.mxu0 0.0
    %4350 = vmatpush1.msra.mxu0 0.0
    %4351 = vmatprep.subr.mxu0 0.0
    %4352 = vmatpush1.msra.mxu0 0.0
    %4353 = vmatprep.subr.mxu0 0.0
    %4354 = vmatpush1.msra.mxu0 0.0
    %4355 = vmatprep.subr.mxu0 0.0
    %4356 = vmatpush1.msra.mxu0 0.0
    %4357 = vmatprep.subr.mxu0 0.0
    %4358 = vmatpush1.msra.mxu0 0.0
    %4359 = vmatprep.subr.mxu0 0.0
    %4360 = vmatpush1.msra.mxu0 0.0
    %4361 = vmatprep.subr.mxu0 0.0
    %4362 = vmatpush1.msra.mxu0 0.0
    %4363 = vmatprep.subr.mxu0 0.0
    %4364 = vmatpush1.msra.mxu0 0.0
    %4365 = vmatprep.subr.mxu0 0.0
    %4366 = vmatpush1.msra.mxu0 0.0
    %4367 = vmatprep.subr.mxu0 0.0
    %4368 = vmatpush1.msra.mxu0 0.0
    %4369 = vmatprep.subr.mxu0 0.0
    %4370 = vmatpush1.msra.mxu0 0.0
    %4371 = vmatprep.subr.mxu0 0.0
    %4372 = vmatpush1.msra.mxu0 0.0
    %4373 = vmatprep.subr.mxu0 0.0
    %4374 = vmatpush1.msra.mxu0 0.0
    %4375 = vmatprep.subr.mxu0 0.0
    %4376 = vmatpush1.msra.mxu0 0.0
    %4377 = vmatprep.mubr.f32.mxu0 0.0
    %4378 = vmatmul.mubr.f32.gmra.mrb[0].mxu0 %v4266
    %v4379 = vpop.f32.mrb[0].mxu0
    %v4380 = vadd.f32 0.0, %v4379
    %v4381 = vpop.f32.mrb[0].mxu0
    %4382 = vmatprep.mubr.f32.mxu0 0.0
    %4383 = vmatmul.mubr.f32.gmra.mrb[0].mxu0 %v4269
    %v4384 = vpop.f32.mrb[0].mxu0
    %v4385 = vadd.f32 0.0, %v4384
    %v4386 = vpop.f32.mrb[0].mxu0
    %4387 = vmatprep.mubr.f32.mxu0 0.0
    %4388 = vmatmul.mubr.f32.gmra.mrb[0].mxu0 %v4272
    %v4389 = vpop.f32.mrb[0].mxu0
    %v4390 = vadd.f32 0.0, %v4389
    %v4391 = vpop.f32.mrb[0].mxu0
    %4392 = vmatprep.mubr.f32.mxu0 0.0
    %4393 = vmatmul.mubr.f32.gmra.mrb[0].mxu0 %v4275
    %v4394 = vpop.f32.mrb[0].mxu0
    %v4395 = vadd.f32 0.0, %v4394
    %v4396 = vpop.f32.mrb[0].mxu0
    %4397 = vmatprep.mubr.f32.mxu0 0.0
    %4398 = vmatmul.mubr.f32.gmra.mrb[0].mxu0 %v4278
    %v4399 = vpop.f32.mrb[0].mxu0
    %v4400 = vadd.f32 0.0, %v4399
    %v4401 = vpop.f32.mrb[0].mxu0
    %4402 = vmatprep.mubr.f32.mxu0 0.0
    %4403 = vmatmul.mubr.f32.gmra.mrb[0].mxu0 %v4281
    %v4404 = vpop.f32.mrb[0].mxu0
    %v4405 = vadd.f32 0.0, %v4404
    %v4406 = vpop.f32.mrb[0].mxu0
    %4407 = vmatprep.mubr.f32.mxu0 0.0
    %4408 = vmatmul.mubr.f32.gmra.mrb[0].mxu0 %v4284
    %v4409 = vpop.f32.mrb[0].mxu0
    %v4410 = vadd.f32 0.0, %v4409
    %v4411 = vpop.f32.mrb[0].mxu0
    %4412 = vmatprep.mubr.f32.mxu0 0.0
    %4413 = vmatmul.mubr.f32.gmra.mrb[0].mxu0 %v4287
    %v4414 = vpop.f32.mrb[0].mxu0
    %v4415 = vadd.f32 0.0, %v4414
    %v4416 = vpop.f32.mrb[0].mxu0
    %4417 = vmatprep.mubr.f32.mxu0 0.0
    %4418 = vmatmul.mubr.f32.gmra.mrb[0].mxu0 %v4290
    %v4419 = vpop.f32.mrb[0].mxu0
    %v4420 = vadd.f32 0.0, %v4419
    %v4421 = vpop.f32.mrb[0].mxu0
    %4422 = vmatprep.mubr.f32.mxu0 0.0
    %4423 = vmatmul.mubr.f32.gmra.mrb[0].mxu0 %v4293
    %v4424 = vpop.f32.mrb[0].mxu0
    %v4425 = vadd.f32 0.0, %v4424
    %v4426 = vpop.f32.mrb[0].mxu0
    %4427 = vmatprep.mubr.f32.mxu0 0.0
    %4428 = vmatmul.mubr.f32.gmra.mrb[0].mxu0 %v4296
    %v4429 = vpop.f32.mrb[0].mxu0
    %v4430 = vadd.f32 0.0, %v4429
    %v4431 = vpop.f32.mrb[0].mxu0
    %4432 = vmatprep.mubr.f32.mxu0 0.0
    %4433 = vmatmul.mubr.f32.gmra.mrb[0].mxu0 %v4299
    %v4434 = vpop.f32.mrb[0].mxu0
    %v4435 = vadd.f32 0.0, %v4434
    %v4436 = vpop.f32.mrb[0].mxu0
    %4437 = vmatprep.mubr.f32.mxu0 0.0
    %4438 = vmatmul.mubr.f32.gmra.mrb[0].mxu0 %v4302
    %v4439 = vpop.f32.mrb[0].mxu0
    %v4440 = vadd.f32 0.0, %v4439
    %v4441 = vpop.f32.mrb[0].mxu0
    %4442 = vmatprep.mubr.f32.mxu0 0.0
    %4443 = vmatmul.mubr.f32.gmra.mrb[0].mxu0 %v4305
    %v4444 = vpop.f32.mrb[0].mxu0
    %v4445 = vadd.f32 0.0, %v4444
    %v4446 = vpop.f32.mrb[0].mxu0
    %4447 = vmatprep.mubr.f32.mxu0 0.0
    %4448 = vmatmul.mubr.f32.gmra.mrb[0].mxu0 %v4308
    %v4449 = vpop.f32.mrb[0].mxu0
    %v4450 = vadd.f32 0.0, %v4449
    %v4451 = vpop.f32.mrb[0].mxu0
    %4452 = vmatprep.mubr.f32.mxu0 0.0
    %4453 = vmatmul.mubr.f32.gmra.mrb[0].mxu0 %v4311
    %v4454 = vpop.f32.mrb[0].mxu0
    %v4455 = vadd.f32 0.0, %v4454
    %v4456 = vpop.f32.mrb[0].mxu0
    %4457 = vdwg.mxu0
    %v4458 = vmul.f32 %v3435, 0.95
    %v4459 = vmul.f32 %v3436, 0.95
    %v4460 = vmul.f32 %v3437, 0.95
    %v4461 = vmul.f32 %v3438, 0.95
    %v4462 = vmul.f32 %v3439, 0.95
    %v4463 = vmul.f32 %v3440, 0.95
    %v4464 = vmul.f32 %v3441, 0.95
    %v4465 = vmul.f32 %v3442, 0.95
    %v4466 = vmul.f32 %v3443, 0.95
    %v4467 = vmul.f32 %v3444, 0.95
    %v4468 = vmul.f32 %v3445, 0.95
    %v4469 = vmul.f32 %v3446, 0.95
    %v4470 = vmul.f32 %v3447, 0.95
    %v4471 = vmul.f32 %v3448, 0.95
    %v4472 = vmul.f32 %v3449, 0.95
    %v4473 = vmul.f32 %v3450, 0.95
    %v4474 = vadd.f32 %v4458, %v4380
    %v4475 = vadd.f32 %v4459, %v4385
    %v4476 = vadd.f32 %v4460, %v4390
    %v4477 = vadd.f32 %v4461, %v4395
    %v4478 = vadd.f32 %v4462, %v4400
    %v4479 = vadd.f32 %v4463, %v4405
    %v4480 = vadd.f32 %v4464, %v4410
    %v4481 = vadd.f32 %v4465, %v4415
    %v4482 = vadd.f32 %v4466, %v4420
    %v4483 = vadd.f32 %v4467, %v4425
    %v4484 = vadd.f32 %v4468, %v4430
    %v4485 = vadd.f32 %v4469, %v4435
    %v4486 = vadd.f32 %v4470, %v4440
    %v4487 = vadd.f32 %v4471, %v4445
    %v4488 = vadd.f32 %v4472, %v4450
    %v4489 = vadd.f32 %v4473, %v4455
    %v4490 = vmax.f32 %v4474, -4.0
    %v4491 = vmax.f32 %v4475, -4.0
    %v4492 = vmax.f32 %v4476, -4.0
    %v4493 = vmax.f32 %v4477, -4.0
    %v4494 = vmax.f32 %v4478, -4.0
    %v4495 = vmax.f32 %v4479, -4.0
    %v4496 = vmax.f32 %v4480, -4.0
    %v4497 = vmax.f32 %v4481, -4.0
    %v4498 = vmax.f32 %v4482, -4.0
    %v4499 = vmax.f32 %v4483, -4.0
    %v4500 = vmax.f32 %v4484, -4.0
    %v4501 = vmax.f32 %v4485, -4.0
    %v4502 = vmax.f32 %v4486, -4.0
    %v4503 = vmax.f32 %v4487, -4.0
    %v4504 = vmax.f32 %v4488, -4.0
    %v4505 = vmax.f32 %v4489, -4.0
    %v4506 = vmin.f32 %v4490, 4.0
    %v4507 = vmin.f32 %v4491, 4.0
    %v4508 = vmin.f32 %v4492, 4.0
    %v4509 = vmin.f32 %v4493, 4.0
    %v4510 = vmin.f32 %v4494, 4.0
    %v4511 = vmin.f32 %v4495, 4.0
    %v4512 = vmin.f32 %v4496, 4.0
    %v4513 = vmin.f32 %v4497, 4.0
    %v4514 = vmin.f32 %v4498, 4.0
    %v4515 = vmin.f32 %v4499, 4.0
    %v4516 = vmin.f32 %v4500, 4.0
    %v4517 = vmin.f32 %v4501, 4.0
    %v4518 = vmin.f32 %v4502, 4.0
    %v4519 = vmin.f32 %v4503, 4.0
    %v4520 = vmin.f32 %v4504, 4.0
    %v4521 = vmin.f32 %v4505, 4.0
    %v4522 = vsub.f32 %v4226, %v3458
    %v4523 = vmul.f32 %v4522, 0.5
    %v4524 = vadd.f32 %v3458, %v4523
    %vm4525 = vcmp.ge.f32.partialorder %v4524, 1.0
    %v4526 = vsel %vm4525, 1, 0
    %v4527 = vcvt.s32.f32 %v4526
    %v4528 = vsub.f32 1.0, %v4527
    %v4529 = vmul.f32 %v4524, %v4528
    %v4530 = vadd.f32 %v3459, %v4527
    %v4531 = vld [vmem:[%s15] sm:$0xff]
    %v4532 = vld [vmem:[%s15 + $0x8] sm:$0xff]
    %v4533 = vld [vmem:[%s15 + $0x10] sm:$0xff]
    %v4534 = vld [vmem:[%s15 + $0x18] sm:$0xff]
    %v4535 = vld [vmem:[%s15 + $0x20] sm:$0xff]
    %v4536 = vld [vmem:[%s15 + $0x28] sm:$0xff]
    %v4537 = vld [vmem:[%s15 + $0x30] sm:$0xff]
    %v4538 = vld [vmem:[%s15 + $0x38] sm:$0xff]
    %v4539 = vld [vmem:[%s15 + $0x40] sm:$0xff]
    %v4540 = vld [vmem:[%s15 + $0x48] sm:$0xff]
    %v4541 = vld [vmem:[%s15 + $0x50] sm:$0xff]
    %v4542 = vld [vmem:[%s15 + $0x58] sm:$0xff]
    %v4543 = vld [vmem:[%s15 + $0x60] sm:$0xff]
    %v4544 = vld [vmem:[%s15 + $0x68] sm:$0xff]
    %v4545 = vld [vmem:[%s15 + $0x70] sm:$0xff]
    %v4546 = vld [vmem:[%s15 + $0x78] sm:$0xff]
    %v4547 = vld [vmem:[%s15 + $0x80] sm:$0xff]
    %v4548 = vld [vmem:[%s15 + $0x88] sm:$0xff]
    %v4549 = vld [vmem:[%s15 + $0x90] sm:$0xff]
    %v4550 = vld [vmem:[%s15 + $0x98] sm:$0xff]
    %v4551 = vld [vmem:[%s15 + $0xa0] sm:$0xff]
    %v4552 = vld [vmem:[%s15 + $0xa8] sm:$0xff]
    %v4553 = vld [vmem:[%s15 + $0xb0] sm:$0xff]
    %v4554 = vld [vmem:[%s15 + $0xb8] sm:$0xff]
    %v4555 = vld [vmem:[%s15 + $0xc0] sm:$0xff]
    %v4556 = vld [vmem:[%s15 + $0xc8] sm:$0xff]
    %v4557 = vld [vmem:[%s15 + $0xd0] sm:$0xff]
    %v4558 = vld [vmem:[%s15 + $0xd8] sm:$0xff]
    %v4559 = vld [vmem:[%s15 + $0xe0] sm:$0xff]
    %v4560 = vld [vmem:[%s15 + $0xe8] sm:$0xff]
    %v4561 = vld [vmem:[%s15 + $0xf0] sm:$0xff]
    %v4562 = vld [vmem:[%s15 + $0xf8] sm:$0xff]
    %4563 = vmatprep.subr.mxu0 0.0
    %4564 = vmatpush1.msra.mxu0 %v4531
    %4565 = vmatprep.subr.mxu0 0.0
    %4566 = vmatpush1.msra.mxu0 %v4532
    %4567 = vmatprep.subr.mxu0 0.0
    %4568 = vmatpush1.msra.mxu0 %v4533
    %4569 = vmatprep.subr.mxu0 0.0
    %4570 = vmatpush1.msra.mxu0 %v4534
    %4571 = vmatprep.subr.mxu0 0.0
    %4572 = vmatpush1.msra.mxu0 %v4535
    %4573 = vmatprep.subr.mxu0 0.0
    %4574 = vmatpush1.msra.mxu0 %v4536
    %4575 = vmatprep.subr.mxu0 0.0
    %4576 = vmatpush1.msra.mxu0 %v4537
    %4577 = vmatprep.subr.mxu0 0.0
    %4578 = vmatpush1.msra.mxu0 %v4538
    %4579 = vmatprep.subr.mxu0 0.0
    %4580 = vmatpush1.msra.mxu0 %v4539
    %4581 = vmatprep.subr.mxu0 0.0
    %4582 = vmatpush1.msra.mxu0 %v4540
    %4583 = vmatprep.subr.mxu0 0.0
    %4584 = vmatpush1.msra.mxu0 %v4541
    %4585 = vmatprep.subr.mxu0 0.0
    %4586 = vmatpush1.msra.mxu0 %v4542
    %4587 = vmatprep.subr.mxu0 0.0
    %4588 = vmatpush1.msra.mxu0 %v4543
    %4589 = vmatprep.subr.mxu0 0.0
    %4590 = vmatpush1.msra.mxu0 %v4544
    %4591 = vmatprep.subr.mxu0 0.0
    %4592 = vmatpush1.msra.mxu0 %v4545
    %4593 = vmatprep.subr.mxu0 0.0
    %4594 = vmatpush1.msra.mxu0 %v4546
    %4595 = vmatprep.subr.mxu0 0.0
    %4596 = vmatpush1.msra.mxu0 %v4547
    %4597 = vmatprep.subr.mxu0 0.0
    %4598 = vmatpush1.msra.mxu0 %v4548
    %4599 = vmatprep.subr.mxu0 0.0
    %4600 = vmatpush1.msra.mxu0 %v4549
    %4601 = vmatprep.subr.mxu0 0.0
    %4602 = vmatpush1.msra.mxu0 %v4550
    %4603 = vmatprep.subr.mxu0 0.0
    %4604 = vmatpush1.msra.mxu0 %v4551
    %4605 = vmatprep.subr.mxu0 0.0
    %4606 = vmatpush1.msra.mxu0 %v4552
    %4607 = vmatprep.subr.mxu0 0.0
    %4608 = vmatpush1.msra.mxu0 %v4553
    %4609 = vmatprep.subr.mxu0 0.0
    %4610 = vmatpush1.msra.mxu0 %v4554
    %4611 = vmatprep.subr.mxu0 0.0
    %4612 = vmatpush1.msra.mxu0 %v4555
    %4613 = vmatprep.subr.mxu0 0.0
    %4614 = vmatpush1.msra.mxu0 %v4556
    %4615 = vmatprep.subr.mxu0 0.0
    %4616 = vmatpush1.msra.mxu0 %v4557
    %4617 = vmatprep.subr.mxu0 0.0
    %4618 = vmatpush1.msra.mxu0 %v4558
    %4619 = vmatprep.subr.mxu0 0.0
    %4620 = vmatpush1.msra.mxu0 %v4559
    %4621 = vmatprep.subr.mxu0 0.0
    %4622 = vmatpush1.msra.mxu0 %v4560
    %4623 = vmatprep.subr.mxu0 0.0
    %4624 = vmatpush1.msra.mxu0 %v4561
    %4625 = vmatprep.subr.mxu0 0.0
    %4626 = vmatpush1.msra.mxu0 %v4562
    %4627 = vmatprep.mubr.f32.mxu0 %v64
    %4628 = vmatmul.mubr.f32.gmra.mrb[0].mxu0 %v63
    %v4629 = vpop.f32.mrb[0].mxu0
    %v4630 = vadd.f32 0.0, %v4629
    %v4631 = vpop.f32.mrb[0].mxu0
    %4632 = vdwg.mxu0
    %v4633 = vmul.f32 %v164, 0.9048374
    %v4634 = vadd.f32 %v4633, %v325
    %s4635 = smul.f32 %s61, 0.9048374
    %v4636 = vstv %s4635
    %v4637 = vmul.f32 %v4636, %v4630
    %v4638 = vadd.f32 %v4634, %v4637
    %v4639 = vmul.f32 %v4638, 2.857143
    %v4640 = vsub.f32 %v4639, %v336
    %v4641 = vtanh.pop %v4640
    %v4642 = vmul.f32 %v179, 0.11310468
    %v4643 = vmul.f32 %v180, 0.11310468
    %4644 = vxpose.xlu0.b32.start [1/16] %v4642, 128
    %4645 = vxpose.xlu0.b32.cont [2/16] 0.0, 128
    %4646 = vxpose.xlu0.b32.cont [3/16] 0.0, 128
    %4647 = vxpose.xlu0.b32.cont [4/16] 0.0, 128
    %4648 = vxpose.xlu0.b32.cont [5/16] 0.0, 128
    %4649 = vxpose.xlu0.b32.cont [6/16] 0.0, 128
    %4650 = vxpose.xlu0.b32.cont [7/16] 0.0, 128
    %4651 = vxpose.xlu0.b32.cont [8/16] 0.0, 128
    %4652 = vxpose.xlu0.b32.cont [9/16] 0.0, 128
    %4653 = vxpose.xlu0.b32.cont [10/16] 0.0, 128
    %4654 = vxpose.xlu0.b32.cont [11/16] 0.0, 128
    %4655 = vxpose.xlu0.b32.cont [12/16] 0.0, 128
    %4656 = vxpose.xlu0.b32.cont [13/16] 0.0, 128
    %4657 = vxpose.xlu0.b32.cont [14/16] 0.0, 128
    %4658 = vxpose.xlu0.b32.cont [15/16] 0.0, 128
    %4659 = vxpose.xlu0.b32.end [16/16] 0.0, 128
    %v4660 = vpop.trf.xlu0
    %v4661 = vpop.trf.xlu0
    %v4662 = vpop.trf.xlu0
    %v4663 = vpop.trf.xlu0
    %v4664 = vpop.trf.xlu0
    %v4665 = vpop.trf.xlu0
    %v4666 = vpop.trf.xlu0
    %v4667 = vpop.trf.xlu0
    %v4668 = vpop.trf.xlu0
    %v4669 = vpop.trf.xlu0
    %v4670 = vpop.trf.xlu0
    %v4671 = vpop.trf.xlu0
    %v4672 = vpop.trf.xlu0
    %v4673 = vpop.trf.xlu0
    %v4674 = vpop.trf.xlu0
    %v4675 = vpop.trf.xlu0
    %4676 = vxpose.xlu0.b32.start [1/16] %v4643, 128
    %4677 = vxpose.xlu0.b32.cont [2/16] 0.0, 128
    %4678 = vxpose.xlu0.b32.cont [3/16] 0.0, 128
    %4679 = vxpose.xlu0.b32.cont [4/16] 0.0, 128
    %4680 = vxpose.xlu0.b32.cont [5/16] 0.0, 128
    %4681 = vxpose.xlu0.b32.cont [6/16] 0.0, 128
    %4682 = vxpose.xlu0.b32.cont [7/16] 0.0, 128
    %4683 = vxpose.xlu0.b32.cont [8/16] 0.0, 128
    %4684 = vxpose.xlu0.b32.cont [9/16] 0.0, 128
    %4685 = vxpose.xlu0.b32.cont [10/16] 0.0, 128
    %4686 = vxpose.xlu0.b32.cont [11/16] 0.0, 128
    %4687 = vxpose.xlu0.b32.cont [12/16] 0.0, 128
    %4688 = vxpose.xlu0.b32.cont [13/16] 0.0, 128
    %4689 = vxpose.xlu0.b32.cont [14/16] 0.0, 128
    %4690 = vxpose.xlu0.b32.cont [15/16] 0.0, 128
    %4691 = vxpose.xlu0.b32.end [16/16] 0.0, 128
    %v4692 = vpop.trf.xlu0
    %v4693 = vpop.trf.xlu0
    %v4694 = vpop.trf.xlu0
    %v4695 = vpop.trf.xlu0
    %v4696 = vpop.trf.xlu0
    %v4697 = vpop.trf.xlu0
    %v4698 = vpop.trf.xlu0
    %v4699 = vpop.trf.xlu0
    %v4700 = vpop.trf.xlu0
    %v4701 = vpop.trf.xlu0
    %v4702 = vpop.trf.xlu0
    %v4703 = vpop.trf.xlu0
    %v4704 = vpop.trf.xlu0
    %v4705 = vpop.trf.xlu0
    %v4706 = vpop.trf.xlu0
    %v4707 = vpop.trf.xlu0
    %v4709 = vsel %vm406, %v4660, 0
    %v4712 = vsel %vm406, %v4661, 0
    %v4715 = vsel %vm406, %v4662, 0
    %v4718 = vsel %vm406, %v4663, 0
    %v4721 = vsel %vm406, %v4664, 0
    %v4724 = vsel %vm406, %v4665, 0
    %v4727 = vsel %vm406, %v4666, 0
    %v4730 = vsel %vm406, %v4667, 0
    %v4733 = vsel %vm406, %v4668, 0
    %v4736 = vsel %vm406, %v4669, 0
    %v4739 = vsel %vm406, %v4670, 0
    %v4742 = vsel %vm406, %v4671, 0
    %v4745 = vsel %vm406, %v4672, 0
    %v4748 = vsel %vm406, %v4673, 0
    %v4751 = vsel %vm406, %v4674, 0
    %v4754 = vsel %vm406, %v4675, 0
    %v4757 = vsel %vm406, %v4692, 0
    %v4760 = vsel %vm406, %v4693, 0
    %v4763 = vsel %vm406, %v4694, 0
    %v4766 = vsel %vm406, %v4695, 0
    %v4769 = vsel %vm406, %v4696, 0
    %v4772 = vsel %vm406, %v4697, 0
    %v4775 = vsel %vm406, %v4698, 0
    %v4778 = vsel %vm406, %v4699, 0
    %v4781 = vsel %vm406, %v4700, 0
    %v4784 = vsel %vm406, %v4701, 0
    %v4787 = vsel %vm406, %v4702, 0
    %v4790 = vsel %vm406, %v4703, 0
    %v4793 = vsel %vm406, %v4704, 0
    %v4796 = vsel %vm406, %v4705, 0
    %v4799 = vsel %vm406, %v4706, 0
    %v4802 = vsel %vm406, %v4707, 0
    %4804 = vmatprep.subr.mxu0 0.0
    %4805 = vmatpush1.msra.mxu0 %v4641
    %4806 = vmatprep.subr.mxu0 0.0
    %4807 = vmatpush1.msra.mxu0 0.0
    %4808 = vmatprep.subr.mxu0 0.0
    %4809 = vmatpush1.msra.mxu0 0.0
    %4810 = vmatprep.subr.mxu0 0.0
    %4811 = vmatpush1.msra.mxu0 0.0
    %4812 = vmatprep.subr.mxu0 0.0
    %4813 = vmatpush1.msra.mxu0 0.0
    %4814 = vmatprep.subr.mxu0 0.0
    %4815 = vmatpush1.msra.mxu0 0.0
    %4816 = vmatprep.subr.mxu0 0.0
    %4817 = vmatpush1.msra.mxu0 0.0
    %4818 = vmatprep.subr.mxu0 0.0
    %4819 = vmatpush1.msra.mxu0 0.0
    %4820 = vmatprep.subr.mxu0 0.0
    %4821 = vmatpush1.msra.mxu0 0.0
    %4822 = vmatprep.subr.mxu0 0.0
    %4823 = vmatpush1.msra.mxu0 0.0
    %4824 = vmatprep.subr.mxu0 0.0
    %4825 = vmatpush1.msra.mxu0 0.0
    %4826 = vmatprep.subr.mxu0 0.0
    %4827 = vmatpush1.msra.mxu0 0.0
    %4828 = vmatprep.subr.mxu0 0.0
    %4829 = vmatpush1.msra.mxu0 0.0
    %4830 = vmatprep.subr.mxu0 0.0
    %4831 = vmatpush1.msra.mxu0 0.0
    %4832 = vmatprep.subr.mxu0 0.0
    %4833 = vmatpush1.msra.mxu0 0.0
    %4834 = vmatprep.subr.mxu0 0.0
    %4835 = vmatpush1.msra.mxu0 0.0
    %4836 = vmatprep.subr.mxu0 0.0
    %4837 = vmatpush1.msra.mxu0 0.0
    %4838 = vmatprep.subr.mxu0 0.0
    %4839 = vmatpush1.msra.mxu0 0.0
    %4840 = vmatprep.subr.mxu0 0.0
    %4841 = vmatpush1.msra.mxu0 0.0
    %4842 = vmatprep.subr.mxu0 0.0
    %4843 = vmatpush1.msra.mxu0 0.0
    %4844 = vmatprep.subr.mxu0 0.0
    %4845 = vmatpush1.msra.mxu0 0.0
    %4846 = vmatprep.subr.mxu0 0.0
    %4847 = vmatpush1.msra.mxu0 0.0
    %4848 = vmatprep.subr.mxu0 0.0
    %4849 = vmatpush1.msra.mxu0 0.0
    %4850 = vmatprep.subr.mxu0 0.0
    %4851 = vmatpush1.msra.mxu0 0.0
    %4852 = vmatprep.subr.mxu0 0.0
    %4853 = vmatpush1.msra.mxu0 0.0
    %4854 = vmatprep.subr.mxu0 0.0
    %4855 = vmatpush1.msra.mxu0 0.0
    %4856 = vmatprep.subr.mxu0 0.0
    %4857 = vmatpush1.msra.mxu0 0.0
    %4858 = vmatprep.subr.mxu0 0.0
    %4859 = vmatpush1.msra.mxu0 0.0
    %4860 = vmatprep.subr.mxu0 0.0
    %4861 = vmatpush1.msra.mxu0 0.0
    %4862 = vmatprep.subr.mxu0 0.0
    %4863 = vmatpush1.msra.mxu0 0.0
    %4864 = vmatprep.subr.mxu0 0.0
    %4865 = vmatpush1.msra.mxu0 0.0
    %4866 = vmatprep.subr.mxu0 0.0
    %4867 = vmatpush1.msra.mxu0 0.0
    %4868 = vmatprep.mubr.f32.mxu0 0.0
    %4869 = vmatmul.mubr.f32.gmra.mrb[0].mxu0 %v4709
    %v4870 = vpop.f32.mrb[0].mxu0
    %v4871 = vadd.f32 0.0, %v4870
    %v4872 = vpop.f32.mrb[0].mxu0
    %4873 = vmatprep.mubr.f32.mxu0 0.0
    %4874 = vmatmul.mubr.f32.gmra.mrb[0].mxu0 %v4712
    %v4875 = vpop.f32.mrb[0].mxu0
    %v4876 = vadd.f32 0.0, %v4875
    %v4877 = vpop.f32.mrb[0].mxu0
    %4878 = vmatprep.mubr.f32.mxu0 0.0
    %4879 = vmatmul.mubr.f32.gmra.mrb[0].mxu0 %v4715
    %v4880 = vpop.f32.mrb[0].mxu0
    %v4881 = vadd.f32 0.0, %v4880
    %v4882 = vpop.f32.mrb[0].mxu0
    %4883 = vmatprep.mubr.f32.mxu0 0.0
    %4884 = vmatmul.mubr.f32.gmra.mrb[0].mxu0 %v4718
    %v4885 = vpop.f32.mrb[0].mxu0
    %v4886 = vadd.f32 0.0, %v4885
    %v4887 = vpop.f32.mrb[0].mxu0
    %4888 = vmatprep.mubr.f32.mxu0 0.0
    %4889 = vmatmul.mubr.f32.gmra.mrb[0].mxu0 %v4721
    %v4890 = vpop.f32.mrb[0].mxu0
    %v4891 = vadd.f32 0.0, %v4890
    %v4892 = vpop.f32.mrb[0].mxu0
    %4893 = vmatprep.mubr.f32.mxu0 0.0
    %4894 = vmatmul.mubr.f32.gmra.mrb[0].mxu0 %v4724
    %v4895 = vpop.f32.mrb[0].mxu0
    %v4896 = vadd.f32 0.0, %v4895
    %v4897 = vpop.f32.mrb[0].mxu0
    %4898 = vmatprep.mubr.f32.mxu0 0.0
    %4899 = vmatmul.mubr.f32.gmra.mrb[0].mxu0 %v4727
    %v4900 = vpop.f32.mrb[0].mxu0
    %v4901 = vadd.f32 0.0, %v4900
    %v4902 = vpop.f32.mrb[0].mxu0
    %4903 = vmatprep.mubr.f32.mxu0 0.0
    %4904 = vmatmul.mubr.f32.gmra.mrb[0].mxu0 %v4730
    %v4905 = vpop.f32.mrb[0].mxu0
    %v4906 = vadd.f32 0.0, %v4905
    %v4907 = vpop.f32.mrb[0].mxu0
    %4908 = vmatprep.mubr.f32.mxu0 0.0
    %4909 = vmatmul.mubr.f32.gmra.mrb[0].mxu0 %v4733
    %v4910 = vpop.f32.mrb[0].mxu0
    %v4911 = vadd.f32 0.0, %v4910
    %v4912 = vpop.f32.mrb[0].mxu0
    %4913 = vmatprep.mubr.f32.mxu0 0.0
    %4914 = vmatmul.mubr.f32.gmra.mrb[0].mxu0 %v4736
    %v4915 = vpop.f32.mrb[0].mxu0
    %v4916 = vadd.f32 0.0, %v4915
    %v4917 = vpop.f32.mrb[0].mxu0
    %4918 = vmatprep.mubr.f32.mxu0 0.0
    %4919 = vmatmul.mubr.f32.gmra.mrb[0].mxu0 %v4739
    %v4920 = vpop.f32.mrb[0].mxu0
    %v4921 = vadd.f32 0.0, %v4920
    %v4922 = vpop.f32.mrb[0].mxu0
    %4923 = vmatprep.mubr.f32.mxu0 0.0
    %4924 = vmatmul.mubr.f32.gmra.mrb[0].mxu0 %v4742
    %v4925 = vpop.f32.mrb[0].mxu0
    %v4926 = vadd.f32 0.0, %v4925
    %v4927 = vpop.f32.mrb[0].mxu0
    %4928 = vmatprep.mubr.f32.mxu0 0.0
    %4929 = vmatmul.mubr.f32.gmra.mrb[0].mxu0 %v4745
    %v4930 = vpop.f32.mrb[0].mxu0
    %v4931 = vadd.f32 0.0, %v4930
    %v4932 = vpop.f32.mrb[0].mxu0
    %4933 = vmatprep.mubr.f32.mxu0 0.0
    %4934 = vmatmul.mubr.f32.gmra.mrb[0].mxu0 %v4748
    %v4935 = vpop.f32.mrb[0].mxu0
    %v4936 = vadd.f32 0.0, %v4935
    %v4937 = vpop.f32.mrb[0].mxu0
    %4938 = vmatprep.mubr.f32.mxu0 0.0
    %4939 = vmatmul.mubr.f32.gmra.mrb[0].mxu0 %v4751
    %v4940 = vpop.f32.mrb[0].mxu0
    %v4941 = vadd.f32 0.0, %v4940
    %v4942 = vpop.f32.mrb[0].mxu0
    %4943 = vmatprep.mubr.f32.mxu0 0.0
    %4944 = vmatmul.mubr.f32.gmra.mrb[0].mxu0 %v4754
    %v4945 = vpop.f32.mrb[0].mxu0
    %v4946 = vadd.f32 0.0, %v4945
    %v4947 = vpop.f32.mrb[0].mxu0
    %4948 = vmatprep.mubr.f32.mxu0 0.0
    %4949 = vmatmul.mubr.f32.gmra.mrb[0].mxu0 %v4757
    %v4950 = vpop.f32.mrb[0].mxu0
    %v4951 = vadd.f32 0.0, %v4950
    %v4952 = vpop.f32.mrb[0].mxu0
    %4953 = vmatprep.mubr.f32.mxu0 0.0
    %4954 = vmatmul.mubr.f32.gmra.mrb[0].mxu0 %v4760
    %v4955 = vpop.f32.mrb[0].mxu0
    %v4956 = vadd.f32 0.0, %v4955
    %v4957 = vpop.f32.mrb[0].mxu0
    %4958 = vmatprep.mubr.f32.mxu0 0.0
    %4959 = vmatmul.mubr.f32.gmra.mrb[0].mxu0 %v4763
    %v4960 = vpop.f32.mrb[0].mxu0
    %v4961 = vadd.f32 0.0, %v4960
    %v4962 = vpop.f32.mrb[0].mxu0
    %4963 = vmatprep.mubr.f32.mxu0 0.0
    %4964 = vmatmul.mubr.f32.gmra.mrb[0].mxu0 %v4766
    %v4965 = vpop.f32.mrb[0].mxu0
    %v4966 = vadd.f32 0.0, %v4965
    %v4967 = vpop.f32.mrb[0].mxu0
    %4968 = vmatprep.mubr.f32.mxu0 0.0
    %4969 = vmatmul.mubr.f32.gmra.mrb[0].mxu0 %v4769
    %v4970 = vpop.f32.mrb[0].mxu0
    %v4971 = vadd.f32 0.0, %v4970
    %v4972 = vpop.f32.mrb[0].mxu0
    %4973 = vmatprep.mubr.f32.mxu0 0.0
    %4974 = vmatmul.mubr.f32.gmra.mrb[0].mxu0 %v4772
    %v4975 = vpop.f32.mrb[0].mxu0
    %v4976 = vadd.f32 0.0, %v4975
    %v4977 = vpop.f32.mrb[0].mxu0
    %4978 = vmatprep.mubr.f32.mxu0 0.0
    %4979 = vmatmul.mubr.f32.gmra.mrb[0].mxu0 %v4775
    %v4980 = vpop.f32.mrb[0].mxu0
    %v4981 = vadd.f32 0.0, %v4980
    %v4982 = vpop.f32.mrb[0].mxu0
    %4983 = vmatprep.mubr.f32.mxu0 0.0
    %4984 = vmatmul.mubr.f32.gmra.mrb[0].mxu0 %v4778
    %v4985 = vpop.f32.mrb[0].mxu0
    %v4986 = vadd.f32 0.0, %v4985
    %v4987 = vpop.f32.mrb[0].mxu0
    %4988 = vmatprep.mubr.f32.mxu0 0.0
    %4989 = vmatmul.mubr.f32.gmra.mrb[0].mxu0 %v4781
    %v4990 = vpop.f32.mrb[0].mxu0
    %v4991 = vadd.f32 0.0, %v4990
    %v4992 = vpop.f32.mrb[0].mxu0
    %4993 = vmatprep.mubr.f32.mxu0 0.0
    %4994 = vmatmul.mubr.f32.gmra.mrb[0].mxu0 %v4784
    %v4995 = vpop.f32.mrb[0].mxu0
    %v4996 = vadd.f32 0.0, %v4995
    %v4997 = vpop.f32.mrb[0].mxu0
    %4998 = vmatprep.mubr.f32.mxu0 0.0
    %4999 = vmatmul.mubr.f32.gmra.mrb[0].mxu0 %v4787
    %v5000 = vpop.f32.mrb[0].mxu0
    %v5001 = vadd.f32 0.0, %v5000
    %v5002 = vpop.f32.mrb[0].mxu0
    %5003 = vmatprep.mubr.f32.mxu0 0.0
    %5004 = vmatmul.mubr.f32.gmra.mrb[0].mxu0 %v4790
    %v5005 = vpop.f32.mrb[0].mxu0
    %v5006 = vadd.f32 0.0, %v5005
    %v5007 = vpop.f32.mrb[0].mxu0
    %5008 = vmatprep.mubr.f32.mxu0 0.0
    %5009 = vmatmul.mubr.f32.gmra.mrb[0].mxu0 %v4793
    %v5010 = vpop.f32.mrb[0].mxu0
    %v5011 = vadd.f32 0.0, %v5010
    %v5012 = vpop.f32.mrb[0].mxu0
    %5013 = vmatprep.mubr.f32.mxu0 0.0
    %5014 = vmatmul.mubr.f32.gmra.mrb[0].mxu0 %v4796
    %v5015 = vpop.f32.mrb[0].mxu0
    %v5016 = vadd.f32 0.0, %v5015
    %v5017 = vpop.f32.mrb[0].mxu0
    %5018 = vmatprep.mubr.f32.mxu0 0.0
    %5019 = vmatmul.mubr.f32.gmra.mrb[0].mxu0 %v4799
    %v5020 = vpop.f32.mrb[0].mxu0
    %v5021 = vadd.f32 0.0, %v5020
    %v5022 = vpop.f32.mrb[0].mxu0
    %5023 = vmatprep.mubr.f32.mxu0 0.0
    %5024 = vmatmul.mubr.f32.gmra.mrb[0].mxu0 %v4802
    %v5025 = vpop.f32.mrb[0].mxu0
    %v5026 = vadd.f32 0.0, %v5025
    %v5027 = vpop.f32.mrb[0].mxu0
    %5028 = vdwg.mxu0
    %v5029 = vmul.f32 %v4531, 0.95
    %v5030 = vmul.f32 %v4532, 0.95
    %v5031 = vmul.f32 %v4533, 0.95
    %v5032 = vmul.f32 %v4534, 0.95
    %v5033 = vmul.f32 %v4535, 0.95
    %v5034 = vmul.f32 %v4536, 0.95
    %v5035 = vmul.f32 %v4537, 0.95
    %v5036 = vmul.f32 %v4538, 0.95
    %v5037 = vmul.f32 %v4539, 0.95
    %v5038 = vmul.f32 %v4540, 0.95
    %v5039 = vmul.f32 %v4541, 0.95
    %v5040 = vmul.f32 %v4542, 0.95
    %v5041 = vmul.f32 %v4543, 0.95
    %v5042 = vmul.f32 %v4544, 0.95
    %v5043 = vmul.f32 %v4545, 0.95
    %v5044 = vmul.f32 %v4546, 0.95
    %v5045 = vmul.f32 %v4547, 0.95
    %v5046 = vmul.f32 %v4548, 0.95
    %v5047 = vmul.f32 %v4549, 0.95
    %v5048 = vmul.f32 %v4550, 0.95
    %v5049 = vmul.f32 %v4551, 0.95
    %v5050 = vmul.f32 %v4552, 0.95
    %v5051 = vmul.f32 %v4553, 0.95
    %v5052 = vmul.f32 %v4554, 0.95
    %v5053 = vmul.f32 %v4555, 0.95
    %v5054 = vmul.f32 %v4556, 0.95
    %v5055 = vmul.f32 %v4557, 0.95
    %v5056 = vmul.f32 %v4558, 0.95
    %v5057 = vmul.f32 %v4559, 0.95
    %v5058 = vmul.f32 %v4560, 0.95
    %v5059 = vmul.f32 %v4561, 0.95
    %v5060 = vmul.f32 %v4562, 0.95
    %v5061 = vadd.f32 %v5029, %v4871
    %v5062 = vadd.f32 %v5030, %v4876
    %v5063 = vadd.f32 %v5031, %v4881
    %v5064 = vadd.f32 %v5032, %v4886
    %v5065 = vadd.f32 %v5033, %v4891
    %v5066 = vadd.f32 %v5034, %v4896
    %v5067 = vadd.f32 %v5035, %v4901
    %v5068 = vadd.f32 %v5036, %v4906
    %v5069 = vadd.f32 %v5037, %v4911
    %v5070 = vadd.f32 %v5038, %v4916
    %v5071 = vadd.f32 %v5039, %v4921
    %v5072 = vadd.f32 %v5040, %v4926
    %v5073 = vadd.f32 %v5041, %v4931
    %v5074 = vadd.f32 %v5042, %v4936
    %v5075 = vadd.f32 %v5043, %v4941
    %v5076 = vadd.f32 %v5044, %v4946
    %v5077 = vadd.f32 %v5045, %v4951
    %v5078 = vadd.f32 %v5046, %v4956
    %v5079 = vadd.f32 %v5047, %v4961
    %v5080 = vadd.f32 %v5048, %v4966
    %v5081 = vadd.f32 %v5049, %v4971
    %v5082 = vadd.f32 %v5050, %v4976
    %v5083 = vadd.f32 %v5051, %v4981
    %v5084 = vadd.f32 %v5052, %v4986
    %v5085 = vadd.f32 %v5053, %v4991
    %v5086 = vadd.f32 %v5054, %v4996
    %v5087 = vadd.f32 %v5055, %v5001
    %v5088 = vadd.f32 %v5056, %v5006
    %v5089 = vadd.f32 %v5057, %v5011
    %v5090 = vadd.f32 %v5058, %v5016
    %v5091 = vadd.f32 %v5059, %v5021
    %v5092 = vadd.f32 %v5060, %v5026
    %v5093 = vmax.f32 %v5061, -4.0
    %v5094 = vmax.f32 %v5062, -4.0
    %v5095 = vmax.f32 %v5063, -4.0
    %v5096 = vmax.f32 %v5064, -4.0
    %v5097 = vmax.f32 %v5065, -4.0
    %v5098 = vmax.f32 %v5066, -4.0
    %v5099 = vmax.f32 %v5067, -4.0
    %v5100 = vmax.f32 %v5068, -4.0
    %v5101 = vmax.f32 %v5069, -4.0
    %v5102 = vmax.f32 %v5070, -4.0
    %v5103 = vmax.f32 %v5071, -4.0
    %v5104 = vmax.f32 %v5072, -4.0
    %v5105 = vmax.f32 %v5073, -4.0
    %v5106 = vmax.f32 %v5074, -4.0
    %v5107 = vmax.f32 %v5075, -4.0
    %v5108 = vmax.f32 %v5076, -4.0
    %v5109 = vmax.f32 %v5077, -4.0
    %v5110 = vmax.f32 %v5078, -4.0
    %v5111 = vmax.f32 %v5079, -4.0
    %v5112 = vmax.f32 %v5080, -4.0
    %v5113 = vmax.f32 %v5081, -4.0
    %v5114 = vmax.f32 %v5082, -4.0
    %v5115 = vmax.f32 %v5083, -4.0
    %v5116 = vmax.f32 %v5084, -4.0
    %v5117 = vmax.f32 %v5085, -4.0
    %v5118 = vmax.f32 %v5086, -4.0
    %v5119 = vmax.f32 %v5087, -4.0
    %v5120 = vmax.f32 %v5088, -4.0
    %v5121 = vmax.f32 %v5089, -4.0
    %v5122 = vmax.f32 %v5090, -4.0
    %v5123 = vmax.f32 %v5091, -4.0
    %v5124 = vmax.f32 %v5092, -4.0
    %v5125 = vmin.f32 %v5093, 4.0
    %v5126 = vmin.f32 %v5094, 4.0
    %v5127 = vmin.f32 %v5095, 4.0
    %v5128 = vmin.f32 %v5096, 4.0
    %v5129 = vmin.f32 %v5097, 4.0
    %v5130 = vmin.f32 %v5098, 4.0
    %v5131 = vmin.f32 %v5099, 4.0
    %v5132 = vmin.f32 %v5100, 4.0
    %v5133 = vmin.f32 %v5101, 4.0
    %v5134 = vmin.f32 %v5102, 4.0
    %v5135 = vmin.f32 %v5103, 4.0
    %v5136 = vmin.f32 %v5104, 4.0
    %v5137 = vmin.f32 %v5105, 4.0
    %v5138 = vmin.f32 %v5106, 4.0
    %v5139 = vmin.f32 %v5107, 4.0
    %v5140 = vmin.f32 %v5108, 4.0
    %v5141 = vmin.f32 %v5109, 4.0
    %v5142 = vmin.f32 %v5110, 4.0
    %v5143 = vmin.f32 %v5111, 4.0
    %v5144 = vmin.f32 %v5112, 4.0
    %v5145 = vmin.f32 %v5113, 4.0
    %v5146 = vmin.f32 %v5114, 4.0
    %v5147 = vmin.f32 %v5115, 4.0
    %v5148 = vmin.f32 %v5116, 4.0
    %v5149 = vmin.f32 %v5117, 4.0
    %v5150 = vmin.f32 %v5118, 4.0
    %v5151 = vmin.f32 %v5119, 4.0
    %v5152 = vmin.f32 %v5120, 4.0
    %v5153 = vmin.f32 %v5121, 4.0
    %v5154 = vmin.f32 %v5122, 4.0
    %v5155 = vmin.f32 %v5123, 4.0
    %v5156 = vmin.f32 %v5124, 4.0
    %5157 = vst [vmem:[%s15] sm:$0xff] %v5125
    %5158 = vst [vmem:[%s15 + $0x8] sm:$0xff] %v5126
    %5159 = vst [vmem:[%s15 + $0x10] sm:$0xff] %v5127
    %5160 = vst [vmem:[%s15 + $0x18] sm:$0xff] %v5128
    %5161 = vst [vmem:[%s15 + $0x20] sm:$0xff] %v5129
    %5162 = vst [vmem:[%s15 + $0x28] sm:$0xff] %v5130
    %5163 = vst [vmem:[%s15 + $0x30] sm:$0xff] %v5131
    %5164 = vst [vmem:[%s15 + $0x38] sm:$0xff] %v5132
    %5165 = vst [vmem:[%s15 + $0x40] sm:$0xff] %v5133
    %5166 = vst [vmem:[%s15 + $0x48] sm:$0xff] %v5134
    %5167 = vst [vmem:[%s15 + $0x50] sm:$0xff] %v5135
    %5168 = vst [vmem:[%s15 + $0x58] sm:$0xff] %v5136
    %5169 = vst [vmem:[%s15 + $0x60] sm:$0xff] %v5137
    %5170 = vst [vmem:[%s15 + $0x68] sm:$0xff] %v5138
    %5171 = vst [vmem:[%s15 + $0x70] sm:$0xff] %v5139
    %5172 = vst [vmem:[%s15 + $0x78] sm:$0xff] %v5140
    %5173 = vst [vmem:[%s15 + $0x80] sm:$0xff] %v5141
    %5174 = vst [vmem:[%s15 + $0x88] sm:$0xff] %v5142
    %5175 = vst [vmem:[%s15 + $0x90] sm:$0xff] %v5143
    %5176 = vst [vmem:[%s15 + $0x98] sm:$0xff] %v5144
    %5177 = vst [vmem:[%s15 + $0xa0] sm:$0xff] %v5145
    %5178 = vst [vmem:[%s15 + $0xa8] sm:$0xff] %v5146
    %5179 = vst [vmem:[%s15 + $0xb0] sm:$0xff] %v5147
    %5180 = vst [vmem:[%s15 + $0xb8] sm:$0xff] %v5148
    %5181 = vst [vmem:[%s15 + $0xc0] sm:$0xff] %v5149
    %5182 = vst [vmem:[%s15 + $0xc8] sm:$0xff] %v5150
    %5183 = vst [vmem:[%s15 + $0xd0] sm:$0xff] %v5151
    %5184 = vst [vmem:[%s15 + $0xd8] sm:$0xff] %v5152
    %5185 = vst [vmem:[%s15 + $0xe0] sm:$0xff] %v5153
    %5186 = vst [vmem:[%s15 + $0xe8] sm:$0xff] %v5154
    %5187 = vst [vmem:[%s15 + $0xf0] sm:$0xff] %v5155
    %5188 = vst [vmem:[%s15 + $0xf8] sm:$0xff] %v5156
    %v5189 = vsub.f32 %v4638, %v4125
    %v5190 = vmul.f32 %v5189, 0.5
    %v5191 = vadd.f32 %v4125, %v5190
    %vm5192 = vcmp.ge.f32.partialorder %v5191, 1.0
    %v5193 = vsel %vm5192, 1, 0
    %v5194 = vcvt.s32.f32 %v5193
    %v5195 = vsub.f32 1.0, %v5194
    %v5196 = vmul.f32 %v5191, %v5195
    %v5197 = vadd.f32 %v4126, %v5194
    %v5198 = vmul.f32 %v896, %v4506
    %v5199 = vmul.f32 %v896, %v4507
    %v5200 = vmul.f32 %v896, %v4508
    %v5201 = vmul.f32 %v896, %v4509
    %v5202 = vmul.f32 %v896, %v4510
    %v5203 = vmul.f32 %v896, %v4511
    %v5204 = vmul.f32 %v896, %v4512
    %v5205 = vmul.f32 %v896, %v4513
    %v5206 = vmul.f32 %v896, %v4514
    %v5207 = vmul.f32 %v896, %v4515
    %v5208 = vmul.f32 %v896, %v4516
    %v5209 = vmul.f32 %v896, %v4517
    %v5210 = vmul.f32 %v896, %v4518
    %v5211 = vmul.f32 %v896, %v4519
    %v5212 = vmul.f32 %v896, %v4520
    %v5213 = vmul.f32 %v896, %v4521
    %v5214 = vadd.f32 %v187, %v5198
    %v5215 = vadd.f32 %v188, %v5199
    %v5216 = vadd.f32 %v189, %v5200
    %v5217 = vadd.f32 %v190, %v5201
    %v5218 = vadd.f32 %v191, %v5202
    %v5219 = vadd.f32 %v192, %v5203
    %v5220 = vadd.f32 %v193, %v5204
    %v5221 = vadd.f32 %v194, %v5205
    %v5222 = vadd.f32 %v195, %v5206
    %v5223 = vadd.f32 %v196, %v5207
    %v5224 = vadd.f32 %v197, %v5208
    %v5225 = vadd.f32 %v198, %v5209
    %v5226 = vadd.f32 %v199, %v5210
    %v5227 = vadd.f32 %v200, %v5211
    %v5228 = vadd.f32 %v201, %v5212
    %v5229 = vadd.f32 %v202, %v5213
    %5230 = vmatprep.subr.mxu0 0.0
    %5231 = vmatpush1.msra.mxu0 %v5214
    %5232 = vmatprep.subr.mxu0 0.0
    %5233 = vmatpush1.msra.mxu0 %v5215
    %5234 = vmatprep.subr.mxu0 0.0
    %5235 = vmatpush1.msra.mxu0 %v5216
    %5236 = vmatprep.subr.mxu0 0.0
    %5237 = vmatpush1.msra.mxu0 %v5217
    %5238 = vmatprep.subr.mxu0 0.0
    %5239 = vmatpush1.msra.mxu0 %v5218
    %5240 = vmatprep.subr.mxu0 0.0
    %5241 = vmatpush1.msra.mxu0 %v5219
    %5242 = vmatprep.subr.mxu0 0.0
    %5243 = vmatpush1.msra.mxu0 %v5220
    %5244 = vmatprep.subr.mxu0 0.0
    %5245 = vmatpush1.msra.mxu0 %v5221
    %5246 = vmatprep.subr.mxu0 0.0
    %5247 = vmatpush1.msra.mxu0 %v5222
    %5248 = vmatprep.subr.mxu0 0.0
    %5249 = vmatpush1.msra.mxu0 %v5223
    %5250 = vmatprep.subr.mxu0 0.0
    %5251 = vmatpush1.msra.mxu0 %v5224
    %5252 = vmatprep.subr.mxu0 0.0
    %5253 = vmatpush1.msra.mxu0 %v5225
    %5254 = vmatprep.subr.mxu0 0.0
    %5255 = vmatpush1.msra.mxu0 %v5226
    %5256 = vmatprep.subr.mxu0 0.0
    %5257 = vmatpush1.msra.mxu0 %v5227
    %5258 = vmatprep.subr.mxu0 0.0
    %5259 = vmatpush1.msra.mxu0 %v5228
    %5260 = vmatprep.subr.mxu0 0.0
    %5261 = vmatpush1.msra.mxu0 %v5229
    %5262 = vmatprep.subr.mxu0 0.0
    %5263 = vmatpush1.msra.mxu0 0.0
    %5264 = vmatprep.subr.mxu0 0.0
    %5265 = vmatpush1.msra.mxu0 0.0
    %5266 = vmatprep.subr.mxu0 0.0
    %5267 = vmatpush1.msra.mxu0 0.0
    %5268 = vmatprep.subr.mxu0 0.0
    %5269 = vmatpush1.msra.mxu0 0.0
    %5270 = vmatprep.subr.mxu0 0.0
    %5271 = vmatpush1.msra.mxu0 0.0
    %5272 = vmatprep.subr.mxu0 0.0
    %5273 = vmatpush1.msra.mxu0 0.0
    %5274 = vmatprep.subr.mxu0 0.0
    %5275 = vmatpush1.msra.mxu0 0.0
    %5276 = vmatprep.subr.mxu0 0.0
    %5277 = vmatpush1.msra.mxu0 0.0
    %5278 = vmatprep.subr.mxu0 0.0
    %5279 = vmatpush1.msra.mxu0 0.0
    %5280 = vmatprep.subr.mxu0 0.0
    %5281 = vmatpush1.msra.mxu0 0.0
    %5282 = vmatprep.subr.mxu0 0.0
    %5283 = vmatpush1.msra.mxu0 0.0
    %5284 = vmatprep.subr.mxu0 0.0
    %5285 = vmatpush1.msra.mxu0 0.0
    %5286 = vmatprep.subr.mxu0 0.0
    %5287 = vmatpush1.msra.mxu0 0.0
    %5288 = vmatprep.subr.mxu0 0.0
    %5289 = vmatpush1.msra.mxu0 0.0
    %5290 = vmatprep.subr.mxu0 0.0
    %5291 = vmatpush1.msra.mxu0 0.0
    %5292 = vmatprep.subr.mxu0 0.0
    %5293 = vmatpush1.msra.mxu0 0.0
    %5294 = vmatprep.mubr.f32.mxu0 0.0
    %5295 = vmatmul.mubr.f32.gmra.mrb[0].mxu0 %v5194
    %v5296 = vpop.f32.mrb[0].mxu0
    %v5297 = vadd.f32 %v933, %v5296
    %v5298 = vpop.f32.mrb[0].mxu0
    %5299 = vdwg.mxu0
    %v5300 = vmul.f32 %v5297, 2.857143
    %v5301 = vsub.f32 %v5300, %v1010
    %v5302 = vtanh.pop %v5301
    %v5303 = vmul.f32 %v5194, %v1018
    %5304 = vxpose.xlu0.b32.start [1/16] %v5303, 128
    %5305 = vxpose.xlu0.b32.cont [2/16] 0.0, 128
    %5306 = vxpose.xlu0.b32.cont [3/16] 0.0, 128
    %5307 = vxpose.xlu0.b32.cont [4/16] 0.0, 128
    %5308 = vxpose.xlu0.b32.cont [5/16] 0.0, 128
    %5309 = vxpose.xlu0.b32.cont [6/16] 0.0, 128
    %5310 = vxpose.xlu0.b32.cont [7/16] 0.0, 128
    %5311 = vxpose.xlu0.b32.cont [8/16] 0.0, 128
    %5312 = vxpose.xlu0.b32.cont [9/16] 0.0, 128
    %5313 = vxpose.xlu0.b32.cont [10/16] 0.0, 128
    %5314 = vxpose.xlu0.b32.cont [11/16] 0.0, 128
    %5315 = vxpose.xlu0.b32.cont [12/16] 0.0, 128
    %5316 = vxpose.xlu0.b32.cont [13/16] 0.0, 128
    %5317 = vxpose.xlu0.b32.cont [14/16] 0.0, 128
    %5318 = vxpose.xlu0.b32.cont [15/16] 0.0, 128
    %5319 = vxpose.xlu0.b32.end [16/16] 0.0, 128
    %v5320 = vpop.trf.xlu0
    %v5321 = vpop.trf.xlu0
    %v5322 = vpop.trf.xlu0
    %v5323 = vpop.trf.xlu0
    %v5324 = vpop.trf.xlu0
    %v5325 = vpop.trf.xlu0
    %v5326 = vpop.trf.xlu0
    %v5327 = vpop.trf.xlu0
    %v5328 = vpop.trf.xlu0
    %v5329 = vpop.trf.xlu0
    %v5330 = vpop.trf.xlu0
    %v5331 = vpop.trf.xlu0
    %v5332 = vpop.trf.xlu0
    %v5333 = vpop.trf.xlu0
    %v5334 = vpop.trf.xlu0
    %v5335 = vpop.trf.xlu0
    %v5337 = vsel %vm406, %v5320, 0
    %v5340 = vsel %vm406, %v5321, 0
    %v5343 = vsel %vm406, %v5322, 0
    %v5346 = vsel %vm406, %v5323, 0
    %v5349 = vsel %vm406, %v5324, 0
    %v5352 = vsel %vm406, %v5325, 0
    %v5355 = vsel %vm406, %v5326, 0
    %v5358 = vsel %vm406, %v5327, 0
    %v5361 = vsel %vm406, %v5328, 0
    %v5364 = vsel %vm406, %v5329, 0
    %v5367 = vsel %vm406, %v5330, 0
    %v5370 = vsel %vm406, %v5331, 0
    %v5373 = vsel %vm406, %v5332, 0
    %v5376 = vsel %vm406, %v5333, 0
    %v5379 = vsel %vm406, %v5334, 0
    %v5382 = vsel %vm406, %v5335, 0
    %5384 = vmatprep.subr.mxu0 0.0
    %5385 = vmatpush1.msra.mxu0 %v5302
    %5386 = vmatprep.subr.mxu0 0.0
    %5387 = vmatpush1.msra.mxu0 0.0
    %5388 = vmatprep.subr.mxu0 0.0
    %5389 = vmatpush1.msra.mxu0 0.0
    %5390 = vmatprep.subr.mxu0 0.0
    %5391 = vmatpush1.msra.mxu0 0.0
    %5392 = vmatprep.subr.mxu0 0.0
    %5393 = vmatpush1.msra.mxu0 0.0
    %5394 = vmatprep.subr.mxu0 0.0
    %5395 = vmatpush1.msra.mxu0 0.0
    %5396 = vmatprep.subr.mxu0 0.0
    %5397 = vmatpush1.msra.mxu0 0.0
    %5398 = vmatprep.subr.mxu0 0.0
    %5399 = vmatpush1.msra.mxu0 0.0
    %5400 = vmatprep.subr.mxu0 0.0
    %5401 = vmatpush1.msra.mxu0 0.0
    %5402 = vmatprep.subr.mxu0 0.0
    %5403 = vmatpush1.msra.mxu0 0.0
    %5404 = vmatprep.subr.mxu0 0.0
    %5405 = vmatpush1.msra.mxu0 0.0
    %5406 = vmatprep.subr.mxu0 0.0
    %5407 = vmatpush1.msra.mxu0 0.0
    %5408 = vmatprep.subr.mxu0 0.0
    %5409 = vmatpush1.msra.mxu0 0.0
    %5410 = vmatprep.subr.mxu0 0.0
    %5411 = vmatpush1.msra.mxu0 0.0
    %5412 = vmatprep.subr.mxu0 0.0
    %5413 = vmatpush1.msra.mxu0 0.0
    %5414 = vmatprep.subr.mxu0 0.0
    %5415 = vmatpush1.msra.mxu0 0.0
    %5416 = vmatprep.subr.mxu0 0.0
    %5417 = vmatpush1.msra.mxu0 0.0
    %5418 = vmatprep.subr.mxu0 0.0
    %5419 = vmatpush1.msra.mxu0 0.0
    %5420 = vmatprep.subr.mxu0 0.0
    %5421 = vmatpush1.msra.mxu0 0.0
    %5422 = vmatprep.subr.mxu0 0.0
    %5423 = vmatpush1.msra.mxu0 0.0
    %5424 = vmatprep.subr.mxu0 0.0
    %5425 = vmatpush1.msra.mxu0 0.0
    %5426 = vmatprep.subr.mxu0 0.0
    %5427 = vmatpush1.msra.mxu0 0.0
    %5428 = vmatprep.subr.mxu0 0.0
    %5429 = vmatpush1.msra.mxu0 0.0
    %5430 = vmatprep.subr.mxu0 0.0
    %5431 = vmatpush1.msra.mxu0 0.0
    %5432 = vmatprep.subr.mxu0 0.0
    %5433 = vmatpush1.msra.mxu0 0.0
    %5434 = vmatprep.subr.mxu0 0.0
    %5435 = vmatpush1.msra.mxu0 0.0
    %5436 = vmatprep.subr.mxu0 0.0
    %5437 = vmatpush1.msra.mxu0 0.0
    %5438 = vmatprep.subr.mxu0 0.0
    %5439 = vmatpush1.msra.mxu0 0.0
    %5440 = vmatprep.subr.mxu0 0.0
    %5441 = vmatpush1.msra.mxu0 0.0
    %5442 = vmatprep.subr.mxu0 0.0
    %5443 = vmatpush1.msra.mxu0 0.0
    %5444 = vmatprep.subr.mxu0 0.0
    %5445 = vmatpush1.msra.mxu0 0.0
    %5446 = vmatprep.subr.mxu0 0.0
    %5447 = vmatpush1.msra.mxu0 0.0
    %5448 = vmatprep.mubr.f32.mxu0 0.0
    %5449 = vmatmul.mubr.f32.gmra.mrb[0].mxu0 %v5337
    %v5450 = vpop.f32.mrb[0].mxu0
    %v5451 = vadd.f32 0.0, %v5450
    %v5452 = vpop.f32.mrb[0].mxu0
    %5453 = vmatprep.mubr.f32.mxu0 0.0
    %5454 = vmatmul.mubr.f32.gmra.mrb[0].mxu0 %v5340
    %v5455 = vpop.f32.mrb[0].mxu0
    %v5456 = vadd.f32 0.0, %v5455
    %v5457 = vpop.f32.mrb[0].mxu0
    %5458 = vmatprep.mubr.f32.mxu0 0.0
    %5459 = vmatmul.mubr.f32.gmra.mrb[0].mxu0 %v5343
    %v5460 = vpop.f32.mrb[0].mxu0
    %v5461 = vadd.f32 0.0, %v5460
    %v5462 = vpop.f32.mrb[0].mxu0
    %5463 = vmatprep.mubr.f32.mxu0 0.0
    %5464 = vmatmul.mubr.f32.gmra.mrb[0].mxu0 %v5346
    %v5465 = vpop.f32.mrb[0].mxu0
    %v5466 = vadd.f32 0.0, %v5465
    %v5467 = vpop.f32.mrb[0].mxu0
    %5468 = vmatprep.mubr.f32.mxu0 0.0
    %5469 = vmatmul.mubr.f32.gmra.mrb[0].mxu0 %v5349
    %v5470 = vpop.f32.mrb[0].mxu0
    %v5471 = vadd.f32 0.0, %v5470
    %v5472 = vpop.f32.mrb[0].mxu0
    %5473 = vmatprep.mubr.f32.mxu0 0.0
    %5474 = vmatmul.mubr.f32.gmra.mrb[0].mxu0 %v5352
    %v5475 = vpop.f32.mrb[0].mxu0
    %v5476 = vadd.f32 0.0, %v5475
    %v5477 = vpop.f32.mrb[0].mxu0
    %5478 = vmatprep.mubr.f32.mxu0 0.0
    %5479 = vmatmul.mubr.f32.gmra.mrb[0].mxu0 %v5355
    %v5480 = vpop.f32.mrb[0].mxu0
    %v5481 = vadd.f32 0.0, %v5480
    %v5482 = vpop.f32.mrb[0].mxu0
    %5483 = vmatprep.mubr.f32.mxu0 0.0
    %5484 = vmatmul.mubr.f32.gmra.mrb[0].mxu0 %v5358
    %v5485 = vpop.f32.mrb[0].mxu0
    %v5486 = vadd.f32 0.0, %v5485
    %v5487 = vpop.f32.mrb[0].mxu0
    %5488 = vmatprep.mubr.f32.mxu0 0.0
    %5489 = vmatmul.mubr.f32.gmra.mrb[0].mxu0 %v5361
    %v5490 = vpop.f32.mrb[0].mxu0
    %v5491 = vadd.f32 0.0, %v5490
    %v5492 = vpop.f32.mrb[0].mxu0
    %5493 = vmatprep.mubr.f32.mxu0 0.0
    %5494 = vmatmul.mubr.f32.gmra.mrb[0].mxu0 %v5364
    %v5495 = vpop.f32.mrb[0].mxu0
    %v5496 = vadd.f32 0.0, %v5495
    %v5497 = vpop.f32.mrb[0].mxu0
    %5498 = vmatprep.mubr.f32.mxu0 0.0
    %5499 = vmatmul.mubr.f32.gmra.mrb[0].mxu0 %v5367
    %v5500 = vpop.f32.mrb[0].mxu0
    %v5501 = vadd.f32 0.0, %v5500
    %v5502 = vpop.f32.mrb[0].mxu0
    %5503 = vmatprep.mubr.f32.mxu0 0.0
    %5504 = vmatmul.mubr.f32.gmra.mrb[0].mxu0 %v5370
    %v5505 = vpop.f32.mrb[0].mxu0
    %v5506 = vadd.f32 0.0, %v5505
    %v5507 = vpop.f32.mrb[0].mxu0
    %5508 = vmatprep.mubr.f32.mxu0 0.0
    %5509 = vmatmul.mubr.f32.gmra.mrb[0].mxu0 %v5373
    %v5510 = vpop.f32.mrb[0].mxu0
    %v5511 = vadd.f32 0.0, %v5510
    %v5512 = vpop.f32.mrb[0].mxu0
    %5513 = vmatprep.mubr.f32.mxu0 0.0
    %5514 = vmatmul.mubr.f32.gmra.mrb[0].mxu0 %v5376
    %v5515 = vpop.f32.mrb[0].mxu0
    %v5516 = vadd.f32 0.0, %v5515
    %v5517 = vpop.f32.mrb[0].mxu0
    %5518 = vmatprep.mubr.f32.mxu0 0.0
    %5519 = vmatmul.mubr.f32.gmra.mrb[0].mxu0 %v5379
    %v5520 = vpop.f32.mrb[0].mxu0
    %v5521 = vadd.f32 0.0, %v5520
    %v5522 = vpop.f32.mrb[0].mxu0
    %5523 = vmatprep.mubr.f32.mxu0 0.0
    %5524 = vmatmul.mubr.f32.gmra.mrb[0].mxu0 %v5382
    %v5525 = vpop.f32.mrb[0].mxu0
    %v5526 = vadd.f32 0.0, %v5525
    %v5527 = vpop.f32.mrb[0].mxu0
    %5528 = vdwg.mxu0
    %v5529 = vmul.f32 %v4506, 0.95
    %v5530 = vmul.f32 %v4507, 0.95
    %v5531 = vmul.f32 %v4508, 0.95
    %v5532 = vmul.f32 %v4509, 0.95
    %v5533 = vmul.f32 %v4510, 0.95
    %v5534 = vmul.f32 %v4511, 0.95
    %v5535 = vmul.f32 %v4512, 0.95
    %v5536 = vmul.f32 %v4513, 0.95
    %v5537 = vmul.f32 %v4514, 0.95
    %v5538 = vmul.f32 %v4515, 0.95
    %v5539 = vmul.f32 %v4516, 0.95
    %v5540 = vmul.f32 %v4517, 0.95
    %v5541 = vmul.f32 %v4518, 0.95
    %v5542 = vmul.f32 %v4519, 0.95
    %v5543 = vmul.f32 %v4520, 0.95
    %v5544 = vmul.f32 %v4521, 0.95
    %v5545 = vadd.f32 %v5529, %v5451
    %v5546 = vadd.f32 %v5530, %v5456
    %v5547 = vadd.f32 %v5531, %v5461
    %v5548 = vadd.f32 %v5532, %v5466
    %v5549 = vadd.f32 %v5533, %v5471
    %v5550 = vadd.f32 %v5534, %v5476
    %v5551 = vadd.f32 %v5535, %v5481
    %v5552 = vadd.f32 %v5536, %v5486
    %v5553 = vadd.f32 %v5537, %v5491
    %v5554 = vadd.f32 %v5538, %v5496
    %v5555 = vadd.f32 %v5539, %v5501
    %v5556 = vadd.f32 %v5540, %v5506
    %v5557 = vadd.f32 %v5541, %v5511
    %v5558 = vadd.f32 %v5542, %v5516
    %v5559 = vadd.f32 %v5543, %v5521
    %v5560 = vadd.f32 %v5544, %v5526
    %v5561 = vmax.f32 %v5545, -4.0
    %v5562 = vmax.f32 %v5546, -4.0
    %v5563 = vmax.f32 %v5547, -4.0
    %v5564 = vmax.f32 %v5548, -4.0
    %v5565 = vmax.f32 %v5549, -4.0
    %v5566 = vmax.f32 %v5550, -4.0
    %v5567 = vmax.f32 %v5551, -4.0
    %v5568 = vmax.f32 %v5552, -4.0
    %v5569 = vmax.f32 %v5553, -4.0
    %v5570 = vmax.f32 %v5554, -4.0
    %v5571 = vmax.f32 %v5555, -4.0
    %v5572 = vmax.f32 %v5556, -4.0
    %v5573 = vmax.f32 %v5557, -4.0
    %v5574 = vmax.f32 %v5558, -4.0
    %v5575 = vmax.f32 %v5559, -4.0
    %v5576 = vmax.f32 %v5560, -4.0
    %v5577 = vmin.f32 %v5561, 4.0
    %v5578 = vmin.f32 %v5562, 4.0
    %v5579 = vmin.f32 %v5563, 4.0
    %v5580 = vmin.f32 %v5564, 4.0
    %v5581 = vmin.f32 %v5565, 4.0
    %v5582 = vmin.f32 %v5566, 4.0
    %v5583 = vmin.f32 %v5567, 4.0
    %v5584 = vmin.f32 %v5568, 4.0
    %v5585 = vmin.f32 %v5569, 4.0
    %v5586 = vmin.f32 %v5570, 4.0
    %v5587 = vmin.f32 %v5571, 4.0
    %v5588 = vmin.f32 %v5572, 4.0
    %v5589 = vmin.f32 %v5573, 4.0
    %v5590 = vmin.f32 %v5574, 4.0
    %v5591 = vmin.f32 %v5575, 4.0
    %v5592 = vmin.f32 %v5576, 4.0
    %v5593 = vsub.f32 %v5297, %v4529
    %v5594 = vmul.f32 %v5593, 0.5
    %v5595 = vadd.f32 %v4529, %v5594
    %vm5596 = vcmp.ge.f32.partialorder %v5595, 1.0
    %v5597 = vsel %vm5596, 1, 0
    %v5598 = vcvt.s32.f32 %v5597
    %v5599 = vsub.f32 1.0, %v5598
    %v5600 = vmul.f32 %v5595, %v5599
    %v5601 = vadd.f32 %v4530, %v5598
    %v5602 = vld [vmem:[%s15] sm:$0xff]
    %v5603 = vld [vmem:[%s15 + $0x8] sm:$0xff]
    %v5604 = vld [vmem:[%s15 + $0x10] sm:$0xff]
    %v5605 = vld [vmem:[%s15 + $0x18] sm:$0xff]
    %v5606 = vld [vmem:[%s15 + $0x20] sm:$0xff]
    %v5607 = vld [vmem:[%s15 + $0x28] sm:$0xff]
    %v5608 = vld [vmem:[%s15 + $0x30] sm:$0xff]
    %v5609 = vld [vmem:[%s15 + $0x38] sm:$0xff]
    %v5610 = vld [vmem:[%s15 + $0x40] sm:$0xff]
    %v5611 = vld [vmem:[%s15 + $0x48] sm:$0xff]
    %v5612 = vld [vmem:[%s15 + $0x50] sm:$0xff]
    %v5613 = vld [vmem:[%s15 + $0x58] sm:$0xff]
    %v5614 = vld [vmem:[%s15 + $0x60] sm:$0xff]
    %v5615 = vld [vmem:[%s15 + $0x68] sm:$0xff]
    %v5616 = vld [vmem:[%s15 + $0x70] sm:$0xff]
    %v5617 = vld [vmem:[%s15 + $0x78] sm:$0xff]
    %v5618 = vld [vmem:[%s15 + $0x80] sm:$0xff]
    %v5619 = vld [vmem:[%s15 + $0x88] sm:$0xff]
    %v5620 = vld [vmem:[%s15 + $0x90] sm:$0xff]
    %v5621 = vld [vmem:[%s15 + $0x98] sm:$0xff]
    %v5622 = vld [vmem:[%s15 + $0xa0] sm:$0xff]
    %v5623 = vld [vmem:[%s15 + $0xa8] sm:$0xff]
    %v5624 = vld [vmem:[%s15 + $0xb0] sm:$0xff]
    %v5625 = vld [vmem:[%s15 + $0xb8] sm:$0xff]
    %v5626 = vld [vmem:[%s15 + $0xc0] sm:$0xff]
    %v5627 = vld [vmem:[%s15 + $0xc8] sm:$0xff]
    %v5628 = vld [vmem:[%s15 + $0xd0] sm:$0xff]
    %v5629 = vld [vmem:[%s15 + $0xd8] sm:$0xff]
    %v5630 = vld [vmem:[%s15 + $0xe0] sm:$0xff]
    %v5631 = vld [vmem:[%s15 + $0xe8] sm:$0xff]
    %v5632 = vld [vmem:[%s15 + $0xf0] sm:$0xff]
    %v5633 = vld [vmem:[%s15 + $0xf8] sm:$0xff]
    %5634 = vmatprep.subr.mxu0 0.0
    %5635 = vmatpush1.msra.mxu0 %v5602
    %5636 = vmatprep.subr.mxu0 0.0
    %5637 = vmatpush1.msra.mxu0 %v5603
    %5638 = vmatprep.subr.mxu0 0.0
    %5639 = vmatpush1.msra.mxu0 %v5604
    %5640 = vmatprep.subr.mxu0 0.0
    %5641 = vmatpush1.msra.mxu0 %v5605
    %5642 = vmatprep.subr.mxu0 0.0
    %5643 = vmatpush1.msra.mxu0 %v5606
    %5644 = vmatprep.subr.mxu0 0.0
    %5645 = vmatpush1.msra.mxu0 %v5607
    %5646 = vmatprep.subr.mxu0 0.0
    %5647 = vmatpush1.msra.mxu0 %v5608
    %5648 = vmatprep.subr.mxu0 0.0
    %5649 = vmatpush1.msra.mxu0 %v5609
    %5650 = vmatprep.subr.mxu0 0.0
    %5651 = vmatpush1.msra.mxu0 %v5610
    %5652 = vmatprep.subr.mxu0 0.0
    %5653 = vmatpush1.msra.mxu0 %v5611
    %5654 = vmatprep.subr.mxu0 0.0
    %5655 = vmatpush1.msra.mxu0 %v5612
    %5656 = vmatprep.subr.mxu0 0.0
    %5657 = vmatpush1.msra.mxu0 %v5613
    %5658 = vmatprep.subr.mxu0 0.0
    %5659 = vmatpush1.msra.mxu0 %v5614
    %5660 = vmatprep.subr.mxu0 0.0
    %5661 = vmatpush1.msra.mxu0 %v5615
    %5662 = vmatprep.subr.mxu0 0.0
    %5663 = vmatpush1.msra.mxu0 %v5616
    %5664 = vmatprep.subr.mxu0 0.0
    %5665 = vmatpush1.msra.mxu0 %v5617
    %5666 = vmatprep.subr.mxu0 0.0
    %5667 = vmatpush1.msra.mxu0 %v5618
    %5668 = vmatprep.subr.mxu0 0.0
    %5669 = vmatpush1.msra.mxu0 %v5619
    %5670 = vmatprep.subr.mxu0 0.0
    %5671 = vmatpush1.msra.mxu0 %v5620
    %5672 = vmatprep.subr.mxu0 0.0
    %5673 = vmatpush1.msra.mxu0 %v5621
    %5674 = vmatprep.subr.mxu0 0.0
    %5675 = vmatpush1.msra.mxu0 %v5622
    %5676 = vmatprep.subr.mxu0 0.0
    %5677 = vmatpush1.msra.mxu0 %v5623
    %5678 = vmatprep.subr.mxu0 0.0
    %5679 = vmatpush1.msra.mxu0 %v5624
    %5680 = vmatprep.subr.mxu0 0.0
    %5681 = vmatpush1.msra.mxu0 %v5625
    %5682 = vmatprep.subr.mxu0 0.0
    %5683 = vmatpush1.msra.mxu0 %v5626
    %5684 = vmatprep.subr.mxu0 0.0
    %5685 = vmatpush1.msra.mxu0 %v5627
    %5686 = vmatprep.subr.mxu0 0.0
    %5687 = vmatpush1.msra.mxu0 %v5628
    %5688 = vmatprep.subr.mxu0 0.0
    %5689 = vmatpush1.msra.mxu0 %v5629
    %5690 = vmatprep.subr.mxu0 0.0
    %5691 = vmatpush1.msra.mxu0 %v5630
    %5692 = vmatprep.subr.mxu0 0.0
    %5693 = vmatpush1.msra.mxu0 %v5631
    %5694 = vmatprep.subr.mxu0 0.0
    %5695 = vmatpush1.msra.mxu0 %v5632
    %5696 = vmatprep.subr.mxu0 0.0
    %5697 = vmatpush1.msra.mxu0 %v5633
    %5698 = vmatprep.mubr.f32.mxu0 %v64
    %5699 = vmatmul.mubr.f32.gmra.mrb[0].mxu0 %v63
    %v5700 = vpop.f32.mrb[0].mxu0
    %v5701 = vadd.f32 0.0, %v5700
    %v5702 = vpop.f32.mrb[0].mxu0
    %5703 = vdwg.mxu0
    %v5704 = vmul.f32 %v164, 0.8824969
    %v5705 = vadd.f32 %v5704, %v325
    %s5706 = smul.f32 %s61, 0.8824969
    %v5707 = vstv %s5706
    %v5708 = vmul.f32 %v5707, %v5701
    %v5709 = vadd.f32 %v5705, %v5708
    %v5710 = vmul.f32 %v5709, 2.857143
    %v5711 = vsub.f32 %v5710, %v336
    %v5712 = vtanh.pop %v5711
    %v5713 = vmul.f32 %v179, 0.11031211
    %v5714 = vmul.f32 %v180, 0.11031211
    %5715 = vxpose.xlu0.b32.start [1/16] %v5713, 128
    %5716 = vxpose.xlu0.b32.cont [2/16] 0.0, 128
    %5717 = vxpose.xlu0.b32.cont [3/16] 0.0, 128
    %5718 = vxpose.xlu0.b32.cont [4/16] 0.0, 128
    %5719 = vxpose.xlu0.b32.cont [5/16] 0.0, 128
    %5720 = vxpose.xlu0.b32.cont [6/16] 0.0, 128
    %5721 = vxpose.xlu0.b32.cont [7/16] 0.0, 128
    %5722 = vxpose.xlu0.b32.cont [8/16] 0.0, 128
    %5723 = vxpose.xlu0.b32.cont [9/16] 0.0, 128
    %5724 = vxpose.xlu0.b32.cont [10/16] 0.0, 128
    %5725 = vxpose.xlu0.b32.cont [11/16] 0.0, 128
    %5726 = vxpose.xlu0.b32.cont [12/16] 0.0, 128
    %5727 = vxpose.xlu0.b32.cont [13/16] 0.0, 128
    %5728 = vxpose.xlu0.b32.cont [14/16] 0.0, 128
    %5729 = vxpose.xlu0.b32.cont [15/16] 0.0, 128
    %5730 = vxpose.xlu0.b32.end [16/16] 0.0, 128
    %v5731 = vpop.trf.xlu0
    %v5732 = vpop.trf.xlu0
    %v5733 = vpop.trf.xlu0
    %v5734 = vpop.trf.xlu0
    %v5735 = vpop.trf.xlu0
    %v5736 = vpop.trf.xlu0
    %v5737 = vpop.trf.xlu0
    %v5738 = vpop.trf.xlu0
    %v5739 = vpop.trf.xlu0
    %v5740 = vpop.trf.xlu0
    %v5741 = vpop.trf.xlu0
    %v5742 = vpop.trf.xlu0
    %v5743 = vpop.trf.xlu0
    %v5744 = vpop.trf.xlu0
    %v5745 = vpop.trf.xlu0
    %v5746 = vpop.trf.xlu0
    %5747 = vxpose.xlu0.b32.start [1/16] %v5714, 128
    %5748 = vxpose.xlu0.b32.cont [2/16] 0.0, 128
    %5749 = vxpose.xlu0.b32.cont [3/16] 0.0, 128
    %5750 = vxpose.xlu0.b32.cont [4/16] 0.0, 128
    %5751 = vxpose.xlu0.b32.cont [5/16] 0.0, 128
    %5752 = vxpose.xlu0.b32.cont [6/16] 0.0, 128
    %5753 = vxpose.xlu0.b32.cont [7/16] 0.0, 128
    %5754 = vxpose.xlu0.b32.cont [8/16] 0.0, 128
    %5755 = vxpose.xlu0.b32.cont [9/16] 0.0, 128
    %5756 = vxpose.xlu0.b32.cont [10/16] 0.0, 128
    %5757 = vxpose.xlu0.b32.cont [11/16] 0.0, 128
    %5758 = vxpose.xlu0.b32.cont [12/16] 0.0, 128
    %5759 = vxpose.xlu0.b32.cont [13/16] 0.0, 128
    %5760 = vxpose.xlu0.b32.cont [14/16] 0.0, 128
    %5761 = vxpose.xlu0.b32.cont [15/16] 0.0, 128
    %5762 = vxpose.xlu0.b32.end [16/16] 0.0, 128
    %v5763 = vpop.trf.xlu0
    %v5764 = vpop.trf.xlu0
    %v5765 = vpop.trf.xlu0
    %v5766 = vpop.trf.xlu0
    %v5767 = vpop.trf.xlu0
    %v5768 = vpop.trf.xlu0
    %v5769 = vpop.trf.xlu0
    %v5770 = vpop.trf.xlu0
    %v5771 = vpop.trf.xlu0
    %v5772 = vpop.trf.xlu0
    %v5773 = vpop.trf.xlu0
    %v5774 = vpop.trf.xlu0
    %v5775 = vpop.trf.xlu0
    %v5776 = vpop.trf.xlu0
    %v5777 = vpop.trf.xlu0
    %v5778 = vpop.trf.xlu0
    %v5780 = vsel %vm406, %v5731, 0
    %v5783 = vsel %vm406, %v5732, 0
    %v5786 = vsel %vm406, %v5733, 0
    %v5789 = vsel %vm406, %v5734, 0
    %v5792 = vsel %vm406, %v5735, 0
    %v5795 = vsel %vm406, %v5736, 0
    %v5798 = vsel %vm406, %v5737, 0
    %v5801 = vsel %vm406, %v5738, 0
    %v5804 = vsel %vm406, %v5739, 0
    %v5807 = vsel %vm406, %v5740, 0
    %v5810 = vsel %vm406, %v5741, 0
    %v5813 = vsel %vm406, %v5742, 0
    %v5816 = vsel %vm406, %v5743, 0
    %v5819 = vsel %vm406, %v5744, 0
    %v5822 = vsel %vm406, %v5745, 0
    %v5825 = vsel %vm406, %v5746, 0
    %v5828 = vsel %vm406, %v5763, 0
    %v5831 = vsel %vm406, %v5764, 0
    %v5834 = vsel %vm406, %v5765, 0
    %v5837 = vsel %vm406, %v5766, 0
    %v5840 = vsel %vm406, %v5767, 0
    %v5843 = vsel %vm406, %v5768, 0
    %v5846 = vsel %vm406, %v5769, 0
    %v5849 = vsel %vm406, %v5770, 0
    %v5852 = vsel %vm406, %v5771, 0
    %v5855 = vsel %vm406, %v5772, 0
    %v5858 = vsel %vm406, %v5773, 0
    %v5861 = vsel %vm406, %v5774, 0
    %v5864 = vsel %vm406, %v5775, 0
    %v5867 = vsel %vm406, %v5776, 0
    %v5870 = vsel %vm406, %v5777, 0
    %v5873 = vsel %vm406, %v5778, 0
    %5875 = vmatprep.subr.mxu0 0.0
    %5876 = vmatpush1.msra.mxu0 %v5712
    %5877 = vmatprep.subr.mxu0 0.0
    %5878 = vmatpush1.msra.mxu0 0.0
    %5879 = vmatprep.subr.mxu0 0.0
    %5880 = vmatpush1.msra.mxu0 0.0
    %5881 = vmatprep.subr.mxu0 0.0
    %5882 = vmatpush1.msra.mxu0 0.0
    %5883 = vmatprep.subr.mxu0 0.0
    %5884 = vmatpush1.msra.mxu0 0.0
    %5885 = vmatprep.subr.mxu0 0.0
    %5886 = vmatpush1.msra.mxu0 0.0
    %5887 = vmatprep.subr.mxu0 0.0
    %5888 = vmatpush1.msra.mxu0 0.0
    %5889 = vmatprep.subr.mxu0 0.0
    %5890 = vmatpush1.msra.mxu0 0.0
    %5891 = vmatprep.subr.mxu0 0.0
    %5892 = vmatpush1.msra.mxu0 0.0
    %5893 = vmatprep.subr.mxu0 0.0
    %5894 = vmatpush1.msra.mxu0 0.0
    %5895 = vmatprep.subr.mxu0 0.0
    %5896 = vmatpush1.msra.mxu0 0.0
    %5897 = vmatprep.subr.mxu0 0.0
    %5898 = vmatpush1.msra.mxu0 0.0
    %5899 = vmatprep.subr.mxu0 0.0
    %5900 = vmatpush1.msra.mxu0 0.0
    %5901 = vmatprep.subr.mxu0 0.0
    %5902 = vmatpush1.msra.mxu0 0.0
    %5903 = vmatprep.subr.mxu0 0.0
    %5904 = vmatpush1.msra.mxu0 0.0
    %5905 = vmatprep.subr.mxu0 0.0
    %5906 = vmatpush1.msra.mxu0 0.0
    %5907 = vmatprep.subr.mxu0 0.0
    %5908 = vmatpush1.msra.mxu0 0.0
    %5909 = vmatprep.subr.mxu0 0.0
    %5910 = vmatpush1.msra.mxu0 0.0
    %5911 = vmatprep.subr.mxu0 0.0
    %5912 = vmatpush1.msra.mxu0 0.0
    %5913 = vmatprep.subr.mxu0 0.0
    %5914 = vmatpush1.msra.mxu0 0.0
    %5915 = vmatprep.subr.mxu0 0.0
    %5916 = vmatpush1.msra.mxu0 0.0
    %5917 = vmatprep.subr.mxu0 0.0
    %5918 = vmatpush1.msra.mxu0 0.0
    %5919 = vmatprep.subr.mxu0 0.0
    %5920 = vmatpush1.msra.mxu0 0.0
    %5921 = vmatprep.subr.mxu0 0.0
    %5922 = vmatpush1.msra.mxu0 0.0
    %5923 = vmatprep.subr.mxu0 0.0
    %5924 = vmatpush1.msra.mxu0 0.0
    %5925 = vmatprep.subr.mxu0 0.0
    %5926 = vmatpush1.msra.mxu0 0.0
    %5927 = vmatprep.subr.mxu0 0.0
    %5928 = vmatpush1.msra.mxu0 0.0
    %5929 = vmatprep.subr.mxu0 0.0
    %5930 = vmatpush1.msra.mxu0 0.0
    %5931 = vmatprep.subr.mxu0 0.0
    %5932 = vmatpush1.msra.mxu0 0.0
    %5933 = vmatprep.subr.mxu0 0.0
    %5934 = vmatpush1.msra.mxu0 0.0
    %5935 = vmatprep.subr.mxu0 0.0
    %5936 = vmatpush1.msra.mxu0 0.0
    %5937 = vmatprep.subr.mxu0 0.0
    %5938 = vmatpush1.msra.mxu0 0.0
    %5939 = vmatprep.mubr.f32.mxu0 0.0
    %5940 = vmatmul.mubr.f32.gmra.mrb[0].mxu0 %v5780
    %v5941 = vpop.f32.mrb[0].mxu0
    %v5942 = vadd.f32 0.0, %v5941
    %v5943 = vpop.f32.mrb[0].mxu0
    %5944 = vmatprep.mubr.f32.mxu0 0.0
    %5945 = vmatmul.mubr.f32.gmra.mrb[0].mxu0 %v5783
    %v5946 = vpop.f32.mrb[0].mxu0
    %v5947 = vadd.f32 0.0, %v5946
    %v5948 = vpop.f32.mrb[0].mxu0
    %5949 = vmatprep.mubr.f32.mxu0 0.0
    %5950 = vmatmul.mubr.f32.gmra.mrb[0].mxu0 %v5786
    %v5951 = vpop.f32.mrb[0].mxu0
    %v5952 = vadd.f32 0.0, %v5951
    %v5953 = vpop.f32.mrb[0].mxu0
    %5954 = vmatprep.mubr.f32.mxu0 0.0
    %5955 = vmatmul.mubr.f32.gmra.mrb[0].mxu0 %v5789
    %v5956 = vpop.f32.mrb[0].mxu0
    %v5957 = vadd.f32 0.0, %v5956
    %v5958 = vpop.f32.mrb[0].mxu0
    %5959 = vmatprep.mubr.f32.mxu0 0.0
    %5960 = vmatmul.mubr.f32.gmra.mrb[0].mxu0 %v5792
    %v5961 = vpop.f32.mrb[0].mxu0
    %v5962 = vadd.f32 0.0, %v5961
    %v5963 = vpop.f32.mrb[0].mxu0
    %5964 = vmatprep.mubr.f32.mxu0 0.0
    %5965 = vmatmul.mubr.f32.gmra.mrb[0].mxu0 %v5795
    %v5966 = vpop.f32.mrb[0].mxu0
    %v5967 = vadd.f32 0.0, %v5966
    %v5968 = vpop.f32.mrb[0].mxu0
    %5969 = vmatprep.mubr.f32.mxu0 0.0
    %5970 = vmatmul.mubr.f32.gmra.mrb[0].mxu0 %v5798
    %v5971 = vpop.f32.mrb[0].mxu0
    %v5972 = vadd.f32 0.0, %v5971
    %v5973 = vpop.f32.mrb[0].mxu0
    %5974 = vmatprep.mubr.f32.mxu0 0.0
    %5975 = vmatmul.mubr.f32.gmra.mrb[0].mxu0 %v5801
    %v5976 = vpop.f32.mrb[0].mxu0
    %v5977 = vadd.f32 0.0, %v5976
    %v5978 = vpop.f32.mrb[0].mxu0
    %5979 = vmatprep.mubr.f32.mxu0 0.0
    %5980 = vmatmul.mubr.f32.gmra.mrb[0].mxu0 %v5804
    %v5981 = vpop.f32.mrb[0].mxu0
    %v5982 = vadd.f32 0.0, %v5981
    %v5983 = vpop.f32.mrb[0].mxu0
    %5984 = vmatprep.mubr.f32.mxu0 0.0
    %5985 = vmatmul.mubr.f32.gmra.mrb[0].mxu0 %v5807
    %v5986 = vpop.f32.mrb[0].mxu0
    %v5987 = vadd.f32 0.0, %v5986
    %v5988 = vpop.f32.mrb[0].mxu0
    %5989 = vmatprep.mubr.f32.mxu0 0.0
    %5990 = vmatmul.mubr.f32.gmra.mrb[0].mxu0 %v5810
    %v5991 = vpop.f32.mrb[0].mxu0
    %v5992 = vadd.f32 0.0, %v5991
    %v5993 = vpop.f32.mrb[0].mxu0
    %5994 = vmatprep.mubr.f32.mxu0 0.0
    %5995 = vmatmul.mubr.f32.gmra.mrb[0].mxu0 %v5813
    %v5996 = vpop.f32.mrb[0].mxu0
    %v5997 = vadd.f32 0.0, %v5996
    %v5998 = vpop.f32.mrb[0].mxu0
    %5999 = vmatprep.mubr.f32.mxu0 0.0
    %6000 = vmatmul.mubr.f32.gmra.mrb[0].mxu0 %v5816
    %v6001 = vpop.f32.mrb[0].mxu0
    %v6002 = vadd.f32 0.0, %v6001
    %v6003 = vpop.f32.mrb[0].mxu0
    %6004 = vmatprep.mubr.f32.mxu0 0.0
    %6005 = vmatmul.mubr.f32.gmra.mrb[0].mxu0 %v5819
    %v6006 = vpop.f32.mrb[0].mxu0
    %v6007 = vadd.f32 0.0, %v6006
    %v6008 = vpop.f32.mrb[0].mxu0
    %6009 = vmatprep.mubr.f32.mxu0 0.0
    %6010 = vmatmul.mubr.f32.gmra.mrb[0].mxu0 %v5822
    %v6011 = vpop.f32.mrb[0].mxu0
    %v6012 = vadd.f32 0.0, %v6011
    %v6013 = vpop.f32.mrb[0].mxu0
    %6014 = vmatprep.mubr.f32.mxu0 0.0
    %6015 = vmatmul.mubr.f32.gmra.mrb[0].mxu0 %v5825
    %v6016 = vpop.f32.mrb[0].mxu0
    %v6017 = vadd.f32 0.0, %v6016
    %v6018 = vpop.f32.mrb[0].mxu0
    %6019 = vmatprep.mubr.f32.mxu0 0.0
    %6020 = vmatmul.mubr.f32.gmra.mrb[0].mxu0 %v5828
    %v6021 = vpop.f32.mrb[0].mxu0
    %v6022 = vadd.f32 0.0, %v6021
    %v6023 = vpop.f32.mrb[0].mxu0
    %6024 = vmatprep.mubr.f32.mxu0 0.0
    %6025 = vmatmul.mubr.f32.gmra.mrb[0].mxu0 %v5831
    %v6026 = vpop.f32.mrb[0].mxu0
    %v6027 = vadd.f32 0.0, %v6026
    %v6028 = vpop.f32.mrb[0].mxu0
    %6029 = vmatprep.mubr.f32.mxu0 0.0
    %6030 = vmatmul.mubr.f32.gmra.mrb[0].mxu0 %v5834
    %v6031 = vpop.f32.mrb[0].mxu0
    %v6032 = vadd.f32 0.0, %v6031
    %v6033 = vpop.f32.mrb[0].mxu0
    %6034 = vmatprep.mubr.f32.mxu0 0.0
    %6035 = vmatmul.mubr.f32.gmra.mrb[0].mxu0 %v5837
    %v6036 = vpop.f32.mrb[0].mxu0
    %v6037 = vadd.f32 0.0, %v6036
    %v6038 = vpop.f32.mrb[0].mxu0
    %6039 = vmatprep.mubr.f32.mxu0 0.0
    %6040 = vmatmul.mubr.f32.gmra.mrb[0].mxu0 %v5840
    %v6041 = vpop.f32.mrb[0].mxu0
    %v6042 = vadd.f32 0.0, %v6041
    %v6043 = vpop.f32.mrb[0].mxu0
    %6044 = vmatprep.mubr.f32.mxu0 0.0
    %6045 = vmatmul.mubr.f32.gmra.mrb[0].mxu0 %v5843
    %v6046 = vpop.f32.mrb[0].mxu0
    %v6047 = vadd.f32 0.0, %v6046
    %v6048 = vpop.f32.mrb[0].mxu0
    %6049 = vmatprep.mubr.f32.mxu0 0.0
    %6050 = vmatmul.mubr.f32.gmra.mrb[0].mxu0 %v5846
    %v6051 = vpop.f32.mrb[0].mxu0
    %v6052 = vadd.f32 0.0, %v6051
    %v6053 = vpop.f32.mrb[0].mxu0
    %6054 = vmatprep.mubr.f32.mxu0 0.0
    %6055 = vmatmul.mubr.f32.gmra.mrb[0].mxu0 %v5849
    %v6056 = vpop.f32.mrb[0].mxu0
    %v6057 = vadd.f32 0.0, %v6056
    %v6058 = vpop.f32.mrb[0].mxu0
    %6059 = vmatprep.mubr.f32.mxu0 0.0
    %6060 = vmatmul.mubr.f32.gmra.mrb[0].mxu0 %v5852
    %v6061 = vpop.f32.mrb[0].mxu0
    %v6062 = vadd.f32 0.0, %v6061
    %v6063 = vpop.f32.mrb[0].mxu0
    %6064 = vmatprep.mubr.f32.mxu0 0.0
    %6065 = vmatmul.mubr.f32.gmra.mrb[0].mxu0 %v5855
    %v6066 = vpop.f32.mrb[0].mxu0
    %v6067 = vadd.f32 0.0, %v6066
    %v6068 = vpop.f32.mrb[0].mxu0
    %6069 = vmatprep.mubr.f32.mxu0 0.0
    %6070 = vmatmul.mubr.f32.gmra.mrb[0].mxu0 %v5858
    %v6071 = vpop.f32.mrb[0].mxu0
    %v6072 = vadd.f32 0.0, %v6071
    %v6073 = vpop.f32.mrb[0].mxu0
    %6074 = vmatprep.mubr.f32.mxu0 0.0
    %6075 = vmatmul.mubr.f32.gmra.mrb[0].mxu0 %v5861
    %v6076 = vpop.f32.mrb[0].mxu0
    %v6077 = vadd.f32 0.0, %v6076
    %v6078 = vpop.f32.mrb[0].mxu0
    %6079 = vmatprep.mubr.f32.mxu0 0.0
    %6080 = vmatmul.mubr.f32.gmra.mrb[0].mxu0 %v5864
    %v6081 = vpop.f32.mrb[0].mxu0
    %v6082 = vadd.f32 0.0, %v6081
    %v6083 = vpop.f32.mrb[0].mxu0
    %6084 = vmatprep.mubr.f32.mxu0 0.0
    %6085 = vmatmul.mubr.f32.gmra.mrb[0].mxu0 %v5867
    %v6086 = vpop.f32.mrb[0].mxu0
    %v6087 = vadd.f32 0.0, %v6086
    %v6088 = vpop.f32.mrb[0].mxu0
    %6089 = vmatprep.mubr.f32.mxu0 0.0
    %6090 = vmatmul.mubr.f32.gmra.mrb[0].mxu0 %v5870
    %v6091 = vpop.f32.mrb[0].mxu0
    %v6092 = vadd.f32 0.0, %v6091
    %v6093 = vpop.f32.mrb[0].mxu0
    %6094 = vmatprep.mubr.f32.mxu0 0.0
    %6095 = vmatmul.mubr.f32.gmra.mrb[0].mxu0 %v5873
    %v6096 = vpop.f32.mrb[0].mxu0
    %v6097 = vadd.f32 0.0, %v6096
    %v6098 = vpop.f32.mrb[0].mxu0
    %6099 = vdwg.mxu0
    %v6100 = vmul.f32 %v5602, 0.95
    %v6101 = vmul.f32 %v5603, 0.95
    %v6102 = vmul.f32 %v5604, 0.95
    %v6103 = vmul.f32 %v5605, 0.95
    %v6104 = vmul.f32 %v5606, 0.95
    %v6105 = vmul.f32 %v5607, 0.95
    %v6106 = vmul.f32 %v5608, 0.95
    %v6107 = vmul.f32 %v5609, 0.95
    %v6108 = vmul.f32 %v5610, 0.95
    %v6109 = vmul.f32 %v5611, 0.95
    %v6110 = vmul.f32 %v5612, 0.95
    %v6111 = vmul.f32 %v5613, 0.95
    %v6112 = vmul.f32 %v5614, 0.95
    %v6113 = vmul.f32 %v5615, 0.95
    %v6114 = vmul.f32 %v5616, 0.95
    %v6115 = vmul.f32 %v5617, 0.95
    %v6116 = vmul.f32 %v5618, 0.95
    %v6117 = vmul.f32 %v5619, 0.95
    %v6118 = vmul.f32 %v5620, 0.95
    %v6119 = vmul.f32 %v5621, 0.95
    %v6120 = vmul.f32 %v5622, 0.95
    %v6121 = vmul.f32 %v5623, 0.95
    %v6122 = vmul.f32 %v5624, 0.95
    %v6123 = vmul.f32 %v5625, 0.95
    %v6124 = vmul.f32 %v5626, 0.95
    %v6125 = vmul.f32 %v5627, 0.95
    %v6126 = vmul.f32 %v5628, 0.95
    %v6127 = vmul.f32 %v5629, 0.95
    %v6128 = vmul.f32 %v5630, 0.95
    %v6129 = vmul.f32 %v5631, 0.95
    %v6130 = vmul.f32 %v5632, 0.95
    %v6131 = vmul.f32 %v5633, 0.95
    %v6132 = vadd.f32 %v6100, %v5942
    %v6133 = vadd.f32 %v6101, %v5947
    %v6134 = vadd.f32 %v6102, %v5952
    %v6135 = vadd.f32 %v6103, %v5957
    %v6136 = vadd.f32 %v6104, %v5962
    %v6137 = vadd.f32 %v6105, %v5967
    %v6138 = vadd.f32 %v6106, %v5972
    %v6139 = vadd.f32 %v6107, %v5977
    %v6140 = vadd.f32 %v6108, %v5982
    %v6141 = vadd.f32 %v6109, %v5987
    %v6142 = vadd.f32 %v6110, %v5992
    %v6143 = vadd.f32 %v6111, %v5997
    %v6144 = vadd.f32 %v6112, %v6002
    %v6145 = vadd.f32 %v6113, %v6007
    %v6146 = vadd.f32 %v6114, %v6012
    %v6147 = vadd.f32 %v6115, %v6017
    %v6148 = vadd.f32 %v6116, %v6022
    %v6149 = vadd.f32 %v6117, %v6027
    %v6150 = vadd.f32 %v6118, %v6032
    %v6151 = vadd.f32 %v6119, %v6037
    %v6152 = vadd.f32 %v6120, %v6042
    %v6153 = vadd.f32 %v6121, %v6047
    %v6154 = vadd.f32 %v6122, %v6052
    %v6155 = vadd.f32 %v6123, %v6057
    %v6156 = vadd.f32 %v6124, %v6062
    %v6157 = vadd.f32 %v6125, %v6067
    %v6158 = vadd.f32 %v6126, %v6072
    %v6159 = vadd.f32 %v6127, %v6077
    %v6160 = vadd.f32 %v6128, %v6082
    %v6161 = vadd.f32 %v6129, %v6087
    %v6162 = vadd.f32 %v6130, %v6092
    %v6163 = vadd.f32 %v6131, %v6097
    %v6164 = vmax.f32 %v6132, -4.0
    %v6165 = vmax.f32 %v6133, -4.0
    %v6166 = vmax.f32 %v6134, -4.0
    %v6167 = vmax.f32 %v6135, -4.0
    %v6168 = vmax.f32 %v6136, -4.0
    %v6169 = vmax.f32 %v6137, -4.0
    %v6170 = vmax.f32 %v6138, -4.0
    %v6171 = vmax.f32 %v6139, -4.0
    %v6172 = vmax.f32 %v6140, -4.0
    %v6173 = vmax.f32 %v6141, -4.0
    %v6174 = vmax.f32 %v6142, -4.0
    %v6175 = vmax.f32 %v6143, -4.0
    %v6176 = vmax.f32 %v6144, -4.0
    %v6177 = vmax.f32 %v6145, -4.0
    %v6178 = vmax.f32 %v6146, -4.0
    %v6179 = vmax.f32 %v6147, -4.0
    %v6180 = vmax.f32 %v6148, -4.0
    %v6181 = vmax.f32 %v6149, -4.0
    %v6182 = vmax.f32 %v6150, -4.0
    %v6183 = vmax.f32 %v6151, -4.0
    %v6184 = vmax.f32 %v6152, -4.0
    %v6185 = vmax.f32 %v6153, -4.0
    %v6186 = vmax.f32 %v6154, -4.0
    %v6187 = vmax.f32 %v6155, -4.0
    %v6188 = vmax.f32 %v6156, -4.0
    %v6189 = vmax.f32 %v6157, -4.0
    %v6190 = vmax.f32 %v6158, -4.0
    %v6191 = vmax.f32 %v6159, -4.0
    %v6192 = vmax.f32 %v6160, -4.0
    %v6193 = vmax.f32 %v6161, -4.0
    %v6194 = vmax.f32 %v6162, -4.0
    %v6195 = vmax.f32 %v6163, -4.0
    %v6196 = vmin.f32 %v6164, 4.0
    %v6197 = vmin.f32 %v6165, 4.0
    %v6198 = vmin.f32 %v6166, 4.0
    %v6199 = vmin.f32 %v6167, 4.0
    %v6200 = vmin.f32 %v6168, 4.0
    %v6201 = vmin.f32 %v6169, 4.0
    %v6202 = vmin.f32 %v6170, 4.0
    %v6203 = vmin.f32 %v6171, 4.0
    %v6204 = vmin.f32 %v6172, 4.0
    %v6205 = vmin.f32 %v6173, 4.0
    %v6206 = vmin.f32 %v6174, 4.0
    %v6207 = vmin.f32 %v6175, 4.0
    %v6208 = vmin.f32 %v6176, 4.0
    %v6209 = vmin.f32 %v6177, 4.0
    %v6210 = vmin.f32 %v6178, 4.0
    %v6211 = vmin.f32 %v6179, 4.0
    %v6212 = vmin.f32 %v6180, 4.0
    %v6213 = vmin.f32 %v6181, 4.0
    %v6214 = vmin.f32 %v6182, 4.0
    %v6215 = vmin.f32 %v6183, 4.0
    %v6216 = vmin.f32 %v6184, 4.0
    %v6217 = vmin.f32 %v6185, 4.0
    %v6218 = vmin.f32 %v6186, 4.0
    %v6219 = vmin.f32 %v6187, 4.0
    %v6220 = vmin.f32 %v6188, 4.0
    %v6221 = vmin.f32 %v6189, 4.0
    %v6222 = vmin.f32 %v6190, 4.0
    %v6223 = vmin.f32 %v6191, 4.0
    %v6224 = vmin.f32 %v6192, 4.0
    %v6225 = vmin.f32 %v6193, 4.0
    %v6226 = vmin.f32 %v6194, 4.0
    %v6227 = vmin.f32 %v6195, 4.0
    %6228 = vst [vmem:[%s15] sm:$0xff] %v6196
    %6229 = vst [vmem:[%s15 + $0x8] sm:$0xff] %v6197
    %6230 = vst [vmem:[%s15 + $0x10] sm:$0xff] %v6198
    %6231 = vst [vmem:[%s15 + $0x18] sm:$0xff] %v6199
    %6232 = vst [vmem:[%s15 + $0x20] sm:$0xff] %v6200
    %6233 = vst [vmem:[%s15 + $0x28] sm:$0xff] %v6201
    %6234 = vst [vmem:[%s15 + $0x30] sm:$0xff] %v6202
    %6235 = vst [vmem:[%s15 + $0x38] sm:$0xff] %v6203
    %6236 = vst [vmem:[%s15 + $0x40] sm:$0xff] %v6204
    %6237 = vst [vmem:[%s15 + $0x48] sm:$0xff] %v6205
    %6238 = vst [vmem:[%s15 + $0x50] sm:$0xff] %v6206
    %6239 = vst [vmem:[%s15 + $0x58] sm:$0xff] %v6207
    %6240 = vst [vmem:[%s15 + $0x60] sm:$0xff] %v6208
    %6241 = vst [vmem:[%s15 + $0x68] sm:$0xff] %v6209
    %6242 = vst [vmem:[%s15 + $0x70] sm:$0xff] %v6210
    %6243 = vst [vmem:[%s15 + $0x78] sm:$0xff] %v6211
    %6244 = vst [vmem:[%s15 + $0x80] sm:$0xff] %v6212
    %6245 = vst [vmem:[%s15 + $0x88] sm:$0xff] %v6213
    %6246 = vst [vmem:[%s15 + $0x90] sm:$0xff] %v6214
    %6247 = vst [vmem:[%s15 + $0x98] sm:$0xff] %v6215
    %6248 = vst [vmem:[%s15 + $0xa0] sm:$0xff] %v6216
    %6249 = vst [vmem:[%s15 + $0xa8] sm:$0xff] %v6217
    %6250 = vst [vmem:[%s15 + $0xb0] sm:$0xff] %v6218
    %6251 = vst [vmem:[%s15 + $0xb8] sm:$0xff] %v6219
    %6252 = vst [vmem:[%s15 + $0xc0] sm:$0xff] %v6220
    %6253 = vst [vmem:[%s15 + $0xc8] sm:$0xff] %v6221
    %6254 = vst [vmem:[%s15 + $0xd0] sm:$0xff] %v6222
    %6255 = vst [vmem:[%s15 + $0xd8] sm:$0xff] %v6223
    %6256 = vst [vmem:[%s15 + $0xe0] sm:$0xff] %v6224
    %6257 = vst [vmem:[%s15 + $0xe8] sm:$0xff] %v6225
    %6258 = vst [vmem:[%s15 + $0xf0] sm:$0xff] %v6226
    %6259 = vst [vmem:[%s15 + $0xf8] sm:$0xff] %v6227
    %v6260 = vsub.f32 %v5709, %v5196
    %v6261 = vmul.f32 %v6260, 0.5
    %v6262 = vadd.f32 %v5196, %v6261
    %vm6263 = vcmp.ge.f32.partialorder %v6262, 1.0
    %v6264 = vsel %vm6263, 1, 0
    %v6265 = vcvt.s32.f32 %v6264
    %v6266 = vsub.f32 1.0, %v6265
    %v6267 = vmul.f32 %v6262, %v6266
    %v6268 = vadd.f32 %v5197, %v6265
    %v6269 = vmul.f32 %v896, %v5577
    %v6270 = vmul.f32 %v896, %v5578
    %v6271 = vmul.f32 %v896, %v5579
    %v6272 = vmul.f32 %v896, %v5580
    %v6273 = vmul.f32 %v896, %v5581
    %v6274 = vmul.f32 %v896, %v5582
    %v6275 = vmul.f32 %v896, %v5583
    %v6276 = vmul.f32 %v896, %v5584
    %v6277 = vmul.f32 %v896, %v5585
    %v6278 = vmul.f32 %v896, %v5586
    %v6279 = vmul.f32 %v896, %v5587
    %v6280 = vmul.f32 %v896, %v5588
    %v6281 = vmul.f32 %v896, %v5589
    %v6282 = vmul.f32 %v896, %v5590
    %v6283 = vmul.f32 %v896, %v5591
    %v6284 = vmul.f32 %v896, %v5592
    %v6285 = vadd.f32 %v187, %v6269
    %v6286 = vadd.f32 %v188, %v6270
    %v6287 = vadd.f32 %v189, %v6271
    %v6288 = vadd.f32 %v190, %v6272
    %v6289 = vadd.f32 %v191, %v6273
    %v6290 = vadd.f32 %v192, %v6274
    %v6291 = vadd.f32 %v193, %v6275
    %v6292 = vadd.f32 %v194, %v6276
    %v6293 = vadd.f32 %v195, %v6277
    %v6294 = vadd.f32 %v196, %v6278
    %v6295 = vadd.f32 %v197, %v6279
    %v6296 = vadd.f32 %v198, %v6280
    %v6297 = vadd.f32 %v199, %v6281
    %v6298 = vadd.f32 %v200, %v6282
    %v6299 = vadd.f32 %v201, %v6283
    %v6300 = vadd.f32 %v202, %v6284
    %6301 = vmatprep.subr.mxu0 0.0
    %6302 = vmatpush1.msra.mxu0 %v6285
    %6303 = vmatprep.subr.mxu0 0.0
    %6304 = vmatpush1.msra.mxu0 %v6286
    %6305 = vmatprep.subr.mxu0 0.0
    %6306 = vmatpush1.msra.mxu0 %v6287
    %6307 = vmatprep.subr.mxu0 0.0
    %6308 = vmatpush1.msra.mxu0 %v6288
    %6309 = vmatprep.subr.mxu0 0.0
    %6310 = vmatpush1.msra.mxu0 %v6289
    %6311 = vmatprep.subr.mxu0 0.0
    %6312 = vmatpush1.msra.mxu0 %v6290
    %6313 = vmatprep.subr.mxu0 0.0
    %6314 = vmatpush1.msra.mxu0 %v6291
    %6315 = vmatprep.subr.mxu0 0.0
    %6316 = vmatpush1.msra.mxu0 %v6292
    %6317 = vmatprep.subr.mxu0 0.0
    %6318 = vmatpush1.msra.mxu0 %v6293
    %6319 = vmatprep.subr.mxu0 0.0
    %6320 = vmatpush1.msra.mxu0 %v6294
    %6321 = vmatprep.subr.mxu0 0.0
    %6322 = vmatpush1.msra.mxu0 %v6295
    %6323 = vmatprep.subr.mxu0 0.0
    %6324 = vmatpush1.msra.mxu0 %v6296
    %6325 = vmatprep.subr.mxu0 0.0
    %6326 = vmatpush1.msra.mxu0 %v6297
    %6327 = vmatprep.subr.mxu0 0.0
    %6328 = vmatpush1.msra.mxu0 %v6298
    %6329 = vmatprep.subr.mxu0 0.0
    %6330 = vmatpush1.msra.mxu0 %v6299
    %6331 = vmatprep.subr.mxu0 0.0
    %6332 = vmatpush1.msra.mxu0 %v6300
    %6333 = vmatprep.subr.mxu0 0.0
    %6334 = vmatpush1.msra.mxu0 0.0
    %6335 = vmatprep.subr.mxu0 0.0
    %6336 = vmatpush1.msra.mxu0 0.0
    %6337 = vmatprep.subr.mxu0 0.0
    %6338 = vmatpush1.msra.mxu0 0.0
    %6339 = vmatprep.subr.mxu0 0.0
    %6340 = vmatpush1.msra.mxu0 0.0
    %6341 = vmatprep.subr.mxu0 0.0
    %6342 = vmatpush1.msra.mxu0 0.0
    %6343 = vmatprep.subr.mxu0 0.0
    %6344 = vmatpush1.msra.mxu0 0.0
    %6345 = vmatprep.subr.mxu0 0.0
    %6346 = vmatpush1.msra.mxu0 0.0
    %6347 = vmatprep.subr.mxu0 0.0
    %6348 = vmatpush1.msra.mxu0 0.0
    %6349 = vmatprep.subr.mxu0 0.0
    %6350 = vmatpush1.msra.mxu0 0.0
    %6351 = vmatprep.subr.mxu0 0.0
    %6352 = vmatpush1.msra.mxu0 0.0
    %6353 = vmatprep.subr.mxu0 0.0
    %6354 = vmatpush1.msra.mxu0 0.0
    %6355 = vmatprep.subr.mxu0 0.0
    %6356 = vmatpush1.msra.mxu0 0.0
    %6357 = vmatprep.subr.mxu0 0.0
    %6358 = vmatpush1.msra.mxu0 0.0
    %6359 = vmatprep.subr.mxu0 0.0
    %6360 = vmatpush1.msra.mxu0 0.0
    %6361 = vmatprep.subr.mxu0 0.0
    %6362 = vmatpush1.msra.mxu0 0.0
    %6363 = vmatprep.subr.mxu0 0.0
    %6364 = vmatpush1.msra.mxu0 0.0
    %6365 = vmatprep.mubr.f32.mxu0 0.0
    %6366 = vmatmul.mubr.f32.gmra.mrb[0].mxu0 %v6265
    %v6367 = vpop.f32.mrb[0].mxu0
    %v6368 = vadd.f32 %v933, %v6367
    %v6369 = vpop.f32.mrb[0].mxu0
    %6370 = vdwg.mxu0
    %v6371 = vmul.f32 %v6368, 2.857143
    %v6372 = vsub.f32 %v6371, %v1010
    %v6373 = vtanh.pop %v6372
    %v6374 = vmul.f32 %v6265, %v1018
    %6375 = vxpose.xlu0.b32.start [1/16] %v6374, 128
    %6376 = vxpose.xlu0.b32.cont [2/16] 0.0, 128
    %6377 = vxpose.xlu0.b32.cont [3/16] 0.0, 128
    %6378 = vxpose.xlu0.b32.cont [4/16] 0.0, 128
    %6379 = vxpose.xlu0.b32.cont [5/16] 0.0, 128
    %6380 = vxpose.xlu0.b32.cont [6/16] 0.0, 128
    %6381 = vxpose.xlu0.b32.cont [7/16] 0.0, 128
    %6382 = vxpose.xlu0.b32.cont [8/16] 0.0, 128
    %6383 = vxpose.xlu0.b32.cont [9/16] 0.0, 128
    %6384 = vxpose.xlu0.b32.cont [10/16] 0.0, 128
    %6385 = vxpose.xlu0.b32.cont [11/16] 0.0, 128
    %6386 = vxpose.xlu0.b32.cont [12/16] 0.0, 128
    %6387 = vxpose.xlu0.b32.cont [13/16] 0.0, 128
    %6388 = vxpose.xlu0.b32.cont [14/16] 0.0, 128
    %6389 = vxpose.xlu0.b32.cont [15/16] 0.0, 128
    %6390 = vxpose.xlu0.b32.end [16/16] 0.0, 128
    %v6391 = vpop.trf.xlu0
    %v6392 = vpop.trf.xlu0
    %v6393 = vpop.trf.xlu0
    %v6394 = vpop.trf.xlu0
    %v6395 = vpop.trf.xlu0
    %v6396 = vpop.trf.xlu0
    %v6397 = vpop.trf.xlu0
    %v6398 = vpop.trf.xlu0
    %v6399 = vpop.trf.xlu0
    %v6400 = vpop.trf.xlu0
    %v6401 = vpop.trf.xlu0
    %v6402 = vpop.trf.xlu0
    %v6403 = vpop.trf.xlu0
    %v6404 = vpop.trf.xlu0
    %v6405 = vpop.trf.xlu0
    %v6406 = vpop.trf.xlu0
    %v6408 = vsel %vm406, %v6391, 0
    %v6411 = vsel %vm406, %v6392, 0
    %v6414 = vsel %vm406, %v6393, 0
    %v6417 = vsel %vm406, %v6394, 0
    %v6420 = vsel %vm406, %v6395, 0
    %v6423 = vsel %vm406, %v6396, 0
    %v6426 = vsel %vm406, %v6397, 0
    %v6429 = vsel %vm406, %v6398, 0
    %v6432 = vsel %vm406, %v6399, 0
    %v6435 = vsel %vm406, %v6400, 0
    %v6438 = vsel %vm406, %v6401, 0
    %v6441 = vsel %vm406, %v6402, 0
    %v6444 = vsel %vm406, %v6403, 0
    %v6447 = vsel %vm406, %v6404, 0
    %v6450 = vsel %vm406, %v6405, 0
    %v6453 = vsel %vm406, %v6406, 0
    %6455 = vmatprep.subr.mxu0 0.0
    %6456 = vmatpush1.msra.mxu0 %v6373
    %6457 = vmatprep.subr.mxu0 0.0
    %6458 = vmatpush1.msra.mxu0 0.0
    %6459 = vmatprep.subr.mxu0 0.0
    %6460 = vmatpush1.msra.mxu0 0.0
    %6461 = vmatprep.subr.mxu0 0.0
    %6462 = vmatpush1.msra.mxu0 0.0
    %6463 = vmatprep.subr.mxu0 0.0
    %6464 = vmatpush1.msra.mxu0 0.0
    %6465 = vmatprep.subr.mxu0 0.0
    %6466 = vmatpush1.msra.mxu0 0.0
    %6467 = vmatprep.subr.mxu0 0.0
    %6468 = vmatpush1.msra.mxu0 0.0
    %6469 = vmatprep.subr.mxu0 0.0
    %6470 = vmatpush1.msra.mxu0 0.0
    %6471 = vmatprep.subr.mxu0 0.0
    %6472 = vmatpush1.msra.mxu0 0.0
    %6473 = vmatprep.subr.mxu0 0.0
    %6474 = vmatpush1.msra.mxu0 0.0
    %6475 = vmatprep.subr.mxu0 0.0
    %6476 = vmatpush1.msra.mxu0 0.0
    %6477 = vmatprep.subr.mxu0 0.0
    %6478 = vmatpush1.msra.mxu0 0.0
    %6479 = vmatprep.subr.mxu0 0.0
    %6480 = vmatpush1.msra.mxu0 0.0
    %6481 = vmatprep.subr.mxu0 0.0
    %6482 = vmatpush1.msra.mxu0 0.0
    %6483 = vmatprep.subr.mxu0 0.0
    %6484 = vmatpush1.msra.mxu0 0.0
    %6485 = vmatprep.subr.mxu0 0.0
    %6486 = vmatpush1.msra.mxu0 0.0
    %6487 = vmatprep.subr.mxu0 0.0
    %6488 = vmatpush1.msra.mxu0 0.0
    %6489 = vmatprep.subr.mxu0 0.0
    %6490 = vmatpush1.msra.mxu0 0.0
    %6491 = vmatprep.subr.mxu0 0.0
    %6492 = vmatpush1.msra.mxu0 0.0
    %6493 = vmatprep.subr.mxu0 0.0
    %6494 = vmatpush1.msra.mxu0 0.0
    %6495 = vmatprep.subr.mxu0 0.0
    %6496 = vmatpush1.msra.mxu0 0.0
    %6497 = vmatprep.subr.mxu0 0.0
    %6498 = vmatpush1.msra.mxu0 0.0
    %6499 = vmatprep.subr.mxu0 0.0
    %6500 = vmatpush1.msra.mxu0 0.0
    %6501 = vmatprep.subr.mxu0 0.0
    %6502 = vmatpush1.msra.mxu0 0.0
    %6503 = vmatprep.subr.mxu0 0.0
    %6504 = vmatpush1.msra.mxu0 0.0
    %6505 = vmatprep.subr.mxu0 0.0
    %6506 = vmatpush1.msra.mxu0 0.0
    %6507 = vmatprep.subr.mxu0 0.0
    %6508 = vmatpush1.msra.mxu0 0.0
    %6509 = vmatprep.subr.mxu0 0.0
    %6510 = vmatpush1.msra.mxu0 0.0
    %6511 = vmatprep.subr.mxu0 0.0
    %6512 = vmatpush1.msra.mxu0 0.0
    %6513 = vmatprep.subr.mxu0 0.0
    %6514 = vmatpush1.msra.mxu0 0.0
    %6515 = vmatprep.subr.mxu0 0.0
    %6516 = vmatpush1.msra.mxu0 0.0
    %6517 = vmatprep.subr.mxu0 0.0
    %6518 = vmatpush1.msra.mxu0 0.0
    %6519 = vmatprep.mubr.f32.mxu0 0.0
    %6520 = vmatmul.mubr.f32.gmra.mrb[0].mxu0 %v6408
    %v6521 = vpop.f32.mrb[0].mxu0
    %v6522 = vadd.f32 0.0, %v6521
    %v6523 = vpop.f32.mrb[0].mxu0
    %6524 = vmatprep.mubr.f32.mxu0 0.0
    %6525 = vmatmul.mubr.f32.gmra.mrb[0].mxu0 %v6411
    %v6526 = vpop.f32.mrb[0].mxu0
    %v6527 = vadd.f32 0.0, %v6526
    %v6528 = vpop.f32.mrb[0].mxu0
    %6529 = vmatprep.mubr.f32.mxu0 0.0
    %6530 = vmatmul.mubr.f32.gmra.mrb[0].mxu0 %v6414
    %v6531 = vpop.f32.mrb[0].mxu0
    %v6532 = vadd.f32 0.0, %v6531
    %v6533 = vpop.f32.mrb[0].mxu0
    %6534 = vmatprep.mubr.f32.mxu0 0.0
    %6535 = vmatmul.mubr.f32.gmra.mrb[0].mxu0 %v6417
    %v6536 = vpop.f32.mrb[0].mxu0
    %v6537 = vadd.f32 0.0, %v6536
    %v6538 = vpop.f32.mrb[0].mxu0
    %6539 = vmatprep.mubr.f32.mxu0 0.0
    %6540 = vmatmul.mubr.f32.gmra.mrb[0].mxu0 %v6420
    %v6541 = vpop.f32.mrb[0].mxu0
    %v6542 = vadd.f32 0.0, %v6541
    %v6543 = vpop.f32.mrb[0].mxu0
    %6544 = vmatprep.mubr.f32.mxu0 0.0
    %6545 = vmatmul.mubr.f32.gmra.mrb[0].mxu0 %v6423
    %v6546 = vpop.f32.mrb[0].mxu0
    %v6547 = vadd.f32 0.0, %v6546
    %v6548 = vpop.f32.mrb[0].mxu0
    %6549 = vmatprep.mubr.f32.mxu0 0.0
    %6550 = vmatmul.mubr.f32.gmra.mrb[0].mxu0 %v6426
    %v6551 = vpop.f32.mrb[0].mxu0
    %v6552 = vadd.f32 0.0, %v6551
    %v6553 = vpop.f32.mrb[0].mxu0
    %6554 = vmatprep.mubr.f32.mxu0 0.0
    %6555 = vmatmul.mubr.f32.gmra.mrb[0].mxu0 %v6429
    %v6556 = vpop.f32.mrb[0].mxu0
    %v6557 = vadd.f32 0.0, %v6556
    %v6558 = vpop.f32.mrb[0].mxu0
    %6559 = vmatprep.mubr.f32.mxu0 0.0
    %6560 = vmatmul.mubr.f32.gmra.mrb[0].mxu0 %v6432
    %v6561 = vpop.f32.mrb[0].mxu0
    %v6562 = vadd.f32 0.0, %v6561
    %v6563 = vpop.f32.mrb[0].mxu0
    %6564 = vmatprep.mubr.f32.mxu0 0.0
    %6565 = vmatmul.mubr.f32.gmra.mrb[0].mxu0 %v6435
    %v6566 = vpop.f32.mrb[0].mxu0
    %v6567 = vadd.f32 0.0, %v6566
    %v6568 = vpop.f32.mrb[0].mxu0
    %6569 = vmatprep.mubr.f32.mxu0 0.0
    %6570 = vmatmul.mubr.f32.gmra.mrb[0].mxu0 %v6438
    %v6571 = vpop.f32.mrb[0].mxu0
    %v6572 = vadd.f32 0.0, %v6571
    %v6573 = vpop.f32.mrb[0].mxu0
    %6574 = vmatprep.mubr.f32.mxu0 0.0
    %6575 = vmatmul.mubr.f32.gmra.mrb[0].mxu0 %v6441
    %v6576 = vpop.f32.mrb[0].mxu0
    %v6577 = vadd.f32 0.0, %v6576
    %v6578 = vpop.f32.mrb[0].mxu0
    %6579 = vmatprep.mubr.f32.mxu0 0.0
    %6580 = vmatmul.mubr.f32.gmra.mrb[0].mxu0 %v6444
    %v6581 = vpop.f32.mrb[0].mxu0
    %v6582 = vadd.f32 0.0, %v6581
    %v6583 = vpop.f32.mrb[0].mxu0
    %6584 = vmatprep.mubr.f32.mxu0 0.0
    %6585 = vmatmul.mubr.f32.gmra.mrb[0].mxu0 %v6447
    %v6586 = vpop.f32.mrb[0].mxu0
    %v6587 = vadd.f32 0.0, %v6586
    %v6588 = vpop.f32.mrb[0].mxu0
    %6589 = vmatprep.mubr.f32.mxu0 0.0
    %6590 = vmatmul.mubr.f32.gmra.mrb[0].mxu0 %v6450
    %v6591 = vpop.f32.mrb[0].mxu0
    %v6592 = vadd.f32 0.0, %v6591
    %v6593 = vpop.f32.mrb[0].mxu0
    %6594 = vmatprep.mubr.f32.mxu0 0.0
    %6595 = vmatmul.mubr.f32.gmra.mrb[0].mxu0 %v6453
    %v6596 = vpop.f32.mrb[0].mxu0
    %v6597 = vadd.f32 0.0, %v6596
    %v6598 = vpop.f32.mrb[0].mxu0
    %6599 = vdwg.mxu0
    %v6600 = vmul.f32 %v5577, 0.95
    %v6601 = vmul.f32 %v5578, 0.95
    %v6602 = vmul.f32 %v5579, 0.95
    %v6603 = vmul.f32 %v5580, 0.95
    %v6604 = vmul.f32 %v5581, 0.95
    %v6605 = vmul.f32 %v5582, 0.95
    %v6606 = vmul.f32 %v5583, 0.95
    %v6607 = vmul.f32 %v5584, 0.95
    %v6608 = vmul.f32 %v5585, 0.95
    %v6609 = vmul.f32 %v5586, 0.95
    %v6610 = vmul.f32 %v5587, 0.95
    %v6611 = vmul.f32 %v5588, 0.95
    %v6612 = vmul.f32 %v5589, 0.95
    %v6613 = vmul.f32 %v5590, 0.95
    %v6614 = vmul.f32 %v5591, 0.95
    %v6615 = vmul.f32 %v5592, 0.95
    %v6616 = vadd.f32 %v6600, %v6522
    %v6617 = vadd.f32 %v6601, %v6527
    %v6618 = vadd.f32 %v6602, %v6532
    %v6619 = vadd.f32 %v6603, %v6537
    %v6620 = vadd.f32 %v6604, %v6542
    %v6621 = vadd.f32 %v6605, %v6547
    %v6622 = vadd.f32 %v6606, %v6552
    %v6623 = vadd.f32 %v6607, %v6557
    %v6624 = vadd.f32 %v6608, %v6562
    %v6625 = vadd.f32 %v6609, %v6567
    %v6626 = vadd.f32 %v6610, %v6572
    %v6627 = vadd.f32 %v6611, %v6577
    %v6628 = vadd.f32 %v6612, %v6582
    %v6629 = vadd.f32 %v6613, %v6587
    %v6630 = vadd.f32 %v6614, %v6592
    %v6631 = vadd.f32 %v6615, %v6597
    %v6632 = vmax.f32 %v6616, -4.0
    %v6633 = vmax.f32 %v6617, -4.0
    %v6634 = vmax.f32 %v6618, -4.0
    %v6635 = vmax.f32 %v6619, -4.0
    %v6636 = vmax.f32 %v6620, -4.0
    %v6637 = vmax.f32 %v6621, -4.0
    %v6638 = vmax.f32 %v6622, -4.0
    %v6639 = vmax.f32 %v6623, -4.0
    %v6640 = vmax.f32 %v6624, -4.0
    %v6641 = vmax.f32 %v6625, -4.0
    %v6642 = vmax.f32 %v6626, -4.0
    %v6643 = vmax.f32 %v6627, -4.0
    %v6644 = vmax.f32 %v6628, -4.0
    %v6645 = vmax.f32 %v6629, -4.0
    %v6646 = vmax.f32 %v6630, -4.0
    %v6647 = vmax.f32 %v6631, -4.0
    %v6648 = vmin.f32 %v6632, 4.0
    %v6649 = vmin.f32 %v6633, 4.0
    %v6650 = vmin.f32 %v6634, 4.0
    %v6651 = vmin.f32 %v6635, 4.0
    %v6652 = vmin.f32 %v6636, 4.0
    %v6653 = vmin.f32 %v6637, 4.0
    %v6654 = vmin.f32 %v6638, 4.0
    %v6655 = vmin.f32 %v6639, 4.0
    %v6656 = vmin.f32 %v6640, 4.0
    %v6657 = vmin.f32 %v6641, 4.0
    %v6658 = vmin.f32 %v6642, 4.0
    %v6659 = vmin.f32 %v6643, 4.0
    %v6660 = vmin.f32 %v6644, 4.0
    %v6661 = vmin.f32 %v6645, 4.0
    %v6662 = vmin.f32 %v6646, 4.0
    %v6663 = vmin.f32 %v6647, 4.0
    %v6664 = vsub.f32 %v6368, %v5600
    %v6665 = vmul.f32 %v6664, 0.5
    %v6666 = vadd.f32 %v5600, %v6665
    %vm6667 = vcmp.ge.f32.partialorder %v6666, 1.0
    %v6668 = vsel %vm6667, 1, 0
    %v6669 = vcvt.s32.f32 %v6668
    %v6670 = vsub.f32 1.0, %v6669
    %v6671 = vmul.f32 %v6666, %v6670
    %v6672 = vadd.f32 %v5601, %v6669
    %v6673 = vld [vmem:[%s15] sm:$0xff]
    %v6674 = vld [vmem:[%s15 + $0x8] sm:$0xff]
    %v6675 = vld [vmem:[%s15 + $0x10] sm:$0xff]
    %v6676 = vld [vmem:[%s15 + $0x18] sm:$0xff]
    %v6677 = vld [vmem:[%s15 + $0x20] sm:$0xff]
    %v6678 = vld [vmem:[%s15 + $0x28] sm:$0xff]
    %v6679 = vld [vmem:[%s15 + $0x30] sm:$0xff]
    %v6680 = vld [vmem:[%s15 + $0x38] sm:$0xff]
    %v6681 = vld [vmem:[%s15 + $0x40] sm:$0xff]
    %v6682 = vld [vmem:[%s15 + $0x48] sm:$0xff]
    %v6683 = vld [vmem:[%s15 + $0x50] sm:$0xff]
    %v6684 = vld [vmem:[%s15 + $0x58] sm:$0xff]
    %v6685 = vld [vmem:[%s15 + $0x60] sm:$0xff]
    %v6686 = vld [vmem:[%s15 + $0x68] sm:$0xff]
    %v6687 = vld [vmem:[%s15 + $0x70] sm:$0xff]
    %v6688 = vld [vmem:[%s15 + $0x78] sm:$0xff]
    %v6689 = vld [vmem:[%s15 + $0x80] sm:$0xff]
    %v6690 = vld [vmem:[%s15 + $0x88] sm:$0xff]
    %v6691 = vld [vmem:[%s15 + $0x90] sm:$0xff]
    %v6692 = vld [vmem:[%s15 + $0x98] sm:$0xff]
    %v6693 = vld [vmem:[%s15 + $0xa0] sm:$0xff]
    %v6694 = vld [vmem:[%s15 + $0xa8] sm:$0xff]
    %v6695 = vld [vmem:[%s15 + $0xb0] sm:$0xff]
    %v6696 = vld [vmem:[%s15 + $0xb8] sm:$0xff]
    %v6697 = vld [vmem:[%s15 + $0xc0] sm:$0xff]
    %v6698 = vld [vmem:[%s15 + $0xc8] sm:$0xff]
    %v6699 = vld [vmem:[%s15 + $0xd0] sm:$0xff]
    %v6700 = vld [vmem:[%s15 + $0xd8] sm:$0xff]
    %v6701 = vld [vmem:[%s15 + $0xe0] sm:$0xff]
    %v6702 = vld [vmem:[%s15 + $0xe8] sm:$0xff]
    %v6703 = vld [vmem:[%s15 + $0xf0] sm:$0xff]
    %v6704 = vld [vmem:[%s15 + $0xf8] sm:$0xff]
    %6705 = vmatprep.subr.mxu0 0.0
    %6706 = vmatpush1.msra.mxu0 %v6673
    %6707 = vmatprep.subr.mxu0 0.0
    %6708 = vmatpush1.msra.mxu0 %v6674
    %6709 = vmatprep.subr.mxu0 0.0
    %6710 = vmatpush1.msra.mxu0 %v6675
    %6711 = vmatprep.subr.mxu0 0.0
    %6712 = vmatpush1.msra.mxu0 %v6676
    %6713 = vmatprep.subr.mxu0 0.0
    %6714 = vmatpush1.msra.mxu0 %v6677
    %6715 = vmatprep.subr.mxu0 0.0
    %6716 = vmatpush1.msra.mxu0 %v6678
    %6717 = vmatprep.subr.mxu0 0.0
    %6718 = vmatpush1.msra.mxu0 %v6679
    %6719 = vmatprep.subr.mxu0 0.0
    %6720 = vmatpush1.msra.mxu0 %v6680
    %6721 = vmatprep.subr.mxu0 0.0
    %6722 = vmatpush1.msra.mxu0 %v6681
    %6723 = vmatprep.subr.mxu0 0.0
    %6724 = vmatpush1.msra.mxu0 %v6682
    %6725 = vmatprep.subr.mxu0 0.0
    %6726 = vmatpush1.msra.mxu0 %v6683
    %6727 = vmatprep.subr.mxu0 0.0
    %6728 = vmatpush1.msra.mxu0 %v6684
    %6729 = vmatprep.subr.mxu0 0.0
    %6730 = vmatpush1.msra.mxu0 %v6685
    %6731 = vmatprep.subr.mxu0 0.0
    %6732 = vmatpush1.msra.mxu0 %v6686
    %6733 = vmatprep.subr.mxu0 0.0
    %6734 = vmatpush1.msra.mxu0 %v6687
    %6735 = vmatprep.subr.mxu0 0.0
    %6736 = vmatpush1.msra.mxu0 %v6688
    %6737 = vmatprep.subr.mxu0 0.0
    %6738 = vmatpush1.msra.mxu0 %v6689
    %6739 = vmatprep.subr.mxu0 0.0
    %6740 = vmatpush1.msra.mxu0 %v6690
    %6741 = vmatprep.subr.mxu0 0.0
    %6742 = vmatpush1.msra.mxu0 %v6691
    %6743 = vmatprep.subr.mxu0 0.0
    %6744 = vmatpush1.msra.mxu0 %v6692
    %6745 = vmatprep.subr.mxu0 0.0
    %6746 = vmatpush1.msra.mxu0 %v6693
    %6747 = vmatprep.subr.mxu0 0.0
    %6748 = vmatpush1.msra.mxu0 %v6694
    %6749 = vmatprep.subr.mxu0 0.0
    %6750 = vmatpush1.msra.mxu0 %v6695
    %6751 = vmatprep.subr.mxu0 0.0
    %6752 = vmatpush1.msra.mxu0 %v6696
    %6753 = vmatprep.subr.mxu0 0.0
    %6754 = vmatpush1.msra.mxu0 %v6697
    %6755 = vmatprep.subr.mxu0 0.0
    %6756 = vmatpush1.msra.mxu0 %v6698
    %6757 = vmatprep.subr.mxu0 0.0
    %6758 = vmatpush1.msra.mxu0 %v6699
    %6759 = vmatprep.subr.mxu0 0.0
    %6760 = vmatpush1.msra.mxu0 %v6700
    %6761 = vmatprep.subr.mxu0 0.0
    %6762 = vmatpush1.msra.mxu0 %v6701
    %6763 = vmatprep.subr.mxu0 0.0
    %6764 = vmatpush1.msra.mxu0 %v6702
    %6765 = vmatprep.subr.mxu0 0.0
    %6766 = vmatpush1.msra.mxu0 %v6703
    %6767 = vmatprep.subr.mxu0 0.0
    %6768 = vmatpush1.msra.mxu0 %v6704
    %6769 = vmatprep.mubr.f32.mxu0 %v64
    %6770 = vmatmul.mubr.f32.gmra.mrb[0].mxu0 %v63
    %v6771 = vpop.f32.mrb[0].mxu0
    %v6772 = vadd.f32 0.0, %v6771
    %v6773 = vpop.f32.mrb[0].mxu0
    %6774 = vdwg.mxu0
    %v6775 = vmul.f32 %v164, 0.8607079
    %v6776 = vadd.f32 %v6775, %v325
    %s6777 = smul.f32 %s61, 0.8607079
    %v6778 = vstv %s6777
    %v6779 = vmul.f32 %v6778, %v6772
    %v6780 = vadd.f32 %v6776, %v6779
    %v6781 = vmul.f32 %v6780, 2.857143
    %v6782 = vsub.f32 %v6781, %v336
    %v6783 = vtanh.pop %v6782
    %v6784 = vmul.f32 %v179, 0.107588485
    %v6785 = vmul.f32 %v180, 0.107588485
    %6786 = vxpose.xlu0.b32.start [1/16] %v6784, 128
    %6787 = vxpose.xlu0.b32.cont [2/16] 0.0, 128
    %6788 = vxpose.xlu0.b32.cont [3/16] 0.0, 128
    %6789 = vxpose.xlu0.b32.cont [4/16] 0.0, 128
    %6790 = vxpose.xlu0.b32.cont [5/16] 0.0, 128
    %6791 = vxpose.xlu0.b32.cont [6/16] 0.0, 128
    %6792 = vxpose.xlu0.b32.cont [7/16] 0.0, 128
    %6793 = vxpose.xlu0.b32.cont [8/16] 0.0, 128
    %6794 = vxpose.xlu0.b32.cont [9/16] 0.0, 128
    %6795 = vxpose.xlu0.b32.cont [10/16] 0.0, 128
    %6796 = vxpose.xlu0.b32.cont [11/16] 0.0, 128
    %6797 = vxpose.xlu0.b32.cont [12/16] 0.0, 128
    %6798 = vxpose.xlu0.b32.cont [13/16] 0.0, 128
    %6799 = vxpose.xlu0.b32.cont [14/16] 0.0, 128
    %6800 = vxpose.xlu0.b32.cont [15/16] 0.0, 128
    %6801 = vxpose.xlu0.b32.end [16/16] 0.0, 128
    %v6802 = vpop.trf.xlu0
    %v6803 = vpop.trf.xlu0
    %v6804 = vpop.trf.xlu0
    %v6805 = vpop.trf.xlu0
    %v6806 = vpop.trf.xlu0
    %v6807 = vpop.trf.xlu0
    %v6808 = vpop.trf.xlu0
    %v6809 = vpop.trf.xlu0
    %v6810 = vpop.trf.xlu0
    %v6811 = vpop.trf.xlu0
    %v6812 = vpop.trf.xlu0
    %v6813 = vpop.trf.xlu0
    %v6814 = vpop.trf.xlu0
    %v6815 = vpop.trf.xlu0
    %v6816 = vpop.trf.xlu0
    %v6817 = vpop.trf.xlu0
    %6818 = vxpose.xlu0.b32.start [1/16] %v6785, 128
    %6819 = vxpose.xlu0.b32.cont [2/16] 0.0, 128
    %6820 = vxpose.xlu0.b32.cont [3/16] 0.0, 128
    %6821 = vxpose.xlu0.b32.cont [4/16] 0.0, 128
    %6822 = vxpose.xlu0.b32.cont [5/16] 0.0, 128
    %6823 = vxpose.xlu0.b32.cont [6/16] 0.0, 128
    %6824 = vxpose.xlu0.b32.cont [7/16] 0.0, 128
    %6825 = vxpose.xlu0.b32.cont [8/16] 0.0, 128
    %6826 = vxpose.xlu0.b32.cont [9/16] 0.0, 128
    %6827 = vxpose.xlu0.b32.cont [10/16] 0.0, 128
    %6828 = vxpose.xlu0.b32.cont [11/16] 0.0, 128
    %6829 = vxpose.xlu0.b32.cont [12/16] 0.0, 128
    %6830 = vxpose.xlu0.b32.cont [13/16] 0.0, 128
    %6831 = vxpose.xlu0.b32.cont [14/16] 0.0, 128
    %6832 = vxpose.xlu0.b32.cont [15/16] 0.0, 128
    %6833 = vxpose.xlu0.b32.end [16/16] 0.0, 128
    %v6834 = vpop.trf.xlu0
    %v6835 = vpop.trf.xlu0
    %v6836 = vpop.trf.xlu0
    %v6837 = vpop.trf.xlu0
    %v6838 = vpop.trf.xlu0
    %v6839 = vpop.trf.xlu0
    %v6840 = vpop.trf.xlu0
    %v6841 = vpop.trf.xlu0
    %v6842 = vpop.trf.xlu0
    %v6843 = vpop.trf.xlu0
    %v6844 = vpop.trf.xlu0
    %v6845 = vpop.trf.xlu0
    %v6846 = vpop.trf.xlu0
    %v6847 = vpop.trf.xlu0
    %v6848 = vpop.trf.xlu0
    %v6849 = vpop.trf.xlu0
    %v6851 = vsel %vm406, %v6802, 0
    %v6854 = vsel %vm406, %v6803, 0
    %v6857 = vsel %vm406, %v6804, 0
    %v6860 = vsel %vm406, %v6805, 0
    %v6863 = vsel %vm406, %v6806, 0
    %v6866 = vsel %vm406, %v6807, 0
    %v6869 = vsel %vm406, %v6808, 0
    %v6872 = vsel %vm406, %v6809, 0
    %v6875 = vsel %vm406, %v6810, 0
    %v6878 = vsel %vm406, %v6811, 0
    %v6881 = vsel %vm406, %v6812, 0
    %v6884 = vsel %vm406, %v6813, 0
    %v6887 = vsel %vm406, %v6814, 0
    %v6890 = vsel %vm406, %v6815, 0
    %v6893 = vsel %vm406, %v6816, 0
    %v6896 = vsel %vm406, %v6817, 0
    %v6899 = vsel %vm406, %v6834, 0
    %v6902 = vsel %vm406, %v6835, 0
    %v6905 = vsel %vm406, %v6836, 0
    %v6908 = vsel %vm406, %v6837, 0
    %v6911 = vsel %vm406, %v6838, 0
    %v6914 = vsel %vm406, %v6839, 0
    %v6917 = vsel %vm406, %v6840, 0
    %v6920 = vsel %vm406, %v6841, 0
    %v6923 = vsel %vm406, %v6842, 0
    %v6926 = vsel %vm406, %v6843, 0
    %v6929 = vsel %vm406, %v6844, 0
    %v6932 = vsel %vm406, %v6845, 0
    %v6935 = vsel %vm406, %v6846, 0
    %v6938 = vsel %vm406, %v6847, 0
    %v6941 = vsel %vm406, %v6848, 0
    %v6944 = vsel %vm406, %v6849, 0
    %6946 = vmatprep.subr.mxu0 0.0
    %6947 = vmatpush1.msra.mxu0 %v6783
    %6948 = vmatprep.subr.mxu0 0.0
    %6949 = vmatpush1.msra.mxu0 0.0
    %6950 = vmatprep.subr.mxu0 0.0
    %6951 = vmatpush1.msra.mxu0 0.0
    %6952 = vmatprep.subr.mxu0 0.0
    %6953 = vmatpush1.msra.mxu0 0.0
    %6954 = vmatprep.subr.mxu0 0.0
    %6955 = vmatpush1.msra.mxu0 0.0
    %6956 = vmatprep.subr.mxu0 0.0
    %6957 = vmatpush1.msra.mxu0 0.0
    %6958 = vmatprep.subr.mxu0 0.0
    %6959 = vmatpush1.msra.mxu0 0.0
    %6960 = vmatprep.subr.mxu0 0.0
    %6961 = vmatpush1.msra.mxu0 0.0
    %6962 = vmatprep.subr.mxu0 0.0
    %6963 = vmatpush1.msra.mxu0 0.0
    %6964 = vmatprep.subr.mxu0 0.0
    %6965 = vmatpush1.msra.mxu0 0.0
    %6966 = vmatprep.subr.mxu0 0.0
    %6967 = vmatpush1.msra.mxu0 0.0
    %6968 = vmatprep.subr.mxu0 0.0
    %6969 = vmatpush1.msra.mxu0 0.0
    %6970 = vmatprep.subr.mxu0 0.0
    %6971 = vmatpush1.msra.mxu0 0.0
    %6972 = vmatprep.subr.mxu0 0.0
    %6973 = vmatpush1.msra.mxu0 0.0
    %6974 = vmatprep.subr.mxu0 0.0
    %6975 = vmatpush1.msra.mxu0 0.0
    %6976 = vmatprep.subr.mxu0 0.0
    %6977 = vmatpush1.msra.mxu0 0.0
    %6978 = vmatprep.subr.mxu0 0.0
    %6979 = vmatpush1.msra.mxu0 0.0
    %6980 = vmatprep.subr.mxu0 0.0
    %6981 = vmatpush1.msra.mxu0 0.0
    %6982 = vmatprep.subr.mxu0 0.0
    %6983 = vmatpush1.msra.mxu0 0.0
    %6984 = vmatprep.subr.mxu0 0.0
    %6985 = vmatpush1.msra.mxu0 0.0
    %6986 = vmatprep.subr.mxu0 0.0
    %6987 = vmatpush1.msra.mxu0 0.0
    %6988 = vmatprep.subr.mxu0 0.0
    %6989 = vmatpush1.msra.mxu0 0.0
    %6990 = vmatprep.subr.mxu0 0.0
    %6991 = vmatpush1.msra.mxu0 0.0
    %6992 = vmatprep.subr.mxu0 0.0
    %6993 = vmatpush1.msra.mxu0 0.0
    %6994 = vmatprep.subr.mxu0 0.0
    %6995 = vmatpush1.msra.mxu0 0.0
    %6996 = vmatprep.subr.mxu0 0.0
    %6997 = vmatpush1.msra.mxu0 0.0
    %6998 = vmatprep.subr.mxu0 0.0
    %6999 = vmatpush1.msra.mxu0 0.0
    %7000 = vmatprep.subr.mxu0 0.0
    %7001 = vmatpush1.msra.mxu0 0.0
    %7002 = vmatprep.subr.mxu0 0.0
    %7003 = vmatpush1.msra.mxu0 0.0
    %7004 = vmatprep.subr.mxu0 0.0
    %7005 = vmatpush1.msra.mxu0 0.0
    %7006 = vmatprep.subr.mxu0 0.0
    %7007 = vmatpush1.msra.mxu0 0.0
    %7008 = vmatprep.subr.mxu0 0.0
    %7009 = vmatpush1.msra.mxu0 0.0
    %7010 = vmatprep.mubr.f32.mxu0 0.0
    %7011 = vmatmul.mubr.f32.gmra.mrb[0].mxu0 %v6851
    %v7012 = vpop.f32.mrb[0].mxu0
    %v7013 = vadd.f32 0.0, %v7012
    %v7014 = vpop.f32.mrb[0].mxu0
    %7015 = vmatprep.mubr.f32.mxu0 0.0
    %7016 = vmatmul.mubr.f32.gmra.mrb[0].mxu0 %v6854
    %v7017 = vpop.f32.mrb[0].mxu0
    %v7018 = vadd.f32 0.0, %v7017
    %v7019 = vpop.f32.mrb[0].mxu0
    %7020 = vmatprep.mubr.f32.mxu0 0.0
    %7021 = vmatmul.mubr.f32.gmra.mrb[0].mxu0 %v6857
    %v7022 = vpop.f32.mrb[0].mxu0
    %v7023 = vadd.f32 0.0, %v7022
    %v7024 = vpop.f32.mrb[0].mxu0
    %7025 = vmatprep.mubr.f32.mxu0 0.0
    %7026 = vmatmul.mubr.f32.gmra.mrb[0].mxu0 %v6860
    %v7027 = vpop.f32.mrb[0].mxu0
    %v7028 = vadd.f32 0.0, %v7027
    %v7029 = vpop.f32.mrb[0].mxu0
    %7030 = vmatprep.mubr.f32.mxu0 0.0
    %7031 = vmatmul.mubr.f32.gmra.mrb[0].mxu0 %v6863
    %v7032 = vpop.f32.mrb[0].mxu0
    %v7033 = vadd.f32 0.0, %v7032
    %v7034 = vpop.f32.mrb[0].mxu0
    %7035 = vmatprep.mubr.f32.mxu0 0.0
    %7036 = vmatmul.mubr.f32.gmra.mrb[0].mxu0 %v6866
    %v7037 = vpop.f32.mrb[0].mxu0
    %v7038 = vadd.f32 0.0, %v7037
    %v7039 = vpop.f32.mrb[0].mxu0
    %7040 = vmatprep.mubr.f32.mxu0 0.0
    %7041 = vmatmul.mubr.f32.gmra.mrb[0].mxu0 %v6869
    %v7042 = vpop.f32.mrb[0].mxu0
    %v7043 = vadd.f32 0.0, %v7042
    %v7044 = vpop.f32.mrb[0].mxu0
    %7045 = vmatprep.mubr.f32.mxu0 0.0
    %7046 = vmatmul.mubr.f32.gmra.mrb[0].mxu0 %v6872
    %v7047 = vpop.f32.mrb[0].mxu0
    %v7048 = vadd.f32 0.0, %v7047
    %v7049 = vpop.f32.mrb[0].mxu0
    %7050 = vmatprep.mubr.f32.mxu0 0.0
    %7051 = vmatmul.mubr.f32.gmra.mrb[0].mxu0 %v6875
    %v7052 = vpop.f32.mrb[0].mxu0
    %v7053 = vadd.f32 0.0, %v7052
    %v7054 = vpop.f32.mrb[0].mxu0
    %7055 = vmatprep.mubr.f32.mxu0 0.0
    %7056 = vmatmul.mubr.f32.gmra.mrb[0].mxu0 %v6878
    %v7057 = vpop.f32.mrb[0].mxu0
    %v7058 = vadd.f32 0.0, %v7057
    %v7059 = vpop.f32.mrb[0].mxu0
    %7060 = vmatprep.mubr.f32.mxu0 0.0
    %7061 = vmatmul.mubr.f32.gmra.mrb[0].mxu0 %v6881
    %v7062 = vpop.f32.mrb[0].mxu0
    %v7063 = vadd.f32 0.0, %v7062
    %v7064 = vpop.f32.mrb[0].mxu0
    %7065 = vmatprep.mubr.f32.mxu0 0.0
    %7066 = vmatmul.mubr.f32.gmra.mrb[0].mxu0 %v6884
    %v7067 = vpop.f32.mrb[0].mxu0
    %v7068 = vadd.f32 0.0, %v7067
    %v7069 = vpop.f32.mrb[0].mxu0
    %7070 = vmatprep.mubr.f32.mxu0 0.0
    %7071 = vmatmul.mubr.f32.gmra.mrb[0].mxu0 %v6887
    %v7072 = vpop.f32.mrb[0].mxu0
    %v7073 = vadd.f32 0.0, %v7072
    %v7074 = vpop.f32.mrb[0].mxu0
    %7075 = vmatprep.mubr.f32.mxu0 0.0
    %7076 = vmatmul.mubr.f32.gmra.mrb[0].mxu0 %v6890
    %v7077 = vpop.f32.mrb[0].mxu0
    %v7078 = vadd.f32 0.0, %v7077
    %v7079 = vpop.f32.mrb[0].mxu0
    %7080 = vmatprep.mubr.f32.mxu0 0.0
    %7081 = vmatmul.mubr.f32.gmra.mrb[0].mxu0 %v6893
    %v7082 = vpop.f32.mrb[0].mxu0
    %v7083 = vadd.f32 0.0, %v7082
    %v7084 = vpop.f32.mrb[0].mxu0
    %7085 = vmatprep.mubr.f32.mxu0 0.0
    %7086 = vmatmul.mubr.f32.gmra.mrb[0].mxu0 %v6896
    %v7087 = vpop.f32.mrb[0].mxu0
    %v7088 = vadd.f32 0.0, %v7087
    %v7089 = vpop.f32.mrb[0].mxu0
    %7090 = vmatprep.mubr.f32.mxu0 0.0
    %7091 = vmatmul.mubr.f32.gmra.mrb[0].mxu0 %v6899
    %v7092 = vpop.f32.mrb[0].mxu0
    %v7093 = vadd.f32 0.0, %v7092
    %v7094 = vpop.f32.mrb[0].mxu0
    %7095 = vmatprep.mubr.f32.mxu0 0.0
    %7096 = vmatmul.mubr.f32.gmra.mrb[0].mxu0 %v6902
    %v7097 = vpop.f32.mrb[0].mxu0
    %v7098 = vadd.f32 0.0, %v7097
    %v7099 = vpop.f32.mrb[0].mxu0
    %7100 = vmatprep.mubr.f32.mxu0 0.0
    %7101 = vmatmul.mubr.f32.gmra.mrb[0].mxu0 %v6905
    %v7102 = vpop.f32.mrb[0].mxu0
    %v7103 = vadd.f32 0.0, %v7102
    %v7104 = vpop.f32.mrb[0].mxu0
    %7105 = vmatprep.mubr.f32.mxu0 0.0
    %7106 = vmatmul.mubr.f32.gmra.mrb[0].mxu0 %v6908
    %v7107 = vpop.f32.mrb[0].mxu0
    %v7108 = vadd.f32 0.0, %v7107
    %v7109 = vpop.f32.mrb[0].mxu0
    %7110 = vmatprep.mubr.f32.mxu0 0.0
    %7111 = vmatmul.mubr.f32.gmra.mrb[0].mxu0 %v6911
    %v7112 = vpop.f32.mrb[0].mxu0
    %v7113 = vadd.f32 0.0, %v7112
    %v7114 = vpop.f32.mrb[0].mxu0
    %7115 = vmatprep.mubr.f32.mxu0 0.0
    %7116 = vmatmul.mubr.f32.gmra.mrb[0].mxu0 %v6914
    %v7117 = vpop.f32.mrb[0].mxu0
    %v7118 = vadd.f32 0.0, %v7117
    %v7119 = vpop.f32.mrb[0].mxu0
    %7120 = vmatprep.mubr.f32.mxu0 0.0
    %7121 = vmatmul.mubr.f32.gmra.mrb[0].mxu0 %v6917
    %v7122 = vpop.f32.mrb[0].mxu0
    %v7123 = vadd.f32 0.0, %v7122
    %v7124 = vpop.f32.mrb[0].mxu0
    %7125 = vmatprep.mubr.f32.mxu0 0.0
    %7126 = vmatmul.mubr.f32.gmra.mrb[0].mxu0 %v6920
    %v7127 = vpop.f32.mrb[0].mxu0
    %v7128 = vadd.f32 0.0, %v7127
    %v7129 = vpop.f32.mrb[0].mxu0
    %7130 = vmatprep.mubr.f32.mxu0 0.0
    %7131 = vmatmul.mubr.f32.gmra.mrb[0].mxu0 %v6923
    %v7132 = vpop.f32.mrb[0].mxu0
    %v7133 = vadd.f32 0.0, %v7132
    %v7134 = vpop.f32.mrb[0].mxu0
    %7135 = vmatprep.mubr.f32.mxu0 0.0
    %7136 = vmatmul.mubr.f32.gmra.mrb[0].mxu0 %v6926
    %v7137 = vpop.f32.mrb[0].mxu0
    %v7138 = vadd.f32 0.0, %v7137
    %v7139 = vpop.f32.mrb[0].mxu0
    %7140 = vmatprep.mubr.f32.mxu0 0.0
    %7141 = vmatmul.mubr.f32.gmra.mrb[0].mxu0 %v6929
    %v7142 = vpop.f32.mrb[0].mxu0
    %v7143 = vadd.f32 0.0, %v7142
    %v7144 = vpop.f32.mrb[0].mxu0
    %7145 = vmatprep.mubr.f32.mxu0 0.0
    %7146 = vmatmul.mubr.f32.gmra.mrb[0].mxu0 %v6932
    %v7147 = vpop.f32.mrb[0].mxu0
    %v7148 = vadd.f32 0.0, %v7147
    %v7149 = vpop.f32.mrb[0].mxu0
    %7150 = vmatprep.mubr.f32.mxu0 0.0
    %7151 = vmatmul.mubr.f32.gmra.mrb[0].mxu0 %v6935
    %v7152 = vpop.f32.mrb[0].mxu0
    %v7153 = vadd.f32 0.0, %v7152
    %v7154 = vpop.f32.mrb[0].mxu0
    %7155 = vmatprep.mubr.f32.mxu0 0.0
    %7156 = vmatmul.mubr.f32.gmra.mrb[0].mxu0 %v6938
    %v7157 = vpop.f32.mrb[0].mxu0
    %v7158 = vadd.f32 0.0, %v7157
    %v7159 = vpop.f32.mrb[0].mxu0
    %7160 = vmatprep.mubr.f32.mxu0 0.0
    %7161 = vmatmul.mubr.f32.gmra.mrb[0].mxu0 %v6941
    %v7162 = vpop.f32.mrb[0].mxu0
    %v7163 = vadd.f32 0.0, %v7162
    %v7164 = vpop.f32.mrb[0].mxu0
    %7165 = vmatprep.mubr.f32.mxu0 0.0
    %7166 = vmatmul.mubr.f32.gmra.mrb[0].mxu0 %v6944
    %v7167 = vpop.f32.mrb[0].mxu0
    %v7168 = vadd.f32 0.0, %v7167
    %v7169 = vpop.f32.mrb[0].mxu0
    %7170 = vdwg.mxu0
    %v7171 = vmul.f32 %v6673, 0.95
    %v7172 = vmul.f32 %v6674, 0.95
    %v7173 = vmul.f32 %v6675, 0.95
    %v7174 = vmul.f32 %v6676, 0.95
    %v7175 = vmul.f32 %v6677, 0.95
    %v7176 = vmul.f32 %v6678, 0.95
    %v7177 = vmul.f32 %v6679, 0.95
    %v7178 = vmul.f32 %v6680, 0.95
    %v7179 = vmul.f32 %v6681, 0.95
    %v7180 = vmul.f32 %v6682, 0.95
    %v7181 = vmul.f32 %v6683, 0.95
    %v7182 = vmul.f32 %v6684, 0.95
    %v7183 = vmul.f32 %v6685, 0.95
    %v7184 = vmul.f32 %v6686, 0.95
    %v7185 = vmul.f32 %v6687, 0.95
    %v7186 = vmul.f32 %v6688, 0.95
    %v7187 = vmul.f32 %v6689, 0.95
    %v7188 = vmul.f32 %v6690, 0.95
    %v7189 = vmul.f32 %v6691, 0.95
    %v7190 = vmul.f32 %v6692, 0.95
    %v7191 = vmul.f32 %v6693, 0.95
    %v7192 = vmul.f32 %v6694, 0.95
    %v7193 = vmul.f32 %v6695, 0.95
    %v7194 = vmul.f32 %v6696, 0.95
    %v7195 = vmul.f32 %v6697, 0.95
    %v7196 = vmul.f32 %v6698, 0.95
    %v7197 = vmul.f32 %v6699, 0.95
    %v7198 = vmul.f32 %v6700, 0.95
    %v7199 = vmul.f32 %v6701, 0.95
    %v7200 = vmul.f32 %v6702, 0.95
    %v7201 = vmul.f32 %v6703, 0.95
    %v7202 = vmul.f32 %v6704, 0.95
    %v7203 = vadd.f32 %v7171, %v7013
    %v7204 = vadd.f32 %v7172, %v7018
    %v7205 = vadd.f32 %v7173, %v7023
    %v7206 = vadd.f32 %v7174, %v7028
    %v7207 = vadd.f32 %v7175, %v7033
    %v7208 = vadd.f32 %v7176, %v7038
    %v7209 = vadd.f32 %v7177, %v7043
    %v7210 = vadd.f32 %v7178, %v7048
    %v7211 = vadd.f32 %v7179, %v7053
    %v7212 = vadd.f32 %v7180, %v7058
    %v7213 = vadd.f32 %v7181, %v7063
    %v7214 = vadd.f32 %v7182, %v7068
    %v7215 = vadd.f32 %v7183, %v7073
    %v7216 = vadd.f32 %v7184, %v7078
    %v7217 = vadd.f32 %v7185, %v7083
    %v7218 = vadd.f32 %v7186, %v7088
    %v7219 = vadd.f32 %v7187, %v7093
    %v7220 = vadd.f32 %v7188, %v7098
    %v7221 = vadd.f32 %v7189, %v7103
    %v7222 = vadd.f32 %v7190, %v7108
    %v7223 = vadd.f32 %v7191, %v7113
    %v7224 = vadd.f32 %v7192, %v7118
    %v7225 = vadd.f32 %v7193, %v7123
    %v7226 = vadd.f32 %v7194, %v7128
    %v7227 = vadd.f32 %v7195, %v7133
    %v7228 = vadd.f32 %v7196, %v7138
    %v7229 = vadd.f32 %v7197, %v7143
    %v7230 = vadd.f32 %v7198, %v7148
    %v7231 = vadd.f32 %v7199, %v7153
    %v7232 = vadd.f32 %v7200, %v7158
    %v7233 = vadd.f32 %v7201, %v7163
    %v7234 = vadd.f32 %v7202, %v7168
    %v7235 = vmax.f32 %v7203, -4.0
    %v7236 = vmax.f32 %v7204, -4.0
    %v7237 = vmax.f32 %v7205, -4.0
    %v7238 = vmax.f32 %v7206, -4.0
    %v7239 = vmax.f32 %v7207, -4.0
    %v7240 = vmax.f32 %v7208, -4.0
    %v7241 = vmax.f32 %v7209, -4.0
    %v7242 = vmax.f32 %v7210, -4.0
    %v7243 = vmax.f32 %v7211, -4.0
    %v7244 = vmax.f32 %v7212, -4.0
    %v7245 = vmax.f32 %v7213, -4.0
    %v7246 = vmax.f32 %v7214, -4.0
    %v7247 = vmax.f32 %v7215, -4.0
    %v7248 = vmax.f32 %v7216, -4.0
    %v7249 = vmax.f32 %v7217, -4.0
    %v7250 = vmax.f32 %v7218, -4.0
    %v7251 = vmax.f32 %v7219, -4.0
    %v7252 = vmax.f32 %v7220, -4.0
    %v7253 = vmax.f32 %v7221, -4.0
    %v7254 = vmax.f32 %v7222, -4.0
    %v7255 = vmax.f32 %v7223, -4.0
    %v7256 = vmax.f32 %v7224, -4.0
    %v7257 = vmax.f32 %v7225, -4.0
    %v7258 = vmax.f32 %v7226, -4.0
    %v7259 = vmax.f32 %v7227, -4.0
    %v7260 = vmax.f32 %v7228, -4.0
    %v7261 = vmax.f32 %v7229, -4.0
    %v7262 = vmax.f32 %v7230, -4.0
    %v7263 = vmax.f32 %v7231, -4.0
    %v7264 = vmax.f32 %v7232, -4.0
    %v7265 = vmax.f32 %v7233, -4.0
    %v7266 = vmax.f32 %v7234, -4.0
    %v7267 = vmin.f32 %v7235, 4.0
    %v7268 = vmin.f32 %v7236, 4.0
    %v7269 = vmin.f32 %v7237, 4.0
    %v7270 = vmin.f32 %v7238, 4.0
    %v7271 = vmin.f32 %v7239, 4.0
    %v7272 = vmin.f32 %v7240, 4.0
    %v7273 = vmin.f32 %v7241, 4.0
    %v7274 = vmin.f32 %v7242, 4.0
    %v7275 = vmin.f32 %v7243, 4.0
    %v7276 = vmin.f32 %v7244, 4.0
    %v7277 = vmin.f32 %v7245, 4.0
    %v7278 = vmin.f32 %v7246, 4.0
    %v7279 = vmin.f32 %v7247, 4.0
    %v7280 = vmin.f32 %v7248, 4.0
    %v7281 = vmin.f32 %v7249, 4.0
    %v7282 = vmin.f32 %v7250, 4.0
    %v7283 = vmin.f32 %v7251, 4.0
    %v7284 = vmin.f32 %v7252, 4.0
    %v7285 = vmin.f32 %v7253, 4.0
    %v7286 = vmin.f32 %v7254, 4.0
    %v7287 = vmin.f32 %v7255, 4.0
    %v7288 = vmin.f32 %v7256, 4.0
    %v7289 = vmin.f32 %v7257, 4.0
    %v7290 = vmin.f32 %v7258, 4.0
    %v7291 = vmin.f32 %v7259, 4.0
    %v7292 = vmin.f32 %v7260, 4.0
    %v7293 = vmin.f32 %v7261, 4.0
    %v7294 = vmin.f32 %v7262, 4.0
    %v7295 = vmin.f32 %v7263, 4.0
    %v7296 = vmin.f32 %v7264, 4.0
    %v7297 = vmin.f32 %v7265, 4.0
    %v7298 = vmin.f32 %v7266, 4.0
    %7299 = vst [vmem:[%s15] sm:$0xff] %v7267
    %7300 = vst [vmem:[%s15 + $0x8] sm:$0xff] %v7268
    %7301 = vst [vmem:[%s15 + $0x10] sm:$0xff] %v7269
    %7302 = vst [vmem:[%s15 + $0x18] sm:$0xff] %v7270
    %7303 = vst [vmem:[%s15 + $0x20] sm:$0xff] %v7271
    %7304 = vst [vmem:[%s15 + $0x28] sm:$0xff] %v7272
    %7305 = vst [vmem:[%s15 + $0x30] sm:$0xff] %v7273
    %7306 = vst [vmem:[%s15 + $0x38] sm:$0xff] %v7274
    %7307 = vst [vmem:[%s15 + $0x40] sm:$0xff] %v7275
    %7308 = vst [vmem:[%s15 + $0x48] sm:$0xff] %v7276
    %7309 = vst [vmem:[%s15 + $0x50] sm:$0xff] %v7277
    %7310 = vst [vmem:[%s15 + $0x58] sm:$0xff] %v7278
    %7311 = vst [vmem:[%s15 + $0x60] sm:$0xff] %v7279
    %7312 = vst [vmem:[%s15 + $0x68] sm:$0xff] %v7280
    %7313 = vst [vmem:[%s15 + $0x70] sm:$0xff] %v7281
    %7314 = vst [vmem:[%s15 + $0x78] sm:$0xff] %v7282
    %7315 = vst [vmem:[%s15 + $0x80] sm:$0xff] %v7283
    %7316 = vst [vmem:[%s15 + $0x88] sm:$0xff] %v7284
    %7317 = vst [vmem:[%s15 + $0x90] sm:$0xff] %v7285
    %7318 = vst [vmem:[%s15 + $0x98] sm:$0xff] %v7286
    %7319 = vst [vmem:[%s15 + $0xa0] sm:$0xff] %v7287
    %7320 = vst [vmem:[%s15 + $0xa8] sm:$0xff] %v7288
    %7321 = vst [vmem:[%s15 + $0xb0] sm:$0xff] %v7289
    %7322 = vst [vmem:[%s15 + $0xb8] sm:$0xff] %v7290
    %7323 = vst [vmem:[%s15 + $0xc0] sm:$0xff] %v7291
    %7324 = vst [vmem:[%s15 + $0xc8] sm:$0xff] %v7292
    %7325 = vst [vmem:[%s15 + $0xd0] sm:$0xff] %v7293
    %7326 = vst [vmem:[%s15 + $0xd8] sm:$0xff] %v7294
    %7327 = vst [vmem:[%s15 + $0xe0] sm:$0xff] %v7295
    %7328 = vst [vmem:[%s15 + $0xe8] sm:$0xff] %v7296
    %7329 = vst [vmem:[%s15 + $0xf0] sm:$0xff] %v7297
    %7330 = vst [vmem:[%s15 + $0xf8] sm:$0xff] %v7298
    %v7331 = vsub.f32 %v6780, %v6267
    %v7332 = vmul.f32 %v7331, 0.5
    %v7333 = vadd.f32 %v6267, %v7332
    %vm7334 = vcmp.ge.f32.partialorder %v7333, 1.0
    %v7335 = vsel %vm7334, 1, 0
    %v7336 = vcvt.s32.f32 %v7335
    %v7337 = vsub.f32 1.0, %v7336
    %v7338 = vmul.f32 %v7333, %v7337
    %v7339 = vadd.f32 %v6268, %v7336
    %v7340 = vmul.f32 %v896, %v6648
    %v7341 = vmul.f32 %v896, %v6649
    %v7342 = vmul.f32 %v896, %v6650
    %v7343 = vmul.f32 %v896, %v6651
    %v7344 = vmul.f32 %v896, %v6652
    %v7345 = vmul.f32 %v896, %v6653
    %v7346 = vmul.f32 %v896, %v6654
    %v7347 = vmul.f32 %v896, %v6655
    %v7348 = vmul.f32 %v896, %v6656
    %v7349 = vmul.f32 %v896, %v6657
    %v7350 = vmul.f32 %v896, %v6658
    %v7351 = vmul.f32 %v896, %v6659
    %v7352 = vmul.f32 %v896, %v6660
    %v7353 = vmul.f32 %v896, %v6661
    %v7354 = vmul.f32 %v896, %v6662
    %v7355 = vmul.f32 %v896, %v6663
    %v7356 = vadd.f32 %v187, %v7340
    %v7357 = vadd.f32 %v188, %v7341
    %v7358 = vadd.f32 %v189, %v7342
    %v7359 = vadd.f32 %v190, %v7343
    %v7360 = vadd.f32 %v191, %v7344
    %v7361 = vadd.f32 %v192, %v7345
    %v7362 = vadd.f32 %v193, %v7346
    %v7363 = vadd.f32 %v194, %v7347
    %v7364 = vadd.f32 %v195, %v7348
    %v7365 = vadd.f32 %v196, %v7349
    %v7366 = vadd.f32 %v197, %v7350
    %v7367 = vadd.f32 %v198, %v7351
    %v7368 = vadd.f32 %v199, %v7352
    %v7369 = vadd.f32 %v200, %v7353
    %v7370 = vadd.f32 %v201, %v7354
    %v7371 = vadd.f32 %v202, %v7355
    %7372 = vmatprep.subr.mxu0 0.0
    %7373 = vmatpush1.msra.mxu0 %v7356
    %7374 = vmatprep.subr.mxu0 0.0
    %7375 = vmatpush1.msra.mxu0 %v7357
    %7376 = vmatprep.subr.mxu0 0.0
    %7377 = vmatpush1.msra.mxu0 %v7358
    %7378 = vmatprep.subr.mxu0 0.0
    %7379 = vmatpush1.msra.mxu0 %v7359
    %7380 = vmatprep.subr.mxu0 0.0
    %7381 = vmatpush1.msra.mxu0 %v7360
    %7382 = vmatprep.subr.mxu0 0.0
    %7383 = vmatpush1.msra.mxu0 %v7361
    %7384 = vmatprep.subr.mxu0 0.0
    %7385 = vmatpush1.msra.mxu0 %v7362
    %7386 = vmatprep.subr.mxu0 0.0
    %7387 = vmatpush1.msra.mxu0 %v7363
    %7388 = vmatprep.subr.mxu0 0.0
    %7389 = vmatpush1.msra.mxu0 %v7364
    %7390 = vmatprep.subr.mxu0 0.0
    %7391 = vmatpush1.msra.mxu0 %v7365
    %7392 = vmatprep.subr.mxu0 0.0
    %7393 = vmatpush1.msra.mxu0 %v7366
    %7394 = vmatprep.subr.mxu0 0.0
    %7395 = vmatpush1.msra.mxu0 %v7367
    %7396 = vmatprep.subr.mxu0 0.0
    %7397 = vmatpush1.msra.mxu0 %v7368
    %7398 = vmatprep.subr.mxu0 0.0
    %7399 = vmatpush1.msra.mxu0 %v7369
    %7400 = vmatprep.subr.mxu0 0.0
    %7401 = vmatpush1.msra.mxu0 %v7370
    %7402 = vmatprep.subr.mxu0 0.0
    %7403 = vmatpush1.msra.mxu0 %v7371
    %7404 = vmatprep.subr.mxu0 0.0
    %7405 = vmatpush1.msra.mxu0 0.0
    %7406 = vmatprep.subr.mxu0 0.0
    %7407 = vmatpush1.msra.mxu0 0.0
    %7408 = vmatprep.subr.mxu0 0.0
    %7409 = vmatpush1.msra.mxu0 0.0
    %7410 = vmatprep.subr.mxu0 0.0
    %7411 = vmatpush1.msra.mxu0 0.0
    %7412 = vmatprep.subr.mxu0 0.0
    %7413 = vmatpush1.msra.mxu0 0.0
    %7414 = vmatprep.subr.mxu0 0.0
    %7415 = vmatpush1.msra.mxu0 0.0
    %7416 = vmatprep.subr.mxu0 0.0
    %7417 = vmatpush1.msra.mxu0 0.0
    %7418 = vmatprep.subr.mxu0 0.0
    %7419 = vmatpush1.msra.mxu0 0.0
    %7420 = vmatprep.subr.mxu0 0.0
    %7421 = vmatpush1.msra.mxu0 0.0
    %7422 = vmatprep.subr.mxu0 0.0
    %7423 = vmatpush1.msra.mxu0 0.0
    %7424 = vmatprep.subr.mxu0 0.0
    %7425 = vmatpush1.msra.mxu0 0.0
    %7426 = vmatprep.subr.mxu0 0.0
    %7427 = vmatpush1.msra.mxu0 0.0
    %7428 = vmatprep.subr.mxu0 0.0
    %7429 = vmatpush1.msra.mxu0 0.0
    %7430 = vmatprep.subr.mxu0 0.0
    %7431 = vmatpush1.msra.mxu0 0.0
    %7432 = vmatprep.subr.mxu0 0.0
    %7433 = vmatpush1.msra.mxu0 0.0
    %7434 = vmatprep.subr.mxu0 0.0
    %7435 = vmatpush1.msra.mxu0 0.0
    %7436 = vmatprep.mubr.f32.mxu0 0.0
    %7437 = vmatmul.mubr.f32.gmra.mrb[0].mxu0 %v7336
    %v7438 = vpop.f32.mrb[0].mxu0
    %v7439 = vadd.f32 %v933, %v7438
    %v7440 = vpop.f32.mrb[0].mxu0
    %7441 = vdwg.mxu0
    %v7442 = vmul.f32 %v7439, 2.857143
    %v7443 = vsub.f32 %v7442, %v1010
    %v7444 = vtanh.pop %v7443
    %v7445 = vmul.f32 %v7336, %v1018
    %7446 = vxpose.xlu0.b32.start [1/16] %v7445, 128
    %7447 = vxpose.xlu0.b32.cont [2/16] 0.0, 128
    %7448 = vxpose.xlu0.b32.cont [3/16] 0.0, 128
    %7449 = vxpose.xlu0.b32.cont [4/16] 0.0, 128
    %7450 = vxpose.xlu0.b32.cont [5/16] 0.0, 128
    %7451 = vxpose.xlu0.b32.cont [6/16] 0.0, 128
    %7452 = vxpose.xlu0.b32.cont [7/16] 0.0, 128
    %7453 = vxpose.xlu0.b32.cont [8/16] 0.0, 128
    %7454 = vxpose.xlu0.b32.cont [9/16] 0.0, 128
    %7455 = vxpose.xlu0.b32.cont [10/16] 0.0, 128
    %7456 = vxpose.xlu0.b32.cont [11/16] 0.0, 128
    %7457 = vxpose.xlu0.b32.cont [12/16] 0.0, 128
    %7458 = vxpose.xlu0.b32.cont [13/16] 0.0, 128
    %7459 = vxpose.xlu0.b32.cont [14/16] 0.0, 128
    %7460 = vxpose.xlu0.b32.cont [15/16] 0.0, 128
    %7461 = vxpose.xlu0.b32.end [16/16] 0.0, 128
    %v7462 = vpop.trf.xlu0
    %v7463 = vpop.trf.xlu0
    %v7464 = vpop.trf.xlu0
    %v7465 = vpop.trf.xlu0
    %v7466 = vpop.trf.xlu0
    %v7467 = vpop.trf.xlu0
    %v7468 = vpop.trf.xlu0
    %v7469 = vpop.trf.xlu0
    %v7470 = vpop.trf.xlu0
    %v7471 = vpop.trf.xlu0
    %v7472 = vpop.trf.xlu0
    %v7473 = vpop.trf.xlu0
    %v7474 = vpop.trf.xlu0
    %v7475 = vpop.trf.xlu0
    %v7476 = vpop.trf.xlu0
    %v7477 = vpop.trf.xlu0
    %v7479 = vsel %vm406, %v7462, 0
    %v7482 = vsel %vm406, %v7463, 0
    %v7485 = vsel %vm406, %v7464, 0
    %v7488 = vsel %vm406, %v7465, 0
    %v7491 = vsel %vm406, %v7466, 0
    %v7494 = vsel %vm406, %v7467, 0
    %v7497 = vsel %vm406, %v7468, 0
    %v7500 = vsel %vm406, %v7469, 0
    %v7503 = vsel %vm406, %v7470, 0
    %v7506 = vsel %vm406, %v7471, 0
    %v7509 = vsel %vm406, %v7472, 0
    %v7512 = vsel %vm406, %v7473, 0
    %v7515 = vsel %vm406, %v7474, 0
    %v7518 = vsel %vm406, %v7475, 0
    %v7521 = vsel %vm406, %v7476, 0
    %v7524 = vsel %vm406, %v7477, 0
    %7526 = vmatprep.subr.mxu0 0.0
    %7527 = vmatpush1.msra.mxu0 %v7444
    %7528 = vmatprep.subr.mxu0 0.0
    %7529 = vmatpush1.msra.mxu0 0.0
    %7530 = vmatprep.subr.mxu0 0.0
    %7531 = vmatpush1.msra.mxu0 0.0
    %7532 = vmatprep.subr.mxu0 0.0
    %7533 = vmatpush1.msra.mxu0 0.0
    %7534 = vmatprep.subr.mxu0 0.0
    %7535 = vmatpush1.msra.mxu0 0.0
    %7536 = vmatprep.subr.mxu0 0.0
    %7537 = vmatpush1.msra.mxu0 0.0
    %7538 = vmatprep.subr.mxu0 0.0
    %7539 = vmatpush1.msra.mxu0 0.0
    %7540 = vmatprep.subr.mxu0 0.0
    %7541 = vmatpush1.msra.mxu0 0.0
    %7542 = vmatprep.subr.mxu0 0.0
    %7543 = vmatpush1.msra.mxu0 0.0
    %7544 = vmatprep.subr.mxu0 0.0
    %7545 = vmatpush1.msra.mxu0 0.0
    %7546 = vmatprep.subr.mxu0 0.0
    %7547 = vmatpush1.msra.mxu0 0.0
    %7548 = vmatprep.subr.mxu0 0.0
    %7549 = vmatpush1.msra.mxu0 0.0
    %7550 = vmatprep.subr.mxu0 0.0
    %7551 = vmatpush1.msra.mxu0 0.0
    %7552 = vmatprep.subr.mxu0 0.0
    %7553 = vmatpush1.msra.mxu0 0.0
    %7554 = vmatprep.subr.mxu0 0.0
    %7555 = vmatpush1.msra.mxu0 0.0
    %7556 = vmatprep.subr.mxu0 0.0
    %7557 = vmatpush1.msra.mxu0 0.0
    %7558 = vmatprep.subr.mxu0 0.0
    %7559 = vmatpush1.msra.mxu0 0.0
    %7560 = vmatprep.subr.mxu0 0.0
    %7561 = vmatpush1.msra.mxu0 0.0
    %7562 = vmatprep.subr.mxu0 0.0
    %7563 = vmatpush1.msra.mxu0 0.0
    %7564 = vmatprep.subr.mxu0 0.0
    %7565 = vmatpush1.msra.mxu0 0.0
    %7566 = vmatprep.subr.mxu0 0.0
    %7567 = vmatpush1.msra.mxu0 0.0
    %7568 = vmatprep.subr.mxu0 0.0
    %7569 = vmatpush1.msra.mxu0 0.0
    %7570 = vmatprep.subr.mxu0 0.0
    %7571 = vmatpush1.msra.mxu0 0.0
    %7572 = vmatprep.subr.mxu0 0.0
    %7573 = vmatpush1.msra.mxu0 0.0
    %7574 = vmatprep.subr.mxu0 0.0
    %7575 = vmatpush1.msra.mxu0 0.0
    %7576 = vmatprep.subr.mxu0 0.0
    %7577 = vmatpush1.msra.mxu0 0.0
    %7578 = vmatprep.subr.mxu0 0.0
    %7579 = vmatpush1.msra.mxu0 0.0
    %7580 = vmatprep.subr.mxu0 0.0
    %7581 = vmatpush1.msra.mxu0 0.0
    %7582 = vmatprep.subr.mxu0 0.0
    %7583 = vmatpush1.msra.mxu0 0.0
    %7584 = vmatprep.subr.mxu0 0.0
    %7585 = vmatpush1.msra.mxu0 0.0
    %7586 = vmatprep.subr.mxu0 0.0
    %7587 = vmatpush1.msra.mxu0 0.0
    %7588 = vmatprep.subr.mxu0 0.0
    %7589 = vmatpush1.msra.mxu0 0.0
    %7590 = vmatprep.mubr.f32.mxu0 0.0
    %7591 = vmatmul.mubr.f32.gmra.mrb[0].mxu0 %v7479
    %v7592 = vpop.f32.mrb[0].mxu0
    %v7593 = vadd.f32 0.0, %v7592
    %v7594 = vpop.f32.mrb[0].mxu0
    %7595 = vmatprep.mubr.f32.mxu0 0.0
    %7596 = vmatmul.mubr.f32.gmra.mrb[0].mxu0 %v7482
    %v7597 = vpop.f32.mrb[0].mxu0
    %v7598 = vadd.f32 0.0, %v7597
    %v7599 = vpop.f32.mrb[0].mxu0
    %7600 = vmatprep.mubr.f32.mxu0 0.0
    %7601 = vmatmul.mubr.f32.gmra.mrb[0].mxu0 %v7485
    %v7602 = vpop.f32.mrb[0].mxu0
    %v7603 = vadd.f32 0.0, %v7602
    %v7604 = vpop.f32.mrb[0].mxu0
    %7605 = vmatprep.mubr.f32.mxu0 0.0
    %7606 = vmatmul.mubr.f32.gmra.mrb[0].mxu0 %v7488
    %v7607 = vpop.f32.mrb[0].mxu0
    %v7608 = vadd.f32 0.0, %v7607
    %v7609 = vpop.f32.mrb[0].mxu0
    %7610 = vmatprep.mubr.f32.mxu0 0.0
    %7611 = vmatmul.mubr.f32.gmra.mrb[0].mxu0 %v7491
    %v7612 = vpop.f32.mrb[0].mxu0
    %v7613 = vadd.f32 0.0, %v7612
    %v7614 = vpop.f32.mrb[0].mxu0
    %7615 = vmatprep.mubr.f32.mxu0 0.0
    %7616 = vmatmul.mubr.f32.gmra.mrb[0].mxu0 %v7494
    %v7617 = vpop.f32.mrb[0].mxu0
    %v7618 = vadd.f32 0.0, %v7617
    %v7619 = vpop.f32.mrb[0].mxu0
    %7620 = vmatprep.mubr.f32.mxu0 0.0
    %7621 = vmatmul.mubr.f32.gmra.mrb[0].mxu0 %v7497
    %v7622 = vpop.f32.mrb[0].mxu0
    %v7623 = vadd.f32 0.0, %v7622
    %v7624 = vpop.f32.mrb[0].mxu0
    %7625 = vmatprep.mubr.f32.mxu0 0.0
    %7626 = vmatmul.mubr.f32.gmra.mrb[0].mxu0 %v7500
    %v7627 = vpop.f32.mrb[0].mxu0
    %v7628 = vadd.f32 0.0, %v7627
    %v7629 = vpop.f32.mrb[0].mxu0
    %7630 = vmatprep.mubr.f32.mxu0 0.0
    %7631 = vmatmul.mubr.f32.gmra.mrb[0].mxu0 %v7503
    %v7632 = vpop.f32.mrb[0].mxu0
    %v7633 = vadd.f32 0.0, %v7632
    %v7634 = vpop.f32.mrb[0].mxu0
    %7635 = vmatprep.mubr.f32.mxu0 0.0
    %7636 = vmatmul.mubr.f32.gmra.mrb[0].mxu0 %v7506
    %v7637 = vpop.f32.mrb[0].mxu0
    %v7638 = vadd.f32 0.0, %v7637
    %v7639 = vpop.f32.mrb[0].mxu0
    %7640 = vmatprep.mubr.f32.mxu0 0.0
    %7641 = vmatmul.mubr.f32.gmra.mrb[0].mxu0 %v7509
    %v7642 = vpop.f32.mrb[0].mxu0
    %v7643 = vadd.f32 0.0, %v7642
    %v7644 = vpop.f32.mrb[0].mxu0
    %7645 = vmatprep.mubr.f32.mxu0 0.0
    %7646 = vmatmul.mubr.f32.gmra.mrb[0].mxu0 %v7512
    %v7647 = vpop.f32.mrb[0].mxu0
    %v7648 = vadd.f32 0.0, %v7647
    %v7649 = vpop.f32.mrb[0].mxu0
    %7650 = vmatprep.mubr.f32.mxu0 0.0
    %7651 = vmatmul.mubr.f32.gmra.mrb[0].mxu0 %v7515
    %v7652 = vpop.f32.mrb[0].mxu0
    %v7653 = vadd.f32 0.0, %v7652
    %v7654 = vpop.f32.mrb[0].mxu0
    %7655 = vmatprep.mubr.f32.mxu0 0.0
    %7656 = vmatmul.mubr.f32.gmra.mrb[0].mxu0 %v7518
    %v7657 = vpop.f32.mrb[0].mxu0
    %v7658 = vadd.f32 0.0, %v7657
    %v7659 = vpop.f32.mrb[0].mxu0
    %7660 = vmatprep.mubr.f32.mxu0 0.0
    %7661 = vmatmul.mubr.f32.gmra.mrb[0].mxu0 %v7521
    %v7662 = vpop.f32.mrb[0].mxu0
    %v7663 = vadd.f32 0.0, %v7662
    %v7664 = vpop.f32.mrb[0].mxu0
    %7665 = vmatprep.mubr.f32.mxu0 0.0
    %7666 = vmatmul.mubr.f32.gmra.mrb[0].mxu0 %v7524
    %v7667 = vpop.f32.mrb[0].mxu0
    %v7668 = vadd.f32 0.0, %v7667
    %v7669 = vpop.f32.mrb[0].mxu0
    %7670 = vdwg.mxu0
    %v7671 = vmul.f32 %v6648, 0.95
    %v7672 = vmul.f32 %v6649, 0.95
    %v7673 = vmul.f32 %v6650, 0.95
    %v7674 = vmul.f32 %v6651, 0.95
    %v7675 = vmul.f32 %v6652, 0.95
    %v7676 = vmul.f32 %v6653, 0.95
    %v7677 = vmul.f32 %v6654, 0.95
    %v7678 = vmul.f32 %v6655, 0.95
    %v7679 = vmul.f32 %v6656, 0.95
    %v7680 = vmul.f32 %v6657, 0.95
    %v7681 = vmul.f32 %v6658, 0.95
    %v7682 = vmul.f32 %v6659, 0.95
    %v7683 = vmul.f32 %v6660, 0.95
    %v7684 = vmul.f32 %v6661, 0.95
    %v7685 = vmul.f32 %v6662, 0.95
    %v7686 = vmul.f32 %v6663, 0.95
    %v7687 = vadd.f32 %v7671, %v7593
    %v7688 = vadd.f32 %v7672, %v7598
    %v7689 = vadd.f32 %v7673, %v7603
    %v7690 = vadd.f32 %v7674, %v7608
    %v7691 = vadd.f32 %v7675, %v7613
    %v7692 = vadd.f32 %v7676, %v7618
    %v7693 = vadd.f32 %v7677, %v7623
    %v7694 = vadd.f32 %v7678, %v7628
    %v7695 = vadd.f32 %v7679, %v7633
    %v7696 = vadd.f32 %v7680, %v7638
    %v7697 = vadd.f32 %v7681, %v7643
    %v7698 = vadd.f32 %v7682, %v7648
    %v7699 = vadd.f32 %v7683, %v7653
    %v7700 = vadd.f32 %v7684, %v7658
    %v7701 = vadd.f32 %v7685, %v7663
    %v7702 = vadd.f32 %v7686, %v7668
    %v7703 = vmax.f32 %v7687, -4.0
    %v7704 = vmax.f32 %v7688, -4.0
    %v7705 = vmax.f32 %v7689, -4.0
    %v7706 = vmax.f32 %v7690, -4.0
    %v7707 = vmax.f32 %v7691, -4.0
    %v7708 = vmax.f32 %v7692, -4.0
    %v7709 = vmax.f32 %v7693, -4.0
    %v7710 = vmax.f32 %v7694, -4.0
    %v7711 = vmax.f32 %v7695, -4.0
    %v7712 = vmax.f32 %v7696, -4.0
    %v7713 = vmax.f32 %v7697, -4.0
    %v7714 = vmax.f32 %v7698, -4.0
    %v7715 = vmax.f32 %v7699, -4.0
    %v7716 = vmax.f32 %v7700, -4.0
    %v7717 = vmax.f32 %v7701, -4.0
    %v7718 = vmax.f32 %v7702, -4.0
    %v7719 = vmin.f32 %v7703, 4.0
    %v7720 = vmin.f32 %v7704, 4.0
    %v7721 = vmin.f32 %v7705, 4.0
    %v7722 = vmin.f32 %v7706, 4.0
    %v7723 = vmin.f32 %v7707, 4.0
    %v7724 = vmin.f32 %v7708, 4.0
    %v7725 = vmin.f32 %v7709, 4.0
    %v7726 = vmin.f32 %v7710, 4.0
    %v7727 = vmin.f32 %v7711, 4.0
    %v7728 = vmin.f32 %v7712, 4.0
    %v7729 = vmin.f32 %v7713, 4.0
    %v7730 = vmin.f32 %v7714, 4.0
    %v7731 = vmin.f32 %v7715, 4.0
    %v7732 = vmin.f32 %v7716, 4.0
    %v7733 = vmin.f32 %v7717, 4.0
    %v7734 = vmin.f32 %v7718, 4.0
    %v7735 = vsub.f32 %v7439, %v6671
    %v7736 = vmul.f32 %v7735, 0.5
    %v7737 = vadd.f32 %v6671, %v7736
    %vm7738 = vcmp.ge.f32.partialorder %v7737, 1.0
    %v7739 = vsel %vm7738, 1, 0
    %v7740 = vcvt.s32.f32 %v7739
    %v7741 = vsub.f32 1.0, %v7740
    %v7742 = vmul.f32 %v7737, %v7741
    %v7743 = vadd.f32 %v6672, %v7740
    %v7744 = vld [vmem:[%s15] sm:$0xff]
    %v7745 = vld [vmem:[%s15 + $0x8] sm:$0xff]
    %v7746 = vld [vmem:[%s15 + $0x10] sm:$0xff]
    %v7747 = vld [vmem:[%s15 + $0x18] sm:$0xff]
    %v7748 = vld [vmem:[%s15 + $0x20] sm:$0xff]
    %v7749 = vld [vmem:[%s15 + $0x28] sm:$0xff]
    %v7750 = vld [vmem:[%s15 + $0x30] sm:$0xff]
    %v7751 = vld [vmem:[%s15 + $0x38] sm:$0xff]
    %v7752 = vld [vmem:[%s15 + $0x40] sm:$0xff]
    %v7753 = vld [vmem:[%s15 + $0x48] sm:$0xff]
    %v7754 = vld [vmem:[%s15 + $0x50] sm:$0xff]
    %v7755 = vld [vmem:[%s15 + $0x58] sm:$0xff]
    %v7756 = vld [vmem:[%s15 + $0x60] sm:$0xff]
    %v7757 = vld [vmem:[%s15 + $0x68] sm:$0xff]
    %v7758 = vld [vmem:[%s15 + $0x70] sm:$0xff]
    %v7759 = vld [vmem:[%s15 + $0x78] sm:$0xff]
    %v7760 = vld [vmem:[%s15 + $0x80] sm:$0xff]
    %v7761 = vld [vmem:[%s15 + $0x88] sm:$0xff]
    %v7762 = vld [vmem:[%s15 + $0x90] sm:$0xff]
    %v7763 = vld [vmem:[%s15 + $0x98] sm:$0xff]
    %v7764 = vld [vmem:[%s15 + $0xa0] sm:$0xff]
    %v7765 = vld [vmem:[%s15 + $0xa8] sm:$0xff]
    %v7766 = vld [vmem:[%s15 + $0xb0] sm:$0xff]
    %v7767 = vld [vmem:[%s15 + $0xb8] sm:$0xff]
    %v7768 = vld [vmem:[%s15 + $0xc0] sm:$0xff]
    %v7769 = vld [vmem:[%s15 + $0xc8] sm:$0xff]
    %v7770 = vld [vmem:[%s15 + $0xd0] sm:$0xff]
    %v7771 = vld [vmem:[%s15 + $0xd8] sm:$0xff]
    %v7772 = vld [vmem:[%s15 + $0xe0] sm:$0xff]
    %v7773 = vld [vmem:[%s15 + $0xe8] sm:$0xff]
    %v7774 = vld [vmem:[%s15 + $0xf0] sm:$0xff]
    %v7775 = vld [vmem:[%s15 + $0xf8] sm:$0xff]
    %7776 = vmatprep.subr.mxu0 0.0
    %7777 = vmatpush1.msra.mxu0 %v7744
    %7778 = vmatprep.subr.mxu0 0.0
    %7779 = vmatpush1.msra.mxu0 %v7745
    %7780 = vmatprep.subr.mxu0 0.0
    %7781 = vmatpush1.msra.mxu0 %v7746
    %7782 = vmatprep.subr.mxu0 0.0
    %7783 = vmatpush1.msra.mxu0 %v7747
    %7784 = vmatprep.subr.mxu0 0.0
    %7785 = vmatpush1.msra.mxu0 %v7748
    %7786 = vmatprep.subr.mxu0 0.0
    %7787 = vmatpush1.msra.mxu0 %v7749
    %7788 = vmatprep.subr.mxu0 0.0
    %7789 = vmatpush1.msra.mxu0 %v7750
    %7790 = vmatprep.subr.mxu0 0.0
    %7791 = vmatpush1.msra.mxu0 %v7751
    %7792 = vmatprep.subr.mxu0 0.0
    %7793 = vmatpush1.msra.mxu0 %v7752
    %7794 = vmatprep.subr.mxu0 0.0
    %7795 = vmatpush1.msra.mxu0 %v7753
    %7796 = vmatprep.subr.mxu0 0.0
    %7797 = vmatpush1.msra.mxu0 %v7754
    %7798 = vmatprep.subr.mxu0 0.0
    %7799 = vmatpush1.msra.mxu0 %v7755
    %7800 = vmatprep.subr.mxu0 0.0
    %7801 = vmatpush1.msra.mxu0 %v7756
    %7802 = vmatprep.subr.mxu0 0.0
    %7803 = vmatpush1.msra.mxu0 %v7757
    %7804 = vmatprep.subr.mxu0 0.0
    %7805 = vmatpush1.msra.mxu0 %v7758
    %7806 = vmatprep.subr.mxu0 0.0
    %7807 = vmatpush1.msra.mxu0 %v7759
    %7808 = vmatprep.subr.mxu0 0.0
    %7809 = vmatpush1.msra.mxu0 %v7760
    %7810 = vmatprep.subr.mxu0 0.0
    %7811 = vmatpush1.msra.mxu0 %v7761
    %7812 = vmatprep.subr.mxu0 0.0
    %7813 = vmatpush1.msra.mxu0 %v7762
    %7814 = vmatprep.subr.mxu0 0.0
    %7815 = vmatpush1.msra.mxu0 %v7763
    %7816 = vmatprep.subr.mxu0 0.0
    %7817 = vmatpush1.msra.mxu0 %v7764
    %7818 = vmatprep.subr.mxu0 0.0
    %7819 = vmatpush1.msra.mxu0 %v7765
    %7820 = vmatprep.subr.mxu0 0.0
    %7821 = vmatpush1.msra.mxu0 %v7766
    %7822 = vmatprep.subr.mxu0 0.0
    %7823 = vmatpush1.msra.mxu0 %v7767
    %7824 = vmatprep.subr.mxu0 0.0
    %7825 = vmatpush1.msra.mxu0 %v7768
    %7826 = vmatprep.subr.mxu0 0.0
    %7827 = vmatpush1.msra.mxu0 %v7769
    %7828 = vmatprep.subr.mxu0 0.0
    %7829 = vmatpush1.msra.mxu0 %v7770
    %7830 = vmatprep.subr.mxu0 0.0
    %7831 = vmatpush1.msra.mxu0 %v7771
    %7832 = vmatprep.subr.mxu0 0.0
    %7833 = vmatpush1.msra.mxu0 %v7772
    %7834 = vmatprep.subr.mxu0 0.0
    %7835 = vmatpush1.msra.mxu0 %v7773
    %7836 = vmatprep.subr.mxu0 0.0
    %7837 = vmatpush1.msra.mxu0 %v7774
    %7838 = vmatprep.subr.mxu0 0.0
    %7839 = vmatpush1.msra.mxu0 %v7775
    %7840 = vmatprep.mubr.f32.mxu0 %v64
    %7841 = vmatmul.mubr.f32.gmra.mrb[0].mxu0 %v63
    %v7842 = vpop.f32.mrb[0].mxu0
    %v7843 = vadd.f32 0.0, %v7842
    %v7844 = vpop.f32.mrb[0].mxu0
    %7845 = vdwg.mxu0
    %v7846 = vmul.f32 %v164, 0.8394571
    %v7847 = vadd.f32 %v7846, %v325
    %s7848 = smul.f32 %s61, 0.8394571
    %v7849 = vstv %s7848
    %v7850 = vmul.f32 %v7849, %v7843
    %v7851 = vadd.f32 %v7847, %v7850
    %v7852 = vmul.f32 %v7851, 2.857143
    %v7853 = vsub.f32 %v7852, %v336
    %v7854 = vtanh.pop %v7853
    %v7855 = vmul.f32 %v179, 0.10493214
    %v7856 = vmul.f32 %v180, 0.10493214
    %7857 = vxpose.xlu0.b32.start [1/16] %v7855, 128
    %7858 = vxpose.xlu0.b32.cont [2/16] 0.0, 128
    %7859 = vxpose.xlu0.b32.cont [3/16] 0.0, 128
    %7860 = vxpose.xlu0.b32.cont [4/16] 0.0, 128
    %7861 = vxpose.xlu0.b32.cont [5/16] 0.0, 128
    %7862 = vxpose.xlu0.b32.cont [6/16] 0.0, 128
    %7863 = vxpose.xlu0.b32.cont [7/16] 0.0, 128
    %7864 = vxpose.xlu0.b32.cont [8/16] 0.0, 128
    %7865 = vxpose.xlu0.b32.cont [9/16] 0.0, 128
    %7866 = vxpose.xlu0.b32.cont [10/16] 0.0, 128
    %7867 = vxpose.xlu0.b32.cont [11/16] 0.0, 128
    %7868 = vxpose.xlu0.b32.cont [12/16] 0.0, 128
    %7869 = vxpose.xlu0.b32.cont [13/16] 0.0, 128
    %7870 = vxpose.xlu0.b32.cont [14/16] 0.0, 128
    %7871 = vxpose.xlu0.b32.cont [15/16] 0.0, 128
    %7872 = vxpose.xlu0.b32.end [16/16] 0.0, 128
    %v7873 = vpop.trf.xlu0
    %v7874 = vpop.trf.xlu0
    %v7875 = vpop.trf.xlu0
    %v7876 = vpop.trf.xlu0
    %v7877 = vpop.trf.xlu0
    %v7878 = vpop.trf.xlu0
    %v7879 = vpop.trf.xlu0
    %v7880 = vpop.trf.xlu0
    %v7881 = vpop.trf.xlu0
    %v7882 = vpop.trf.xlu0
    %v7883 = vpop.trf.xlu0
    %v7884 = vpop.trf.xlu0
    %v7885 = vpop.trf.xlu0
    %v7886 = vpop.trf.xlu0
    %v7887 = vpop.trf.xlu0
    %v7888 = vpop.trf.xlu0
    %7889 = vxpose.xlu0.b32.start [1/16] %v7856, 128
    %7890 = vxpose.xlu0.b32.cont [2/16] 0.0, 128
    %7891 = vxpose.xlu0.b32.cont [3/16] 0.0, 128
    %7892 = vxpose.xlu0.b32.cont [4/16] 0.0, 128
    %7893 = vxpose.xlu0.b32.cont [5/16] 0.0, 128
    %7894 = vxpose.xlu0.b32.cont [6/16] 0.0, 128
    %7895 = vxpose.xlu0.b32.cont [7/16] 0.0, 128
    %7896 = vxpose.xlu0.b32.cont [8/16] 0.0, 128
    %7897 = vxpose.xlu0.b32.cont [9/16] 0.0, 128
    %7898 = vxpose.xlu0.b32.cont [10/16] 0.0, 128
    %7899 = vxpose.xlu0.b32.cont [11/16] 0.0, 128
    %7900 = vxpose.xlu0.b32.cont [12/16] 0.0, 128
    %7901 = vxpose.xlu0.b32.cont [13/16] 0.0, 128
    %7902 = vxpose.xlu0.b32.cont [14/16] 0.0, 128
    %7903 = vxpose.xlu0.b32.cont [15/16] 0.0, 128
    %7904 = vxpose.xlu0.b32.end [16/16] 0.0, 128
    %v7905 = vpop.trf.xlu0
    %v7906 = vpop.trf.xlu0
    %v7907 = vpop.trf.xlu0
    %v7908 = vpop.trf.xlu0
    %v7909 = vpop.trf.xlu0
    %v7910 = vpop.trf.xlu0
    %v7911 = vpop.trf.xlu0
    %v7912 = vpop.trf.xlu0
    %v7913 = vpop.trf.xlu0
    %v7914 = vpop.trf.xlu0
    %v7915 = vpop.trf.xlu0
    %v7916 = vpop.trf.xlu0
    %v7917 = vpop.trf.xlu0
    %v7918 = vpop.trf.xlu0
    %v7919 = vpop.trf.xlu0
    %v7920 = vpop.trf.xlu0
    %v7922 = vsel %vm406, %v7873, 0
    %v7925 = vsel %vm406, %v7874, 0
    %v7928 = vsel %vm406, %v7875, 0
    %v7931 = vsel %vm406, %v7876, 0
    %v7934 = vsel %vm406, %v7877, 0
    %v7937 = vsel %vm406, %v7878, 0
    %v7940 = vsel %vm406, %v7879, 0
    %v7943 = vsel %vm406, %v7880, 0
    %v7946 = vsel %vm406, %v7881, 0
    %v7949 = vsel %vm406, %v7882, 0
    %v7952 = vsel %vm406, %v7883, 0
    %v7955 = vsel %vm406, %v7884, 0
    %v7958 = vsel %vm406, %v7885, 0
    %v7961 = vsel %vm406, %v7886, 0
    %v7964 = vsel %vm406, %v7887, 0
    %v7967 = vsel %vm406, %v7888, 0
    %v7970 = vsel %vm406, %v7905, 0
    %v7973 = vsel %vm406, %v7906, 0
    %v7976 = vsel %vm406, %v7907, 0
    %v7979 = vsel %vm406, %v7908, 0
    %v7982 = vsel %vm406, %v7909, 0
    %v7985 = vsel %vm406, %v7910, 0
    %v7988 = vsel %vm406, %v7911, 0
    %v7991 = vsel %vm406, %v7912, 0
    %v7994 = vsel %vm406, %v7913, 0
    %v7997 = vsel %vm406, %v7914, 0
    %v8000 = vsel %vm406, %v7915, 0
    %v8003 = vsel %vm406, %v7916, 0
    %v8006 = vsel %vm406, %v7917, 0
    %v8009 = vsel %vm406, %v7918, 0
    %v8012 = vsel %vm406, %v7919, 0
    %v8015 = vsel %vm406, %v7920, 0
    %8017 = vmatprep.subr.mxu0 0.0
    %8018 = vmatpush1.msra.mxu0 %v7854
    %8019 = vmatprep.subr.mxu0 0.0
    %8020 = vmatpush1.msra.mxu0 0.0
    %8021 = vmatprep.subr.mxu0 0.0
    %8022 = vmatpush1.msra.mxu0 0.0
    %8023 = vmatprep.subr.mxu0 0.0
    %8024 = vmatpush1.msra.mxu0 0.0
    %8025 = vmatprep.subr.mxu0 0.0
    %8026 = vmatpush1.msra.mxu0 0.0
    %8027 = vmatprep.subr.mxu0 0.0
    %8028 = vmatpush1.msra.mxu0 0.0
    %8029 = vmatprep.subr.mxu0 0.0
    %8030 = vmatpush1.msra.mxu0 0.0
    %8031 = vmatprep.subr.mxu0 0.0
    %8032 = vmatpush1.msra.mxu0 0.0
    %8033 = vmatprep.subr.mxu0 0.0
    %8034 = vmatpush1.msra.mxu0 0.0
    %8035 = vmatprep.subr.mxu0 0.0
    %8036 = vmatpush1.msra.mxu0 0.0
    %8037 = vmatprep.subr.mxu0 0.0
    %8038 = vmatpush1.msra.mxu0 0.0
    %8039 = vmatprep.subr.mxu0 0.0
    %8040 = vmatpush1.msra.mxu0 0.0
    %8041 = vmatprep.subr.mxu0 0.0
    %8042 = vmatpush1.msra.mxu0 0.0
    %8043 = vmatprep.subr.mxu0 0.0
    %8044 = vmatpush1.msra.mxu0 0.0
    %8045 = vmatprep.subr.mxu0 0.0
    %8046 = vmatpush1.msra.mxu0 0.0
    %8047 = vmatprep.subr.mxu0 0.0
    %8048 = vmatpush1.msra.mxu0 0.0
    %8049 = vmatprep.subr.mxu0 0.0
    %8050 = vmatpush1.msra.mxu0 0.0
    %8051 = vmatprep.subr.mxu0 0.0
    %8052 = vmatpush1.msra.mxu0 0.0
    %8053 = vmatprep.subr.mxu0 0.0
    %8054 = vmatpush1.msra.mxu0 0.0
    %8055 = vmatprep.subr.mxu0 0.0
    %8056 = vmatpush1.msra.mxu0 0.0
    %8057 = vmatprep.subr.mxu0 0.0
    %8058 = vmatpush1.msra.mxu0 0.0
    %8059 = vmatprep.subr.mxu0 0.0
    %8060 = vmatpush1.msra.mxu0 0.0
    %8061 = vmatprep.subr.mxu0 0.0
    %8062 = vmatpush1.msra.mxu0 0.0
    %8063 = vmatprep.subr.mxu0 0.0
    %8064 = vmatpush1.msra.mxu0 0.0
    %8065 = vmatprep.subr.mxu0 0.0
    %8066 = vmatpush1.msra.mxu0 0.0
    %8067 = vmatprep.subr.mxu0 0.0
    %8068 = vmatpush1.msra.mxu0 0.0
    %8069 = vmatprep.subr.mxu0 0.0
    %8070 = vmatpush1.msra.mxu0 0.0
    %8071 = vmatprep.subr.mxu0 0.0
    %8072 = vmatpush1.msra.mxu0 0.0
    %8073 = vmatprep.subr.mxu0 0.0
    %8074 = vmatpush1.msra.mxu0 0.0
    %8075 = vmatprep.subr.mxu0 0.0
    %8076 = vmatpush1.msra.mxu0 0.0
    %8077 = vmatprep.subr.mxu0 0.0
    %8078 = vmatpush1.msra.mxu0 0.0
    %8079 = vmatprep.subr.mxu0 0.0
    %8080 = vmatpush1.msra.mxu0 0.0
    %8081 = vmatprep.mubr.f32.mxu0 0.0
    %8082 = vmatmul.mubr.f32.gmra.mrb[0].mxu0 %v7922
    %v8083 = vpop.f32.mrb[0].mxu0
    %v8084 = vadd.f32 0.0, %v8083
    %v8085 = vpop.f32.mrb[0].mxu0
    %8086 = vmatprep.mubr.f32.mxu0 0.0
    %8087 = vmatmul.mubr.f32.gmra.mrb[0].mxu0 %v7925
    %v8088 = vpop.f32.mrb[0].mxu0
    %v8089 = vadd.f32 0.0, %v8088
    %v8090 = vpop.f32.mrb[0].mxu0
    %8091 = vmatprep.mubr.f32.mxu0 0.0
    %8092 = vmatmul.mubr.f32.gmra.mrb[0].mxu0 %v7928
    %v8093 = vpop.f32.mrb[0].mxu0
    %v8094 = vadd.f32 0.0, %v8093
    %v8095 = vpop.f32.mrb[0].mxu0
    %8096 = vmatprep.mubr.f32.mxu0 0.0
    %8097 = vmatmul.mubr.f32.gmra.mrb[0].mxu0 %v7931
    %v8098 = vpop.f32.mrb[0].mxu0
    %v8099 = vadd.f32 0.0, %v8098
    %v8100 = vpop.f32.mrb[0].mxu0
    %8101 = vmatprep.mubr.f32.mxu0 0.0
    %8102 = vmatmul.mubr.f32.gmra.mrb[0].mxu0 %v7934
    %v8103 = vpop.f32.mrb[0].mxu0
    %v8104 = vadd.f32 0.0, %v8103
    %v8105 = vpop.f32.mrb[0].mxu0
    %8106 = vmatprep.mubr.f32.mxu0 0.0
    %8107 = vmatmul.mubr.f32.gmra.mrb[0].mxu0 %v7937
    %v8108 = vpop.f32.mrb[0].mxu0
    %v8109 = vadd.f32 0.0, %v8108
    %v8110 = vpop.f32.mrb[0].mxu0
    %8111 = vmatprep.mubr.f32.mxu0 0.0
    %8112 = vmatmul.mubr.f32.gmra.mrb[0].mxu0 %v7940
    %v8113 = vpop.f32.mrb[0].mxu0
    %v8114 = vadd.f32 0.0, %v8113
    %v8115 = vpop.f32.mrb[0].mxu0
    %8116 = vmatprep.mubr.f32.mxu0 0.0
    %8117 = vmatmul.mubr.f32.gmra.mrb[0].mxu0 %v7943
    %v8118 = vpop.f32.mrb[0].mxu0
    %v8119 = vadd.f32 0.0, %v8118
    %v8120 = vpop.f32.mrb[0].mxu0
    %8121 = vmatprep.mubr.f32.mxu0 0.0
    %8122 = vmatmul.mubr.f32.gmra.mrb[0].mxu0 %v7946
    %v8123 = vpop.f32.mrb[0].mxu0
    %v8124 = vadd.f32 0.0, %v8123
    %v8125 = vpop.f32.mrb[0].mxu0
    %8126 = vmatprep.mubr.f32.mxu0 0.0
    %8127 = vmatmul.mubr.f32.gmra.mrb[0].mxu0 %v7949
    %v8128 = vpop.f32.mrb[0].mxu0
    %v8129 = vadd.f32 0.0, %v8128
    %v8130 = vpop.f32.mrb[0].mxu0
    %8131 = vmatprep.mubr.f32.mxu0 0.0
    %8132 = vmatmul.mubr.f32.gmra.mrb[0].mxu0 %v7952
    %v8133 = vpop.f32.mrb[0].mxu0
    %v8134 = vadd.f32 0.0, %v8133
    %v8135 = vpop.f32.mrb[0].mxu0
    %8136 = vmatprep.mubr.f32.mxu0 0.0
    %8137 = vmatmul.mubr.f32.gmra.mrb[0].mxu0 %v7955
    %v8138 = vpop.f32.mrb[0].mxu0
    %v8139 = vadd.f32 0.0, %v8138
    %v8140 = vpop.f32.mrb[0].mxu0
    %8141 = vmatprep.mubr.f32.mxu0 0.0
    %8142 = vmatmul.mubr.f32.gmra.mrb[0].mxu0 %v7958
    %v8143 = vpop.f32.mrb[0].mxu0
    %v8144 = vadd.f32 0.0, %v8143
    %v8145 = vpop.f32.mrb[0].mxu0
    %8146 = vmatprep.mubr.f32.mxu0 0.0
    %8147 = vmatmul.mubr.f32.gmra.mrb[0].mxu0 %v7961
    %v8148 = vpop.f32.mrb[0].mxu0
    %v8149 = vadd.f32 0.0, %v8148
    %v8150 = vpop.f32.mrb[0].mxu0
    %8151 = vmatprep.mubr.f32.mxu0 0.0
    %8152 = vmatmul.mubr.f32.gmra.mrb[0].mxu0 %v7964
    %v8153 = vpop.f32.mrb[0].mxu0
    %v8154 = vadd.f32 0.0, %v8153
    %v8155 = vpop.f32.mrb[0].mxu0
    %8156 = vmatprep.mubr.f32.mxu0 0.0
    %8157 = vmatmul.mubr.f32.gmra.mrb[0].mxu0 %v7967
    %v8158 = vpop.f32.mrb[0].mxu0
    %v8159 = vadd.f32 0.0, %v8158
    %v8160 = vpop.f32.mrb[0].mxu0
    %8161 = vmatprep.mubr.f32.mxu0 0.0
    %8162 = vmatmul.mubr.f32.gmra.mrb[0].mxu0 %v7970
    %v8163 = vpop.f32.mrb[0].mxu0
    %v8164 = vadd.f32 0.0, %v8163
    %v8165 = vpop.f32.mrb[0].mxu0
    %8166 = vmatprep.mubr.f32.mxu0 0.0
    %8167 = vmatmul.mubr.f32.gmra.mrb[0].mxu0 %v7973
    %v8168 = vpop.f32.mrb[0].mxu0
    %v8169 = vadd.f32 0.0, %v8168
    %v8170 = vpop.f32.mrb[0].mxu0
    %8171 = vmatprep.mubr.f32.mxu0 0.0
    %8172 = vmatmul.mubr.f32.gmra.mrb[0].mxu0 %v7976
    %v8173 = vpop.f32.mrb[0].mxu0
    %v8174 = vadd.f32 0.0, %v8173
    %v8175 = vpop.f32.mrb[0].mxu0
    %8176 = vmatprep.mubr.f32.mxu0 0.0
    %8177 = vmatmul.mubr.f32.gmra.mrb[0].mxu0 %v7979
    %v8178 = vpop.f32.mrb[0].mxu0
    %v8179 = vadd.f32 0.0, %v8178
    %v8180 = vpop.f32.mrb[0].mxu0
    %8181 = vmatprep.mubr.f32.mxu0 0.0
    %8182 = vmatmul.mubr.f32.gmra.mrb[0].mxu0 %v7982
    %v8183 = vpop.f32.mrb[0].mxu0
    %v8184 = vadd.f32 0.0, %v8183
    %v8185 = vpop.f32.mrb[0].mxu0
    %8186 = vmatprep.mubr.f32.mxu0 0.0
    %8187 = vmatmul.mubr.f32.gmra.mrb[0].mxu0 %v7985
    %v8188 = vpop.f32.mrb[0].mxu0
    %v8189 = vadd.f32 0.0, %v8188
    %v8190 = vpop.f32.mrb[0].mxu0
    %8191 = vmatprep.mubr.f32.mxu0 0.0
    %8192 = vmatmul.mubr.f32.gmra.mrb[0].mxu0 %v7988
    %v8193 = vpop.f32.mrb[0].mxu0
    %v8194 = vadd.f32 0.0, %v8193
    %v8195 = vpop.f32.mrb[0].mxu0
    %8196 = vmatprep.mubr.f32.mxu0 0.0
    %8197 = vmatmul.mubr.f32.gmra.mrb[0].mxu0 %v7991
    %v8198 = vpop.f32.mrb[0].mxu0
    %v8199 = vadd.f32 0.0, %v8198
    %v8200 = vpop.f32.mrb[0].mxu0
    %8201 = vmatprep.mubr.f32.mxu0 0.0
    %8202 = vmatmul.mubr.f32.gmra.mrb[0].mxu0 %v7994
    %v8203 = vpop.f32.mrb[0].mxu0
    %v8204 = vadd.f32 0.0, %v8203
    %v8205 = vpop.f32.mrb[0].mxu0
    %8206 = vmatprep.mubr.f32.mxu0 0.0
    %8207 = vmatmul.mubr.f32.gmra.mrb[0].mxu0 %v7997
    %v8208 = vpop.f32.mrb[0].mxu0
    %v8209 = vadd.f32 0.0, %v8208
    %v8210 = vpop.f32.mrb[0].mxu0
    %8211 = vmatprep.mubr.f32.mxu0 0.0
    %8212 = vmatmul.mubr.f32.gmra.mrb[0].mxu0 %v8000
    %v8213 = vpop.f32.mrb[0].mxu0
    %v8214 = vadd.f32 0.0, %v8213
    %v8215 = vpop.f32.mrb[0].mxu0
    %8216 = vmatprep.mubr.f32.mxu0 0.0
    %8217 = vmatmul.mubr.f32.gmra.mrb[0].mxu0 %v8003
    %v8218 = vpop.f32.mrb[0].mxu0
    %v8219 = vadd.f32 0.0, %v8218
    %v8220 = vpop.f32.mrb[0].mxu0
    %8221 = vmatprep.mubr.f32.mxu0 0.0
    %8222 = vmatmul.mubr.f32.gmra.mrb[0].mxu0 %v8006
    %v8223 = vpop.f32.mrb[0].mxu0
    %v8224 = vadd.f32 0.0, %v8223
    %v8225 = vpop.f32.mrb[0].mxu0
    %8226 = vmatprep.mubr.f32.mxu0 0.0
    %8227 = vmatmul.mubr.f32.gmra.mrb[0].mxu0 %v8009
    %v8228 = vpop.f32.mrb[0].mxu0
    %v8229 = vadd.f32 0.0, %v8228
    %v8230 = vpop.f32.mrb[0].mxu0
    %8231 = vmatprep.mubr.f32.mxu0 0.0
    %8232 = vmatmul.mubr.f32.gmra.mrb[0].mxu0 %v8012
    %v8233 = vpop.f32.mrb[0].mxu0
    %v8234 = vadd.f32 0.0, %v8233
    %v8235 = vpop.f32.mrb[0].mxu0
    %8236 = vmatprep.mubr.f32.mxu0 0.0
    %8237 = vmatmul.mubr.f32.gmra.mrb[0].mxu0 %v8015
    %v8238 = vpop.f32.mrb[0].mxu0
    %v8239 = vadd.f32 0.0, %v8238
    %v8240 = vpop.f32.mrb[0].mxu0
    %8241 = vdwg.mxu0
    %v8242 = vmul.f32 %v7744, 0.95
    %v8243 = vmul.f32 %v7745, 0.95
    %v8244 = vmul.f32 %v7746, 0.95
    %v8245 = vmul.f32 %v7747, 0.95
    %v8246 = vmul.f32 %v7748, 0.95
    %v8247 = vmul.f32 %v7749, 0.95
    %v8248 = vmul.f32 %v7750, 0.95
    %v8249 = vmul.f32 %v7751, 0.95
    %v8250 = vmul.f32 %v7752, 0.95
    %v8251 = vmul.f32 %v7753, 0.95
    %v8252 = vmul.f32 %v7754, 0.95
    %v8253 = vmul.f32 %v7755, 0.95
    %v8254 = vmul.f32 %v7756, 0.95
    %v8255 = vmul.f32 %v7757, 0.95
    %v8256 = vmul.f32 %v7758, 0.95
    %v8257 = vmul.f32 %v7759, 0.95
    %v8258 = vmul.f32 %v7760, 0.95
    %v8259 = vmul.f32 %v7761, 0.95
    %v8260 = vmul.f32 %v7762, 0.95
    %v8261 = vmul.f32 %v7763, 0.95
    %v8262 = vmul.f32 %v7764, 0.95
    %v8263 = vmul.f32 %v7765, 0.95
    %v8264 = vmul.f32 %v7766, 0.95
    %v8265 = vmul.f32 %v7767, 0.95
    %v8266 = vmul.f32 %v7768, 0.95
    %v8267 = vmul.f32 %v7769, 0.95
    %v8268 = vmul.f32 %v7770, 0.95
    %v8269 = vmul.f32 %v7771, 0.95
    %v8270 = vmul.f32 %v7772, 0.95
    %v8271 = vmul.f32 %v7773, 0.95
    %v8272 = vmul.f32 %v7774, 0.95
    %v8273 = vmul.f32 %v7775, 0.95
    %v8274 = vadd.f32 %v8242, %v8084
    %v8275 = vadd.f32 %v8243, %v8089
    %v8276 = vadd.f32 %v8244, %v8094
    %v8277 = vadd.f32 %v8245, %v8099
    %v8278 = vadd.f32 %v8246, %v8104
    %v8279 = vadd.f32 %v8247, %v8109
    %v8280 = vadd.f32 %v8248, %v8114
    %v8281 = vadd.f32 %v8249, %v8119
    %v8282 = vadd.f32 %v8250, %v8124
    %v8283 = vadd.f32 %v8251, %v8129
    %v8284 = vadd.f32 %v8252, %v8134
    %v8285 = vadd.f32 %v8253, %v8139
    %v8286 = vadd.f32 %v8254, %v8144
    %v8287 = vadd.f32 %v8255, %v8149
    %v8288 = vadd.f32 %v8256, %v8154
    %v8289 = vadd.f32 %v8257, %v8159
    %v8290 = vadd.f32 %v8258, %v8164
    %v8291 = vadd.f32 %v8259, %v8169
    %v8292 = vadd.f32 %v8260, %v8174
    %v8293 = vadd.f32 %v8261, %v8179
    %v8294 = vadd.f32 %v8262, %v8184
    %v8295 = vadd.f32 %v8263, %v8189
    %v8296 = vadd.f32 %v8264, %v8194
    %v8297 = vadd.f32 %v8265, %v8199
    %v8298 = vadd.f32 %v8266, %v8204
    %v8299 = vadd.f32 %v8267, %v8209
    %v8300 = vadd.f32 %v8268, %v8214
    %v8301 = vadd.f32 %v8269, %v8219
    %v8302 = vadd.f32 %v8270, %v8224
    %v8303 = vadd.f32 %v8271, %v8229
    %v8304 = vadd.f32 %v8272, %v8234
    %v8305 = vadd.f32 %v8273, %v8239
    %v8306 = vmax.f32 %v8274, -4.0
    %v8307 = vmax.f32 %v8275, -4.0
    %v8308 = vmax.f32 %v8276, -4.0
    %v8309 = vmax.f32 %v8277, -4.0
    %v8310 = vmax.f32 %v8278, -4.0
    %v8311 = vmax.f32 %v8279, -4.0
    %v8312 = vmax.f32 %v8280, -4.0
    %v8313 = vmax.f32 %v8281, -4.0
    %v8314 = vmax.f32 %v8282, -4.0
    %v8315 = vmax.f32 %v8283, -4.0
    %v8316 = vmax.f32 %v8284, -4.0
    %v8317 = vmax.f32 %v8285, -4.0
    %v8318 = vmax.f32 %v8286, -4.0
    %v8319 = vmax.f32 %v8287, -4.0
    %v8320 = vmax.f32 %v8288, -4.0
    %v8321 = vmax.f32 %v8289, -4.0
    %v8322 = vmax.f32 %v8290, -4.0
    %v8323 = vmax.f32 %v8291, -4.0
    %v8324 = vmax.f32 %v8292, -4.0
    %v8325 = vmax.f32 %v8293, -4.0
    %v8326 = vmax.f32 %v8294, -4.0
    %v8327 = vmax.f32 %v8295, -4.0
    %v8328 = vmax.f32 %v8296, -4.0
    %v8329 = vmax.f32 %v8297, -4.0
    %v8330 = vmax.f32 %v8298, -4.0
    %v8331 = vmax.f32 %v8299, -4.0
    %v8332 = vmax.f32 %v8300, -4.0
    %v8333 = vmax.f32 %v8301, -4.0
    %v8334 = vmax.f32 %v8302, -4.0
    %v8335 = vmax.f32 %v8303, -4.0
    %v8336 = vmax.f32 %v8304, -4.0
    %v8337 = vmax.f32 %v8305, -4.0
    %v8338 = vmin.f32 %v8306, 4.0
    %v8339 = vmin.f32 %v8307, 4.0
    %v8340 = vmin.f32 %v8308, 4.0
    %v8341 = vmin.f32 %v8309, 4.0
    %v8342 = vmin.f32 %v8310, 4.0
    %v8343 = vmin.f32 %v8311, 4.0
    %v8344 = vmin.f32 %v8312, 4.0
    %v8345 = vmin.f32 %v8313, 4.0
    %v8346 = vmin.f32 %v8314, 4.0
    %v8347 = vmin.f32 %v8315, 4.0
    %v8348 = vmin.f32 %v8316, 4.0
    %v8349 = vmin.f32 %v8317, 4.0
    %v8350 = vmin.f32 %v8318, 4.0
    %v8351 = vmin.f32 %v8319, 4.0
    %v8352 = vmin.f32 %v8320, 4.0
    %v8353 = vmin.f32 %v8321, 4.0
    %v8354 = vmin.f32 %v8322, 4.0
    %v8355 = vmin.f32 %v8323, 4.0
    %v8356 = vmin.f32 %v8324, 4.0
    %v8357 = vmin.f32 %v8325, 4.0
    %v8358 = vmin.f32 %v8326, 4.0
    %v8359 = vmin.f32 %v8327, 4.0
    %v8360 = vmin.f32 %v8328, 4.0
    %v8361 = vmin.f32 %v8329, 4.0
    %v8362 = vmin.f32 %v8330, 4.0
    %v8363 = vmin.f32 %v8331, 4.0
    %v8364 = vmin.f32 %v8332, 4.0
    %v8365 = vmin.f32 %v8333, 4.0
    %v8366 = vmin.f32 %v8334, 4.0
    %v8367 = vmin.f32 %v8335, 4.0
    %v8368 = vmin.f32 %v8336, 4.0
    %v8369 = vmin.f32 %v8337, 4.0
    %8370 = vst [vmem:[%s15] sm:$0xff] %v8338
    %8371 = vst [vmem:[%s15 + $0x8] sm:$0xff] %v8339
    %8372 = vst [vmem:[%s15 + $0x10] sm:$0xff] %v8340
    %8373 = vst [vmem:[%s15 + $0x18] sm:$0xff] %v8341
    %8374 = vst [vmem:[%s15 + $0x20] sm:$0xff] %v8342
    %8375 = vst [vmem:[%s15 + $0x28] sm:$0xff] %v8343
    %8376 = vst [vmem:[%s15 + $0x30] sm:$0xff] %v8344
    %8377 = vst [vmem:[%s15 + $0x38] sm:$0xff] %v8345
    %8378 = vst [vmem:[%s15 + $0x40] sm:$0xff] %v8346
    %8379 = vst [vmem:[%s15 + $0x48] sm:$0xff] %v8347
    %8380 = vst [vmem:[%s15 + $0x50] sm:$0xff] %v8348
    %8381 = vst [vmem:[%s15 + $0x58] sm:$0xff] %v8349
    %8382 = vst [vmem:[%s15 + $0x60] sm:$0xff] %v8350
    %8383 = vst [vmem:[%s15 + $0x68] sm:$0xff] %v8351
    %8384 = vst [vmem:[%s15 + $0x70] sm:$0xff] %v8352
    %8385 = vst [vmem:[%s15 + $0x78] sm:$0xff] %v8353
    %8386 = vst [vmem:[%s15 + $0x80] sm:$0xff] %v8354
    %8387 = vst [vmem:[%s15 + $0x88] sm:$0xff] %v8355
    %8388 = vst [vmem:[%s15 + $0x90] sm:$0xff] %v8356
    %8389 = vst [vmem:[%s15 + $0x98] sm:$0xff] %v8357
    %8390 = vst [vmem:[%s15 + $0xa0] sm:$0xff] %v8358
    %8391 = vst [vmem:[%s15 + $0xa8] sm:$0xff] %v8359
    %8392 = vst [vmem:[%s15 + $0xb0] sm:$0xff] %v8360
    %8393 = vst [vmem:[%s15 + $0xb8] sm:$0xff] %v8361
    %8394 = vst [vmem:[%s15 + $0xc0] sm:$0xff] %v8362
    %8395 = vst [vmem:[%s15 + $0xc8] sm:$0xff] %v8363
    %8396 = vst [vmem:[%s15 + $0xd0] sm:$0xff] %v8364
    %8397 = vst [vmem:[%s15 + $0xd8] sm:$0xff] %v8365
    %8398 = vst [vmem:[%s15 + $0xe0] sm:$0xff] %v8366
    %8399 = vst [vmem:[%s15 + $0xe8] sm:$0xff] %v8367
    %8400 = vst [vmem:[%s15 + $0xf0] sm:$0xff] %v8368
    %8401 = vst [vmem:[%s15 + $0xf8] sm:$0xff] %v8369
    %v8402 = vsub.f32 %v7851, %v7338
    %v8403 = vmul.f32 %v8402, 0.5
    %v8404 = vadd.f32 %v7338, %v8403
    %vm8405 = vcmp.ge.f32.partialorder %v8404, 1.0
    %v8406 = vsel %vm8405, 1, 0
    %v8407 = vcvt.s32.f32 %v8406
    %v8408 = vsub.f32 1.0, %v8407
    %v8409 = vmul.f32 %v8404, %v8408
    %v8410 = vadd.f32 %v7339, %v8407
    %v8411 = vmul.f32 %v896, %v7719
    %v8412 = vmul.f32 %v896, %v7720
    %v8413 = vmul.f32 %v896, %v7721
    %v8414 = vmul.f32 %v896, %v7722
    %v8415 = vmul.f32 %v896, %v7723
    %v8416 = vmul.f32 %v896, %v7724
    %v8417 = vmul.f32 %v896, %v7725
    %v8418 = vmul.f32 %v896, %v7726
    %v8419 = vmul.f32 %v896, %v7727
    %v8420 = vmul.f32 %v896, %v7728
    %v8421 = vmul.f32 %v896, %v7729
    %v8422 = vmul.f32 %v896, %v7730
    %v8423 = vmul.f32 %v896, %v7731
    %v8424 = vmul.f32 %v896, %v7732
    %v8425 = vmul.f32 %v896, %v7733
    %v8426 = vmul.f32 %v896, %v7734
    %v8427 = vadd.f32 %v187, %v8411
    %v8428 = vadd.f32 %v188, %v8412
    %v8429 = vadd.f32 %v189, %v8413
    %v8430 = vadd.f32 %v190, %v8414
    %v8431 = vadd.f32 %v191, %v8415
    %v8432 = vadd.f32 %v192, %v8416
    %v8433 = vadd.f32 %v193, %v8417
    %v8434 = vadd.f32 %v194, %v8418
    %v8435 = vadd.f32 %v195, %v8419
    %v8436 = vadd.f32 %v196, %v8420
    %v8437 = vadd.f32 %v197, %v8421
    %v8438 = vadd.f32 %v198, %v8422
    %v8439 = vadd.f32 %v199, %v8423
    %v8440 = vadd.f32 %v200, %v8424
    %v8441 = vadd.f32 %v201, %v8425
    %v8442 = vadd.f32 %v202, %v8426
    %8443 = vmatprep.subr.mxu0 0.0
    %8444 = vmatpush1.msra.mxu0 %v8427
    %8445 = vmatprep.subr.mxu0 0.0
    %8446 = vmatpush1.msra.mxu0 %v8428
    %8447 = vmatprep.subr.mxu0 0.0
    %8448 = vmatpush1.msra.mxu0 %v8429
    %8449 = vmatprep.subr.mxu0 0.0
    %8450 = vmatpush1.msra.mxu0 %v8430
    %8451 = vmatprep.subr.mxu0 0.0
    %8452 = vmatpush1.msra.mxu0 %v8431
    %8453 = vmatprep.subr.mxu0 0.0
    %8454 = vmatpush1.msra.mxu0 %v8432
    %8455 = vmatprep.subr.mxu0 0.0
    %8456 = vmatpush1.msra.mxu0 %v8433
    %8457 = vmatprep.subr.mxu0 0.0
    %8458 = vmatpush1.msra.mxu0 %v8434
    %8459 = vmatprep.subr.mxu0 0.0
    %8460 = vmatpush1.msra.mxu0 %v8435
    %8461 = vmatprep.subr.mxu0 0.0
    %8462 = vmatpush1.msra.mxu0 %v8436
    %8463 = vmatprep.subr.mxu0 0.0
    %8464 = vmatpush1.msra.mxu0 %v8437
    %8465 = vmatprep.subr.mxu0 0.0
    %8466 = vmatpush1.msra.mxu0 %v8438
    %8467 = vmatprep.subr.mxu0 0.0
    %8468 = vmatpush1.msra.mxu0 %v8439
    %8469 = vmatprep.subr.mxu0 0.0
    %8470 = vmatpush1.msra.mxu0 %v8440
    %8471 = vmatprep.subr.mxu0 0.0
    %8472 = vmatpush1.msra.mxu0 %v8441
    %8473 = vmatprep.subr.mxu0 0.0
    %8474 = vmatpush1.msra.mxu0 %v8442
    %8475 = vmatprep.subr.mxu0 0.0
    %8476 = vmatpush1.msra.mxu0 0.0
    %8477 = vmatprep.subr.mxu0 0.0
    %8478 = vmatpush1.msra.mxu0 0.0
    %8479 = vmatprep.subr.mxu0 0.0
    %8480 = vmatpush1.msra.mxu0 0.0
    %8481 = vmatprep.subr.mxu0 0.0
    %8482 = vmatpush1.msra.mxu0 0.0
    %8483 = vmatprep.subr.mxu0 0.0
    %8484 = vmatpush1.msra.mxu0 0.0
    %8485 = vmatprep.subr.mxu0 0.0
    %8486 = vmatpush1.msra.mxu0 0.0
    %8487 = vmatprep.subr.mxu0 0.0
    %8488 = vmatpush1.msra.mxu0 0.0
    %8489 = vmatprep.subr.mxu0 0.0
    %8490 = vmatpush1.msra.mxu0 0.0
    %8491 = vmatprep.subr.mxu0 0.0
    %8492 = vmatpush1.msra.mxu0 0.0
    %8493 = vmatprep.subr.mxu0 0.0
    %8494 = vmatpush1.msra.mxu0 0.0
    %8495 = vmatprep.subr.mxu0 0.0
    %8496 = vmatpush1.msra.mxu0 0.0
    %8497 = vmatprep.subr.mxu0 0.0
    %8498 = vmatpush1.msra.mxu0 0.0
    %8499 = vmatprep.subr.mxu0 0.0
    %8500 = vmatpush1.msra.mxu0 0.0
    %8501 = vmatprep.subr.mxu0 0.0
    %8502 = vmatpush1.msra.mxu0 0.0
    %8503 = vmatprep.subr.mxu0 0.0
    %8504 = vmatpush1.msra.mxu0 0.0
    %8505 = vmatprep.subr.mxu0 0.0
    %8506 = vmatpush1.msra.mxu0 0.0
    %8507 = vmatprep.mubr.f32.mxu0 0.0
    %8508 = vmatmul.mubr.f32.gmra.mrb[0].mxu0 %v8407
    %v8509 = vpop.f32.mrb[0].mxu0
    %v8510 = vadd.f32 %v933, %v8509
    %v8511 = vpop.f32.mrb[0].mxu0
    %8512 = vdwg.mxu0
    %v8513 = vmul.f32 %v8510, 2.857143
    %v8514 = vsub.f32 %v8513, %v1010
    %v8515 = vtanh.pop %v8514
    %v8516 = vmul.f32 %v8407, %v1018
    %8517 = vxpose.xlu0.b32.start [1/16] %v8516, 128
    %8518 = vxpose.xlu0.b32.cont [2/16] 0.0, 128
    %8519 = vxpose.xlu0.b32.cont [3/16] 0.0, 128
    %8520 = vxpose.xlu0.b32.cont [4/16] 0.0, 128
    %8521 = vxpose.xlu0.b32.cont [5/16] 0.0, 128
    %8522 = vxpose.xlu0.b32.cont [6/16] 0.0, 128
    %8523 = vxpose.xlu0.b32.cont [7/16] 0.0, 128
    %8524 = vxpose.xlu0.b32.cont [8/16] 0.0, 128
    %8525 = vxpose.xlu0.b32.cont [9/16] 0.0, 128
    %8526 = vxpose.xlu0.b32.cont [10/16] 0.0, 128
    %8527 = vxpose.xlu0.b32.cont [11/16] 0.0, 128
    %8528 = vxpose.xlu0.b32.cont [12/16] 0.0, 128
    %8529 = vxpose.xlu0.b32.cont [13/16] 0.0, 128
    %8530 = vxpose.xlu0.b32.cont [14/16] 0.0, 128
    %8531 = vxpose.xlu0.b32.cont [15/16] 0.0, 128
    %8532 = vxpose.xlu0.b32.end [16/16] 0.0, 128
    %v8533 = vpop.trf.xlu0
    %v8534 = vpop.trf.xlu0
    %v8535 = vpop.trf.xlu0
    %v8536 = vpop.trf.xlu0
    %v8537 = vpop.trf.xlu0
    %v8538 = vpop.trf.xlu0
    %v8539 = vpop.trf.xlu0
    %v8540 = vpop.trf.xlu0
    %v8541 = vpop.trf.xlu0
    %v8542 = vpop.trf.xlu0
    %v8543 = vpop.trf.xlu0
    %v8544 = vpop.trf.xlu0
    %v8545 = vpop.trf.xlu0
    %v8546 = vpop.trf.xlu0
    %v8547 = vpop.trf.xlu0
    %v8548 = vpop.trf.xlu0
    %v8550 = vsel %vm406, %v8533, 0
    %v8553 = vsel %vm406, %v8534, 0
    %v8556 = vsel %vm406, %v8535, 0
    %v8559 = vsel %vm406, %v8536, 0
    %v8562 = vsel %vm406, %v8537, 0
    %v8565 = vsel %vm406, %v8538, 0
    %v8568 = vsel %vm406, %v8539, 0
    %v8571 = vsel %vm406, %v8540, 0
    %v8574 = vsel %vm406, %v8541, 0
    %v8577 = vsel %vm406, %v8542, 0
    %v8580 = vsel %vm406, %v8543, 0
    %v8583 = vsel %vm406, %v8544, 0
    %v8586 = vsel %vm406, %v8545, 0
    %v8589 = vsel %vm406, %v8546, 0
    %v8592 = vsel %vm406, %v8547, 0
    %v8595 = vsel %vm406, %v8548, 0
    %8597 = vmatprep.subr.mxu0 0.0
    %8598 = vmatpush1.msra.mxu0 %v8515
    %8599 = vmatprep.subr.mxu0 0.0
    %8600 = vmatpush1.msra.mxu0 0.0
    %8601 = vmatprep.subr.mxu0 0.0
    %8602 = vmatpush1.msra.mxu0 0.0
    %8603 = vmatprep.subr.mxu0 0.0
    %8604 = vmatpush1.msra.mxu0 0.0
    %8605 = vmatprep.subr.mxu0 0.0
    %8606 = vmatpush1.msra.mxu0 0.0
    %8607 = vmatprep.subr.mxu0 0.0
    %8608 = vmatpush1.msra.mxu0 0.0
    %8609 = vmatprep.subr.mxu0 0.0
    %8610 = vmatpush1.msra.mxu0 0.0
    %8611 = vmatprep.subr.mxu0 0.0
    %8612 = vmatpush1.msra.mxu0 0.0
    %8613 = vmatprep.subr.mxu0 0.0
    %8614 = vmatpush1.msra.mxu0 0.0
    %8615 = vmatprep.subr.mxu0 0.0
    %8616 = vmatpush1.msra.mxu0 0.0
    %8617 = vmatprep.subr.mxu0 0.0
    %8618 = vmatpush1.msra.mxu0 0.0
    %8619 = vmatprep.subr.mxu0 0.0
    %8620 = vmatpush1.msra.mxu0 0.0
    %8621 = vmatprep.subr.mxu0 0.0
    %8622 = vmatpush1.msra.mxu0 0.0
    %8623 = vmatprep.subr.mxu0 0.0
    %8624 = vmatpush1.msra.mxu0 0.0
    %8625 = vmatprep.subr.mxu0 0.0
    %8626 = vmatpush1.msra.mxu0 0.0
    %8627 = vmatprep.subr.mxu0 0.0
    %8628 = vmatpush1.msra.mxu0 0.0
    %8629 = vmatprep.subr.mxu0 0.0
    %8630 = vmatpush1.msra.mxu0 0.0
    %8631 = vmatprep.subr.mxu0 0.0
    %8632 = vmatpush1.msra.mxu0 0.0
    %8633 = vmatprep.subr.mxu0 0.0
    %8634 = vmatpush1.msra.mxu0 0.0
    %8635 = vmatprep.subr.mxu0 0.0
    %8636 = vmatpush1.msra.mxu0 0.0
    %8637 = vmatprep.subr.mxu0 0.0
    %8638 = vmatpush1.msra.mxu0 0.0
    %8639 = vmatprep.subr.mxu0 0.0
    %8640 = vmatpush1.msra.mxu0 0.0
    %8641 = vmatprep.subr.mxu0 0.0
    %8642 = vmatpush1.msra.mxu0 0.0
    %8643 = vmatprep.subr.mxu0 0.0
    %8644 = vmatpush1.msra.mxu0 0.0
    %8645 = vmatprep.subr.mxu0 0.0
    %8646 = vmatpush1.msra.mxu0 0.0
    %8647 = vmatprep.subr.mxu0 0.0
    %8648 = vmatpush1.msra.mxu0 0.0
    %8649 = vmatprep.subr.mxu0 0.0
    %8650 = vmatpush1.msra.mxu0 0.0
    %8651 = vmatprep.subr.mxu0 0.0
    %8652 = vmatpush1.msra.mxu0 0.0
    %8653 = vmatprep.subr.mxu0 0.0
    %8654 = vmatpush1.msra.mxu0 0.0
    %8655 = vmatprep.subr.mxu0 0.0
    %8656 = vmatpush1.msra.mxu0 0.0
    %8657 = vmatprep.subr.mxu0 0.0
    %8658 = vmatpush1.msra.mxu0 0.0
    %8659 = vmatprep.subr.mxu0 0.0
    %8660 = vmatpush1.msra.mxu0 0.0
    %8661 = vmatprep.mubr.f32.mxu0 0.0
    %8662 = vmatmul.mubr.f32.gmra.mrb[0].mxu0 %v8550
    %v8663 = vpop.f32.mrb[0].mxu0
    %v8664 = vadd.f32 0.0, %v8663
    %v8665 = vpop.f32.mrb[0].mxu0
    %8666 = vmatprep.mubr.f32.mxu0 0.0
    %8667 = vmatmul.mubr.f32.gmra.mrb[0].mxu0 %v8553
    %v8668 = vpop.f32.mrb[0].mxu0
    %v8669 = vadd.f32 0.0, %v8668
    %v8670 = vpop.f32.mrb[0].mxu0
    %8671 = vmatprep.mubr.f32.mxu0 0.0
    %8672 = vmatmul.mubr.f32.gmra.mrb[0].mxu0 %v8556
    %v8673 = vpop.f32.mrb[0].mxu0
    %v8674 = vadd.f32 0.0, %v8673
    %v8675 = vpop.f32.mrb[0].mxu0
    %8676 = vmatprep.mubr.f32.mxu0 0.0
    %8677 = vmatmul.mubr.f32.gmra.mrb[0].mxu0 %v8559
    %v8678 = vpop.f32.mrb[0].mxu0
    %v8679 = vadd.f32 0.0, %v8678
    %v8680 = vpop.f32.mrb[0].mxu0
    %8681 = vmatprep.mubr.f32.mxu0 0.0
    %8682 = vmatmul.mubr.f32.gmra.mrb[0].mxu0 %v8562
    %v8683 = vpop.f32.mrb[0].mxu0
    %v8684 = vadd.f32 0.0, %v8683
    %v8685 = vpop.f32.mrb[0].mxu0
    %8686 = vmatprep.mubr.f32.mxu0 0.0
    %8687 = vmatmul.mubr.f32.gmra.mrb[0].mxu0 %v8565
    %v8688 = vpop.f32.mrb[0].mxu0
    %v8689 = vadd.f32 0.0, %v8688
    %v8690 = vpop.f32.mrb[0].mxu0
    %8691 = vmatprep.mubr.f32.mxu0 0.0
    %8692 = vmatmul.mubr.f32.gmra.mrb[0].mxu0 %v8568
    %v8693 = vpop.f32.mrb[0].mxu0
    %v8694 = vadd.f32 0.0, %v8693
    %v8695 = vpop.f32.mrb[0].mxu0
    %8696 = vmatprep.mubr.f32.mxu0 0.0
    %8697 = vmatmul.mubr.f32.gmra.mrb[0].mxu0 %v8571
    %v8698 = vpop.f32.mrb[0].mxu0
    %v8699 = vadd.f32 0.0, %v8698
    %v8700 = vpop.f32.mrb[0].mxu0
    %8701 = vmatprep.mubr.f32.mxu0 0.0
    %8702 = vmatmul.mubr.f32.gmra.mrb[0].mxu0 %v8574
    %v8703 = vpop.f32.mrb[0].mxu0
    %v8704 = vadd.f32 0.0, %v8703
    %v8705 = vpop.f32.mrb[0].mxu0
    %8706 = vmatprep.mubr.f32.mxu0 0.0
    %8707 = vmatmul.mubr.f32.gmra.mrb[0].mxu0 %v8577
    %v8708 = vpop.f32.mrb[0].mxu0
    %v8709 = vadd.f32 0.0, %v8708
    %v8710 = vpop.f32.mrb[0].mxu0
    %8711 = vmatprep.mubr.f32.mxu0 0.0
    %8712 = vmatmul.mubr.f32.gmra.mrb[0].mxu0 %v8580
    %v8713 = vpop.f32.mrb[0].mxu0
    %v8714 = vadd.f32 0.0, %v8713
    %v8715 = vpop.f32.mrb[0].mxu0
    %8716 = vmatprep.mubr.f32.mxu0 0.0
    %8717 = vmatmul.mubr.f32.gmra.mrb[0].mxu0 %v8583
    %v8718 = vpop.f32.mrb[0].mxu0
    %v8719 = vadd.f32 0.0, %v8718
    %v8720 = vpop.f32.mrb[0].mxu0
    %8721 = vmatprep.mubr.f32.mxu0 0.0
    %8722 = vmatmul.mubr.f32.gmra.mrb[0].mxu0 %v8586
    %v8723 = vpop.f32.mrb[0].mxu0
    %v8724 = vadd.f32 0.0, %v8723
    %v8725 = vpop.f32.mrb[0].mxu0
    %8726 = vmatprep.mubr.f32.mxu0 0.0
    %8727 = vmatmul.mubr.f32.gmra.mrb[0].mxu0 %v8589
    %v8728 = vpop.f32.mrb[0].mxu0
    %v8729 = vadd.f32 0.0, %v8728
    %v8730 = vpop.f32.mrb[0].mxu0
    %8731 = vmatprep.mubr.f32.mxu0 0.0
    %8732 = vmatmul.mubr.f32.gmra.mrb[0].mxu0 %v8592
    %v8733 = vpop.f32.mrb[0].mxu0
    %v8734 = vadd.f32 0.0, %v8733
    %v8735 = vpop.f32.mrb[0].mxu0
    %8736 = vmatprep.mubr.f32.mxu0 0.0
    %8737 = vmatmul.mubr.f32.gmra.mrb[0].mxu0 %v8595
    %v8738 = vpop.f32.mrb[0].mxu0
    %v8739 = vadd.f32 0.0, %v8738
    %v8740 = vpop.f32.mrb[0].mxu0
    %8741 = vdwg.mxu0
    %v8742 = vmul.f32 %v7719, 0.95
    %v8743 = vmul.f32 %v7720, 0.95
    %v8744 = vmul.f32 %v7721, 0.95
    %v8745 = vmul.f32 %v7722, 0.95
    %v8746 = vmul.f32 %v7723, 0.95
    %v8747 = vmul.f32 %v7724, 0.95
    %v8748 = vmul.f32 %v7725, 0.95
    %v8749 = vmul.f32 %v7726, 0.95
    %v8750 = vmul.f32 %v7727, 0.95
    %v8751 = vmul.f32 %v7728, 0.95
    %v8752 = vmul.f32 %v7729, 0.95
    %v8753 = vmul.f32 %v7730, 0.95
    %v8754 = vmul.f32 %v7731, 0.95
    %v8755 = vmul.f32 %v7732, 0.95
    %v8756 = vmul.f32 %v7733, 0.95
    %v8757 = vmul.f32 %v7734, 0.95
    %v8758 = vadd.f32 %v8742, %v8664
    %v8759 = vadd.f32 %v8743, %v8669
    %v8760 = vadd.f32 %v8744, %v8674
    %v8761 = vadd.f32 %v8745, %v8679
    %v8762 = vadd.f32 %v8746, %v8684
    %v8763 = vadd.f32 %v8747, %v8689
    %v8764 = vadd.f32 %v8748, %v8694
    %v8765 = vadd.f32 %v8749, %v8699
    %v8766 = vadd.f32 %v8750, %v8704
    %v8767 = vadd.f32 %v8751, %v8709
    %v8768 = vadd.f32 %v8752, %v8714
    %v8769 = vadd.f32 %v8753, %v8719
    %v8770 = vadd.f32 %v8754, %v8724
    %v8771 = vadd.f32 %v8755, %v8729
    %v8772 = vadd.f32 %v8756, %v8734
    %v8773 = vadd.f32 %v8757, %v8739
    %v8774 = vmax.f32 %v8758, -4.0
    %v8775 = vmax.f32 %v8759, -4.0
    %v8776 = vmax.f32 %v8760, -4.0
    %v8777 = vmax.f32 %v8761, -4.0
    %v8778 = vmax.f32 %v8762, -4.0
    %v8779 = vmax.f32 %v8763, -4.0
    %v8780 = vmax.f32 %v8764, -4.0
    %v8781 = vmax.f32 %v8765, -4.0
    %v8782 = vmax.f32 %v8766, -4.0
    %v8783 = vmax.f32 %v8767, -4.0
    %v8784 = vmax.f32 %v8768, -4.0
    %v8785 = vmax.f32 %v8769, -4.0
    %v8786 = vmax.f32 %v8770, -4.0
    %v8787 = vmax.f32 %v8771, -4.0
    %v8788 = vmax.f32 %v8772, -4.0
    %v8789 = vmax.f32 %v8773, -4.0
    %v8790 = vmin.f32 %v8774, 4.0
    %v8791 = vmin.f32 %v8775, 4.0
    %v8792 = vmin.f32 %v8776, 4.0
    %v8793 = vmin.f32 %v8777, 4.0
    %v8794 = vmin.f32 %v8778, 4.0
    %v8795 = vmin.f32 %v8779, 4.0
    %v8796 = vmin.f32 %v8780, 4.0
    %v8797 = vmin.f32 %v8781, 4.0
    %v8798 = vmin.f32 %v8782, 4.0
    %v8799 = vmin.f32 %v8783, 4.0
    %v8800 = vmin.f32 %v8784, 4.0
    %v8801 = vmin.f32 %v8785, 4.0
    %v8802 = vmin.f32 %v8786, 4.0
    %v8803 = vmin.f32 %v8787, 4.0
    %v8804 = vmin.f32 %v8788, 4.0
    %v8805 = vmin.f32 %v8789, 4.0
    %v8806 = vsub.f32 %v8510, %v7742
    %v8807 = vmul.f32 %v8806, 0.5
    %v8808 = vadd.f32 %v7742, %v8807
    %vm8809 = vcmp.ge.f32.partialorder %v8808, 1.0
    %v8810 = vsel %vm8809, 1, 0
    %v8811 = vcvt.s32.f32 %v8810
    %v8812 = vsub.f32 1.0, %v8811
    %v8813 = vmul.f32 %v8808, %v8812
    %v8814 = vadd.f32 %v7743, %v8811
    %v8815 = vld [vmem:[%s15] sm:$0xff]
    %v8816 = vld [vmem:[%s15 + $0x8] sm:$0xff]
    %v8817 = vld [vmem:[%s15 + $0x10] sm:$0xff]
    %v8818 = vld [vmem:[%s15 + $0x18] sm:$0xff]
    %v8819 = vld [vmem:[%s15 + $0x20] sm:$0xff]
    %v8820 = vld [vmem:[%s15 + $0x28] sm:$0xff]
    %v8821 = vld [vmem:[%s15 + $0x30] sm:$0xff]
    %v8822 = vld [vmem:[%s15 + $0x38] sm:$0xff]
    %v8823 = vld [vmem:[%s15 + $0x40] sm:$0xff]
    %v8824 = vld [vmem:[%s15 + $0x48] sm:$0xff]
    %v8825 = vld [vmem:[%s15 + $0x50] sm:$0xff]
    %v8826 = vld [vmem:[%s15 + $0x58] sm:$0xff]
    %v8827 = vld [vmem:[%s15 + $0x60] sm:$0xff]
    %v8828 = vld [vmem:[%s15 + $0x68] sm:$0xff]
    %v8829 = vld [vmem:[%s15 + $0x70] sm:$0xff]
    %v8830 = vld [vmem:[%s15 + $0x78] sm:$0xff]
    %v8831 = vld [vmem:[%s15 + $0x80] sm:$0xff]
    %v8832 = vld [vmem:[%s15 + $0x88] sm:$0xff]
    %v8833 = vld [vmem:[%s15 + $0x90] sm:$0xff]
    %v8834 = vld [vmem:[%s15 + $0x98] sm:$0xff]
    %v8835 = vld [vmem:[%s15 + $0xa0] sm:$0xff]
    %v8836 = vld [vmem:[%s15 + $0xa8] sm:$0xff]
    %v8837 = vld [vmem:[%s15 + $0xb0] sm:$0xff]
    %v8838 = vld [vmem:[%s15 + $0xb8] sm:$0xff]
    %v8839 = vld [vmem:[%s15 + $0xc0] sm:$0xff]
    %v8840 = vld [vmem:[%s15 + $0xc8] sm:$0xff]
    %v8841 = vld [vmem:[%s15 + $0xd0] sm:$0xff]
    %v8842 = vld [vmem:[%s15 + $0xd8] sm:$0xff]
    %v8843 = vld [vmem:[%s15 + $0xe0] sm:$0xff]
    %v8844 = vld [vmem:[%s15 + $0xe8] sm:$0xff]
    %v8845 = vld [vmem:[%s15 + $0xf0] sm:$0xff]
    %v8846 = vld [vmem:[%s15 + $0xf8] sm:$0xff]
    %8847 = vmatprep.subr.mxu0 0.0
    %8848 = vmatpush1.msra.mxu0 %v8815
    %8849 = vmatprep.subr.mxu0 0.0
    %8850 = vmatpush1.msra.mxu0 %v8816
    %8851 = vmatprep.subr.mxu0 0.0
    %8852 = vmatpush1.msra.mxu0 %v8817
    %8853 = vmatprep.subr.mxu0 0.0
    %8854 = vmatpush1.msra.mxu0 %v8818
    %8855 = vmatprep.subr.mxu0 0.0
    %8856 = vmatpush1.msra.mxu0 %v8819
    %8857 = vmatprep.subr.mxu0 0.0
    %8858 = vmatpush1.msra.mxu0 %v8820
    %8859 = vmatprep.subr.mxu0 0.0
    %8860 = vmatpush1.msra.mxu0 %v8821
    %8861 = vmatprep.subr.mxu0 0.0
    %8862 = vmatpush1.msra.mxu0 %v8822
    %8863 = vmatprep.subr.mxu0 0.0
    %8864 = vmatpush1.msra.mxu0 %v8823
    %8865 = vmatprep.subr.mxu0 0.0
    %8866 = vmatpush1.msra.mxu0 %v8824
    %8867 = vmatprep.subr.mxu0 0.0
    %8868 = vmatpush1.msra.mxu0 %v8825
    %8869 = vmatprep.subr.mxu0 0.0
    %8870 = vmatpush1.msra.mxu0 %v8826
    %8871 = vmatprep.subr.mxu0 0.0
    %8872 = vmatpush1.msra.mxu0 %v8827
    %8873 = vmatprep.subr.mxu0 0.0
    %8874 = vmatpush1.msra.mxu0 %v8828
    %8875 = vmatprep.subr.mxu0 0.0
    %8876 = vmatpush1.msra.mxu0 %v8829
    %8877 = vmatprep.subr.mxu0 0.0
    %8878 = vmatpush1.msra.mxu0 %v8830
    %8879 = vmatprep.subr.mxu0 0.0
    %8880 = vmatpush1.msra.mxu0 %v8831
    %8881 = vmatprep.subr.mxu0 0.0
    %8882 = vmatpush1.msra.mxu0 %v8832
    %8883 = vmatprep.subr.mxu0 0.0
    %8884 = vmatpush1.msra.mxu0 %v8833
    %8885 = vmatprep.subr.mxu0 0.0
    %8886 = vmatpush1.msra.mxu0 %v8834
    %8887 = vmatprep.subr.mxu0 0.0
    %8888 = vmatpush1.msra.mxu0 %v8835
    %8889 = vmatprep.subr.mxu0 0.0
    %8890 = vmatpush1.msra.mxu0 %v8836
    %8891 = vmatprep.subr.mxu0 0.0
    %8892 = vmatpush1.msra.mxu0 %v8837
    %8893 = vmatprep.subr.mxu0 0.0
    %8894 = vmatpush1.msra.mxu0 %v8838
    %8895 = vmatprep.subr.mxu0 0.0
    %8896 = vmatpush1.msra.mxu0 %v8839
    %8897 = vmatprep.subr.mxu0 0.0
    %8898 = vmatpush1.msra.mxu0 %v8840
    %8899 = vmatprep.subr.mxu0 0.0
    %8900 = vmatpush1.msra.mxu0 %v8841
    %8901 = vmatprep.subr.mxu0 0.0
    %8902 = vmatpush1.msra.mxu0 %v8842
    %8903 = vmatprep.subr.mxu0 0.0
    %8904 = vmatpush1.msra.mxu0 %v8843
    %8905 = vmatprep.subr.mxu0 0.0
    %8906 = vmatpush1.msra.mxu0 %v8844
    %8907 = vmatprep.subr.mxu0 0.0
    %8908 = vmatpush1.msra.mxu0 %v8845
    %8909 = vmatprep.subr.mxu0 0.0
    %8910 = vmatpush1.msra.mxu0 %v8846
    %8911 = vmatprep.mubr.f32.mxu0 %v64
    %8912 = vmatmul.mubr.f32.gmra.mrb[0].mxu0 %v63
    %v8913 = vpop.f32.mrb[0].mxu0
    %v8914 = vadd.f32 0.0, %v8913
    %v8915 = vpop.f32.mrb[0].mxu0
    %8916 = vdwg.mxu0
    %v8917 = vmul.f32 %v164, 0.8187307
    %v8918 = vadd.f32 %v8917, %v325
    %s8919 = smul.f32 %s61, 0.8187307
    %v8920 = vstv %s8919
    %v8921 = vmul.f32 %v8920, %v8914
    %v8922 = vadd.f32 %v8918, %v8921
    %v8923 = vmul.f32 %v8922, 2.857143
    %v8924 = vsub.f32 %v8923, %v336
    %v8925 = vtanh.pop %v8924
    %v8926 = vmul.f32 %v179, 0.10234134
    %v8927 = vmul.f32 %v180, 0.10234134
    %8928 = vxpose.xlu0.b32.start [1/16] %v8926, 128
    %8929 = vxpose.xlu0.b32.cont [2/16] 0.0, 128
    %8930 = vxpose.xlu0.b32.cont [3/16] 0.0, 128
    %8931 = vxpose.xlu0.b32.cont [4/16] 0.0, 128
    %8932 = vxpose.xlu0.b32.cont [5/16] 0.0, 128
    %8933 = vxpose.xlu0.b32.cont [6/16] 0.0, 128
    %8934 = vxpose.xlu0.b32.cont [7/16] 0.0, 128
    %8935 = vxpose.xlu0.b32.cont [8/16] 0.0, 128
    %8936 = vxpose.xlu0.b32.cont [9/16] 0.0, 128
    %8937 = vxpose.xlu0.b32.cont [10/16] 0.0, 128
    %8938 = vxpose.xlu0.b32.cont [11/16] 0.0, 128
    %8939 = vxpose.xlu0.b32.cont [12/16] 0.0, 128
    %8940 = vxpose.xlu0.b32.cont [13/16] 0.0, 128
    %8941 = vxpose.xlu0.b32.cont [14/16] 0.0, 128
    %8942 = vxpose.xlu0.b32.cont [15/16] 0.0, 128
    %8943 = vxpose.xlu0.b32.end [16/16] 0.0, 128
    %v8944 = vpop.trf.xlu0
    %v8945 = vpop.trf.xlu0
    %v8946 = vpop.trf.xlu0
    %v8947 = vpop.trf.xlu0
    %v8948 = vpop.trf.xlu0
    %v8949 = vpop.trf.xlu0
    %v8950 = vpop.trf.xlu0
    %v8951 = vpop.trf.xlu0
    %v8952 = vpop.trf.xlu0
    %v8953 = vpop.trf.xlu0
    %v8954 = vpop.trf.xlu0
    %v8955 = vpop.trf.xlu0
    %v8956 = vpop.trf.xlu0
    %v8957 = vpop.trf.xlu0
    %v8958 = vpop.trf.xlu0
    %v8959 = vpop.trf.xlu0
    %8960 = vxpose.xlu0.b32.start [1/16] %v8927, 128
    %8961 = vxpose.xlu0.b32.cont [2/16] 0.0, 128
    %8962 = vxpose.xlu0.b32.cont [3/16] 0.0, 128
    %8963 = vxpose.xlu0.b32.cont [4/16] 0.0, 128
    %8964 = vxpose.xlu0.b32.cont [5/16] 0.0, 128
    %8965 = vxpose.xlu0.b32.cont [6/16] 0.0, 128
    %8966 = vxpose.xlu0.b32.cont [7/16] 0.0, 128
    %8967 = vxpose.xlu0.b32.cont [8/16] 0.0, 128
    %8968 = vxpose.xlu0.b32.cont [9/16] 0.0, 128
    %8969 = vxpose.xlu0.b32.cont [10/16] 0.0, 128
    %8970 = vxpose.xlu0.b32.cont [11/16] 0.0, 128
    %8971 = vxpose.xlu0.b32.cont [12/16] 0.0, 128
    %8972 = vxpose.xlu0.b32.cont [13/16] 0.0, 128
    %8973 = vxpose.xlu0.b32.cont [14/16] 0.0, 128
    %8974 = vxpose.xlu0.b32.cont [15/16] 0.0, 128
    %8975 = vxpose.xlu0.b32.end [16/16] 0.0, 128
    %v8976 = vpop.trf.xlu0
    %v8977 = vpop.trf.xlu0
    %v8978 = vpop.trf.xlu0
    %v8979 = vpop.trf.xlu0
    %v8980 = vpop.trf.xlu0
    %v8981 = vpop.trf.xlu0
    %v8982 = vpop.trf.xlu0
    %v8983 = vpop.trf.xlu0
    %v8984 = vpop.trf.xlu0
    %v8985 = vpop.trf.xlu0
    %v8986 = vpop.trf.xlu0
    %v8987 = vpop.trf.xlu0
    %v8988 = vpop.trf.xlu0
    %v8989 = vpop.trf.xlu0
    %v8990 = vpop.trf.xlu0
    %v8991 = vpop.trf.xlu0
    %v8993 = vsel %vm406, %v8944, 0
    %v8996 = vsel %vm406, %v8945, 0
    %v8999 = vsel %vm406, %v8946, 0
    %v9002 = vsel %vm406, %v8947, 0
    %v9005 = vsel %vm406, %v8948, 0
    %v9008 = vsel %vm406, %v8949, 0
    %v9011 = vsel %vm406, %v8950, 0
    %v9014 = vsel %vm406, %v8951, 0
    %v9017 = vsel %vm406, %v8952, 0
    %v9020 = vsel %vm406, %v8953, 0
    %v9023 = vsel %vm406, %v8954, 0
    %v9026 = vsel %vm406, %v8955, 0
    %v9029 = vsel %vm406, %v8956, 0
    %v9032 = vsel %vm406, %v8957, 0
    %v9035 = vsel %vm406, %v8958, 0
    %v9038 = vsel %vm406, %v8959, 0
    %v9041 = vsel %vm406, %v8976, 0
    %v9044 = vsel %vm406, %v8977, 0
    %v9047 = vsel %vm406, %v8978, 0
    %v9050 = vsel %vm406, %v8979, 0
    %v9053 = vsel %vm406, %v8980, 0
    %v9056 = vsel %vm406, %v8981, 0
    %v9059 = vsel %vm406, %v8982, 0
    %v9062 = vsel %vm406, %v8983, 0
    %v9065 = vsel %vm406, %v8984, 0
    %v9068 = vsel %vm406, %v8985, 0
    %v9071 = vsel %vm406, %v8986, 0
    %v9074 = vsel %vm406, %v8987, 0
    %v9077 = vsel %vm406, %v8988, 0
    %v9080 = vsel %vm406, %v8989, 0
    %v9083 = vsel %vm406, %v8990, 0
    %v9086 = vsel %vm406, %v8991, 0
    %9088 = vmatprep.subr.mxu0 0.0
    %9089 = vmatpush1.msra.mxu0 %v8925
    %9090 = vmatprep.subr.mxu0 0.0
    %9091 = vmatpush1.msra.mxu0 0.0
    %9092 = vmatprep.subr.mxu0 0.0
    %9093 = vmatpush1.msra.mxu0 0.0
    %9094 = vmatprep.subr.mxu0 0.0
    %9095 = vmatpush1.msra.mxu0 0.0
    %9096 = vmatprep.subr.mxu0 0.0
    %9097 = vmatpush1.msra.mxu0 0.0
    %9098 = vmatprep.subr.mxu0 0.0
    %9099 = vmatpush1.msra.mxu0 0.0
    %9100 = vmatprep.subr.mxu0 0.0
    %9101 = vmatpush1.msra.mxu0 0.0
    %9102 = vmatprep.subr.mxu0 0.0
    %9103 = vmatpush1.msra.mxu0 0.0
    %9104 = vmatprep.subr.mxu0 0.0
    %9105 = vmatpush1.msra.mxu0 0.0
    %9106 = vmatprep.subr.mxu0 0.0
    %9107 = vmatpush1.msra.mxu0 0.0
    %9108 = vmatprep.subr.mxu0 0.0
    %9109 = vmatpush1.msra.mxu0 0.0
    %9110 = vmatprep.subr.mxu0 0.0
    %9111 = vmatpush1.msra.mxu0 0.0
    %9112 = vmatprep.subr.mxu0 0.0
    %9113 = vmatpush1.msra.mxu0 0.0
    %9114 = vmatprep.subr.mxu0 0.0
    %9115 = vmatpush1.msra.mxu0 0.0
    %9116 = vmatprep.subr.mxu0 0.0
    %9117 = vmatpush1.msra.mxu0 0.0
    %9118 = vmatprep.subr.mxu0 0.0
    %9119 = vmatpush1.msra.mxu0 0.0
    %9120 = vmatprep.subr.mxu0 0.0
    %9121 = vmatpush1.msra.mxu0 0.0
    %9122 = vmatprep.subr.mxu0 0.0
    %9123 = vmatpush1.msra.mxu0 0.0
    %9124 = vmatprep.subr.mxu0 0.0
    %9125 = vmatpush1.msra.mxu0 0.0
    %9126 = vmatprep.subr.mxu0 0.0
    %9127 = vmatpush1.msra.mxu0 0.0
    %9128 = vmatprep.subr.mxu0 0.0
    %9129 = vmatpush1.msra.mxu0 0.0
    %9130 = vmatprep.subr.mxu0 0.0
    %9131 = vmatpush1.msra.mxu0 0.0
    %9132 = vmatprep.subr.mxu0 0.0
    %9133 = vmatpush1.msra.mxu0 0.0
    %9134 = vmatprep.subr.mxu0 0.0
    %9135 = vmatpush1.msra.mxu0 0.0
    %9136 = vmatprep.subr.mxu0 0.0
    %9137 = vmatpush1.msra.mxu0 0.0
    %9138 = vmatprep.subr.mxu0 0.0
    %9139 = vmatpush1.msra.mxu0 0.0
    %9140 = vmatprep.subr.mxu0 0.0
    %9141 = vmatpush1.msra.mxu0 0.0
    %9142 = vmatprep.subr.mxu0 0.0
    %9143 = vmatpush1.msra.mxu0 0.0
    %9144 = vmatprep.subr.mxu0 0.0
    %9145 = vmatpush1.msra.mxu0 0.0
    %9146 = vmatprep.subr.mxu0 0.0
    %9147 = vmatpush1.msra.mxu0 0.0
    %9148 = vmatprep.subr.mxu0 0.0
    %9149 = vmatpush1.msra.mxu0 0.0
    %9150 = vmatprep.subr.mxu0 0.0
    %9151 = vmatpush1.msra.mxu0 0.0
    %9152 = vmatprep.mubr.f32.mxu0 0.0
    %9153 = vmatmul.mubr.f32.gmra.mrb[0].mxu0 %v8993
    %v9154 = vpop.f32.mrb[0].mxu0
    %v9155 = vadd.f32 0.0, %v9154
    %v9156 = vpop.f32.mrb[0].mxu0
    %9157 = vmatprep.mubr.f32.mxu0 0.0
    %9158 = vmatmul.mubr.f32.gmra.mrb[0].mxu0 %v8996
    %v9159 = vpop.f32.mrb[0].mxu0
    %v9160 = vadd.f32 0.0, %v9159
    %v9161 = vpop.f32.mrb[0].mxu0
    %9162 = vmatprep.mubr.f32.mxu0 0.0
    %9163 = vmatmul.mubr.f32.gmra.mrb[0].mxu0 %v8999
    %v9164 = vpop.f32.mrb[0].mxu0
    %v9165 = vadd.f32 0.0, %v9164
    %v9166 = vpop.f32.mrb[0].mxu0
    %9167 = vmatprep.mubr.f32.mxu0 0.0
    %9168 = vmatmul.mubr.f32.gmra.mrb[0].mxu0 %v9002
    %v9169 = vpop.f32.mrb[0].mxu0
    %v9170 = vadd.f32 0.0, %v9169
    %v9171 = vpop.f32.mrb[0].mxu0
    %9172 = vmatprep.mubr.f32.mxu0 0.0
    %9173 = vmatmul.mubr.f32.gmra.mrb[0].mxu0 %v9005
    %v9174 = vpop.f32.mrb[0].mxu0
    %v9175 = vadd.f32 0.0, %v9174
    %v9176 = vpop.f32.mrb[0].mxu0
    %9177 = vmatprep.mubr.f32.mxu0 0.0
    %9178 = vmatmul.mubr.f32.gmra.mrb[0].mxu0 %v9008
    %v9179 = vpop.f32.mrb[0].mxu0
    %v9180 = vadd.f32 0.0, %v9179
    %v9181 = vpop.f32.mrb[0].mxu0
    %9182 = vmatprep.mubr.f32.mxu0 0.0
    %9183 = vmatmul.mubr.f32.gmra.mrb[0].mxu0 %v9011
    %v9184 = vpop.f32.mrb[0].mxu0
    %v9185 = vadd.f32 0.0, %v9184
    %v9186 = vpop.f32.mrb[0].mxu0
    %9187 = vmatprep.mubr.f32.mxu0 0.0
    %9188 = vmatmul.mubr.f32.gmra.mrb[0].mxu0 %v9014
    %v9189 = vpop.f32.mrb[0].mxu0
    %v9190 = vadd.f32 0.0, %v9189
    %v9191 = vpop.f32.mrb[0].mxu0
    %9192 = vmatprep.mubr.f32.mxu0 0.0
    %9193 = vmatmul.mubr.f32.gmra.mrb[0].mxu0 %v9017
    %v9194 = vpop.f32.mrb[0].mxu0
    %v9195 = vadd.f32 0.0, %v9194
    %v9196 = vpop.f32.mrb[0].mxu0
    %9197 = vmatprep.mubr.f32.mxu0 0.0
    %9198 = vmatmul.mubr.f32.gmra.mrb[0].mxu0 %v9020
    %v9199 = vpop.f32.mrb[0].mxu0
    %v9200 = vadd.f32 0.0, %v9199
    %v9201 = vpop.f32.mrb[0].mxu0
    %9202 = vmatprep.mubr.f32.mxu0 0.0
    %9203 = vmatmul.mubr.f32.gmra.mrb[0].mxu0 %v9023
    %v9204 = vpop.f32.mrb[0].mxu0
    %v9205 = vadd.f32 0.0, %v9204
    %v9206 = vpop.f32.mrb[0].mxu0
    %9207 = vmatprep.mubr.f32.mxu0 0.0
    %9208 = vmatmul.mubr.f32.gmra.mrb[0].mxu0 %v9026
    %v9209 = vpop.f32.mrb[0].mxu0
    %v9210 = vadd.f32 0.0, %v9209
    %v9211 = vpop.f32.mrb[0].mxu0
    %9212 = vmatprep.mubr.f32.mxu0 0.0
    %9213 = vmatmul.mubr.f32.gmra.mrb[0].mxu0 %v9029
    %v9214 = vpop.f32.mrb[0].mxu0
    %v9215 = vadd.f32 0.0, %v9214
    %v9216 = vpop.f32.mrb[0].mxu0
    %9217 = vmatprep.mubr.f32.mxu0 0.0
    %9218 = vmatmul.mubr.f32.gmra.mrb[0].mxu0 %v9032
    %v9219 = vpop.f32.mrb[0].mxu0
    %v9220 = vadd.f32 0.0, %v9219
    %v9221 = vpop.f32.mrb[0].mxu0
    %9222 = vmatprep.mubr.f32.mxu0 0.0
    %9223 = vmatmul.mubr.f32.gmra.mrb[0].mxu0 %v9035
    %v9224 = vpop.f32.mrb[0].mxu0
    %v9225 = vadd.f32 0.0, %v9224
    %v9226 = vpop.f32.mrb[0].mxu0
    %9227 = vmatprep.mubr.f32.mxu0 0.0
    %9228 = vmatmul.mubr.f32.gmra.mrb[0].mxu0 %v9038
    %v9229 = vpop.f32.mrb[0].mxu0
    %v9230 = vadd.f32 0.0, %v9229
    %v9231 = vpop.f32.mrb[0].mxu0
    %9232 = vmatprep.mubr.f32.mxu0 0.0
    %9233 = vmatmul.mubr.f32.gmra.mrb[0].mxu0 %v9041
    %v9234 = vpop.f32.mrb[0].mxu0
    %v9235 = vadd.f32 0.0, %v9234
    %v9236 = vpop.f32.mrb[0].mxu0
    %9237 = vmatprep.mubr.f32.mxu0 0.0
    %9238 = vmatmul.mubr.f32.gmra.mrb[0].mxu0 %v9044
    %v9239 = vpop.f32.mrb[0].mxu0
    %v9240 = vadd.f32 0.0, %v9239
    %v9241 = vpop.f32.mrb[0].mxu0
    %9242 = vmatprep.mubr.f32.mxu0 0.0
    %9243 = vmatmul.mubr.f32.gmra.mrb[0].mxu0 %v9047
    %v9244 = vpop.f32.mrb[0].mxu0
    %v9245 = vadd.f32 0.0, %v9244
    %v9246 = vpop.f32.mrb[0].mxu0
    %9247 = vmatprep.mubr.f32.mxu0 0.0
    %9248 = vmatmul.mubr.f32.gmra.mrb[0].mxu0 %v9050
    %v9249 = vpop.f32.mrb[0].mxu0
    %v9250 = vadd.f32 0.0, %v9249
    %v9251 = vpop.f32.mrb[0].mxu0
    %9252 = vmatprep.mubr.f32.mxu0 0.0
    %9253 = vmatmul.mubr.f32.gmra.mrb[0].mxu0 %v9053
    %v9254 = vpop.f32.mrb[0].mxu0
    %v9255 = vadd.f32 0.0, %v9254
    %v9256 = vpop.f32.mrb[0].mxu0
    %9257 = vmatprep.mubr.f32.mxu0 0.0
    %9258 = vmatmul.mubr.f32.gmra.mrb[0].mxu0 %v9056
    %v9259 = vpop.f32.mrb[0].mxu0
    %v9260 = vadd.f32 0.0, %v9259
    %v9261 = vpop.f32.mrb[0].mxu0
    %9262 = vmatprep.mubr.f32.mxu0 0.0
    %9263 = vmatmul.mubr.f32.gmra.mrb[0].mxu0 %v9059
    %v9264 = vpop.f32.mrb[0].mxu0
    %v9265 = vadd.f32 0.0, %v9264
    %v9266 = vpop.f32.mrb[0].mxu0
    %9267 = vmatprep.mubr.f32.mxu0 0.0
    %9268 = vmatmul.mubr.f32.gmra.mrb[0].mxu0 %v9062
    %v9269 = vpop.f32.mrb[0].mxu0
    %v9270 = vadd.f32 0.0, %v9269
    %v9271 = vpop.f32.mrb[0].mxu0
    %9272 = vmatprep.mubr.f32.mxu0 0.0
    %9273 = vmatmul.mubr.f32.gmra.mrb[0].mxu0 %v9065
    %v9274 = vpop.f32.mrb[0].mxu0
    %v9275 = vadd.f32 0.0, %v9274
    %v9276 = vpop.f32.mrb[0].mxu0
    %9277 = vmatprep.mubr.f32.mxu0 0.0
    %9278 = vmatmul.mubr.f32.gmra.mrb[0].mxu0 %v9068
    %v9279 = vpop.f32.mrb[0].mxu0
    %v9280 = vadd.f32 0.0, %v9279
    %v9281 = vpop.f32.mrb[0].mxu0
    %9282 = vmatprep.mubr.f32.mxu0 0.0
    %9283 = vmatmul.mubr.f32.gmra.mrb[0].mxu0 %v9071
    %v9284 = vpop.f32.mrb[0].mxu0
    %v9285 = vadd.f32 0.0, %v9284
    %v9286 = vpop.f32.mrb[0].mxu0
    %9287 = vmatprep.mubr.f32.mxu0 0.0
    %9288 = vmatmul.mubr.f32.gmra.mrb[0].mxu0 %v9074
    %v9289 = vpop.f32.mrb[0].mxu0
    %v9290 = vadd.f32 0.0, %v9289
    %v9291 = vpop.f32.mrb[0].mxu0
    %9292 = vmatprep.mubr.f32.mxu0 0.0
    %9293 = vmatmul.mubr.f32.gmra.mrb[0].mxu0 %v9077
    %v9294 = vpop.f32.mrb[0].mxu0
    %v9295 = vadd.f32 0.0, %v9294
    %v9296 = vpop.f32.mrb[0].mxu0
    %9297 = vmatprep.mubr.f32.mxu0 0.0
    %9298 = vmatmul.mubr.f32.gmra.mrb[0].mxu0 %v9080
    %v9299 = vpop.f32.mrb[0].mxu0
    %v9300 = vadd.f32 0.0, %v9299
    %v9301 = vpop.f32.mrb[0].mxu0
    %9302 = vmatprep.mubr.f32.mxu0 0.0
    %9303 = vmatmul.mubr.f32.gmra.mrb[0].mxu0 %v9083
    %v9304 = vpop.f32.mrb[0].mxu0
    %v9305 = vadd.f32 0.0, %v9304
    %v9306 = vpop.f32.mrb[0].mxu0
    %9307 = vmatprep.mubr.f32.mxu0 0.0
    %9308 = vmatmul.mubr.f32.gmra.mrb[0].mxu0 %v9086
    %v9309 = vpop.f32.mrb[0].mxu0
    %v9310 = vadd.f32 0.0, %v9309
    %v9311 = vpop.f32.mrb[0].mxu0
    %9312 = vdwg.mxu0
    %v9313 = vmul.f32 %v8815, 0.95
    %v9314 = vmul.f32 %v8816, 0.95
    %v9315 = vmul.f32 %v8817, 0.95
    %v9316 = vmul.f32 %v8818, 0.95
    %v9317 = vmul.f32 %v8819, 0.95
    %v9318 = vmul.f32 %v8820, 0.95
    %v9319 = vmul.f32 %v8821, 0.95
    %v9320 = vmul.f32 %v8822, 0.95
    %v9321 = vmul.f32 %v8823, 0.95
    %v9322 = vmul.f32 %v8824, 0.95
    %v9323 = vmul.f32 %v8825, 0.95
    %v9324 = vmul.f32 %v8826, 0.95
    %v9325 = vmul.f32 %v8827, 0.95
    %v9326 = vmul.f32 %v8828, 0.95
    %v9327 = vmul.f32 %v8829, 0.95
    %v9328 = vmul.f32 %v8830, 0.95
    %v9329 = vmul.f32 %v8831, 0.95
    %v9330 = vmul.f32 %v8832, 0.95
    %v9331 = vmul.f32 %v8833, 0.95
    %v9332 = vmul.f32 %v8834, 0.95
    %v9333 = vmul.f32 %v8835, 0.95
    %v9334 = vmul.f32 %v8836, 0.95
    %v9335 = vmul.f32 %v8837, 0.95
    %v9336 = vmul.f32 %v8838, 0.95
    %v9337 = vmul.f32 %v8839, 0.95
    %v9338 = vmul.f32 %v8840, 0.95
    %v9339 = vmul.f32 %v8841, 0.95
    %v9340 = vmul.f32 %v8842, 0.95
    %v9341 = vmul.f32 %v8843, 0.95
    %v9342 = vmul.f32 %v8844, 0.95
    %v9343 = vmul.f32 %v8845, 0.95
    %v9344 = vmul.f32 %v8846, 0.95
    %v9345 = vadd.f32 %v9313, %v9155
    %v9346 = vadd.f32 %v9314, %v9160
    %v9347 = vadd.f32 %v9315, %v9165
    %v9348 = vadd.f32 %v9316, %v9170
    %v9349 = vadd.f32 %v9317, %v9175
    %v9350 = vadd.f32 %v9318, %v9180
    %v9351 = vadd.f32 %v9319, %v9185
    %v9352 = vadd.f32 %v9320, %v9190
    %v9353 = vadd.f32 %v9321, %v9195
    %v9354 = vadd.f32 %v9322, %v9200
    %v9355 = vadd.f32 %v9323, %v9205
    %v9356 = vadd.f32 %v9324, %v9210
    %v9357 = vadd.f32 %v9325, %v9215
    %v9358 = vadd.f32 %v9326, %v9220
    %v9359 = vadd.f32 %v9327, %v9225
    %v9360 = vadd.f32 %v9328, %v9230
    %v9361 = vadd.f32 %v9329, %v9235
    %v9362 = vadd.f32 %v9330, %v9240
    %v9363 = vadd.f32 %v9331, %v9245
    %v9364 = vadd.f32 %v9332, %v9250
    %v9365 = vadd.f32 %v9333, %v9255
    %v9366 = vadd.f32 %v9334, %v9260
    %v9367 = vadd.f32 %v9335, %v9265
    %v9368 = vadd.f32 %v9336, %v9270
    %v9369 = vadd.f32 %v9337, %v9275
    %v9370 = vadd.f32 %v9338, %v9280
    %v9371 = vadd.f32 %v9339, %v9285
    %v9372 = vadd.f32 %v9340, %v9290
    %v9373 = vadd.f32 %v9341, %v9295
    %v9374 = vadd.f32 %v9342, %v9300
    %v9375 = vadd.f32 %v9343, %v9305
    %v9376 = vadd.f32 %v9344, %v9310
    %v9377 = vmax.f32 %v9345, -4.0
    %v9378 = vmax.f32 %v9346, -4.0
    %v9379 = vmax.f32 %v9347, -4.0
    %v9380 = vmax.f32 %v9348, -4.0
    %v9381 = vmax.f32 %v9349, -4.0
    %v9382 = vmax.f32 %v9350, -4.0
    %v9383 = vmax.f32 %v9351, -4.0
    %v9384 = vmax.f32 %v9352, -4.0
    %v9385 = vmax.f32 %v9353, -4.0
    %v9386 = vmax.f32 %v9354, -4.0
    %v9387 = vmax.f32 %v9355, -4.0
    %v9388 = vmax.f32 %v9356, -4.0
    %v9389 = vmax.f32 %v9357, -4.0
    %v9390 = vmax.f32 %v9358, -4.0
    %v9391 = vmax.f32 %v9359, -4.0
    %v9392 = vmax.f32 %v9360, -4.0
    %v9393 = vmax.f32 %v9361, -4.0
    %v9394 = vmax.f32 %v9362, -4.0
    %v9395 = vmax.f32 %v9363, -4.0
    %v9396 = vmax.f32 %v9364, -4.0
    %v9397 = vmax.f32 %v9365, -4.0
    %v9398 = vmax.f32 %v9366, -4.0
    %v9399 = vmax.f32 %v9367, -4.0
    %v9400 = vmax.f32 %v9368, -4.0
    %v9401 = vmax.f32 %v9369, -4.0
    %v9402 = vmax.f32 %v9370, -4.0
    %v9403 = vmax.f32 %v9371, -4.0
    %v9404 = vmax.f32 %v9372, -4.0
    %v9405 = vmax.f32 %v9373, -4.0
    %v9406 = vmax.f32 %v9374, -4.0
    %v9407 = vmax.f32 %v9375, -4.0
    %v9408 = vmax.f32 %v9376, -4.0
    %v9409 = vmin.f32 %v9377, 4.0
    %v9410 = vmin.f32 %v9378, 4.0
    %v9411 = vmin.f32 %v9379, 4.0
    %v9412 = vmin.f32 %v9380, 4.0
    %v9413 = vmin.f32 %v9381, 4.0
    %v9414 = vmin.f32 %v9382, 4.0
    %v9415 = vmin.f32 %v9383, 4.0
    %v9416 = vmin.f32 %v9384, 4.0
    %v9417 = vmin.f32 %v9385, 4.0
    %v9418 = vmin.f32 %v9386, 4.0
    %v9419 = vmin.f32 %v9387, 4.0
    %v9420 = vmin.f32 %v9388, 4.0
    %v9421 = vmin.f32 %v9389, 4.0
    %v9422 = vmin.f32 %v9390, 4.0
    %v9423 = vmin.f32 %v9391, 4.0
    %v9424 = vmin.f32 %v9392, 4.0
    %v9425 = vmin.f32 %v9393, 4.0
    %v9426 = vmin.f32 %v9394, 4.0
    %v9427 = vmin.f32 %v9395, 4.0
    %v9428 = vmin.f32 %v9396, 4.0
    %v9429 = vmin.f32 %v9397, 4.0
    %v9430 = vmin.f32 %v9398, 4.0
    %v9431 = vmin.f32 %v9399, 4.0
    %v9432 = vmin.f32 %v9400, 4.0
    %v9433 = vmin.f32 %v9401, 4.0
    %v9434 = vmin.f32 %v9402, 4.0
    %v9435 = vmin.f32 %v9403, 4.0
    %v9436 = vmin.f32 %v9404, 4.0
    %v9437 = vmin.f32 %v9405, 4.0
    %v9438 = vmin.f32 %v9406, 4.0
    %v9439 = vmin.f32 %v9407, 4.0
    %v9440 = vmin.f32 %v9408, 4.0
    %9441 = vst [vmem:[%s15] sm:$0xff] %v9409
    %9442 = vst [vmem:[%s15 + $0x8] sm:$0xff] %v9410
    %9443 = vst [vmem:[%s15 + $0x10] sm:$0xff] %v9411
    %9444 = vst [vmem:[%s15 + $0x18] sm:$0xff] %v9412
    %9445 = vst [vmem:[%s15 + $0x20] sm:$0xff] %v9413
    %9446 = vst [vmem:[%s15 + $0x28] sm:$0xff] %v9414
    %9447 = vst [vmem:[%s15 + $0x30] sm:$0xff] %v9415
    %9448 = vst [vmem:[%s15 + $0x38] sm:$0xff] %v9416
    %9449 = vst [vmem:[%s15 + $0x40] sm:$0xff] %v9417
    %9450 = vst [vmem:[%s15 + $0x48] sm:$0xff] %v9418
    %9451 = vst [vmem:[%s15 + $0x50] sm:$0xff] %v9419
    %9452 = vst [vmem:[%s15 + $0x58] sm:$0xff] %v9420
    %9453 = vst [vmem:[%s15 + $0x60] sm:$0xff] %v9421
    %9454 = vst [vmem:[%s15 + $0x68] sm:$0xff] %v9422
    %9455 = vst [vmem:[%s15 + $0x70] sm:$0xff] %v9423
    %9456 = vst [vmem:[%s15 + $0x78] sm:$0xff] %v9424
    %9457 = vst [vmem:[%s15 + $0x80] sm:$0xff] %v9425
    %9458 = vst [vmem:[%s15 + $0x88] sm:$0xff] %v9426
    %9459 = vst [vmem:[%s15 + $0x90] sm:$0xff] %v9427
    %9460 = vst [vmem:[%s15 + $0x98] sm:$0xff] %v9428
    %9461 = vst [vmem:[%s15 + $0xa0] sm:$0xff] %v9429
    %9462 = vst [vmem:[%s15 + $0xa8] sm:$0xff] %v9430
    %9463 = vst [vmem:[%s15 + $0xb0] sm:$0xff] %v9431
    %9464 = vst [vmem:[%s15 + $0xb8] sm:$0xff] %v9432
    %9465 = vst [vmem:[%s15 + $0xc0] sm:$0xff] %v9433
    %9466 = vst [vmem:[%s15 + $0xc8] sm:$0xff] %v9434
    %9467 = vst [vmem:[%s15 + $0xd0] sm:$0xff] %v9435
    %9468 = vst [vmem:[%s15 + $0xd8] sm:$0xff] %v9436
    %9469 = vst [vmem:[%s15 + $0xe0] sm:$0xff] %v9437
    %9470 = vst [vmem:[%s15 + $0xe8] sm:$0xff] %v9438
    %9471 = vst [vmem:[%s15 + $0xf0] sm:$0xff] %v9439
    %9472 = vst [vmem:[%s15 + $0xf8] sm:$0xff] %v9440
    %v9473 = vsub.f32 %v8922, %v8409
    %v9474 = vmul.f32 %v9473, 0.5
    %v9475 = vadd.f32 %v8409, %v9474
    %vm9476 = vcmp.ge.f32.partialorder %v9475, 1.0
    %v9477 = vsel %vm9476, 1, 0
    %v9478 = vcvt.s32.f32 %v9477
    %v9479 = vsub.f32 1.0, %v9478
    %v9480 = vmul.f32 %v9475, %v9479
    %v9481 = vadd.f32 %v8410, %v9478
    %v9482 = vmul.f32 %v896, %v8790
    %v9483 = vmul.f32 %v896, %v8791
    %v9484 = vmul.f32 %v896, %v8792
    %v9485 = vmul.f32 %v896, %v8793
    %v9486 = vmul.f32 %v896, %v8794
    %v9487 = vmul.f32 %v896, %v8795
    %v9488 = vmul.f32 %v896, %v8796
    %v9489 = vmul.f32 %v896, %v8797
    %v9490 = vmul.f32 %v896, %v8798
    %v9491 = vmul.f32 %v896, %v8799
    %v9492 = vmul.f32 %v896, %v8800
    %v9493 = vmul.f32 %v896, %v8801
    %v9494 = vmul.f32 %v896, %v8802
    %v9495 = vmul.f32 %v896, %v8803
    %v9496 = vmul.f32 %v896, %v8804
    %v9497 = vmul.f32 %v896, %v8805
    %v9498 = vadd.f32 %v187, %v9482
    %v9499 = vadd.f32 %v188, %v9483
    %v9500 = vadd.f32 %v189, %v9484
    %v9501 = vadd.f32 %v190, %v9485
    %v9502 = vadd.f32 %v191, %v9486
    %v9503 = vadd.f32 %v192, %v9487
    %v9504 = vadd.f32 %v193, %v9488
    %v9505 = vadd.f32 %v194, %v9489
    %v9506 = vadd.f32 %v195, %v9490
    %v9507 = vadd.f32 %v196, %v9491
    %v9508 = vadd.f32 %v197, %v9492
    %v9509 = vadd.f32 %v198, %v9493
    %v9510 = vadd.f32 %v199, %v9494
    %v9511 = vadd.f32 %v200, %v9495
    %v9512 = vadd.f32 %v201, %v9496
    %v9513 = vadd.f32 %v202, %v9497
    %9514 = vmatprep.subr.mxu0 0.0
    %9515 = vmatpush1.msra.mxu0 %v9498
    %9516 = vmatprep.subr.mxu0 0.0
    %9517 = vmatpush1.msra.mxu0 %v9499
    %9518 = vmatprep.subr.mxu0 0.0
    %9519 = vmatpush1.msra.mxu0 %v9500
    %9520 = vmatprep.subr.mxu0 0.0
    %9521 = vmatpush1.msra.mxu0 %v9501
    %9522 = vmatprep.subr.mxu0 0.0
    %9523 = vmatpush1.msra.mxu0 %v9502
    %9524 = vmatprep.subr.mxu0 0.0
    %9525 = vmatpush1.msra.mxu0 %v9503
    %9526 = vmatprep.subr.mxu0 0.0
    %9527 = vmatpush1.msra.mxu0 %v9504
    %9528 = vmatprep.subr.mxu0 0.0
    %9529 = vmatpush1.msra.mxu0 %v9505
    %9530 = vmatprep.subr.mxu0 0.0
    %9531 = vmatpush1.msra.mxu0 %v9506
    %9532 = vmatprep.subr.mxu0 0.0
    %9533 = vmatpush1.msra.mxu0 %v9507
    %9534 = vmatprep.subr.mxu0 0.0
    %9535 = vmatpush1.msra.mxu0 %v9508
    %9536 = vmatprep.subr.mxu0 0.0
    %9537 = vmatpush1.msra.mxu0 %v9509
    %9538 = vmatprep.subr.mxu0 0.0
    %9539 = vmatpush1.msra.mxu0 %v9510
    %9540 = vmatprep.subr.mxu0 0.0
    %9541 = vmatpush1.msra.mxu0 %v9511
    %9542 = vmatprep.subr.mxu0 0.0
    %9543 = vmatpush1.msra.mxu0 %v9512
    %9544 = vmatprep.subr.mxu0 0.0
    %9545 = vmatpush1.msra.mxu0 %v9513
    %9546 = vmatprep.subr.mxu0 0.0
    %9547 = vmatpush1.msra.mxu0 0.0
    %9548 = vmatprep.subr.mxu0 0.0
    %9549 = vmatpush1.msra.mxu0 0.0
    %9550 = vmatprep.subr.mxu0 0.0
    %9551 = vmatpush1.msra.mxu0 0.0
    %9552 = vmatprep.subr.mxu0 0.0
    %9553 = vmatpush1.msra.mxu0 0.0
    %9554 = vmatprep.subr.mxu0 0.0
    %9555 = vmatpush1.msra.mxu0 0.0
    %9556 = vmatprep.subr.mxu0 0.0
    %9557 = vmatpush1.msra.mxu0 0.0
    %9558 = vmatprep.subr.mxu0 0.0
    %9559 = vmatpush1.msra.mxu0 0.0
    %9560 = vmatprep.subr.mxu0 0.0
    %9561 = vmatpush1.msra.mxu0 0.0
    %9562 = vmatprep.subr.mxu0 0.0
    %9563 = vmatpush1.msra.mxu0 0.0
    %9564 = vmatprep.subr.mxu0 0.0
    %9565 = vmatpush1.msra.mxu0 0.0
    %9566 = vmatprep.subr.mxu0 0.0
    %9567 = vmatpush1.msra.mxu0 0.0
    %9568 = vmatprep.subr.mxu0 0.0
    %9569 = vmatpush1.msra.mxu0 0.0
    %9570 = vmatprep.subr.mxu0 0.0
    %9571 = vmatpush1.msra.mxu0 0.0
    %9572 = vmatprep.subr.mxu0 0.0
    %9573 = vmatpush1.msra.mxu0 0.0
    %9574 = vmatprep.subr.mxu0 0.0
    %9575 = vmatpush1.msra.mxu0 0.0
    %9576 = vmatprep.subr.mxu0 0.0
    %9577 = vmatpush1.msra.mxu0 0.0
    %9578 = vmatprep.mubr.f32.mxu0 0.0
    %9579 = vmatmul.mubr.f32.gmra.mrb[0].mxu0 %v9478
    %v9580 = vpop.f32.mrb[0].mxu0
    %v9581 = vadd.f32 %v933, %v9580
    %v9582 = vpop.f32.mrb[0].mxu0
    %9583 = vdwg.mxu0
    %v9584 = vmul.f32 %v9581, 2.857143
    %v9585 = vsub.f32 %v9584, %v1010
    %v9586 = vtanh.pop %v9585
    %v9587 = vmul.f32 %v9478, %v1018
    %9588 = vxpose.xlu0.b32.start [1/16] %v9587, 128
    %9589 = vxpose.xlu0.b32.cont [2/16] 0.0, 128
    %9590 = vxpose.xlu0.b32.cont [3/16] 0.0, 128
    %9591 = vxpose.xlu0.b32.cont [4/16] 0.0, 128
    %9592 = vxpose.xlu0.b32.cont [5/16] 0.0, 128
    %9593 = vxpose.xlu0.b32.cont [6/16] 0.0, 128
    %9594 = vxpose.xlu0.b32.cont [7/16] 0.0, 128
    %9595 = vxpose.xlu0.b32.cont [8/16] 0.0, 128
    %9596 = vxpose.xlu0.b32.cont [9/16] 0.0, 128
    %9597 = vxpose.xlu0.b32.cont [10/16] 0.0, 128
    %9598 = vxpose.xlu0.b32.cont [11/16] 0.0, 128
    %9599 = vxpose.xlu0.b32.cont [12/16] 0.0, 128
    %9600 = vxpose.xlu0.b32.cont [13/16] 0.0, 128
    %9601 = vxpose.xlu0.b32.cont [14/16] 0.0, 128
    %9602 = vxpose.xlu0.b32.cont [15/16] 0.0, 128
    %9603 = vxpose.xlu0.b32.end [16/16] 0.0, 128
    %v9604 = vpop.trf.xlu0
    %v9605 = vpop.trf.xlu0
    %v9606 = vpop.trf.xlu0
    %v9607 = vpop.trf.xlu0
    %v9608 = vpop.trf.xlu0
    %v9609 = vpop.trf.xlu0
    %v9610 = vpop.trf.xlu0
    %v9611 = vpop.trf.xlu0
    %v9612 = vpop.trf.xlu0
    %v9613 = vpop.trf.xlu0
    %v9614 = vpop.trf.xlu0
    %v9615 = vpop.trf.xlu0
    %v9616 = vpop.trf.xlu0
    %v9617 = vpop.trf.xlu0
    %v9618 = vpop.trf.xlu0
    %v9619 = vpop.trf.xlu0
    %v9621 = vsel %vm406, %v9604, 0
    %v9624 = vsel %vm406, %v9605, 0
    %v9627 = vsel %vm406, %v9606, 0
    %v9630 = vsel %vm406, %v9607, 0
    %v9633 = vsel %vm406, %v9608, 0
    %v9636 = vsel %vm406, %v9609, 0
    %v9639 = vsel %vm406, %v9610, 0
    %v9642 = vsel %vm406, %v9611, 0
    %v9645 = vsel %vm406, %v9612, 0
    %v9648 = vsel %vm406, %v9613, 0
    %v9651 = vsel %vm406, %v9614, 0
    %v9654 = vsel %vm406, %v9615, 0
    %v9657 = vsel %vm406, %v9616, 0
    %v9660 = vsel %vm406, %v9617, 0
    %v9663 = vsel %vm406, %v9618, 0
    %v9666 = vsel %vm406, %v9619, 0
    %9668 = vmatprep.subr.mxu0 0.0
    %9669 = vmatpush1.msra.mxu0 %v9586
    %9670 = vmatprep.subr.mxu0 0.0
    %9671 = vmatpush1.msra.mxu0 0.0
    %9672 = vmatprep.subr.mxu0 0.0
    %9673 = vmatpush1.msra.mxu0 0.0
    %9674 = vmatprep.subr.mxu0 0.0
    %9675 = vmatpush1.msra.mxu0 0.0
    %9676 = vmatprep.subr.mxu0 0.0
    %9677 = vmatpush1.msra.mxu0 0.0
    %9678 = vmatprep.subr.mxu0 0.0
    %9679 = vmatpush1.msra.mxu0 0.0
    %9680 = vmatprep.subr.mxu0 0.0
    %9681 = vmatpush1.msra.mxu0 0.0
    %9682 = vmatprep.subr.mxu0 0.0
    %9683 = vmatpush1.msra.mxu0 0.0
    %9684 = vmatprep.subr.mxu0 0.0
    %9685 = vmatpush1.msra.mxu0 0.0
    %9686 = vmatprep.subr.mxu0 0.0
    %9687 = vmatpush1.msra.mxu0 0.0
    %9688 = vmatprep.subr.mxu0 0.0
    %9689 = vmatpush1.msra.mxu0 0.0
    %9690 = vmatprep.subr.mxu0 0.0
    %9691 = vmatpush1.msra.mxu0 0.0
    %9692 = vmatprep.subr.mxu0 0.0
    %9693 = vmatpush1.msra.mxu0 0.0
    %9694 = vmatprep.subr.mxu0 0.0
    %9695 = vmatpush1.msra.mxu0 0.0
    %9696 = vmatprep.subr.mxu0 0.0
    %9697 = vmatpush1.msra.mxu0 0.0
    %9698 = vmatprep.subr.mxu0 0.0
    %9699 = vmatpush1.msra.mxu0 0.0
    %9700 = vmatprep.subr.mxu0 0.0
    %9701 = vmatpush1.msra.mxu0 0.0
    %9702 = vmatprep.subr.mxu0 0.0
    %9703 = vmatpush1.msra.mxu0 0.0
    %9704 = vmatprep.subr.mxu0 0.0
    %9705 = vmatpush1.msra.mxu0 0.0
    %9706 = vmatprep.subr.mxu0 0.0
    %9707 = vmatpush1.msra.mxu0 0.0
    %9708 = vmatprep.subr.mxu0 0.0
    %9709 = vmatpush1.msra.mxu0 0.0
    %9710 = vmatprep.subr.mxu0 0.0
    %9711 = vmatpush1.msra.mxu0 0.0
    %9712 = vmatprep.subr.mxu0 0.0
    %9713 = vmatpush1.msra.mxu0 0.0
    %9714 = vmatprep.subr.mxu0 0.0
    %9715 = vmatpush1.msra.mxu0 0.0
    %9716 = vmatprep.subr.mxu0 0.0
    %9717 = vmatpush1.msra.mxu0 0.0
    %9718 = vmatprep.subr.mxu0 0.0
    %9719 = vmatpush1.msra.mxu0 0.0
    %9720 = vmatprep.subr.mxu0 0.0
    %9721 = vmatpush1.msra.mxu0 0.0
    %9722 = vmatprep.subr.mxu0 0.0
    %9723 = vmatpush1.msra.mxu0 0.0
    %9724 = vmatprep.subr.mxu0 0.0
    %9725 = vmatpush1.msra.mxu0 0.0
    %9726 = vmatprep.subr.mxu0 0.0
    %9727 = vmatpush1.msra.mxu0 0.0
    %9728 = vmatprep.subr.mxu0 0.0
    %9729 = vmatpush1.msra.mxu0 0.0
    %9730 = vmatprep.subr.mxu0 0.0
    %9731 = vmatpush1.msra.mxu0 0.0
    %9732 = vmatprep.mubr.f32.mxu0 0.0
    %9733 = vmatmul.mubr.f32.gmra.mrb[0].mxu0 %v9621
    %v9734 = vpop.f32.mrb[0].mxu0
    %v9735 = vadd.f32 0.0, %v9734
    %v9736 = vpop.f32.mrb[0].mxu0
    %9737 = vmatprep.mubr.f32.mxu0 0.0
    %9738 = vmatmul.mubr.f32.gmra.mrb[0].mxu0 %v9624
    %v9739 = vpop.f32.mrb[0].mxu0
    %v9740 = vadd.f32 0.0, %v9739
    %v9741 = vpop.f32.mrb[0].mxu0
    %9742 = vmatprep.mubr.f32.mxu0 0.0
    %9743 = vmatmul.mubr.f32.gmra.mrb[0].mxu0 %v9627
    %v9744 = vpop.f32.mrb[0].mxu0
    %v9745 = vadd.f32 0.0, %v9744
    %v9746 = vpop.f32.mrb[0].mxu0
    %9747 = vmatprep.mubr.f32.mxu0 0.0
    %9748 = vmatmul.mubr.f32.gmra.mrb[0].mxu0 %v9630
    %v9749 = vpop.f32.mrb[0].mxu0
    %v9750 = vadd.f32 0.0, %v9749
    %v9751 = vpop.f32.mrb[0].mxu0
    %9752 = vmatprep.mubr.f32.mxu0 0.0
    %9753 = vmatmul.mubr.f32.gmra.mrb[0].mxu0 %v9633
    %v9754 = vpop.f32.mrb[0].mxu0
    %v9755 = vadd.f32 0.0, %v9754
    %v9756 = vpop.f32.mrb[0].mxu0
    %9757 = vmatprep.mubr.f32.mxu0 0.0
    %9758 = vmatmul.mubr.f32.gmra.mrb[0].mxu0 %v9636
    %v9759 = vpop.f32.mrb[0].mxu0
    %v9760 = vadd.f32 0.0, %v9759
    %v9761 = vpop.f32.mrb[0].mxu0
    %9762 = vmatprep.mubr.f32.mxu0 0.0
    %9763 = vmatmul.mubr.f32.gmra.mrb[0].mxu0 %v9639
    %v9764 = vpop.f32.mrb[0].mxu0
    %v9765 = vadd.f32 0.0, %v9764
    %v9766 = vpop.f32.mrb[0].mxu0
    %9767 = vmatprep.mubr.f32.mxu0 0.0
    %9768 = vmatmul.mubr.f32.gmra.mrb[0].mxu0 %v9642
    %v9769 = vpop.f32.mrb[0].mxu0
    %v9770 = vadd.f32 0.0, %v9769
    %v9771 = vpop.f32.mrb[0].mxu0
    %9772 = vmatprep.mubr.f32.mxu0 0.0
    %9773 = vmatmul.mubr.f32.gmra.mrb[0].mxu0 %v9645
    %v9774 = vpop.f32.mrb[0].mxu0
    %v9775 = vadd.f32 0.0, %v9774
    %v9776 = vpop.f32.mrb[0].mxu0
    %9777 = vmatprep.mubr.f32.mxu0 0.0
    %9778 = vmatmul.mubr.f32.gmra.mrb[0].mxu0 %v9648
    %v9779 = vpop.f32.mrb[0].mxu0
    %v9780 = vadd.f32 0.0, %v9779
    %v9781 = vpop.f32.mrb[0].mxu0
    %9782 = vmatprep.mubr.f32.mxu0 0.0
    %9783 = vmatmul.mubr.f32.gmra.mrb[0].mxu0 %v9651
    %v9784 = vpop.f32.mrb[0].mxu0
    %v9785 = vadd.f32 0.0, %v9784
    %v9786 = vpop.f32.mrb[0].mxu0
    %9787 = vmatprep.mubr.f32.mxu0 0.0
    %9788 = vmatmul.mubr.f32.gmra.mrb[0].mxu0 %v9654
    %v9789 = vpop.f32.mrb[0].mxu0
    %v9790 = vadd.f32 0.0, %v9789
    %v9791 = vpop.f32.mrb[0].mxu0
    %9792 = vmatprep.mubr.f32.mxu0 0.0
    %9793 = vmatmul.mubr.f32.gmra.mrb[0].mxu0 %v9657
    %v9794 = vpop.f32.mrb[0].mxu0
    %v9795 = vadd.f32 0.0, %v9794
    %v9796 = vpop.f32.mrb[0].mxu0
    %9797 = vmatprep.mubr.f32.mxu0 0.0
    %9798 = vmatmul.mubr.f32.gmra.mrb[0].mxu0 %v9660
    %v9799 = vpop.f32.mrb[0].mxu0
    %v9800 = vadd.f32 0.0, %v9799
    %v9801 = vpop.f32.mrb[0].mxu0
    %9802 = vmatprep.mubr.f32.mxu0 0.0
    %9803 = vmatmul.mubr.f32.gmra.mrb[0].mxu0 %v9663
    %v9804 = vpop.f32.mrb[0].mxu0
    %v9805 = vadd.f32 0.0, %v9804
    %v9806 = vpop.f32.mrb[0].mxu0
    %9807 = vmatprep.mubr.f32.mxu0 0.0
    %9808 = vmatmul.mubr.f32.gmra.mrb[0].mxu0 %v9666
    %v9809 = vpop.f32.mrb[0].mxu0
    %v9810 = vadd.f32 0.0, %v9809
    %v9811 = vpop.f32.mrb[0].mxu0
    %9812 = vdwg.mxu0
    %v9813 = vmul.f32 %v8790, 0.95
    %v9814 = vmul.f32 %v8791, 0.95
    %v9815 = vmul.f32 %v8792, 0.95
    %v9816 = vmul.f32 %v8793, 0.95
    %v9817 = vmul.f32 %v8794, 0.95
    %v9818 = vmul.f32 %v8795, 0.95
    %v9819 = vmul.f32 %v8796, 0.95
    %v9820 = vmul.f32 %v8797, 0.95
    %v9821 = vmul.f32 %v8798, 0.95
    %v9822 = vmul.f32 %v8799, 0.95
    %v9823 = vmul.f32 %v8800, 0.95
    %v9824 = vmul.f32 %v8801, 0.95
    %v9825 = vmul.f32 %v8802, 0.95
    %v9826 = vmul.f32 %v8803, 0.95
    %v9827 = vmul.f32 %v8804, 0.95
    %v9828 = vmul.f32 %v8805, 0.95
    %v9829 = vadd.f32 %v9813, %v9735
    %v9830 = vadd.f32 %v9814, %v9740
    %v9831 = vadd.f32 %v9815, %v9745
    %v9832 = vadd.f32 %v9816, %v9750
    %v9833 = vadd.f32 %v9817, %v9755
    %v9834 = vadd.f32 %v9818, %v9760
    %v9835 = vadd.f32 %v9819, %v9765
    %v9836 = vadd.f32 %v9820, %v9770
    %v9837 = vadd.f32 %v9821, %v9775
    %v9838 = vadd.f32 %v9822, %v9780
    %v9839 = vadd.f32 %v9823, %v9785
    %v9840 = vadd.f32 %v9824, %v9790
    %v9841 = vadd.f32 %v9825, %v9795
    %v9842 = vadd.f32 %v9826, %v9800
    %v9843 = vadd.f32 %v9827, %v9805
    %v9844 = vadd.f32 %v9828, %v9810
    %v9845 = vmax.f32 %v9829, -4.0
    %v9846 = vmax.f32 %v9830, -4.0
    %v9847 = vmax.f32 %v9831, -4.0
    %v9848 = vmax.f32 %v9832, -4.0
    %v9849 = vmax.f32 %v9833, -4.0
    %v9850 = vmax.f32 %v9834, -4.0
    %v9851 = vmax.f32 %v9835, -4.0
    %v9852 = vmax.f32 %v9836, -4.0
    %v9853 = vmax.f32 %v9837, -4.0
    %v9854 = vmax.f32 %v9838, -4.0
    %v9855 = vmax.f32 %v9839, -4.0
    %v9856 = vmax.f32 %v9840, -4.0
    %v9857 = vmax.f32 %v9841, -4.0
    %v9858 = vmax.f32 %v9842, -4.0
    %v9859 = vmax.f32 %v9843, -4.0
    %v9860 = vmax.f32 %v9844, -4.0
    %v9861 = vmin.f32 %v9845, 4.0
    %v9862 = vmin.f32 %v9846, 4.0
    %v9863 = vmin.f32 %v9847, 4.0
    %v9864 = vmin.f32 %v9848, 4.0
    %v9865 = vmin.f32 %v9849, 4.0
    %v9866 = vmin.f32 %v9850, 4.0
    %v9867 = vmin.f32 %v9851, 4.0
    %v9868 = vmin.f32 %v9852, 4.0
    %v9869 = vmin.f32 %v9853, 4.0
    %v9870 = vmin.f32 %v9854, 4.0
    %v9871 = vmin.f32 %v9855, 4.0
    %v9872 = vmin.f32 %v9856, 4.0
    %v9873 = vmin.f32 %v9857, 4.0
    %v9874 = vmin.f32 %v9858, 4.0
    %v9875 = vmin.f32 %v9859, 4.0
    %v9876 = vmin.f32 %v9860, 4.0
    %v9877 = vsub.f32 %v9581, %v8813
    %v9878 = vmul.f32 %v9877, 0.5
    %v9879 = vadd.f32 %v8813, %v9878
    %vm9880 = vcmp.ge.f32.partialorder %v9879, 1.0
    %v9881 = vsel %vm9880, 1, 0
    %v9882 = vcvt.s32.f32 %v9881
    %v9883 = vsub.f32 1.0, %v9882
    %v9884 = vmul.f32 %v9879, %v9883
    %v9885 = vadd.f32 %v8814, %v9882
    %v9886 = vld [vmem:[%s15] sm:$0xff]
    %v9887 = vld [vmem:[%s15 + $0x8] sm:$0xff]
    %v9888 = vld [vmem:[%s15 + $0x10] sm:$0xff]
    %v9889 = vld [vmem:[%s15 + $0x18] sm:$0xff]
    %v9890 = vld [vmem:[%s15 + $0x20] sm:$0xff]
    %v9891 = vld [vmem:[%s15 + $0x28] sm:$0xff]
    %v9892 = vld [vmem:[%s15 + $0x30] sm:$0xff]
    %v9893 = vld [vmem:[%s15 + $0x38] sm:$0xff]
    %v9894 = vld [vmem:[%s15 + $0x40] sm:$0xff]
    %v9895 = vld [vmem:[%s15 + $0x48] sm:$0xff]
    %v9896 = vld [vmem:[%s15 + $0x50] sm:$0xff]
    %v9897 = vld [vmem:[%s15 + $0x58] sm:$0xff]
    %v9898 = vld [vmem:[%s15 + $0x60] sm:$0xff]
    %v9899 = vld [vmem:[%s15 + $0x68] sm:$0xff]
    %v9900 = vld [vmem:[%s15 + $0x70] sm:$0xff]
    %v9901 = vld [vmem:[%s15 + $0x78] sm:$0xff]
    %v9902 = vld [vmem:[%s15 + $0x80] sm:$0xff]
    %v9903 = vld [vmem:[%s15 + $0x88] sm:$0xff]
    %v9904 = vld [vmem:[%s15 + $0x90] sm:$0xff]
    %v9905 = vld [vmem:[%s15 + $0x98] sm:$0xff]
    %v9906 = vld [vmem:[%s15 + $0xa0] sm:$0xff]
    %v9907 = vld [vmem:[%s15 + $0xa8] sm:$0xff]
    %v9908 = vld [vmem:[%s15 + $0xb0] sm:$0xff]
    %v9909 = vld [vmem:[%s15 + $0xb8] sm:$0xff]
    %v9910 = vld [vmem:[%s15 + $0xc0] sm:$0xff]
    %v9911 = vld [vmem:[%s15 + $0xc8] sm:$0xff]
    %v9912 = vld [vmem:[%s15 + $0xd0] sm:$0xff]
    %v9913 = vld [vmem:[%s15 + $0xd8] sm:$0xff]
    %v9914 = vld [vmem:[%s15 + $0xe0] sm:$0xff]
    %v9915 = vld [vmem:[%s15 + $0xe8] sm:$0xff]
    %v9916 = vld [vmem:[%s15 + $0xf0] sm:$0xff]
    %v9917 = vld [vmem:[%s15 + $0xf8] sm:$0xff]
    %9918 = vmatprep.subr.mxu0 0.0
    %9919 = vmatpush1.msra.mxu0 %v9886
    %9920 = vmatprep.subr.mxu0 0.0
    %9921 = vmatpush1.msra.mxu0 %v9887
    %9922 = vmatprep.subr.mxu0 0.0
    %9923 = vmatpush1.msra.mxu0 %v9888
    %9924 = vmatprep.subr.mxu0 0.0
    %9925 = vmatpush1.msra.mxu0 %v9889
    %9926 = vmatprep.subr.mxu0 0.0
    %9927 = vmatpush1.msra.mxu0 %v9890
    %9928 = vmatprep.subr.mxu0 0.0
    %9929 = vmatpush1.msra.mxu0 %v9891
    %9930 = vmatprep.subr.mxu0 0.0
    %9931 = vmatpush1.msra.mxu0 %v9892
    %9932 = vmatprep.subr.mxu0 0.0
    %9933 = vmatpush1.msra.mxu0 %v9893
    %9934 = vmatprep.subr.mxu0 0.0
    %9935 = vmatpush1.msra.mxu0 %v9894
    %9936 = vmatprep.subr.mxu0 0.0
    %9937 = vmatpush1.msra.mxu0 %v9895
    %9938 = vmatprep.subr.mxu0 0.0
    %9939 = vmatpush1.msra.mxu0 %v9896
    %9940 = vmatprep.subr.mxu0 0.0
    %9941 = vmatpush1.msra.mxu0 %v9897
    %9942 = vmatprep.subr.mxu0 0.0
    %9943 = vmatpush1.msra.mxu0 %v9898
    %9944 = vmatprep.subr.mxu0 0.0
    %9945 = vmatpush1.msra.mxu0 %v9899
    %9946 = vmatprep.subr.mxu0 0.0
    %9947 = vmatpush1.msra.mxu0 %v9900
    %9948 = vmatprep.subr.mxu0 0.0
    %9949 = vmatpush1.msra.mxu0 %v9901
    %9950 = vmatprep.subr.mxu0 0.0
    %9951 = vmatpush1.msra.mxu0 %v9902
    %9952 = vmatprep.subr.mxu0 0.0
    %9953 = vmatpush1.msra.mxu0 %v9903
    %9954 = vmatprep.subr.mxu0 0.0
    %9955 = vmatpush1.msra.mxu0 %v9904
    %9956 = vmatprep.subr.mxu0 0.0
    %9957 = vmatpush1.msra.mxu0 %v9905
    %9958 = vmatprep.subr.mxu0 0.0
    %9959 = vmatpush1.msra.mxu0 %v9906
    %9960 = vmatprep.subr.mxu0 0.0
    %9961 = vmatpush1.msra.mxu0 %v9907
    %9962 = vmatprep.subr.mxu0 0.0
    %9963 = vmatpush1.msra.mxu0 %v9908
    %9964 = vmatprep.subr.mxu0 0.0
    %9965 = vmatpush1.msra.mxu0 %v9909
    %9966 = vmatprep.subr.mxu0 0.0
    %9967 = vmatpush1.msra.mxu0 %v9910
    %9968 = vmatprep.subr.mxu0 0.0
    %9969 = vmatpush1.msra.mxu0 %v9911
    %9970 = vmatprep.subr.mxu0 0.0
    %9971 = vmatpush1.msra.mxu0 %v9912
    %9972 = vmatprep.subr.mxu0 0.0
    %9973 = vmatpush1.msra.mxu0 %v9913
    %9974 = vmatprep.subr.mxu0 0.0
    %9975 = vmatpush1.msra.mxu0 %v9914
    %9976 = vmatprep.subr.mxu0 0.0
    %9977 = vmatpush1.msra.mxu0 %v9915
    %9978 = vmatprep.subr.mxu0 0.0
    %9979 = vmatpush1.msra.mxu0 %v9916
    %9980 = vmatprep.subr.mxu0 0.0
    %9981 = vmatpush1.msra.mxu0 %v9917
    %9982 = vmatprep.mubr.f32.mxu0 %v64
    %9983 = vmatmul.mubr.f32.gmra.mrb[0].mxu0 %v63
    %v9984 = vpop.f32.mrb[0].mxu0
    %v9985 = vadd.f32 0.0, %v9984
    %v9986 = vpop.f32.mrb[0].mxu0
    %9987 = vdwg.mxu0
    %v9988 = vmul.f32 %v164, 0.7985163
    %v9989 = vadd.f32 %v9988, %v325
    %s9990 = smul.f32 %s61, 0.7985163
    %v9991 = vstv %s9990
    %v9992 = vmul.f32 %v9991, %v9985
    %v9993 = vadd.f32 %v9989, %v9992
    %v9994 = vmul.f32 %v9993, 2.857143
    %v9995 = vsub.f32 %v9994, %v336
    %v9996 = vtanh.pop %v9995
    %v9997 = vmul.f32 %v179, 0.099814534
    %v9998 = vmul.f32 %v180, 0.099814534
    %9999 = vxpose.xlu0.b32.start [1/16] %v9997, 128
    %10000 = vxpose.xlu0.b32.cont [2/16] 0.0, 128
    %10001 = vxpose.xlu0.b32.cont [3/16] 0.0, 128
    %10002 = vxpose.xlu0.b32.cont [4/16] 0.0, 128
    %10003 = vxpose.xlu0.b32.cont [5/16] 0.0, 128
    %10004 = vxpose.xlu0.b32.cont [6/16] 0.0, 128
    %10005 = vxpose.xlu0.b32.cont [7/16] 0.0, 128
    %10006 = vxpose.xlu0.b32.cont [8/16] 0.0, 128
    %10007 = vxpose.xlu0.b32.cont [9/16] 0.0, 128
    %10008 = vxpose.xlu0.b32.cont [10/16] 0.0, 128
    %10009 = vxpose.xlu0.b32.cont [11/16] 0.0, 128
    %10010 = vxpose.xlu0.b32.cont [12/16] 0.0, 128
    %10011 = vxpose.xlu0.b32.cont [13/16] 0.0, 128
    %10012 = vxpose.xlu0.b32.cont [14/16] 0.0, 128
    %10013 = vxpose.xlu0.b32.cont [15/16] 0.0, 128
    %10014 = vxpose.xlu0.b32.end [16/16] 0.0, 128
    %v10015 = vpop.trf.xlu0
    %v10016 = vpop.trf.xlu0
    %v10017 = vpop.trf.xlu0
    %v10018 = vpop.trf.xlu0
    %v10019 = vpop.trf.xlu0
    %v10020 = vpop.trf.xlu0
    %v10021 = vpop.trf.xlu0
    %v10022 = vpop.trf.xlu0
    %v10023 = vpop.trf.xlu0
    %v10024 = vpop.trf.xlu0
    %v10025 = vpop.trf.xlu0
    %v10026 = vpop.trf.xlu0
    %v10027 = vpop.trf.xlu0
    %v10028 = vpop.trf.xlu0
    %v10029 = vpop.trf.xlu0
    %v10030 = vpop.trf.xlu0
    %10031 = vxpose.xlu0.b32.start [1/16] %v9998, 128
    %10032 = vxpose.xlu0.b32.cont [2/16] 0.0, 128
    %10033 = vxpose.xlu0.b32.cont [3/16] 0.0, 128
    %10034 = vxpose.xlu0.b32.cont [4/16] 0.0, 128
    %10035 = vxpose.xlu0.b32.cont [5/16] 0.0, 128
    %10036 = vxpose.xlu0.b32.cont [6/16] 0.0, 128
    %10037 = vxpose.xlu0.b32.cont [7/16] 0.0, 128
    %10038 = vxpose.xlu0.b32.cont [8/16] 0.0, 128
    %10039 = vxpose.xlu0.b32.cont [9/16] 0.0, 128
    %10040 = vxpose.xlu0.b32.cont [10/16] 0.0, 128
    %10041 = vxpose.xlu0.b32.cont [11/16] 0.0, 128
    %10042 = vxpose.xlu0.b32.cont [12/16] 0.0, 128
    %10043 = vxpose.xlu0.b32.cont [13/16] 0.0, 128
    %10044 = vxpose.xlu0.b32.cont [14/16] 0.0, 128
    %10045 = vxpose.xlu0.b32.cont [15/16] 0.0, 128
    %10046 = vxpose.xlu0.b32.end [16/16] 0.0, 128
    %v10047 = vpop.trf.xlu0
    %v10048 = vpop.trf.xlu0
    %v10049 = vpop.trf.xlu0
    %v10050 = vpop.trf.xlu0
    %v10051 = vpop.trf.xlu0
    %v10052 = vpop.trf.xlu0
    %v10053 = vpop.trf.xlu0
    %v10054 = vpop.trf.xlu0
    %v10055 = vpop.trf.xlu0
    %v10056 = vpop.trf.xlu0
    %v10057 = vpop.trf.xlu0
    %v10058 = vpop.trf.xlu0
    %v10059 = vpop.trf.xlu0
    %v10060 = vpop.trf.xlu0
    %v10061 = vpop.trf.xlu0
    %v10062 = vpop.trf.xlu0
    %v10064 = vsel %vm406, %v10015, 0
    %v10067 = vsel %vm406, %v10016, 0
    %v10070 = vsel %vm406, %v10017, 0
    %v10073 = vsel %vm406, %v10018, 0
    %v10076 = vsel %vm406, %v10019, 0
    %v10079 = vsel %vm406, %v10020, 0
    %v10082 = vsel %vm406, %v10021, 0
    %v10085 = vsel %vm406, %v10022, 0
    %v10088 = vsel %vm406, %v10023, 0
    %v10091 = vsel %vm406, %v10024, 0
    %v10094 = vsel %vm406, %v10025, 0
    %v10097 = vsel %vm406, %v10026, 0
    %v10100 = vsel %vm406, %v10027, 0
    %v10103 = vsel %vm406, %v10028, 0
    %v10106 = vsel %vm406, %v10029, 0
    %v10109 = vsel %vm406, %v10030, 0
    %v10112 = vsel %vm406, %v10047, 0
    %v10115 = vsel %vm406, %v10048, 0
    %v10118 = vsel %vm406, %v10049, 0
    %v10121 = vsel %vm406, %v10050, 0
    %v10124 = vsel %vm406, %v10051, 0
    %v10127 = vsel %vm406, %v10052, 0
    %v10130 = vsel %vm406, %v10053, 0
    %v10133 = vsel %vm406, %v10054, 0
    %v10136 = vsel %vm406, %v10055, 0
    %v10139 = vsel %vm406, %v10056, 0
    %v10142 = vsel %vm406, %v10057, 0
    %v10145 = vsel %vm406, %v10058, 0
    %v10148 = vsel %vm406, %v10059, 0
    %v10151 = vsel %vm406, %v10060, 0
    %v10154 = vsel %vm406, %v10061, 0
    %v10157 = vsel %vm406, %v10062, 0
    %10159 = vmatprep.subr.mxu0 0.0
    %10160 = vmatpush1.msra.mxu0 %v9996
    %10161 = vmatprep.subr.mxu0 0.0
    %10162 = vmatpush1.msra.mxu0 0.0
    %10163 = vmatprep.subr.mxu0 0.0
    %10164 = vmatpush1.msra.mxu0 0.0
    %10165 = vmatprep.subr.mxu0 0.0
    %10166 = vmatpush1.msra.mxu0 0.0
    %10167 = vmatprep.subr.mxu0 0.0
    %10168 = vmatpush1.msra.mxu0 0.0
    %10169 = vmatprep.subr.mxu0 0.0
    %10170 = vmatpush1.msra.mxu0 0.0
    %10171 = vmatprep.subr.mxu0 0.0
    %10172 = vmatpush1.msra.mxu0 0.0
    %10173 = vmatprep.subr.mxu0 0.0
    %10174 = vmatpush1.msra.mxu0 0.0
    %10175 = vmatprep.subr.mxu0 0.0
    %10176 = vmatpush1.msra.mxu0 0.0
    %10177 = vmatprep.subr.mxu0 0.0
    %10178 = vmatpush1.msra.mxu0 0.0
    %10179 = vmatprep.subr.mxu0 0.0
    %10180 = vmatpush1.msra.mxu0 0.0
    %10181 = vmatprep.subr.mxu0 0.0
    %10182 = vmatpush1.msra.mxu0 0.0
    %10183 = vmatprep.subr.mxu0 0.0
    %10184 = vmatpush1.msra.mxu0 0.0
    %10185 = vmatprep.subr.mxu0 0.0
    %10186 = vmatpush1.msra.mxu0 0.0
    %10187 = vmatprep.subr.mxu0 0.0
    %10188 = vmatpush1.msra.mxu0 0.0
    %10189 = vmatprep.subr.mxu0 0.0
    %10190 = vmatpush1.msra.mxu0 0.0
    %10191 = vmatprep.subr.mxu0 0.0
    %10192 = vmatpush1.msra.mxu0 0.0
    %10193 = vmatprep.subr.mxu0 0.0
    %10194 = vmatpush1.msra.mxu0 0.0
    %10195 = vmatprep.subr.mxu0 0.0
    %10196 = vmatpush1.msra.mxu0 0.0
    %10197 = vmatprep.subr.mxu0 0.0
    %10198 = vmatpush1.msra.mxu0 0.0
    %10199 = vmatprep.subr.mxu0 0.0
    %10200 = vmatpush1.msra.mxu0 0.0
    %10201 = vmatprep.subr.mxu0 0.0
    %10202 = vmatpush1.msra.mxu0 0.0
    %10203 = vmatprep.subr.mxu0 0.0
    %10204 = vmatpush1.msra.mxu0 0.0
    %10205 = vmatprep.subr.mxu0 0.0
    %10206 = vmatpush1.msra.mxu0 0.0
    %10207 = vmatprep.subr.mxu0 0.0
    %10208 = vmatpush1.msra.mxu0 0.0
    %10209 = vmatprep.subr.mxu0 0.0
    %10210 = vmatpush1.msra.mxu0 0.0
    %10211 = vmatprep.subr.mxu0 0.0
    %10212 = vmatpush1.msra.mxu0 0.0
    %10213 = vmatprep.subr.mxu0 0.0
    %10214 = vmatpush1.msra.mxu0 0.0
    %10215 = vmatprep.subr.mxu0 0.0
    %10216 = vmatpush1.msra.mxu0 0.0
    %10217 = vmatprep.subr.mxu0 0.0
    %10218 = vmatpush1.msra.mxu0 0.0
    %10219 = vmatprep.subr.mxu0 0.0
    %10220 = vmatpush1.msra.mxu0 0.0
    %10221 = vmatprep.subr.mxu0 0.0
    %10222 = vmatpush1.msra.mxu0 0.0
    %10223 = vmatprep.mubr.f32.mxu0 0.0
    %10224 = vmatmul.mubr.f32.gmra.mrb[0].mxu0 %v10064
    %v10225 = vpop.f32.mrb[0].mxu0
    %v10226 = vadd.f32 0.0, %v10225
    %v10227 = vpop.f32.mrb[0].mxu0
    %10228 = vmatprep.mubr.f32.mxu0 0.0
    %10229 = vmatmul.mubr.f32.gmra.mrb[0].mxu0 %v10067
    %v10230 = vpop.f32.mrb[0].mxu0
    %v10231 = vadd.f32 0.0, %v10230
    %v10232 = vpop.f32.mrb[0].mxu0
    %10233 = vmatprep.mubr.f32.mxu0 0.0
    %10234 = vmatmul.mubr.f32.gmra.mrb[0].mxu0 %v10070
    %v10235 = vpop.f32.mrb[0].mxu0
    %v10236 = vadd.f32 0.0, %v10235
    %v10237 = vpop.f32.mrb[0].mxu0
    %10238 = vmatprep.mubr.f32.mxu0 0.0
    %10239 = vmatmul.mubr.f32.gmra.mrb[0].mxu0 %v10073
    %v10240 = vpop.f32.mrb[0].mxu0
    %v10241 = vadd.f32 0.0, %v10240
    %v10242 = vpop.f32.mrb[0].mxu0
    %10243 = vmatprep.mubr.f32.mxu0 0.0
    %10244 = vmatmul.mubr.f32.gmra.mrb[0].mxu0 %v10076
    %v10245 = vpop.f32.mrb[0].mxu0
    %v10246 = vadd.f32 0.0, %v10245
    %v10247 = vpop.f32.mrb[0].mxu0
    %10248 = vmatprep.mubr.f32.mxu0 0.0
    %10249 = vmatmul.mubr.f32.gmra.mrb[0].mxu0 %v10079
    %v10250 = vpop.f32.mrb[0].mxu0
    %v10251 = vadd.f32 0.0, %v10250
    %v10252 = vpop.f32.mrb[0].mxu0
    %10253 = vmatprep.mubr.f32.mxu0 0.0
    %10254 = vmatmul.mubr.f32.gmra.mrb[0].mxu0 %v10082
    %v10255 = vpop.f32.mrb[0].mxu0
    %v10256 = vadd.f32 0.0, %v10255
    %v10257 = vpop.f32.mrb[0].mxu0
    %10258 = vmatprep.mubr.f32.mxu0 0.0
    %10259 = vmatmul.mubr.f32.gmra.mrb[0].mxu0 %v10085
    %v10260 = vpop.f32.mrb[0].mxu0
    %v10261 = vadd.f32 0.0, %v10260
    %v10262 = vpop.f32.mrb[0].mxu0
    %10263 = vmatprep.mubr.f32.mxu0 0.0
    %10264 = vmatmul.mubr.f32.gmra.mrb[0].mxu0 %v10088
    %v10265 = vpop.f32.mrb[0].mxu0
    %v10266 = vadd.f32 0.0, %v10265
    %v10267 = vpop.f32.mrb[0].mxu0
    %10268 = vmatprep.mubr.f32.mxu0 0.0
    %10269 = vmatmul.mubr.f32.gmra.mrb[0].mxu0 %v10091
    %v10270 = vpop.f32.mrb[0].mxu0
    %v10271 = vadd.f32 0.0, %v10270
    %v10272 = vpop.f32.mrb[0].mxu0
    %10273 = vmatprep.mubr.f32.mxu0 0.0
    %10274 = vmatmul.mubr.f32.gmra.mrb[0].mxu0 %v10094
    %v10275 = vpop.f32.mrb[0].mxu0
    %v10276 = vadd.f32 0.0, %v10275
    %v10277 = vpop.f32.mrb[0].mxu0
    %10278 = vmatprep.mubr.f32.mxu0 0.0
    %10279 = vmatmul.mubr.f32.gmra.mrb[0].mxu0 %v10097
    %v10280 = vpop.f32.mrb[0].mxu0
    %v10281 = vadd.f32 0.0, %v10280
    %v10282 = vpop.f32.mrb[0].mxu0
    %10283 = vmatprep.mubr.f32.mxu0 0.0
    %10284 = vmatmul.mubr.f32.gmra.mrb[0].mxu0 %v10100
    %v10285 = vpop.f32.mrb[0].mxu0
    %v10286 = vadd.f32 0.0, %v10285
    %v10287 = vpop.f32.mrb[0].mxu0
    %10288 = vmatprep.mubr.f32.mxu0 0.0
    %10289 = vmatmul.mubr.f32.gmra.mrb[0].mxu0 %v10103
    %v10290 = vpop.f32.mrb[0].mxu0
    %v10291 = vadd.f32 0.0, %v10290
    %v10292 = vpop.f32.mrb[0].mxu0
    %10293 = vmatprep.mubr.f32.mxu0 0.0
    %10294 = vmatmul.mubr.f32.gmra.mrb[0].mxu0 %v10106
    %v10295 = vpop.f32.mrb[0].mxu0
    %v10296 = vadd.f32 0.0, %v10295
    %v10297 = vpop.f32.mrb[0].mxu0
    %10298 = vmatprep.mubr.f32.mxu0 0.0
    %10299 = vmatmul.mubr.f32.gmra.mrb[0].mxu0 %v10109
    %v10300 = vpop.f32.mrb[0].mxu0
    %v10301 = vadd.f32 0.0, %v10300
    %v10302 = vpop.f32.mrb[0].mxu0
    %10303 = vmatprep.mubr.f32.mxu0 0.0
    %10304 = vmatmul.mubr.f32.gmra.mrb[0].mxu0 %v10112
    %v10305 = vpop.f32.mrb[0].mxu0
    %v10306 = vadd.f32 0.0, %v10305
    %v10307 = vpop.f32.mrb[0].mxu0
    %10308 = vmatprep.mubr.f32.mxu0 0.0
    %10309 = vmatmul.mubr.f32.gmra.mrb[0].mxu0 %v10115
    %v10310 = vpop.f32.mrb[0].mxu0
    %v10311 = vadd.f32 0.0, %v10310
    %v10312 = vpop.f32.mrb[0].mxu0
    %10313 = vmatprep.mubr.f32.mxu0 0.0
    %10314 = vmatmul.mubr.f32.gmra.mrb[0].mxu0 %v10118
    %v10315 = vpop.f32.mrb[0].mxu0
    %v10316 = vadd.f32 0.0, %v10315
    %v10317 = vpop.f32.mrb[0].mxu0
    %10318 = vmatprep.mubr.f32.mxu0 0.0
    %10319 = vmatmul.mubr.f32.gmra.mrb[0].mxu0 %v10121
    %v10320 = vpop.f32.mrb[0].mxu0
    %v10321 = vadd.f32 0.0, %v10320
    %v10322 = vpop.f32.mrb[0].mxu0
    %10323 = vmatprep.mubr.f32.mxu0 0.0
    %10324 = vmatmul.mubr.f32.gmra.mrb[0].mxu0 %v10124
    %v10325 = vpop.f32.mrb[0].mxu0
    %v10326 = vadd.f32 0.0, %v10325
    %v10327 = vpop.f32.mrb[0].mxu0
    %10328 = vmatprep.mubr.f32.mxu0 0.0
    %10329 = vmatmul.mubr.f32.gmra.mrb[0].mxu0 %v10127
    %v10330 = vpop.f32.mrb[0].mxu0
    %v10331 = vadd.f32 0.0, %v10330
    %v10332 = vpop.f32.mrb[0].mxu0
    %10333 = vmatprep.mubr.f32.mxu0 0.0
    %10334 = vmatmul.mubr.f32.gmra.mrb[0].mxu0 %v10130
    %v10335 = vpop.f32.mrb[0].mxu0
    %v10336 = vadd.f32 0.0, %v10335
    %v10337 = vpop.f32.mrb[0].mxu0
    %10338 = vmatprep.mubr.f32.mxu0 0.0
    %10339 = vmatmul.mubr.f32.gmra.mrb[0].mxu0 %v10133
    %v10340 = vpop.f32.mrb[0].mxu0
    %v10341 = vadd.f32 0.0, %v10340
    %v10342 = vpop.f32.mrb[0].mxu0
    %10343 = vmatprep.mubr.f32.mxu0 0.0
    %10344 = vmatmul.mubr.f32.gmra.mrb[0].mxu0 %v10136
    %v10345 = vpop.f32.mrb[0].mxu0
    %v10346 = vadd.f32 0.0, %v10345
    %v10347 = vpop.f32.mrb[0].mxu0
    %10348 = vmatprep.mubr.f32.mxu0 0.0
    %10349 = vmatmul.mubr.f32.gmra.mrb[0].mxu0 %v10139
    %v10350 = vpop.f32.mrb[0].mxu0
    %v10351 = vadd.f32 0.0, %v10350
    %v10352 = vpop.f32.mrb[0].mxu0
    %10353 = vmatprep.mubr.f32.mxu0 0.0
    %10354 = vmatmul.mubr.f32.gmra.mrb[0].mxu0 %v10142
    %v10355 = vpop.f32.mrb[0].mxu0
    %v10356 = vadd.f32 0.0, %v10355
    %v10357 = vpop.f32.mrb[0].mxu0
    %10358 = vmatprep.mubr.f32.mxu0 0.0
    %10359 = vmatmul.mubr.f32.gmra.mrb[0].mxu0 %v10145
    %v10360 = vpop.f32.mrb[0].mxu0
    %v10361 = vadd.f32 0.0, %v10360
    %v10362 = vpop.f32.mrb[0].mxu0
    %10363 = vmatprep.mubr.f32.mxu0 0.0
    %10364 = vmatmul.mubr.f32.gmra.mrb[0].mxu0 %v10148
    %v10365 = vpop.f32.mrb[0].mxu0
    %v10366 = vadd.f32 0.0, %v10365
    %v10367 = vpop.f32.mrb[0].mxu0
    %10368 = vmatprep.mubr.f32.mxu0 0.0
    %10369 = vmatmul.mubr.f32.gmra.mrb[0].mxu0 %v10151
    %v10370 = vpop.f32.mrb[0].mxu0
    %v10371 = vadd.f32 0.0, %v10370
    %v10372 = vpop.f32.mrb[0].mxu0
    %10373 = vmatprep.mubr.f32.mxu0 0.0
    %10374 = vmatmul.mubr.f32.gmra.mrb[0].mxu0 %v10154
    %v10375 = vpop.f32.mrb[0].mxu0
    %v10376 = vadd.f32 0.0, %v10375
    %v10377 = vpop.f32.mrb[0].mxu0
    %10378 = vmatprep.mubr.f32.mxu0 0.0
    %10379 = vmatmul.mubr.f32.gmra.mrb[0].mxu0 %v10157
    %v10380 = vpop.f32.mrb[0].mxu0
    %v10381 = vadd.f32 0.0, %v10380
    %v10382 = vpop.f32.mrb[0].mxu0
    %10383 = vdwg.mxu0
    %v10384 = vmul.f32 %v9886, 0.95
    %v10385 = vmul.f32 %v9887, 0.95
    %v10386 = vmul.f32 %v9888, 0.95
    %v10387 = vmul.f32 %v9889, 0.95
    %v10388 = vmul.f32 %v9890, 0.95
    %v10389 = vmul.f32 %v9891, 0.95
    %v10390 = vmul.f32 %v9892, 0.95
    %v10391 = vmul.f32 %v9893, 0.95
    %v10392 = vmul.f32 %v9894, 0.95
    %v10393 = vmul.f32 %v9895, 0.95
    %v10394 = vmul.f32 %v9896, 0.95
    %v10395 = vmul.f32 %v9897, 0.95
    %v10396 = vmul.f32 %v9898, 0.95
    %v10397 = vmul.f32 %v9899, 0.95
    %v10398 = vmul.f32 %v9900, 0.95
    %v10399 = vmul.f32 %v9901, 0.95
    %v10400 = vmul.f32 %v9902, 0.95
    %v10401 = vmul.f32 %v9903, 0.95
    %v10402 = vmul.f32 %v9904, 0.95
    %v10403 = vmul.f32 %v9905, 0.95
    %v10404 = vmul.f32 %v9906, 0.95
    %v10405 = vmul.f32 %v9907, 0.95
    %v10406 = vmul.f32 %v9908, 0.95
    %v10407 = vmul.f32 %v9909, 0.95
    %v10408 = vmul.f32 %v9910, 0.95
    %v10409 = vmul.f32 %v9911, 0.95
    %v10410 = vmul.f32 %v9912, 0.95
    %v10411 = vmul.f32 %v9913, 0.95
    %v10412 = vmul.f32 %v9914, 0.95
    %v10413 = vmul.f32 %v9915, 0.95
    %v10414 = vmul.f32 %v9916, 0.95
    %v10415 = vmul.f32 %v9917, 0.95
    %v10416 = vadd.f32 %v10384, %v10226
    %v10417 = vadd.f32 %v10385, %v10231
    %v10418 = vadd.f32 %v10386, %v10236
    %v10419 = vadd.f32 %v10387, %v10241
    %v10420 = vadd.f32 %v10388, %v10246
    %v10421 = vadd.f32 %v10389, %v10251
    %v10422 = vadd.f32 %v10390, %v10256
    %v10423 = vadd.f32 %v10391, %v10261
    %v10424 = vadd.f32 %v10392, %v10266
    %v10425 = vadd.f32 %v10393, %v10271
    %v10426 = vadd.f32 %v10394, %v10276
    %v10427 = vadd.f32 %v10395, %v10281
    %v10428 = vadd.f32 %v10396, %v10286
    %v10429 = vadd.f32 %v10397, %v10291
    %v10430 = vadd.f32 %v10398, %v10296
    %v10431 = vadd.f32 %v10399, %v10301
    %v10432 = vadd.f32 %v10400, %v10306
    %v10433 = vadd.f32 %v10401, %v10311
    %v10434 = vadd.f32 %v10402, %v10316
    %v10435 = vadd.f32 %v10403, %v10321
    %v10436 = vadd.f32 %v10404, %v10326
    %v10437 = vadd.f32 %v10405, %v10331
    %v10438 = vadd.f32 %v10406, %v10336
    %v10439 = vadd.f32 %v10407, %v10341
    %v10440 = vadd.f32 %v10408, %v10346
    %v10441 = vadd.f32 %v10409, %v10351
    %v10442 = vadd.f32 %v10410, %v10356
    %v10443 = vadd.f32 %v10411, %v10361
    %v10444 = vadd.f32 %v10412, %v10366
    %v10445 = vadd.f32 %v10413, %v10371
    %v10446 = vadd.f32 %v10414, %v10376
    %v10447 = vadd.f32 %v10415, %v10381
    %v10448 = vmax.f32 %v10416, -4.0
    %v10449 = vmax.f32 %v10417, -4.0
    %v10450 = vmax.f32 %v10418, -4.0
    %v10451 = vmax.f32 %v10419, -4.0
    %v10452 = vmax.f32 %v10420, -4.0
    %v10453 = vmax.f32 %v10421, -4.0
    %v10454 = vmax.f32 %v10422, -4.0
    %v10455 = vmax.f32 %v10423, -4.0
    %v10456 = vmax.f32 %v10424, -4.0
    %v10457 = vmax.f32 %v10425, -4.0
    %v10458 = vmax.f32 %v10426, -4.0
    %v10459 = vmax.f32 %v10427, -4.0
    %v10460 = vmax.f32 %v10428, -4.0
    %v10461 = vmax.f32 %v10429, -4.0
    %v10462 = vmax.f32 %v10430, -4.0
    %v10463 = vmax.f32 %v10431, -4.0
    %v10464 = vmax.f32 %v10432, -4.0
    %v10465 = vmax.f32 %v10433, -4.0
    %v10466 = vmax.f32 %v10434, -4.0
    %v10467 = vmax.f32 %v10435, -4.0
    %v10468 = vmax.f32 %v10436, -4.0
    %v10469 = vmax.f32 %v10437, -4.0
    %v10470 = vmax.f32 %v10438, -4.0
    %v10471 = vmax.f32 %v10439, -4.0
    %v10472 = vmax.f32 %v10440, -4.0
    %v10473 = vmax.f32 %v10441, -4.0
    %v10474 = vmax.f32 %v10442, -4.0
    %v10475 = vmax.f32 %v10443, -4.0
    %v10476 = vmax.f32 %v10444, -4.0
    %v10477 = vmax.f32 %v10445, -4.0
    %v10478 = vmax.f32 %v10446, -4.0
    %v10479 = vmax.f32 %v10447, -4.0
    %v10480 = vmin.f32 %v10448, 4.0
    %v10481 = vmin.f32 %v10449, 4.0
    %v10482 = vmin.f32 %v10450, 4.0
    %v10483 = vmin.f32 %v10451, 4.0
    %v10484 = vmin.f32 %v10452, 4.0
    %v10485 = vmin.f32 %v10453, 4.0
    %v10486 = vmin.f32 %v10454, 4.0
    %v10487 = vmin.f32 %v10455, 4.0
    %v10488 = vmin.f32 %v10456, 4.0
    %v10489 = vmin.f32 %v10457, 4.0
    %v10490 = vmin.f32 %v10458, 4.0
    %v10491 = vmin.f32 %v10459, 4.0
    %v10492 = vmin.f32 %v10460, 4.0
    %v10493 = vmin.f32 %v10461, 4.0
    %v10494 = vmin.f32 %v10462, 4.0
    %v10495 = vmin.f32 %v10463, 4.0
    %v10496 = vmin.f32 %v10464, 4.0
    %v10497 = vmin.f32 %v10465, 4.0
    %v10498 = vmin.f32 %v10466, 4.0
    %v10499 = vmin.f32 %v10467, 4.0
    %v10500 = vmin.f32 %v10468, 4.0
    %v10501 = vmin.f32 %v10469, 4.0
    %v10502 = vmin.f32 %v10470, 4.0
    %v10503 = vmin.f32 %v10471, 4.0
    %v10504 = vmin.f32 %v10472, 4.0
    %v10505 = vmin.f32 %v10473, 4.0
    %v10506 = vmin.f32 %v10474, 4.0
    %v10507 = vmin.f32 %v10475, 4.0
    %v10508 = vmin.f32 %v10476, 4.0
    %v10509 = vmin.f32 %v10477, 4.0
    %v10510 = vmin.f32 %v10478, 4.0
    %v10511 = vmin.f32 %v10479, 4.0
    %10512 = vst [vmem:[%s15] sm:$0xff] %v10480
    %10513 = vst [vmem:[%s15 + $0x8] sm:$0xff] %v10481
    %10514 = vst [vmem:[%s15 + $0x10] sm:$0xff] %v10482
    %10515 = vst [vmem:[%s15 + $0x18] sm:$0xff] %v10483
    %10516 = vst [vmem:[%s15 + $0x20] sm:$0xff] %v10484
    %10517 = vst [vmem:[%s15 + $0x28] sm:$0xff] %v10485
    %10518 = vst [vmem:[%s15 + $0x30] sm:$0xff] %v10486
    %10519 = vst [vmem:[%s15 + $0x38] sm:$0xff] %v10487
    %10520 = vst [vmem:[%s15 + $0x40] sm:$0xff] %v10488
    %10521 = vst [vmem:[%s15 + $0x48] sm:$0xff] %v10489
    %10522 = vst [vmem:[%s15 + $0x50] sm:$0xff] %v10490
    %10523 = vst [vmem:[%s15 + $0x58] sm:$0xff] %v10491
    %10524 = vst [vmem:[%s15 + $0x60] sm:$0xff] %v10492
    %10525 = vst [vmem:[%s15 + $0x68] sm:$0xff] %v10493
    %10526 = vst [vmem:[%s15 + $0x70] sm:$0xff] %v10494
    %10527 = vst [vmem:[%s15 + $0x78] sm:$0xff] %v10495
    %10528 = vst [vmem:[%s15 + $0x80] sm:$0xff] %v10496
    %10529 = vst [vmem:[%s15 + $0x88] sm:$0xff] %v10497
    %10530 = vst [vmem:[%s15 + $0x90] sm:$0xff] %v10498
    %10531 = vst [vmem:[%s15 + $0x98] sm:$0xff] %v10499
    %10532 = vst [vmem:[%s15 + $0xa0] sm:$0xff] %v10500
    %10533 = vst [vmem:[%s15 + $0xa8] sm:$0xff] %v10501
    %10534 = vst [vmem:[%s15 + $0xb0] sm:$0xff] %v10502
    %10535 = vst [vmem:[%s15 + $0xb8] sm:$0xff] %v10503
    %10536 = vst [vmem:[%s15 + $0xc0] sm:$0xff] %v10504
    %10537 = vst [vmem:[%s15 + $0xc8] sm:$0xff] %v10505
    %10538 = vst [vmem:[%s15 + $0xd0] sm:$0xff] %v10506
    %10539 = vst [vmem:[%s15 + $0xd8] sm:$0xff] %v10507
    %10540 = vst [vmem:[%s15 + $0xe0] sm:$0xff] %v10508
    %10541 = vst [vmem:[%s15 + $0xe8] sm:$0xff] %v10509
    %10542 = vst [vmem:[%s15 + $0xf0] sm:$0xff] %v10510
    %10543 = vst [vmem:[%s15 + $0xf8] sm:$0xff] %v10511
    %v10544 = vsub.f32 %v9993, %v9480
    %v10545 = vmul.f32 %v10544, 0.5
    %v10546 = vadd.f32 %v9480, %v10545
    %vm10547 = vcmp.ge.f32.partialorder %v10546, 1.0
    %v10548 = vsel %vm10547, 1, 0
    %v10549 = vcvt.s32.f32 %v10548
    %v10550 = vadd.f32 %v9481, %v10549
    %v10551 = vmul.f32 %v896, %v9861
    %v10552 = vmul.f32 %v896, %v9862
    %v10553 = vmul.f32 %v896, %v9863
    %v10554 = vmul.f32 %v896, %v9864
    %v10555 = vmul.f32 %v896, %v9865
    %v10556 = vmul.f32 %v896, %v9866
    %v10557 = vmul.f32 %v896, %v9867
    %v10558 = vmul.f32 %v896, %v9868
    %v10559 = vmul.f32 %v896, %v9869
    %v10560 = vmul.f32 %v896, %v9870
    %v10561 = vmul.f32 %v896, %v9871
    %v10562 = vmul.f32 %v896, %v9872
    %v10563 = vmul.f32 %v896, %v9873
    %v10564 = vmul.f32 %v896, %v9874
    %v10565 = vmul.f32 %v896, %v9875
    %v10566 = vmul.f32 %v896, %v9876
    %v10567 = vadd.f32 %v187, %v10551
    %v10568 = vadd.f32 %v188, %v10552
    %v10569 = vadd.f32 %v189, %v10553
    %v10570 = vadd.f32 %v190, %v10554
    %v10571 = vadd.f32 %v191, %v10555
    %v10572 = vadd.f32 %v192, %v10556
    %v10573 = vadd.f32 %v193, %v10557
    %v10574 = vadd.f32 %v194, %v10558
    %v10575 = vadd.f32 %v195, %v10559
    %v10576 = vadd.f32 %v196, %v10560
    %v10577 = vadd.f32 %v197, %v10561
    %v10578 = vadd.f32 %v198, %v10562
    %v10579 = vadd.f32 %v199, %v10563
    %v10580 = vadd.f32 %v200, %v10564
    %v10581 = vadd.f32 %v201, %v10565
    %v10582 = vadd.f32 %v202, %v10566
    %10583 = vmatprep.subr.mxu0 0.0
    %10584 = vmatpush1.msra.mxu0 %v10567
    %10585 = vmatprep.subr.mxu0 0.0
    %10586 = vmatpush1.msra.mxu0 %v10568
    %10587 = vmatprep.subr.mxu0 0.0
    %10588 = vmatpush1.msra.mxu0 %v10569
    %10589 = vmatprep.subr.mxu0 0.0
    %10590 = vmatpush1.msra.mxu0 %v10570
    %10591 = vmatprep.subr.mxu0 0.0
    %10592 = vmatpush1.msra.mxu0 %v10571
    %10593 = vmatprep.subr.mxu0 0.0
    %10594 = vmatpush1.msra.mxu0 %v10572
    %10595 = vmatprep.subr.mxu0 0.0
    %10596 = vmatpush1.msra.mxu0 %v10573
    %10597 = vmatprep.subr.mxu0 0.0
    %10598 = vmatpush1.msra.mxu0 %v10574
    %10599 = vmatprep.subr.mxu0 0.0
    %10600 = vmatpush1.msra.mxu0 %v10575
    %10601 = vmatprep.subr.mxu0 0.0
    %10602 = vmatpush1.msra.mxu0 %v10576
    %10603 = vmatprep.subr.mxu0 0.0
    %10604 = vmatpush1.msra.mxu0 %v10577
    %10605 = vmatprep.subr.mxu0 0.0
    %10606 = vmatpush1.msra.mxu0 %v10578
    %10607 = vmatprep.subr.mxu0 0.0
    %10608 = vmatpush1.msra.mxu0 %v10579
    %10609 = vmatprep.subr.mxu0 0.0
    %10610 = vmatpush1.msra.mxu0 %v10580
    %10611 = vmatprep.subr.mxu0 0.0
    %10612 = vmatpush1.msra.mxu0 %v10581
    %10613 = vmatprep.subr.mxu0 0.0
    %10614 = vmatpush1.msra.mxu0 %v10582
    %10615 = vmatprep.subr.mxu0 0.0
    %10616 = vmatpush1.msra.mxu0 0.0
    %10617 = vmatprep.subr.mxu0 0.0
    %10618 = vmatpush1.msra.mxu0 0.0
    %10619 = vmatprep.subr.mxu0 0.0
    %10620 = vmatpush1.msra.mxu0 0.0
    %10621 = vmatprep.subr.mxu0 0.0
    %10622 = vmatpush1.msra.mxu0 0.0
    %10623 = vmatprep.subr.mxu0 0.0
    %10624 = vmatpush1.msra.mxu0 0.0
    %10625 = vmatprep.subr.mxu0 0.0
    %10626 = vmatpush1.msra.mxu0 0.0
    %10627 = vmatprep.subr.mxu0 0.0
    %10628 = vmatpush1.msra.mxu0 0.0
    %10629 = vmatprep.subr.mxu0 0.0
    %10630 = vmatpush1.msra.mxu0 0.0
    %10631 = vmatprep.subr.mxu0 0.0
    %10632 = vmatpush1.msra.mxu0 0.0
    %10633 = vmatprep.subr.mxu0 0.0
    %10634 = vmatpush1.msra.mxu0 0.0
    %10635 = vmatprep.subr.mxu0 0.0
    %10636 = vmatpush1.msra.mxu0 0.0
    %10637 = vmatprep.subr.mxu0 0.0
    %10638 = vmatpush1.msra.mxu0 0.0
    %10639 = vmatprep.subr.mxu0 0.0
    %10640 = vmatpush1.msra.mxu0 0.0
    %10641 = vmatprep.subr.mxu0 0.0
    %10642 = vmatpush1.msra.mxu0 0.0
    %10643 = vmatprep.subr.mxu0 0.0
    %10644 = vmatpush1.msra.mxu0 0.0
    %10645 = vmatprep.subr.mxu0 0.0
    %10646 = vmatpush1.msra.mxu0 0.0
    %10647 = vmatprep.mubr.f32.mxu0 0.0
    %10648 = vmatmul.mubr.f32.gmra.mrb[0].mxu0 %v10549
    %v10649 = vpop.f32.mrb[0].mxu0
    %v10650 = vadd.f32 %v933, %v10649
    %v10651 = vpop.f32.mrb[0].mxu0
    %10652 = vdwg.mxu0
    %v10653 = vmul.f32 %v10650, 2.857143
    %v10654 = vsub.f32 %v10653, %v1010
    %v10655 = vtanh.pop %v10654
    %v10656 = vmul.f32 %v10549, %v1018
    %10657 = vxpose.xlu0.b32.start [1/16] %v10656, 128
    %10658 = vxpose.xlu0.b32.cont [2/16] 0.0, 128
    %10659 = vxpose.xlu0.b32.cont [3/16] 0.0, 128
    %10660 = vxpose.xlu0.b32.cont [4/16] 0.0, 128
    %10661 = vxpose.xlu0.b32.cont [5/16] 0.0, 128
    %10662 = vxpose.xlu0.b32.cont [6/16] 0.0, 128
    %10663 = vxpose.xlu0.b32.cont [7/16] 0.0, 128
    %10664 = vxpose.xlu0.b32.cont [8/16] 0.0, 128
    %10665 = vxpose.xlu0.b32.cont [9/16] 0.0, 128
    %10666 = vxpose.xlu0.b32.cont [10/16] 0.0, 128
    %10667 = vxpose.xlu0.b32.cont [11/16] 0.0, 128
    %10668 = vxpose.xlu0.b32.cont [12/16] 0.0, 128
    %10669 = vxpose.xlu0.b32.cont [13/16] 0.0, 128
    %10670 = vxpose.xlu0.b32.cont [14/16] 0.0, 128
    %10671 = vxpose.xlu0.b32.cont [15/16] 0.0, 128
    %10672 = vxpose.xlu0.b32.end [16/16] 0.0, 128
    %v10673 = vpop.trf.xlu0
    %v10674 = vpop.trf.xlu0
    %v10675 = vpop.trf.xlu0
    %v10676 = vpop.trf.xlu0
    %v10677 = vpop.trf.xlu0
    %v10678 = vpop.trf.xlu0
    %v10679 = vpop.trf.xlu0
    %v10680 = vpop.trf.xlu0
    %v10681 = vpop.trf.xlu0
    %v10682 = vpop.trf.xlu0
    %v10683 = vpop.trf.xlu0
    %v10684 = vpop.trf.xlu0
    %v10685 = vpop.trf.xlu0
    %v10686 = vpop.trf.xlu0
    %v10687 = vpop.trf.xlu0
    %v10688 = vpop.trf.xlu0
    %v10690 = vsel %vm406, %v10673, 0
    %v10693 = vsel %vm406, %v10674, 0
    %v10696 = vsel %vm406, %v10675, 0
    %v10699 = vsel %vm406, %v10676, 0
    %v10702 = vsel %vm406, %v10677, 0
    %v10705 = vsel %vm406, %v10678, 0
    %v10708 = vsel %vm406, %v10679, 0
    %v10711 = vsel %vm406, %v10680, 0
    %v10714 = vsel %vm406, %v10681, 0
    %v10717 = vsel %vm406, %v10682, 0
    %v10720 = vsel %vm406, %v10683, 0
    %v10723 = vsel %vm406, %v10684, 0
    %v10726 = vsel %vm406, %v10685, 0
    %v10729 = vsel %vm406, %v10686, 0
    %v10732 = vsel %vm406, %v10687, 0
    %v10735 = vsel %vm406, %v10688, 0
    %10737 = vmatprep.subr.mxu0 0.0
    %10738 = vmatpush1.msra.mxu0 %v10655
    %10739 = vmatprep.subr.mxu0 0.0
    %10740 = vmatpush1.msra.mxu0 0.0
    %10741 = vmatprep.subr.mxu0 0.0
    %10742 = vmatpush1.msra.mxu0 0.0
    %10743 = vmatprep.subr.mxu0 0.0
    %10744 = vmatpush1.msra.mxu0 0.0
    %10745 = vmatprep.subr.mxu0 0.0
    %10746 = vmatpush1.msra.mxu0 0.0
    %10747 = vmatprep.subr.mxu0 0.0
    %10748 = vmatpush1.msra.mxu0 0.0
    %10749 = vmatprep.subr.mxu0 0.0
    %10750 = vmatpush1.msra.mxu0 0.0
    %10751 = vmatprep.subr.mxu0 0.0
    %10752 = vmatpush1.msra.mxu0 0.0
    %10753 = vmatprep.subr.mxu0 0.0
    %10754 = vmatpush1.msra.mxu0 0.0
    %10755 = vmatprep.subr.mxu0 0.0
    %10756 = vmatpush1.msra.mxu0 0.0
    %10757 = vmatprep.subr.mxu0 0.0
    %10758 = vmatpush1.msra.mxu0 0.0
    %10759 = vmatprep.subr.mxu0 0.0
    %10760 = vmatpush1.msra.mxu0 0.0
    %10761 = vmatprep.subr.mxu0 0.0
    %10762 = vmatpush1.msra.mxu0 0.0
    %10763 = vmatprep.subr.mxu0 0.0
    %10764 = vmatpush1.msra.mxu0 0.0
    %10765 = vmatprep.subr.mxu0 0.0
    %10766 = vmatpush1.msra.mxu0 0.0
    %10767 = vmatprep.subr.mxu0 0.0
    %10768 = vmatpush1.msra.mxu0 0.0
    %10769 = vmatprep.subr.mxu0 0.0
    %10770 = vmatpush1.msra.mxu0 0.0
    %10771 = vmatprep.subr.mxu0 0.0
    %10772 = vmatpush1.msra.mxu0 0.0
    %10773 = vmatprep.subr.mxu0 0.0
    %10774 = vmatpush1.msra.mxu0 0.0
    %10775 = vmatprep.subr.mxu0 0.0
    %10776 = vmatpush1.msra.mxu0 0.0
    %10777 = vmatprep.subr.mxu0 0.0
    %10778 = vmatpush1.msra.mxu0 0.0
    %10779 = vmatprep.subr.mxu0 0.0
    %10780 = vmatpush1.msra.mxu0 0.0
    %10781 = vmatprep.subr.mxu0 0.0
    %10782 = vmatpush1.msra.mxu0 0.0
    %10783 = vmatprep.subr.mxu0 0.0
    %10784 = vmatpush1.msra.mxu0 0.0
    %10785 = vmatprep.subr.mxu0 0.0
    %10786 = vmatpush1.msra.mxu0 0.0
    %10787 = vmatprep.subr.mxu0 0.0
    %10788 = vmatpush1.msra.mxu0 0.0
    %10789 = vmatprep.subr.mxu0 0.0
    %10790 = vmatpush1.msra.mxu0 0.0
    %10791 = vmatprep.subr.mxu0 0.0
    %10792 = vmatpush1.msra.mxu0 0.0
    %10793 = vmatprep.subr.mxu0 0.0
    %10794 = vmatpush1.msra.mxu0 0.0
    %10795 = vmatprep.subr.mxu0 0.0
    %10796 = vmatpush1.msra.mxu0 0.0
    %10797 = vmatprep.subr.mxu0 0.0
    %10798 = vmatpush1.msra.mxu0 0.0
    %10799 = vmatprep.subr.mxu0 0.0
    %10800 = vmatpush1.msra.mxu0 0.0
    %10801 = vmatprep.mubr.f32.mxu0 0.0
    %10802 = vmatmul.mubr.f32.gmra.mrb[0].mxu0 %v10690
    %v10803 = vpop.f32.mrb[0].mxu0
    %v10804 = vadd.f32 0.0, %v10803
    %v10805 = vpop.f32.mrb[0].mxu0
    %10806 = vmatprep.mubr.f32.mxu0 0.0
    %10807 = vmatmul.mubr.f32.gmra.mrb[0].mxu0 %v10693
    %v10808 = vpop.f32.mrb[0].mxu0
    %v10809 = vadd.f32 0.0, %v10808
    %v10810 = vpop.f32.mrb[0].mxu0
    %10811 = vmatprep.mubr.f32.mxu0 0.0
    %10812 = vmatmul.mubr.f32.gmra.mrb[0].mxu0 %v10696
    %v10813 = vpop.f32.mrb[0].mxu0
    %v10814 = vadd.f32 0.0, %v10813
    %v10815 = vpop.f32.mrb[0].mxu0
    %10816 = vmatprep.mubr.f32.mxu0 0.0
    %10817 = vmatmul.mubr.f32.gmra.mrb[0].mxu0 %v10699
    %v10818 = vpop.f32.mrb[0].mxu0
    %v10819 = vadd.f32 0.0, %v10818
    %v10820 = vpop.f32.mrb[0].mxu0
    %10821 = vmatprep.mubr.f32.mxu0 0.0
    %10822 = vmatmul.mubr.f32.gmra.mrb[0].mxu0 %v10702
    %v10823 = vpop.f32.mrb[0].mxu0
    %v10824 = vadd.f32 0.0, %v10823
    %v10825 = vpop.f32.mrb[0].mxu0
    %10826 = vmatprep.mubr.f32.mxu0 0.0
    %10827 = vmatmul.mubr.f32.gmra.mrb[0].mxu0 %v10705
    %v10828 = vpop.f32.mrb[0].mxu0
    %v10829 = vadd.f32 0.0, %v10828
    %v10830 = vpop.f32.mrb[0].mxu0
    %10831 = vmatprep.mubr.f32.mxu0 0.0
    %10832 = vmatmul.mubr.f32.gmra.mrb[0].mxu0 %v10708
    %v10833 = vpop.f32.mrb[0].mxu0
    %v10834 = vadd.f32 0.0, %v10833
    %v10835 = vpop.f32.mrb[0].mxu0
    %10836 = vmatprep.mubr.f32.mxu0 0.0
    %10837 = vmatmul.mubr.f32.gmra.mrb[0].mxu0 %v10711
    %v10838 = vpop.f32.mrb[0].mxu0
    %v10839 = vadd.f32 0.0, %v10838
    %v10840 = vpop.f32.mrb[0].mxu0
    %10841 = vmatprep.mubr.f32.mxu0 0.0
    %10842 = vmatmul.mubr.f32.gmra.mrb[0].mxu0 %v10714
    %v10843 = vpop.f32.mrb[0].mxu0
    %v10844 = vadd.f32 0.0, %v10843
    %v10845 = vpop.f32.mrb[0].mxu0
    %10846 = vmatprep.mubr.f32.mxu0 0.0
    %10847 = vmatmul.mubr.f32.gmra.mrb[0].mxu0 %v10717
    %v10848 = vpop.f32.mrb[0].mxu0
    %v10849 = vadd.f32 0.0, %v10848
    %v10850 = vpop.f32.mrb[0].mxu0
    %10851 = vmatprep.mubr.f32.mxu0 0.0
    %10852 = vmatmul.mubr.f32.gmra.mrb[0].mxu0 %v10720
    %v10853 = vpop.f32.mrb[0].mxu0
    %v10854 = vadd.f32 0.0, %v10853
    %v10855 = vpop.f32.mrb[0].mxu0
    %10856 = vmatprep.mubr.f32.mxu0 0.0
    %10857 = vmatmul.mubr.f32.gmra.mrb[0].mxu0 %v10723
    %v10858 = vpop.f32.mrb[0].mxu0
    %v10859 = vadd.f32 0.0, %v10858
    %v10860 = vpop.f32.mrb[0].mxu0
    %10861 = vmatprep.mubr.f32.mxu0 0.0
    %10862 = vmatmul.mubr.f32.gmra.mrb[0].mxu0 %v10726
    %v10863 = vpop.f32.mrb[0].mxu0
    %v10864 = vadd.f32 0.0, %v10863
    %v10865 = vpop.f32.mrb[0].mxu0
    %10866 = vmatprep.mubr.f32.mxu0 0.0
    %10867 = vmatmul.mubr.f32.gmra.mrb[0].mxu0 %v10729
    %v10868 = vpop.f32.mrb[0].mxu0
    %v10869 = vadd.f32 0.0, %v10868
    %v10870 = vpop.f32.mrb[0].mxu0
    %10871 = vmatprep.mubr.f32.mxu0 0.0
    %10872 = vmatmul.mubr.f32.gmra.mrb[0].mxu0 %v10732
    %v10873 = vpop.f32.mrb[0].mxu0
    %v10874 = vadd.f32 0.0, %v10873
    %v10875 = vpop.f32.mrb[0].mxu0
    %10876 = vmatprep.mubr.f32.mxu0 0.0
    %10877 = vmatmul.mubr.f32.gmra.mrb[0].mxu0 %v10735
    %v10878 = vpop.f32.mrb[0].mxu0
    %v10879 = vadd.f32 0.0, %v10878
    %v10880 = vpop.f32.mrb[0].mxu0
    %10881 = vdwg.mxu0
    %v10882 = vmul.f32 %v9861, 0.95
    %v10883 = vmul.f32 %v9862, 0.95
    %v10884 = vmul.f32 %v9863, 0.95
    %v10885 = vmul.f32 %v9864, 0.95
    %v10886 = vmul.f32 %v9865, 0.95
    %v10887 = vmul.f32 %v9866, 0.95
    %v10888 = vmul.f32 %v9867, 0.95
    %v10889 = vmul.f32 %v9868, 0.95
    %v10890 = vmul.f32 %v9869, 0.95
    %v10891 = vmul.f32 %v9870, 0.95
    %v10892 = vmul.f32 %v9871, 0.95
    %v10893 = vmul.f32 %v9872, 0.95
    %v10894 = vmul.f32 %v9873, 0.95
    %v10895 = vmul.f32 %v9874, 0.95
    %v10896 = vmul.f32 %v9875, 0.95
    %v10897 = vmul.f32 %v9876, 0.95
    %v10898 = vadd.f32 %v10882, %v10804
    %v10899 = vadd.f32 %v10883, %v10809
    %v10900 = vadd.f32 %v10884, %v10814
    %v10901 = vadd.f32 %v10885, %v10819
    %v10902 = vadd.f32 %v10886, %v10824
    %v10903 = vadd.f32 %v10887, %v10829
    %v10904 = vadd.f32 %v10888, %v10834
    %v10905 = vadd.f32 %v10889, %v10839
    %v10906 = vadd.f32 %v10890, %v10844
    %v10907 = vadd.f32 %v10891, %v10849
    %v10908 = vadd.f32 %v10892, %v10854
    %v10909 = vadd.f32 %v10893, %v10859
    %v10910 = vadd.f32 %v10894, %v10864
    %v10911 = vadd.f32 %v10895, %v10869
    %v10912 = vadd.f32 %v10896, %v10874
    %v10913 = vadd.f32 %v10897, %v10879
    %v10914 = vmax.f32 %v10898, -4.0
    %v10915 = vmax.f32 %v10899, -4.0
    %v10916 = vmax.f32 %v10900, -4.0
    %v10917 = vmax.f32 %v10901, -4.0
    %v10918 = vmax.f32 %v10902, -4.0
    %v10919 = vmax.f32 %v10903, -4.0
    %v10920 = vmax.f32 %v10904, -4.0
    %v10921 = vmax.f32 %v10905, -4.0
    %v10922 = vmax.f32 %v10906, -4.0
    %v10923 = vmax.f32 %v10907, -4.0
    %v10924 = vmax.f32 %v10908, -4.0
    %v10925 = vmax.f32 %v10909, -4.0
    %v10926 = vmax.f32 %v10910, -4.0
    %v10927 = vmax.f32 %v10911, -4.0
    %v10928 = vmax.f32 %v10912, -4.0
    %v10929 = vmax.f32 %v10913, -4.0
    %v10930 = vmin.f32 %v10914, 4.0
    %v10931 = vmin.f32 %v10915, 4.0
    %v10932 = vmin.f32 %v10916, 4.0
    %v10933 = vmin.f32 %v10917, 4.0
    %v10934 = vmin.f32 %v10918, 4.0
    %v10935 = vmin.f32 %v10919, 4.0
    %v10936 = vmin.f32 %v10920, 4.0
    %v10937 = vmin.f32 %v10921, 4.0
    %v10938 = vmin.f32 %v10922, 4.0
    %v10939 = vmin.f32 %v10923, 4.0
    %v10940 = vmin.f32 %v10924, 4.0
    %v10941 = vmin.f32 %v10925, 4.0
    %v10942 = vmin.f32 %v10926, 4.0
    %v10943 = vmin.f32 %v10927, 4.0
    %v10944 = vmin.f32 %v10928, 4.0
    %v10945 = vmin.f32 %v10929, 4.0
    %v10946 = vsub.f32 %v10650, %v9884
    %v10947 = vmul.f32 %v10946, 0.5
    %v10948 = vadd.f32 %v9884, %v10947
    %vm10949 = vcmp.ge.f32.partialorder %v10948, 1.0
    %v10950 = vsel %vm10949, 1, 0
    %v10951 = vcvt.s32.f32 %v10950
    %v10952 = vadd.f32 %v9885, %v10951
    %10953 = vst [vmem:[#allocation5] sm:$0xff] %v10951
    %10954 = vst [vmem:[#allocation6] sm:$0xff] %v10550
    %10955 = vst [vmem:[#allocation8] sm:$0xff] %v10952
    %10956 = vst [vmem:[%s16] sm:$0xff] %v10930
    %10957 = vst [vmem:[%s16 + $0x8] sm:$0xff] %v10931
    %10958 = vst [vmem:[%s16 + $0x10] sm:$0xff] %v10932
    %10959 = vst [vmem:[%s16 + $0x18] sm:$0xff] %v10933
    %10960 = vst [vmem:[%s16 + $0x20] sm:$0xff] %v10934
    %10961 = vst [vmem:[%s16 + $0x28] sm:$0xff] %v10935
    %10962 = vst [vmem:[%s16 + $0x30] sm:$0xff] %v10936
    %10963 = vst [vmem:[%s16 + $0x38] sm:$0xff] %v10937
    %10964 = vst [vmem:[%s16 + $0x40] sm:$0xff] %v10938
    %10965 = vst [vmem:[%s16 + $0x48] sm:$0xff] %v10939
    %10966 = vst [vmem:[%s16 + $0x50] sm:$0xff] %v10940
    %10967 = vst [vmem:[%s16 + $0x58] sm:$0xff] %v10941
    %10968 = vst [vmem:[%s16 + $0x60] sm:$0xff] %v10942
    %10969 = vst [vmem:[%s16 + $0x68] sm:$0xff] %v10943
    %10970 = vst [vmem:[%s16 + $0x70] sm:$0xff] %v10944
    %10971 = vst [vmem:[%s16 + $0x78] sm:$0xff] %v10945
    // Predicated region
    $region54: #{snn_forward.1} parent=1 // pred_check
      _
    $region55: #{snn_forward.1} parent=1 // pred_check_branch
      %10973 = sbr.rel (0) target = $region57
    $region56: #{snn_forward.1} parent=1 // pred_region
      %s10975 = ssub.s32 128, 128
      %10976 = vsyncadd [#allocation3], %s10975
      %s10978 = sshll.u32 [#allocation5], 4
      %s10979 = int_to_ptr.vmem [resolvable:$true] %s10978
      %10981 = dma.vmem_to_hbm [thread:$0]  %s10979, 128, %s12, [#allocation3]
    $region57: #{snn_forward.1} parent=1 // pred_fallthru
      _
    // Predicated region
    $region58: #{snn_forward.1} parent=1 // pred_check
      _
    $region59: #{snn_forward.1} parent=1 // pred_check_branch
      %10983 = sbr.rel (0) target = $region61
    $region60: #{snn_forward.1} parent=1 // pred_region
      %s10985 = ssub.s32 128, 128
      %10986 = vsyncadd [#allocation7], %s10985
      %s10988 = sshll.u32 [#allocation6], 4
      %s10989 = int_to_ptr.vmem [resolvable:$true] %s10988
      %10991 = dma.vmem_to_hbm [thread:$0]  %s10989, 128, %s13, [#allocation7]
    $region61: #{snn_forward.1} parent=1 // pred_fallthru
      _
    // Predicated region
    $region62: #{snn_forward.1} parent=1 // pred_check
      _
    $region63: #{snn_forward.1} parent=1 // pred_check_branch
      %10993 = sbr.rel (0) target = $region65
    $region64: #{snn_forward.1} parent=1 // pred_region
      %s10995 = ssub.s32 128, 128
      %10996 = vsyncadd [#allocation7], %s10995
      %s10998 = sshll.u32 [#allocation8], 4
      %s10999 = int_to_ptr.vmem [resolvable:$true] %s10998
      %11001 = dma.vmem_to_hbm [thread:$0]  %s10999, 128, %s14, [#allocation7]
    $region65: #{snn_forward.1} parent=1 // pred_fallthru
      _
    // Predicated region
    $region66: #{snn_forward.1} parent=1 // pred_check
      _
    $region67: #{snn_forward.1} parent=1 // pred_check_branch
      %11003 = sbr.rel (0) target = $region69
    $region68: #{snn_forward.1} parent=1 // pred_region
      _
    $region69: #{snn_forward.1} parent=1 // pred_fallthru
      _
    // Predicated region
    $region70: #{snn_forward.1} parent=1 // pred_check
      _
    $region71: #{snn_forward.1} parent=1 // pred_check_branch
      %11005 = sbr.rel (0) target = $region73
    $region72: #{snn_forward.1} parent=1 // pred_region
      _
    $region73: #{snn_forward.1} parent=1 // pred_fallthru
      _
    // Predicated region
    $region74: #{snn_forward.1} parent=1 // pred_check
      _
    $region75: #{snn_forward.1} parent=1 // pred_check_branch
      %11007 = sbr.rel (0) target = $region77
    $region76: #{snn_forward.1} parent=1 // pred_region
      %11008 = dma.done [#allocation3], 128
    $region77: #{snn_forward.1} parent=1 // pred_fallthru
      _
    // Predicated region
    $region78: #{snn_forward.1} parent=1 // pred_check
      _
    $region79: #{snn_forward.1} parent=1 // pred_check_branch
      %11010 = sbr.rel (0) target = $region81
    $region80: #{snn_forward.1} parent=1 // pred_region
      %11011 = dma.done [#allocation7], 128
    $region81: #{snn_forward.1} parent=1 // pred_fallthru
      _
    // Predicated region
    $region82: #{snn_forward.1} parent=1 // pred_check
      _
    $region83: #{snn_forward.1} parent=1 // pred_check_branch
      %11013 = sbr.rel (0) target = $region85
    $region84: #{snn_forward.1} parent=1 // pred_region
      %11014 = dma.done [#allocation7], 128
    $region85: #{snn_forward.1} parent=1 // pred_fallthru
      _
    // Predicated region
    $region86: #{snn_forward.1} parent=1 // pred_check
      _
    $region87: #{snn_forward.1} parent=1 // pred_check_branch
      %11016 = sbr.rel (0) target = $region89
    $region88: #{snn_forward.1} parent=1 // pred_region
      _
    $region89: #{snn_forward.1} parent=1 // pred_fallthru
      _
    // Predicated region
    $region90: #{snn_forward.1} parent=1 // pred_check
      _
    $region91: #{snn_forward.1} parent=1 // pred_check_branch
      %11018 = sbr.rel (0) target = $region93
    $region92: #{snn_forward.1} parent=1 // pred_region
      _
    $region93: #{snn_forward.1} parent=1 // pred_fallthru
      _
    %11019 = vsyncpa [#allocation3], 1
    %11020 = vsyncpa [#allocation7], 1
    %11021 = vsyncpa [#allocation4], 1

</llo_original>
